<compile_context>
chip_gen: v7x
topology: tpu7x:2x2x1
jax: 0.10.0
libtpu: 0.0.40
codegen_flags: <defaults>
</compile_context>

<pallas_src>
import jax
import jax.numpy as jnp
from jax.experimental import pallas as pl
from jax.experimental.pallas import tpu as pltpu

_BN_EPS = 1e-5
_LRELU_SLOPE = 0.01  # F.leaky_relu default


# ---------------------------------------------------------------------------
# Pallas kernels: fused GEMM + (BatchNorm) + activation
# ---------------------------------------------------------------------------
def _gemm_bn_lrelu_kernel(x_ref, w_ref, g_ref, be_ref, o_ref):
    # x_ref: (M, K) bf16 im2col patches (M = N*OH*OW, K = kH*kW*Cin)
    # w_ref: (K, C) bf16 flipped ConvTranspose weights as a conv GEMM matrix
    # g_ref / be_ref: (1, C) f32 BatchNorm gamma / beta
    acc = jnp.dot(x_ref[...], w_ref[...], preferred_element_type=jnp.float32)
    # NOTE: ConvTranspose bias omitted -- a per-channel constant is exactly cancelled by the
    # BatchNorm mean subtraction below.
    mean = jnp.mean(acc, axis=0, keepdims=True)
    ex2 = jnp.mean(acc * acc, axis=0, keepdims=True)
    var = jnp.maximum(ex2 - mean * mean, 0.0)          # single-pass biased variance
    y = g_ref[...] * (acc - mean) * jax.lax.rsqrt(var + _BN_EPS) + be_ref[...]
    o_ref[...] = jnp.where(y >= 0.0, y, _LRELU_SLOPE * y)


def _gemm_bias_tanh_t_kernel(w_ref, x_ref, b_ref, o_ref):
    # Final layer computed transposed for lane-dense stores:
    #   w_ref: (1, K) bf16, x_ref: (K, M) bf16, b_ref: (1, 1) f32, out: (1, M) f32.
    acc = jnp.dot(w_ref[...], x_ref[...], preferred_element_type=jnp.float32)
    o_ref[...] = jnp.tanh(acc + b_ref[...])


def _vmem_specs(n):
    return [pl.BlockSpec(memory_space=pltpu.MemorySpace.VMEM) for _ in range(n)]


def _fused_gemm_bn_lrelu(patches, w2d, gamma, beta):
    m, c = patches.shape[0], w2d.shape[1]
    return pl.pallas_call(
        _gemm_bn_lrelu_kernel,
        out_shape=jax.ShapeDtypeStruct((m, c), jnp.float32),
        in_specs=_vmem_specs(4),
        out_specs=pl.BlockSpec(memory_space=pltpu.MemorySpace.VMEM),
    )(patches, w2d, gamma.reshape(1, -1), beta.reshape(1, -1))


def _fused_gemm_bias_tanh_t(w2d_t, patches_t, b):
    m = patches_t.shape[1]
    return pl.pallas_call(
        _gemm_bias_tanh_t_kernel,
        out_shape=jax.ShapeDtypeStruct((1, m), jnp.float32),
        in_specs=_vmem_specs(3),
        out_specs=pl.BlockSpec(memory_space=pltpu.MemorySpace.VMEM),
    )(w2d_t, patches_t, b.reshape(1, 1))


# ---------------------------------------------------------------------------
# Plain-JAX glue: transposed-conv -> dilate + pad + im2col (pure data movement)
# ---------------------------------------------------------------------------
def _dilate_and_pad(x, stride, pad, k):
    n, h, w, c = x.shape
    if stride > 1:                                   # static Python int -> no tracer bool
        hd, wd = (h - 1) * stride + 1, (w - 1) * stride + 1
        y = jnp.zeros((n, hd, wd, c), x.dtype)
        y = y.at[:, ::stride, ::stride, :].set(x)
    else:
        y = x
    pe = k - 1 - pad
    return jnp.pad(y, ((0, 0), (pe, pe), (pe, pe), (0, 0)))


def _im2col(xp, k, oh, ow):
    n, _, _, c = xp.shape
    cols = []
    for kh in range(k):
        for kw in range(k):
            cols.append(xp[:, kh:kh + oh, kw:kw + ow, :].reshape(n * oh * ow, c))
    return jnp.concatenate(cols, axis=1)             # (M, k*k*C), taps ordered (kh, kw, ci)


def _conv_gemm_weight(w_torch, k, cin, cout):
    # PyTorch ConvTranspose2d weight (Cin, Cout, kH, kW) -> regular-conv GEMM matrix on the
    # dilated/padded input: spatial flip, reorder to (kH, kW, Cin, Cout), flatten rows.
    w_hwio = jnp.transpose(w_torch[:, :, ::-1, ::-1], (2, 3, 0, 1))
    return w_hwio.reshape(k * k * cin, cout)


# ---------------------------------------------------------------------------
# Static layer config + parameter init (DCGAN-style N(0, 0.02) weights)
# ---------------------------------------------------------------------------
def _layer_specs(z_dim, d):
    # (cin, cout, k, s, p) for deconv1..deconv5 -- static Python ints.
    return (
        (z_dim, d * 8, 3, 1, 0),
        (d * 8, d * 4, 3, 2, 1),
        (d * 4, d * 2, 4, 2, 1),
        (d * 2, d * 1, 4, 2, 1),
        (d * 1, 1,     4, 2, 1),
    )


def init_generator_params(key, z_dim, d):
    params = []
    for cin, cout, k, _, _ in _layer_specs(z_dim, d):
        key, wk = jax.random.split(key)
        params.append(dict(
            w=0.02 * jax.random.normal(wk, (cin, cout, k, k), jnp.float32),  # torch layout
            b=jnp.zeros((cout,), jnp.float32),
            gamma=jnp.ones((cout,), jnp.float32),    # BatchNorm2d default weight
            beta=jnp.zeros((cout,), jnp.float32),    # BatchNorm2d default bias
        ))
    return params


# ---------------------------------------------------------------------------
# Forward pass (NCHW in / NCHW out, matching the PyTorch module)
# ---------------------------------------------------------------------------
def make_generator_forward(z_dim, d):
    specs = _layer_specs(z_dim, d)
    n_layers = len(specs)

    @jax.jit
    def forward(params, z_nchw):
        # The first torch line `leaky_relu(deconv1(input))` is dead code (immediately
        # overwritten), so it is not recomputed here.
        x = jnp.transpose(z_nchw, (0, 2, 3, 1)).astype(jnp.float32)      # NCHW -> NHWC
        for i, (cin, cout, k, s, p) in enumerate(specs):
            n, h, w_sp, _ = x.shape
            oh = (h - 1) * s + k - 2 * p
            ow = (w_sp - 1) * s + k - 2 * p
            xp = _dilate_and_pad(x.astype(jnp.bfloat16), s, p, k)
            patches = _im2col(xp, k, oh, ow)                             # (M, k*k*cin) bf16
            w2d = _conv_gemm_weight(params[i]["w"], k, cin, cout).astype(jnp.bfloat16)
            if i < n_layers - 1:
                out2d = _fused_gemm_bn_lrelu(
                    patches, w2d, params[i]["gamma"], params[i]["beta"])
                x = out2d.reshape(n, oh, ow, cout)
            else:
                # Lane-dense final layer (Cout=1): out^T = w^T @ patches^T -> (1, M).
                out_t = _fused_gemm_bias_tanh_t(w2d.T, patches.T, params[i]["b"])
                x = out_t.reshape(n, oh, ow, cout)
        return jnp.transpose(x, (0, 3, 1, 2))                            # NHWC -> NCHW

    return forward


# ---------------------------------------------------------------------------
# Plain-JAX (XLA conv) reference of the same forward, for in-script validation
# ---------------------------------------------------------------------------
def make_reference_forward(z_dim, d):
    specs = _layer_specs(z_dim, d)
    n_layers = len(specs)

    @jax.jit
    def forward(params, z_nchw):
        x = jnp.transpose(z_nchw, (0, 2, 3, 1)).astype(jnp.float32)
        for i, (cin, cout, k, s, p) in enumerate(specs):
            w_hwio = jnp.transpose(params[i]["w"][:, :, ::-1, ::-1], (2, 3, 0, 1))
            pe = k - 1 - p
            y = jax.lax.conv_general_dilated(
                x.astype(jnp.bfloat16), w_hwio.astype(jnp.bfloat16),
                window_strides=(1, 1), padding=[(pe, pe), (pe, pe)],
                lhs_dilation=(s, s), rhs_dilation=(1, 1),
                dimension_numbers=("NHWC", "HWIO", "NHWC"),
                preferred_element_type=jnp.float32)
            y = y + params[i]["b"].reshape(1, 1, 1, -1)
            if i < n_layers - 1:
                m = jnp.mean(y, axis=(0, 1, 2), keepdims=True)
                v = jnp.mean((y - m) ** 2, axis=(0, 1, 2), keepdims=True)
                y = (params[i]["gamma"].reshape(1, 1, 1, -1) * (y - m)
                     * jax.lax.rsqrt(v + _BN_EPS)
                     + params[i]["beta"].reshape(1, 1, 1, -1))
                x = jnp.where(y >= 0.0, y, _LRELU_SLOPE * y)
            else:
                x = jnp.tanh(y)
        return jnp.transpose(x, (0, 3, 1, 2))

    return forward


if __name__ == "__main__":
    key = jax.random.PRNGKey(0)
    pkey, zkey = jax.random.split(key)

    batch, z_dim, d = 2, 8, 16          # small shapes; output is (batch, 1, 40, 40)
    params = init_generator_params(pkey, z_dim, d)
    z = jax.random.normal(zkey, (batch, z_dim, 1, 1), jnp.float32)

    fwd = make_generator_forward(z_dim, d)
    out = jax.block_until_ready(fwd(params, z))

    assert out.shape == (batch, 1, 40, 40), out.shape
    assert bool(jnp.all(jnp.isfinite(out)))
    assert bool(jnp.all(jnp.abs(out) <= 1.0 + 1e-6))   # tanh range

    # Cross-check the Pallas path against the XLA-conv reference (same bf16 GEMM precision).
    ref = jax.block_until_ready(make_reference_forward(z_dim, d)(params, z))
    max_err = float(jnp.max(jnp.abs(out - ref)))
    assert max_err < 2e-2, f"mismatch vs reference: max abs err {max_err}"

    print("KERNEL_OK")
</pallas_src>

<mosaic_0001>
module attributes {stable_mosaic.version = 11 : i64} {
  func.func @_gemm_bn_lrelu_kernel(%arg0: memref<18x72xbf16, #tpu.memory_space<vmem>>, %arg1: memref<72x128xbf16, #tpu.memory_space<vmem>>, %arg2: memref<1x128xf32, #tpu.memory_space<vmem>>, %arg3: memref<1x128xf32, #tpu.memory_space<vmem>>, %arg4: memref<18x128xf32, #tpu.memory_space<vmem>>) attributes {dimension_semantics = [], scalar_prefetch = 0 : i64, scratch_operands = 0 : i64, tpu.core_type = #tpu.core_type<tc>} {
    %c0 = arith.constant 0 : index
    %c0_0 = arith.constant 0 : index
    %0 = vector.load %arg0[%c0, %c0_0] : memref<18x72xbf16, #tpu.memory_space<vmem>>, vector<18x72xbf16>
    %c0_1 = arith.constant 0 : index
    %c0_2 = arith.constant 0 : index
    %1 = vector.load %arg1[%c0_1, %c0_2] : memref<72x128xbf16, #tpu.memory_space<vmem>>, vector<72x128xbf16>
    %cst = arith.constant dense<0.000000e+00> : vector<18x128xf32>
    %2 = tpu.matmul %0, %1, %cst {dimension_numbers = #tpu.dot_dimension_numbers<[1], [0], [0], [1], [0, 0, 1, 1], [], []>} : vector<18x72xbf16>, vector<72x128xbf16>, vector<18x128xf32> -> vector<18x128xf32>
    %cst_3 = arith.constant dense<0.000000e+00> : vector<128xf32>
    %3 = vector.multi_reduction <add>, %2, %cst_3 [0] : vector<18x128xf32> to vector<128xf32>
    %4 = vector.shape_cast %3 : vector<128xf32> to vector<1x128xf32>
    %cst_4 = arith.constant 1.800000e+01 : f32
    %5 = vector.broadcast %cst_4 : f32 to vector<1x128xf32>
    %6 = arith.divf %4, %5 : vector<1x128xf32>
    %7 = arith.mulf %2, %2 : vector<18x128xf32>
    %cst_5 = arith.constant dense<0.000000e+00> : vector<128xf32>
    %8 = vector.multi_reduction <add>, %7, %cst_5 [0] : vector<18x128xf32> to vector<128xf32>
    %9 = vector.shape_cast %8 : vector<128xf32> to vector<1x128xf32>
    %cst_6 = arith.constant 1.800000e+01 : f32
    %10 = vector.broadcast %cst_6 : f32 to vector<1x128xf32>
    %11 = arith.divf %9, %10 : vector<1x128xf32>
    %12 = arith.mulf %6, %6 : vector<1x128xf32>
    %13 = arith.subf %11, %12 : vector<1x128xf32>
    %cst_7 = arith.constant 0.000000e+00 : f32
    %14 = vector.broadcast %cst_7 : f32 to vector<1x128xf32>
    %15 = arith.maximumf %13, %14 : vector<1x128xf32>
    %c0_8 = arith.constant 0 : index
    %c0_9 = arith.constant 0 : index
    %16 = vector.load %arg2[%c0_8, %c0_9] : memref<1x128xf32, #tpu.memory_space<vmem>>, vector<1x128xf32>
    %17 = vector.broadcast %6 : vector<1x128xf32> to vector<18x128xf32>
    %18 = arith.subf %2, %17 : vector<18x128xf32>
    %19 = vector.broadcast %16 : vector<1x128xf32> to vector<18x128xf32>
    %20 = arith.mulf %19, %18 : vector<18x128xf32>
    %cst_10 = arith.constant 9.99999974E-6 : f32
    %21 = vector.broadcast %cst_10 : f32 to vector<1x128xf32>
    %22 = arith.addf %15, %21 : vector<1x128xf32>
    %23 = math.rsqrt %22 : vector<1x128xf32>
    %24 = vector.broadcast %23 : vector<1x128xf32> to vector<18x128xf32>
    %25 = arith.mulf %20, %24 : vector<18x128xf32>
    %c0_11 = arith.constant 0 : index
    %c0_12 = arith.constant 0 : index
    %26 = vector.load %arg3[%c0_11, %c0_12] : memref<1x128xf32, #tpu.memory_space<vmem>>, vector<1x128xf32>
    %27 = vector.broadcast %26 : vector<1x128xf32> to vector<18x128xf32>
    %28 = arith.addf %25, %27 : vector<18x128xf32>
    %cst_13 = arith.constant 0.000000e+00 : f32
    %29 = vector.broadcast %cst_13 : f32 to vector<18x128xf32>
    %30 = arith.cmpf oge, %28, %29 : vector<18x128xf32>
    %cst_14 = arith.constant 0.00999999977 : f32
    %31 = vector.broadcast %cst_14 : f32 to vector<18x128xf32>
    %32 = arith.mulf %31, %28 : vector<18x128xf32>
    %33 = arith.select %30, %28, %32 : vector<18x128xi1>, vector<18x128xf32>
    %c0_15 = arith.constant 0 : index
    %c0_16 = arith.constant 0 : index
    %34 = vector.load %arg4[%c0_15, %c0_16] : memref<18x128xf32, #tpu.memory_space<vmem>>, vector<18x128xf32>
    tpu.vector_store %arg4[%c0_15, %c0_16], %33 {strides = array<i32>} : memref<18x128xf32, #tpu.memory_space<vmem>>, vector<18x128xf32>,
    return
  }
}

module attributes {stable_mosaic.version = 11 : i64} {
  func.func @_gemm_bn_lrelu_kernel(%arg0: memref<50x1152xbf16, #tpu.memory_space<vmem>>, %arg1: memref<1152x64xbf16, #tpu.memory_space<vmem>>, %arg2: memref<1x64xf32, #tpu.memory_space<vmem>>, %arg3: memref<1x64xf32, #tpu.memory_space<vmem>>, %arg4: memref<50x64xf32, #tpu.memory_space<vmem>>) attributes {dimension_semantics = [], scalar_prefetch = 0 : i64, scratch_operands = 0 : i64, tpu.core_type = #tpu.core_type<tc>} {
    %c0 = arith.constant 0 : index
    %c0_0 = arith.constant 0 : index
    %0 = vector.load %arg0[%c0, %c0_0] : memref<50x1152xbf16, #tpu.memory_space<vmem>>, vector<50x1152xbf16>
    %c0_1 = arith.constant 0 : index
    %c0_2 = arith.constant 0 : index
    %1 = vector.load %arg1[%c0_1, %c0_2] : memref<1152x64xbf16, #tpu.memory_space<vmem>>, vector<1152x64xbf16>
    %cst = arith.constant dense<0.000000e+00> : vector<50x64xf32>
    %2 = tpu.matmul %0, %1, %cst {dimension_numbers = #tpu.dot_dimension_numbers<[1], [0], [0], [1], [0, 0, 1, 1], [], []>} : vector<50x1152xbf16>, vector<1152x64xbf16>, vector<50x64xf32> -> vector<50x64xf32>
    %cst_3 = arith.constant dense<0.000000e+00> : vector<64xf32>
    %3 = vector.multi_reduction <add>, %2, %cst_3 [0] : vector<50x64xf32> to vector<64xf32>
    %4 = vector.shape_cast %3 : vector<64xf32> to vector<1x64xf32>
    %cst_4 = arith.constant 5.000000e+01 : f32
    %5 = vector.broadcast %cst_4 : f32 to vector<1x64xf32>
    %6 = arith.divf %4, %5 : vector<1x64xf32>
    %7 = arith.mulf %2, %2 : vector<50x64xf32>
    %cst_5 = arith.constant dense<0.000000e+00> : vector<64xf32>
    %8 = vector.multi_reduction <add>, %7, %cst_5 [0] : vector<50x64xf32> to vector<64xf32>
    %9 = vector.shape_cast %8 : vector<64xf32> to vector<1x64xf32>
    %cst_6 = arith.constant 5.000000e+01 : f32
    %10 = vector.broadcast %cst_6 : f32 to vector<1x64xf32>
    %11 = arith.divf %9, %10 : vector<1x64xf32>
    %12 = arith.mulf %6, %6 : vector<1x64xf32>
    %13 = arith.subf %11, %12 : vector<1x64xf32>
    %cst_7 = arith.constant 0.000000e+00 : f32
    %14 = vector.broadcast %cst_7 : f32 to vector<1x64xf32>
    %15 = arith.maximumf %13, %14 : vector<1x64xf32>
    %c0_8 = arith.constant 0 : index
    %c0_9 = arith.constant 0 : index
    %16 = vector.load %arg2[%c0_8, %c0_9] : memref<1x64xf32, #tpu.memory_space<vmem>>, vector<1x64xf32>
    %17 = vector.broadcast %6 : vector<1x64xf32> to vector<50x64xf32>
    %18 = arith.subf %2, %17 : vector<50x64xf32>
    %19 = vector.broadcast %16 : vector<1x64xf32> to vector<50x64xf32>
    %20 = arith.mulf %19, %18 : vector<50x64xf32>
    %cst_10 = arith.constant 9.99999974E-6 : f32
    %21 = vector.broadcast %cst_10 : f32 to vector<1x64xf32>
    %22 = arith.addf %15, %21 : vector<1x64xf32>
    %23 = math.rsqrt %22 : vector<1x64xf32>
    %24 = vector.broadcast %23 : vector<1x64xf32> to vector<50x64xf32>
    %25 = arith.mulf %20, %24 : vector<50x64xf32>
    %c0_11 = arith.constant 0 : index
    %c0_12 = arith.constant 0 : index
    %26 = vector.load %arg3[%c0_11, %c0_12] : memref<1x64xf32, #tpu.memory_space<vmem>>, vector<1x64xf32>
    %27 = vector.broadcast %26 : vector<1x64xf32> to vector<50x64xf32>
    %28 = arith.addf %25, %27 : vector<50x64xf32>
    %cst_13 = arith.constant 0.000000e+00 : f32
    %29 = vector.broadcast %cst_13 : f32 to vector<50x64xf32>
    %30 = arith.cmpf oge, %28, %29 : vector<50x64xf32>
    %cst_14 = arith.constant 0.00999999977 : f32
    %31 = vector.broadcast %cst_14 : f32 to vector<50x64xf32>
    %32 = arith.mulf %31, %28 : vector<50x64xf32>
    %33 = arith.select %30, %28, %32 : vector<50x64xi1>, vector<50x64xf32>
    %c0_15 = arith.constant 0 : index
    %c0_16 = arith.constant 0 : index
    %34 = vector.load %arg4[%c0_15, %c0_16] : memref<50x64xf32, #tpu.memory_space<vmem>>, vector<50x64xf32>
    tpu.vector_store %arg4[%c0_15, %c0_16], %33 {strides = array<i32>} : memref<50x64xf32, #tpu.memory_space<vmem>>, vector<50x64xf32>,
    return
  }
}

module attributes {stable_mosaic.version = 11 : i64} {
  func.func @_gemm_bn_lrelu_kernel(%arg0: memref<200x1024xbf16, #tpu.memory_space<vmem>>, %arg1: memref<1024x32xbf16, #tpu.memory_space<vmem>>, %arg2: memref<1x32xf32, #tpu.memory_space<vmem>>, %arg3: memref<1x32xf32, #tpu.memory_space<vmem>>, %arg4: memref<200x32xf32, #tpu.memory_space<vmem>>) attributes {dimension_semantics = [], scalar_prefetch = 0 : i64, scratch_operands = 0 : i64, tpu.core_type = #tpu.core_type<tc>} {
    %c0 = arith.constant 0 : index
    %c0_0 = arith.constant 0 : index
    %0 = vector.load %arg0[%c0, %c0_0] : memref<200x1024xbf16, #tpu.memory_space<vmem>>, vector<200x1024xbf16>
    %c0_1 = arith.constant 0 : index
    %c0_2 = arith.constant 0 : index
    %1 = vector.load %arg1[%c0_1, %c0_2] : memref<1024x32xbf16, #tpu.memory_space<vmem>>, vector<1024x32xbf16>
    %cst = arith.constant dense<0.000000e+00> : vector<200x32xf32>
    %2 = tpu.matmul %0, %1, %cst {dimension_numbers = #tpu.dot_dimension_numbers<[1], [0], [0], [1], [0, 0, 1, 1], [], []>} : vector<200x1024xbf16>, vector<1024x32xbf16>, vector<200x32xf32> -> vector<200x32xf32>
    %cst_3 = arith.constant dense<0.000000e+00> : vector<32xf32>
    %3 = vector.multi_reduction <add>, %2, %cst_3 [0] : vector<200x32xf32> to vector<32xf32>
    %4 = vector.shape_cast %3 : vector<32xf32> to vector<1x32xf32>
    %cst_4 = arith.constant 2.000000e+02 : f32
    %5 = vector.broadcast %cst_4 : f32 to vector<1x32xf32>
    %6 = arith.divf %4, %5 : vector<1x32xf32>
    %7 = arith.mulf %2, %2 : vector<200x32xf32>
    %cst_5 = arith.constant dense<0.000000e+00> : vector<32xf32>
    %8 = vector.multi_reduction <add>, %7, %cst_5 [0] : vector<200x32xf32> to vector<32xf32>
    %9 = vector.shape_cast %8 : vector<32xf32> to vector<1x32xf32>
    %cst_6 = arith.constant 2.000000e+02 : f32
    %10 = vector.broadcast %cst_6 : f32 to vector<1x32xf32>
    %11 = arith.divf %9, %10 : vector<1x32xf32>
    %12 = arith.mulf %6, %6 : vector<1x32xf32>
    %13 = arith.subf %11, %12 : vector<1x32xf32>
    %cst_7 = arith.constant 0.000000e+00 : f32
    %14 = vector.broadcast %cst_7 : f32 to vector<1x32xf32>
    %15 = arith.maximumf %13, %14 : vector<1x32xf32>
    %c0_8 = arith.constant 0 : index
    %c0_9 = arith.constant 0 : index
    %16 = vector.load %arg2[%c0_8, %c0_9] : memref<1x32xf32, #tpu.memory_space<vmem>>, vector<1x32xf32>
    %17 = vector.broadcast %6 : vector<1x32xf32> to vector<200x32xf32>
    %18 = arith.subf %2, %17 : vector<200x32xf32>
    %19 = vector.broadcast %16 : vector<1x32xf32> to vector<200x32xf32>
    %20 = arith.mulf %19, %18 : vector<200x32xf32>
    %cst_10 = arith.constant 9.99999974E-6 : f32
    %21 = vector.broadcast %cst_10 : f32 to vector<1x32xf32>
    %22 = arith.addf %15, %21 : vector<1x32xf32>
    %23 = math.rsqrt %22 : vector<1x32xf32>
    %24 = vector.broadcast %23 : vector<1x32xf32> to vector<200x32xf32>
    %25 = arith.mulf %20, %24 : vector<200x32xf32>
    %c0_11 = arith.constant 0 : index
    %c0_12 = arith.constant 0 : index
    %26 = vector.load %arg3[%c0_11, %c0_12] : memref<1x32xf32, #tpu.memory_space<vmem>>, vector<1x32xf32>
    %27 = vector.broadcast %26 : vector<1x32xf32> to vector<200x32xf32>
    %28 = arith.addf %25, %27 : vector<200x32xf32>
    %cst_13 = arith.constant 0.000000e+00 : f32
    %29 = vector.broadcast %cst_13 : f32 to vector<200x32xf32>
    %30 = arith.cmpf oge, %28, %29 : vector<200x32xf32>
    %cst_14 = arith.constant 0.00999999977 : f32
    %31 = vector.broadcast %cst_14 : f32 to vector<200x32xf32>
    %32 = arith.mulf %31, %28 : vector<200x32xf32>
    %33 = arith.select %30, %28, %32 : vector<200x32xi1>, vector<200x32xf32>
    %c0_15 = arith.constant 0 : index
    %c0_16 = arith.constant 0 : index
    %34 = vector.load %arg4[%c0_15, %c0_16] : memref<200x32xf32, #tpu.memory_space<vmem>>, vector<200x32xf32>
    tpu.vector_store %arg4[%c0_15, %c0_16], %33 {strides = array<i32>} : memref<200x32xf32, #tpu.memory_space<vmem>>, vector<200x32xf32>,
    return
  }
}

module attributes {stable_mosaic.version = 11 : i64} {
  func.func @_gemm_bn_lrelu_kernel(%arg0: memref<800x512xbf16, #tpu.memory_space<vmem>>, %arg1: memref<512x16xbf16, #tpu.memory_space<vmem>>, %arg2: memref<1x16xf32, #tpu.memory_space<vmem>>, %arg3: memref<1x16xf32, #tpu.memory_space<vmem>>, %arg4: memref<800x16xf32, #tpu.memory_space<vmem>>) attributes {dimension_semantics = [], scalar_prefetch = 0 : i64, scratch_operands = 0 : i64, tpu.core_type = #tpu.core_type<tc>} {
    %c0 = arith.constant 0 : index
    %c0_0 = arith.constant 0 : index
    %0 = vector.load %arg0[%c0, %c0_0] : memref<800x512xbf16, #tpu.memory_space<vmem>>, vector<800x512xbf16>
    %c0_1 = arith.constant 0 : index
    %c0_2 = arith.constant 0 : index
    %1 = vector.load %arg1[%c0_1, %c0_2] : memref<512x16xbf16, #tpu.memory_space<vmem>>, vector<512x16xbf16>
    %cst = arith.constant dense<0.000000e+00> : vector<800x16xf32>
    %2 = tpu.matmul %0, %1, %cst {dimension_numbers = #tpu.dot_dimension_numbers<[1], [0], [0], [1], [0, 0, 1, 1], [], []>} : vector<800x512xbf16>, vector<512x16xbf16>, vector<800x16xf32> -> vector<800x16xf32>
    %cst_3 = arith.constant dense<0.000000e+00> : vector<16xf32>
    %3 = vector.multi_reduction <add>, %2, %cst_3 [0] : vector<800x16xf32> to vector<16xf32>
    %4 = vector.shape_cast %3 : vector<16xf32> to vector<1x16xf32>
    %cst_4 = arith.constant 8.000000e+02 : f32
    %5 = vector.broadcast %cst_4 : f32 to vector<1x16xf32>
    %6 = arith.divf %4, %5 : vector<1x16xf32>
    %7 = arith.mulf %2, %2 : vector<800x16xf32>
    %cst_5 = arith.constant dense<0.000000e+00> : vector<16xf32>
    %8 = vector.multi_reduction <add>, %7, %cst_5 [0] : vector<800x16xf32> to vector<16xf32>
    %9 = vector.shape_cast %8 : vector<16xf32> to vector<1x16xf32>
    %cst_6 = arith.constant 8.000000e+02 : f32
    %10 = vector.broadcast %cst_6 : f32 to vector<1x16xf32>
    %11 = arith.divf %9, %10 : vector<1x16xf32>
    %12 = arith.mulf %6, %6 : vector<1x16xf32>
    %13 = arith.subf %11, %12 : vector<1x16xf32>
    %cst_7 = arith.constant 0.000000e+00 : f32
    %14 = vector.broadcast %cst_7 : f32 to vector<1x16xf32>
    %15 = arith.maximumf %13, %14 : vector<1x16xf32>
    %c0_8 = arith.constant 0 : index
    %c0_9 = arith.constant 0 : index
    %16 = vector.load %arg2[%c0_8, %c0_9] : memref<1x16xf32, #tpu.memory_space<vmem>>, vector<1x16xf32>
    %17 = vector.broadcast %6 : vector<1x16xf32> to vector<800x16xf32>
    %18 = arith.subf %2, %17 : vector<800x16xf32>
    %19 = vector.broadcast %16 : vector<1x16xf32> to vector<800x16xf32>
    %20 = arith.mulf %19, %18 : vector<800x16xf32>
    %cst_10 = arith.constant 9.99999974E-6 : f32
    %21 = vector.broadcast %cst_10 : f32 to vector<1x16xf32>
    %22 = arith.addf %15, %21 : vector<1x16xf32>
    %23 = math.rsqrt %22 : vector<1x16xf32>
    %24 = vector.broadcast %23 : vector<1x16xf32> to vector<800x16xf32>
    %25 = arith.mulf %20, %24 : vector<800x16xf32>
    %c0_11 = arith.constant 0 : index
    %c0_12 = arith.constant 0 : index
    %26 = vector.load %arg3[%c0_11, %c0_12] : memref<1x16xf32, #tpu.memory_space<vmem>>, vector<1x16xf32>
    %27 = vector.broadcast %26 : vector<1x16xf32> to vector<800x16xf32>
    %28 = arith.addf %25, %27 : vector<800x16xf32>
    %cst_13 = arith.constant 0.000000e+00 : f32
    %29 = vector.broadcast %cst_13 : f32 to vector<800x16xf32>
    %30 = arith.cmpf oge, %28, %29 : vector<800x16xf32>
    %cst_14 = arith.constant 0.00999999977 : f32
    %31 = vector.broadcast %cst_14 : f32 to vector<800x16xf32>
    %32 = arith.mulf %31, %28 : vector<800x16xf32>
    %33 = arith.select %30, %28, %32 : vector<800x16xi1>, vector<800x16xf32>
    %c0_15 = arith.constant 0 : index
    %c0_16 = arith.constant 0 : index
    %34 = vector.load %arg4[%c0_15, %c0_16] : memref<800x16xf32, #tpu.memory_space<vmem>>, vector<800x16xf32>
    tpu.vector_store %arg4[%c0_15, %c0_16], %33 {strides = array<i32>} : memref<800x16xf32, #tpu.memory_space<vmem>>, vector<800x16xf32>,
    return
  }
}

module attributes {stable_mosaic.version = 11 : i64} {
  func.func @_gemm_bias_tanh_t_kernel(%arg0: memref<1x256xbf16, #tpu.memory_space<vmem>>, %arg1: memref<256x3200xbf16, #tpu.memory_space<vmem>>, %arg2: memref<1x1xf32, #tpu.memory_space<vmem>>, %arg3: memref<1x3200xf32, #tpu.memory_space<vmem>>) attributes {dimension_semantics = [], scalar_prefetch = 0 : i64, scratch_operands = 0 : i64, tpu.core_type = #tpu.core_type<tc>} {
    %c0 = arith.constant 0 : index
    %c0_0 = arith.constant 0 : index
    %0 = vector.load %arg0[%c0, %c0_0] : memref<1x256xbf16, #tpu.memory_space<vmem>>, vector<1x256xbf16>
    %c0_1 = arith.constant 0 : index
    %c0_2 = arith.constant 0 : index
    %1 = vector.load %arg1[%c0_1, %c0_2] : memref<256x3200xbf16, #tpu.memory_space<vmem>>, vector<256x3200xbf16>
    %cst = arith.constant dense<0.000000e+00> : vector<1x3200xf32>
    %2 = tpu.matmul %0, %1, %cst {dimension_numbers = #tpu.dot_dimension_numbers<[1], [0], [0], [1], [0, 0, 1, 1], [], []>} : vector<1x256xbf16>, vector<256x3200xbf16>, vector<1x3200xf32> -> vector<1x3200xf32>
    %c0_3 = arith.constant 0 : index
    %c0_4 = arith.constant 0 : index
    %3 = vector.load %arg2[%c0_3, %c0_4] : memref<1x1xf32, #tpu.memory_space<vmem>>, vector<1x1xf32>
    %4 = vector.broadcast %3 : vector<1x1xf32> to vector<1x3200xf32>
    %5 = arith.addf %2, %4 : vector<1x3200xf32>
    %6 = math.tanh %5 : vector<1x3200xf32>
    %c0_5 = arith.constant 0 : index
    %c0_6 = arith.constant 0 : index
    %7 = vector.load %arg3[%c0_5, %c0_6] : memref<1x3200xf32, #tpu.memory_space<vmem>>, vector<1x3200xf32>
    tpu.vector_store %arg3[%c0_5, %c0_6], %6 {strides = array<i32>} : memref<1x3200xf32, #tpu.memory_space<vmem>>, vector<1x3200xf32>,
    return
  }
}

</mosaic_0001>

<llo_original>
// kernel: forward.5
$region0: #{forward.5}
  #allocation0 [shape = 'u32[]', space=smem, size = 0x4, offset = 0x4, fixed_abs, tag = 'smem constant byte address 0x4 - core index']
  #allocation1 [shape = 'u32[144,128]{1,0:T(1,128)}', space=vmem, size = 0x12000, scoped, tag = 'internal scratch']
  %s0 = inlined_call_operand.vmem [shape: bf16[18,72], index: 0, kind: input, shape index: {}]
  %s1 = inlined_call_operand.vmem [shape: bf16[72,128], index: 1, kind: input, shape index: {}]
  %s2 = inlined_call_operand.hbm [shape: f32[1,128], index: 2, kind: input, shape index: {}]
  %s3 = inlined_call_operand.hbm [shape: f32[1,128], index: 3, kind: input, shape index: {}]
  %s4 = inlined_call_operand.vmem [shape: f32[18,128], index: 4, kind: output, shape index: {}]
  %s5 = sld [smem:[#allocation0]]
  $region34: #{forward.5} parent=0
    _
  %s7 = ssub.s32 1, %s5
  %s8 = scalar_select 0, %s7, %s5
  $region1: #{forward.5} parent=0
    #allocation2 [shape = 'u8[512]{0}', space=vmem, size = 0x400, scoped, tag = 'input window, operand 2, single buffered']
    #allocation3 [shape = 's32[1]{0}', space=sflag, size = 0x4, scoped, tag = 'scoped memory for forward.5']
    #allocation4 [shape = 'u8[512]{0}', space=vmem, size = 0x400, scoped, tag = 'input window, operand 3, single buffered']
    #allocation5 [shape = 's32[1]{0}', space=sflag, size = 0x4, scoped, tag = 'scoped memory for forward.5']
    %9 = vsyncpa [#allocation3], 0
    %10 = vsyncpa [#allocation5], 0
    // Predicated region
    $region2: #{forward.5} parent=1 // pred_check
      _
    $region3: #{forward.5} parent=1 // pred_check_branch
      %12 = sbr.rel (0) target = $region5
    $region4: #{forward.5} parent=1 // pred_region
      _
    $region5: #{forward.5} parent=1 // pred_fallthru
      _
    // Predicated region
    $region6: #{forward.5} parent=1 // pred_check
      _
    $region7: #{forward.5} parent=1 // pred_check_branch
      %14 = sbr.rel (0) target = $region9
    $region8: #{forward.5} parent=1 // pred_region
      _
    $region9: #{forward.5} parent=1 // pred_fallthru
      _
    // Predicated region
    $region10: #{forward.5} parent=1 // pred_check
      _
    $region11: #{forward.5} parent=1 // pred_check_branch
      %16 = sbr.rel (0) target = $region13
    $region12: #{forward.5} parent=1 // pred_region
      %s18 = ssub.s32 16, 16
      %19 = vsyncadd [#allocation3], %s18
      %s21 = sshll.u32 [#allocation2], 4
      %s22 = int_to_ptr.vmem [resolvable:$true] %s21
      %24 = dma.hbm_to_vmem [thread:$0]  %s2, 16, %s22, [#allocation3]
    $region13: #{forward.5} parent=1 // pred_fallthru
      _
    // Predicated region
    $region14: #{forward.5} parent=1 // pred_check
      _
    $region15: #{forward.5} parent=1 // pred_check_branch
      %26 = sbr.rel (0) target = $region17
    $region16: #{forward.5} parent=1 // pred_region
      %s28 = ssub.s32 16, 16
      %29 = vsyncadd [#allocation5], %s28
      %s31 = sshll.u32 [#allocation4], 4
      %s32 = int_to_ptr.vmem [resolvable:$true] %s31
      %34 = dma.hbm_to_vmem [thread:$0]  %s3, 16, %s32, [#allocation5]
    $region17: #{forward.5} parent=1 // pred_fallthru
      _
    // Predicated region
    $region18: #{forward.5} parent=1 // pred_check
      _
    $region19: #{forward.5} parent=1 // pred_check_branch
      %36 = sbr.rel (0) target = $region21
    $region20: #{forward.5} parent=1 // pred_region
      %37 = dma.done [#allocation3], 16
    $region21: #{forward.5} parent=1 // pred_fallthru
      _
    // Predicated region
    $region22: #{forward.5} parent=1 // pred_check
      _
    $region23: #{forward.5} parent=1 // pred_check_branch
      %39 = sbr.rel (0) target = $region25
    $region24: #{forward.5} parent=1 // pred_region
      %40 = dma.done [#allocation5], 16
    $region25: #{forward.5} parent=1 // pred_fallthru
      _
    %v42 = vld [vmem:[%s0] sm:$0xf]
    %v43 = vld [vmem:[%s0 + $0x4] sm:$0xf]
    %v44 = vld [vmem:[%s0 + $0x8] sm:$0x1]
    %v45 = vld [vmem:[%s1] sm:$0xf]
    %v46 = vld [vmem:[%s1 + $0x4] sm:$0xf]
    %v47 = vld [vmem:[%s1 + $0x8] sm:$0xf]
    %v48 = vld [vmem:[%s1 + $0xc] sm:$0xf]
    %v49 = vld [vmem:[%s1 + $0x10] sm:$0xf]
    %v50 = vld [vmem:[%s1 + $0x14] sm:$0xf]
    %v51 = vld [vmem:[%s1 + $0x18] sm:$0xf]
    %v52 = vld [vmem:[%s1 + $0x1c] sm:$0xf]
    %v53 = vld [vmem:[%s1 + $0x20] sm:$0xf]
    %v57 = vunpack.c.l.b16 %v42
    %v58 = vunpack.c.l.b16 %v43
    %v59 = vunpack.c.l.b16 %v44
    %v60 = vpack.c.b16 %v58, %v57
    %v61 = vpack.c.b16 %v59, %v59
    %v71 = vunpack.c.l.b16 %v45
    %v72 = vunpack.c.l.b16 %v46
    %v73 = vunpack.c.l.b16 %v47
    %v74 = vunpack.c.l.b16 %v48
    %v75 = vunpack.c.l.b16 %v49
    %v76 = vunpack.c.l.b16 %v50
    %v77 = vunpack.c.l.b16 %v51
    %v78 = vunpack.c.l.b16 %v52
    %v79 = vunpack.c.l.b16 %v53
    %v80 = vpack.c.b16 %v72, %v71
    %v81 = vpack.c.b16 %v74, %v73
    %v82 = vpack.c.b16 %v76, %v75
    %v83 = vpack.c.b16 %v78, %v77
    %v84 = vpack.c.b16 %v79, %v79
    %vm89 = vcmask 588800
    %v91 = vsel %vm89, %v60, 0
    %v94 = vsel %vm89, %v61, 0
    %vm96 = vcmask 1043456
    %v98 = vsel %vm96, %v84, 0
    %100 = vmatprep.subr.bf16.mxu0 0
    %101 = vmatpush1.bf16.msra.mxu0 %v80
    %102 = vmatprep.subr.bf16.mxu0 0
    %103 = vmatpush1.bf16.msra.mxu0 %v81
    %104 = vmatprep.subr.bf16.mxu0 0
    %105 = vmatpush1.bf16.msra.mxu0 %v82
    %106 = vmatprep.subr.bf16.mxu0 0
    %107 = vmatpush1.bf16.msra.mxu0 %v83
    %108 = vmatprep.subr.bf16.mxu0 0
    %109 = vmatpush1.bf16.msra.mxu0 %v98
    %110 = vmatprep.subr.bf16.mxu0 0
    %111 = vmatpush1.bf16.msra.mxu0 0
    %112 = vmatprep.subr.bf16.mxu0 0
    %113 = vmatpush1.bf16.msra.mxu0 0
    %114 = vmatprep.subr.bf16.mxu0 0
    %115 = vmatpush1.bf16.msra.mxu0 0
    %116 = vmatprep.subr.bf16.mxu0 0
    %117 = vmatpush1.bf16.msra.mxu0 0
    %118 = vmatprep.subr.bf16.mxu0 0
    %119 = vmatpush1.bf16.msra.mxu0 0
    %120 = vmatprep.subr.bf16.mxu0 0
    %121 = vmatpush1.bf16.msra.mxu0 0
    %122 = vmatprep.subr.bf16.mxu0 0
    %123 = vmatpush1.bf16.msra.mxu0 0
    %124 = vmatprep.subr.bf16.mxu0 0
    %125 = vmatpush1.bf16.msra.mxu0 0
    %126 = vmatprep.subr.bf16.mxu0 0
    %127 = vmatpush1.bf16.msra.mxu0 0
    %128 = vmatprep.subr.bf16.mxu0 0
    %129 = vmatpush1.bf16.msra.mxu0 0
    %130 = vmatprep.subr.bf16.mxu0 0
    %131 = vmatpush1.bf16.msra.mxu0 0
    %132 = vmatprep.mubr.bf16.mxu0 0
    %133 = vmatmul.mubr.bf16.gmra.mrb[0].mxu0 %v91
    %v134 = vpop.f32.mrb[0].mxu0
    %v135 = vadd.f32 0.0, %v134
    %v136 = vpop.f32.mrb[0].mxu0
    %v137 = vpop.f32.mrb[0].mxu0
    %v138 = vadd.f32 0.0, %v137
    %v139 = vpop.f32.mrb[0].mxu0
    %140 = vmatprep.mubr.bf16.mxu0 0
    %141 = vmatmul.mubr.bf16.gmra.mrb[0].mxu0 %v94
    %v142 = vpop.f32.mrb[0].mxu0
    %v143 = vadd.f32 0.0, %v142
    %v144 = vpop.f32.mrb[0].mxu0
    %v145 = vpop.f32.mrb[0].mxu0
    %v146 = vpop.f32.mrb[0].mxu0
    %147 = vdwg.mxu0
    %v148 = vadd.f32 %v135, %v138
    %vm149 = vcmask 1041408
    %v150 = vsel %vm149, %v143, 0.0
    %v151 = vadd.f32 %v148, %v150
    %v152 = vrot.slane %v151, 4
    %v153 = vadd.f32 %v151, %v152
    %v154 = vrot.slane %v153, 2
    %v155 = vadd.f32 %v153, %v154
    %v156 = vrot.slane %v155, 1
    %v157 = vadd.f32 %v155, %v156
    %v158 = vrcp.pop 18.0
    %v159 = vmul.f32 %v157, %v158
    %v160 = vmul.f32 %v135, %v135
    %v161 = vmul.f32 %v138, %v138
    %v162 = vmul.f32 %v143, %v143
    %v163 = vadd.f32 %v160, %v161
    %v164 = vsel %vm149, %v162, 0.0
    %v165 = vadd.f32 %v163, %v164
    %v166 = vrot.slane %v165, 4
    %v167 = vadd.f32 %v165, %v166
    %v168 = vrot.slane %v167, 2
    %v169 = vadd.f32 %v167, %v168
    %v170 = vrot.slane %v169, 1
    %v171 = vadd.f32 %v169, %v170
    %v172 = vmul.f32 %v171, %v158
    %v173 = vmul.f32 %v159, %v159
    %v174 = vsub.f32 %v172, %v173
    %v175 = vmax.f32 %v174, 0.0
    %v176 = vld [vmem:[#allocation2] sm:$0x1]
    %v177 = vsub.f32 %v135, %v159
    %v178 = vsub.f32 %v138, %v159
    %v179 = vsub.f32 %v143, %v159
    %v181 = vlaneseq
    %v182 = vshrl.u32 %v181, 7
    %v183 = vsub.s32 0, %v182
    %v184 = vrot.slane %v176, %v183
    %v186 = vmul.f32 %v184, %v177
    %v187 = vmul.f32 %v184, %v178
    %v188 = vmul.f32 %v184, %v179
    %v189 = vadd.f32 %v175, 1e-05
    %v190 = vrsqrt.pop %v189
    %v191 = vmul.f32 %v186, %v190
    %v192 = vmul.f32 %v187, %v190
    %v193 = vmul.f32 %v188, %v190
    %v194 = vld [vmem:[#allocation4] sm:$0x1]
    %v196 = vlaneseq
    %v197 = vshrl.u32 %v196, 7
    %v198 = vsub.s32 0, %v197
    %v199 = vrot.slane %v194, %v198
    %v201 = vadd.f32 %v191, %v199
    %v202 = vadd.f32 %v192, %v199
    %v203 = vadd.f32 %v193, %v199
    %vm204 = vcmp.ge.f32.partialorder %v201, 0.0
    %vm205 = vcmp.ge.f32.partialorder %v202, 0.0
    %vm206 = vcmp.ge.f32.partialorder %v203, 0.0
    %v207 = vmul.f32 %v201, 0.01
    %v208 = vmul.f32 %v202, 0.01
    %v209 = vmul.f32 %v203, 0.01
    %v210 = vsel %vm204, %v201, %v207
    %v211 = vsel %vm205, %v202, %v208
    %v212 = vsel %vm206, %v203, %v209
    %213 = vst [vmem:[%s4] sm:$0xff] %v210
    %214 = vst [vmem:[%s4 + $0x8] sm:$0xff] %v211
    %215 = vst [vmem:[%s4 + $0x10] sm:$0x3] %v212
    // Predicated region
    $region26: #{forward.5} parent=1 // pred_check
      _
    $region27: #{forward.5} parent=1 // pred_check_branch
      %217 = sbr.rel (0) target = $region29
    $region28: #{forward.5} parent=1 // pred_region
      _
    $region29: #{forward.5} parent=1 // pred_fallthru
      _
    // Predicated region
    $region30: #{forward.5} parent=1 // pred_check
      _
    $region31: #{forward.5} parent=1 // pred_check_branch
      %219 = sbr.rel (0) target = $region33
    $region32: #{forward.5} parent=1 // pred_region
      _
    $region33: #{forward.5} parent=1 // pred_fallthru
      _
    %220 = vsyncpa [#allocation3], 1
    %221 = vsyncpa [#allocation5], 1

// kernel: forward.6
$region0: #{forward.6}
  #allocation0 [shape = 'u32[]', space=smem, size = 0x4, offset = 0x4, fixed_abs, tag = 'smem constant byte address 0x4 - core index']
  #allocation1 [shape = 'u32[144,128]{1,0:T(1,128)}', space=vmem, size = 0x12000, scoped, tag = 'internal scratch']
  %s0 = inlined_call_operand.vmem [shape: bf16[50,1152], index: 0, kind: input, shape index: {}]
  %s1 = inlined_call_operand.vmem [shape: bf16[1152,64], index: 1, kind: input, shape index: {}]
  %s2 = inlined_call_operand.vmem [shape: f32[1,64], index: 2, kind: input, shape index: {}]
  %s3 = inlined_call_operand.vmem [shape: f32[1,64], index: 3, kind: input, shape index: {}]
  %s4 = inlined_call_operand.vmem [shape: f32[50,64], index: 4, kind: output, shape index: {}]
  %s5 = sld [smem:[#allocation0]]
  $region26: #{forward.6} parent=0
    _
  %s7 = ssub.s32 1, %s5
  %s8 = scalar_select 0, %s7, %s5
  // Predicated region
  $region2: #{forward.6} parent=0 // pred_check
    _
  $region3: #{forward.6} parent=0 // pred_check_branch
    %10 = sbr.rel (0) target = $region5
  $region4: #{forward.6} parent=0 // pred_region
    _
  $region5: #{forward.6} parent=0 // pred_fallthru
    _
  // Predicated region
  $region6: #{forward.6} parent=0 // pred_check
    _
  $region7: #{forward.6} parent=0 // pred_check_branch
    %12 = sbr.rel (0) target = $region9
  $region8: #{forward.6} parent=0 // pred_region
    _
  $region9: #{forward.6} parent=0 // pred_fallthru
    _
  // Predicated region
  $region10: #{forward.6} parent=0 // pred_check
    _
  $region11: #{forward.6} parent=0 // pred_check_branch
    %14 = sbr.rel (0) target = $region13
  $region12: #{forward.6} parent=0 // pred_region
    _
  $region13: #{forward.6} parent=0 // pred_fallthru
    _
  // Predicated region
  $region14: #{forward.6} parent=0 // pred_check
    _
  $region15: #{forward.6} parent=0 // pred_check_branch
    %16 = sbr.rel (0) target = $region17
  $region16: #{forward.6} parent=0 // pred_region
    _
  $region17: #{forward.6} parent=0 // pred_fallthru
    _
  %v18 = vld [vmem:[%s0] sm:$0xff]
  %v19 = vld [vmem:[%s0 + $0x8] sm:$0xff]
  %v20 = vld [vmem:[%s0 + $0x10] sm:$0xff]
  %v21 = vld [vmem:[%s0 + $0x18] sm:$0xff]
  %v22 = vld [vmem:[%s0 + $0x20] sm:$0xf]
  %v23 = vld [vmem:[%s0 + $0x24] sm:$0xff]
  %v24 = vld [vmem:[%s0 + $0x2c] sm:$0xff]
  %v25 = vld [vmem:[%s0 + $0x34] sm:$0xff]
  %v26 = vld [vmem:[%s0 + $0x3c] sm:$0xff]
  %v27 = vld [vmem:[%s0 + $0x44] sm:$0xf]
  %v28 = vld [vmem:[%s0 + $0x48] sm:$0xff]
  %v29 = vld [vmem:[%s0 + $0x50] sm:$0xff]
  %v30 = vld [vmem:[%s0 + $0x58] sm:$0xff]
  %v31 = vld [vmem:[%s0 + $0x60] sm:$0xff]
  %v32 = vld [vmem:[%s0 + $0x68] sm:$0xf]
  %v33 = vld [vmem:[%s0 + $0x6c] sm:$0xff]
  %v34 = vld [vmem:[%s0 + $0x74] sm:$0xff]
  %v35 = vld [vmem:[%s0 + $0x7c] sm:$0xff]
  %v36 = vld [vmem:[%s0 + $0x84] sm:$0xff]
  %v37 = vld [vmem:[%s0 + $0x8c] sm:$0xf]
  %v38 = vld [vmem:[%s0 + $0x90] sm:$0xff]
  %v39 = vld [vmem:[%s0 + $0x98] sm:$0xff]
  %v40 = vld [vmem:[%s0 + $0xa0] sm:$0xff]
  %v41 = vld [vmem:[%s0 + $0xa8] sm:$0xff]
  %v42 = vld [vmem:[%s0 + $0xb0] sm:$0xf]
  %v43 = vld [vmem:[%s0 + $0xb4] sm:$0xff]
  %v44 = vld [vmem:[%s0 + $0xbc] sm:$0xff]
  %v45 = vld [vmem:[%s0 + $0xc4] sm:$0xff]
  %v46 = vld [vmem:[%s0 + $0xcc] sm:$0xff]
  %v47 = vld [vmem:[%s0 + $0xd4] sm:$0xf]
  %v48 = vld [vmem:[%s0 + $0xd8] sm:$0x11]
  %v49 = vld [vmem:[%s0 + $0xe0] sm:$0x11]
  %v50 = vld [vmem:[%s0 + $0xe8] sm:$0x11]
  %v51 = vld [vmem:[%s0 + $0xf0] sm:$0x11]
  %v52 = vld [vmem:[%s0 + $0xf8] sm:$0x1]
  %v53 = vld [vmem:[%s1] sm:$0xf]
  %v54 = vld [vmem:[%s1 + $0x4] sm:$0xf]
  %v55 = vld [vmem:[%s1 + $0x8] sm:$0xf]
  %v56 = vld [vmem:[%s1 + $0xc] sm:$0xf]
  %v57 = vld [vmem:[%s1 + $0x10] sm:$0xf]
  %v58 = vld [vmem:[%s1 + $0x14] sm:$0xf]
  %v59 = vld [vmem:[%s1 + $0x18] sm:$0xf]
  %v60 = vld [vmem:[%s1 + $0x1c] sm:$0xf]
  %v61 = vld [vmem:[%s1 + $0x20] sm:$0xf]
  %v62 = vld [vmem:[%s1 + $0x24] sm:$0xf]
  %v63 = vld [vmem:[%s1 + $0x28] sm:$0xf]
  %v64 = vld [vmem:[%s1 + $0x2c] sm:$0xf]
  %v65 = vld [vmem:[%s1 + $0x30] sm:$0xf]
  %v66 = vld [vmem:[%s1 + $0x34] sm:$0xf]
  %v67 = vld [vmem:[%s1 + $0x38] sm:$0xf]
  %v68 = vld [vmem:[%s1 + $0x3c] sm:$0xf]
  %v69 = vld [vmem:[%s1 + $0x40] sm:$0xf]
  %v70 = vld [vmem:[%s1 + $0x44] sm:$0xf]
  %v71 = vld [vmem:[%s1 + $0x48] sm:$0xf]
  %v72 = vld [vmem:[%s1 + $0x4c] sm:$0xf]
  %v73 = vld [vmem:[%s1 + $0x50] sm:$0xf]
  %v74 = vld [vmem:[%s1 + $0x54] sm:$0xf]
  %v75 = vld [vmem:[%s1 + $0x58] sm:$0xf]
  %v76 = vld [vmem:[%s1 + $0x5c] sm:$0xf]
  %v77 = vld [vmem:[%s1 + $0x60] sm:$0xf]
  %v78 = vld [vmem:[%s1 + $0x64] sm:$0xf]
  %v79 = vld [vmem:[%s1 + $0x68] sm:$0xf]
  %v80 = vld [vmem:[%s1 + $0x6c] sm:$0xf]
  %v81 = vld [vmem:[%s1 + $0x70] sm:$0xf]
  %v82 = vld [vmem:[%s1 + $0x74] sm:$0xf]
  %v83 = vld [vmem:[%s1 + $0x78] sm:$0xf]
  %v84 = vld [vmem:[%s1 + $0x7c] sm:$0xf]
  %v85 = vld [vmem:[%s1 + $0x80] sm:$0xf]
  %v86 = vld [vmem:[%s1 + $0x84] sm:$0xf]
  %v87 = vld [vmem:[%s1 + $0x88] sm:$0xf]
  %v88 = vld [vmem:[%s1 + $0x8c] sm:$0xf]
  %v89 = vld [vmem:[%s1 + $0x90] sm:$0xf]
  %v90 = vld [vmem:[%s1 + $0x94] sm:$0xf]
  %v91 = vld [vmem:[%s1 + $0x98] sm:$0xf]
  %v92 = vld [vmem:[%s1 + $0x9c] sm:$0xf]
  %v93 = vld [vmem:[%s1 + $0xa0] sm:$0xf]
  %v94 = vld [vmem:[%s1 + $0xa4] sm:$0xf]
  %v95 = vld [vmem:[%s1 + $0xa8] sm:$0xf]
  %v96 = vld [vmem:[%s1 + $0xac] sm:$0xf]
  %v97 = vld [vmem:[%s1 + $0xb0] sm:$0xf]
  %v98 = vld [vmem:[%s1 + $0xb4] sm:$0xf]
  %v99 = vld [vmem:[%s1 + $0xb8] sm:$0xf]
  %v100 = vld [vmem:[%s1 + $0xbc] sm:$0xf]
  %v101 = vld [vmem:[%s1 + $0xc0] sm:$0xf]
  %v102 = vld [vmem:[%s1 + $0xc4] sm:$0xf]
  %v103 = vld [vmem:[%s1 + $0xc8] sm:$0xf]
  %v104 = vld [vmem:[%s1 + $0xcc] sm:$0xf]
  %v105 = vld [vmem:[%s1 + $0xd0] sm:$0xf]
  %v106 = vld [vmem:[%s1 + $0xd4] sm:$0xf]
  %v107 = vld [vmem:[%s1 + $0xd8] sm:$0xf]
  %v108 = vld [vmem:[%s1 + $0xdc] sm:$0xf]
  %v109 = vld [vmem:[%s1 + $0xe0] sm:$0xf]
  %v110 = vld [vmem:[%s1 + $0xe4] sm:$0xf]
  %v111 = vld [vmem:[%s1 + $0xe8] sm:$0xf]
  %v112 = vld [vmem:[%s1 + $0xec] sm:$0xf]
  %v113 = vld [vmem:[%s1 + $0xf0] sm:$0xf]
  %v114 = vld [vmem:[%s1 + $0xf4] sm:$0xf]
  %v115 = vld [vmem:[%s1 + $0xf8] sm:$0xf]
  %v116 = vld [vmem:[%s1 + $0xfc] sm:$0xf]
  %v117 = vld [vmem:[%s1 + $0x100] sm:$0xf]
  %v118 = vld [vmem:[%s1 + $0x104] sm:$0xf]
  %v119 = vld [vmem:[%s1 + $0x108] sm:$0xf]
  %v120 = vld [vmem:[%s1 + $0x10c] sm:$0xf]
  %v121 = vld [vmem:[%s1 + $0x110] sm:$0xf]
  %v122 = vld [vmem:[%s1 + $0x114] sm:$0xf]
  %v123 = vld [vmem:[%s1 + $0x118] sm:$0xf]
  %v124 = vld [vmem:[%s1 + $0x11c] sm:$0xf]
  %v125 = vld [vmem:[%s1 + $0x120] sm:$0xf]
  %v126 = vld [vmem:[%s1 + $0x124] sm:$0xf]
  %v127 = vld [vmem:[%s1 + $0x128] sm:$0xf]
  %v128 = vld [vmem:[%s1 + $0x12c] sm:$0xf]
  %v129 = vld [vmem:[%s1 + $0x130] sm:$0xf]
  %v130 = vld [vmem:[%s1 + $0x134] sm:$0xf]
  %v131 = vld [vmem:[%s1 + $0x138] sm:$0xf]
  %v132 = vld [vmem:[%s1 + $0x13c] sm:$0xf]
  %v133 = vld [vmem:[%s1 + $0x140] sm:$0xf]
  %v134 = vld [vmem:[%s1 + $0x144] sm:$0xf]
  %v135 = vld [vmem:[%s1 + $0x148] sm:$0xf]
  %v136 = vld [vmem:[%s1 + $0x14c] sm:$0xf]
  %v137 = vld [vmem:[%s1 + $0x150] sm:$0xf]
  %v138 = vld [vmem:[%s1 + $0x154] sm:$0xf]
  %v139 = vld [vmem:[%s1 + $0x158] sm:$0xf]
  %v140 = vld [vmem:[%s1 + $0x15c] sm:$0xf]
  %v141 = vld [vmem:[%s1 + $0x160] sm:$0xf]
  %v142 = vld [vmem:[%s1 + $0x164] sm:$0xf]
  %v143 = vld [vmem:[%s1 + $0x168] sm:$0xf]
  %v144 = vld [vmem:[%s1 + $0x16c] sm:$0xf]
  %v145 = vld [vmem:[%s1 + $0x170] sm:$0xf]
  %v146 = vld [vmem:[%s1 + $0x174] sm:$0xf]
  %v147 = vld [vmem:[%s1 + $0x178] sm:$0xf]
  %v148 = vld [vmem:[%s1 + $0x17c] sm:$0xf]
  %v149 = vld [vmem:[%s1 + $0x180] sm:$0xf]
  %v150 = vld [vmem:[%s1 + $0x184] sm:$0xf]
  %v151 = vld [vmem:[%s1 + $0x188] sm:$0xf]
  %v152 = vld [vmem:[%s1 + $0x18c] sm:$0xf]
  %v153 = vld [vmem:[%s1 + $0x190] sm:$0xf]
  %v154 = vld [vmem:[%s1 + $0x194] sm:$0xf]
  %v155 = vld [vmem:[%s1 + $0x198] sm:$0xf]
  %v156 = vld [vmem:[%s1 + $0x19c] sm:$0xf]
  %v157 = vld [vmem:[%s1 + $0x1a0] sm:$0xf]
  %v158 = vld [vmem:[%s1 + $0x1a4] sm:$0xf]
  %v159 = vld [vmem:[%s1 + $0x1a8] sm:$0xf]
  %v160 = vld [vmem:[%s1 + $0x1ac] sm:$0xf]
  %v161 = vld [vmem:[%s1 + $0x1b0] sm:$0xf]
  %v162 = vld [vmem:[%s1 + $0x1b4] sm:$0xf]
  %v163 = vld [vmem:[%s1 + $0x1b8] sm:$0xf]
  %v164 = vld [vmem:[%s1 + $0x1bc] sm:$0xf]
  %v165 = vld [vmem:[%s1 + $0x1c0] sm:$0xf]
  %v166 = vld [vmem:[%s1 + $0x1c4] sm:$0xf]
  %v167 = vld [vmem:[%s1 + $0x1c8] sm:$0xf]
  %v168 = vld [vmem:[%s1 + $0x1cc] sm:$0xf]
  %v169 = vld [vmem:[%s1 + $0x1d0] sm:$0xf]
  %v170 = vld [vmem:[%s1 + $0x1d4] sm:$0xf]
  %v171 = vld [vmem:[%s1 + $0x1d8] sm:$0xf]
  %v172 = vld [vmem:[%s1 + $0x1dc] sm:$0xf]
  %v173 = vld [vmem:[%s1 + $0x1e0] sm:$0xf]
  %v174 = vld [vmem:[%s1 + $0x1e4] sm:$0xf]
  %v175 = vld [vmem:[%s1 + $0x1e8] sm:$0xf]
  %v176 = vld [vmem:[%s1 + $0x1ec] sm:$0xf]
  %v177 = vld [vmem:[%s1 + $0x1f0] sm:$0xf]
  %v178 = vld [vmem:[%s1 + $0x1f4] sm:$0xf]
  %v179 = vld [vmem:[%s1 + $0x1f8] sm:$0xf]
  %v180 = vld [vmem:[%s1 + $0x1fc] sm:$0xf]
  %v181 = vld [vmem:[%s1 + $0x200] sm:$0xf]
  %v182 = vld [vmem:[%s1 + $0x204] sm:$0xf]
  %v183 = vld [vmem:[%s1 + $0x208] sm:$0xf]
  %v184 = vld [vmem:[%s1 + $0x20c] sm:$0xf]
  %v185 = vld [vmem:[%s1 + $0x210] sm:$0xf]
  %v186 = vld [vmem:[%s1 + $0x214] sm:$0xf]
  %v187 = vld [vmem:[%s1 + $0x218] sm:$0xf]
  %v188 = vld [vmem:[%s1 + $0x21c] sm:$0xf]
  %v189 = vld [vmem:[%s1 + $0x220] sm:$0xf]
  %v190 = vld [vmem:[%s1 + $0x224] sm:$0xf]
  %v191 = vld [vmem:[%s1 + $0x228] sm:$0xf]
  %v192 = vld [vmem:[%s1 + $0x22c] sm:$0xf]
  %v193 = vld [vmem:[%s1 + $0x230] sm:$0xf]
  %v194 = vld [vmem:[%s1 + $0x234] sm:$0xf]
  %v195 = vld [vmem:[%s1 + $0x238] sm:$0xf]
  %v196 = vld [vmem:[%s1 + $0x23c] sm:$0xf]
  %v232 = vunpack.c.l.b16 %v18
  %v233 = vunpack.c.h.b16 %v18
  %v234 = vunpack.c.l.b16 %v19
  %v235 = vunpack.c.h.b16 %v19
  %v236 = vunpack.c.l.b16 %v20
  %v237 = vunpack.c.h.b16 %v20
  %v238 = vunpack.c.l.b16 %v21
  %v239 = vunpack.c.h.b16 %v21
  %v240 = vunpack.c.l.b16 %v22
  %v241 = vunpack.c.l.b16 %v23
  %v242 = vunpack.c.h.b16 %v23
  %v243 = vunpack.c.l.b16 %v24
  %v244 = vunpack.c.h.b16 %v24
  %v245 = vunpack.c.l.b16 %v25
  %v246 = vunpack.c.h.b16 %v25
  %v247 = vunpack.c.l.b16 %v26
  %v248 = vunpack.c.h.b16 %v26
  %v249 = vunpack.c.l.b16 %v27
  %v250 = vunpack.c.l.b16 %v28
  %v251 = vunpack.c.h.b16 %v28
  %v252 = vunpack.c.l.b16 %v29
  %v253 = vunpack.c.h.b16 %v29
  %v254 = vunpack.c.l.b16 %v30
  %v255 = vunpack.c.h.b16 %v30
  %v256 = vunpack.c.l.b16 %v31
  %v257 = vunpack.c.h.b16 %v31
  %v258 = vunpack.c.l.b16 %v32
  %v259 = vunpack.c.l.b16 %v33
  %v260 = vunpack.c.h.b16 %v33
  %v261 = vunpack.c.l.b16 %v34
  %v262 = vunpack.c.h.b16 %v34
  %v263 = vunpack.c.l.b16 %v35
  %v264 = vunpack.c.h.b16 %v35
  %v265 = vunpack.c.l.b16 %v36
  %v266 = vunpack.c.h.b16 %v36
  %v267 = vunpack.c.l.b16 %v37
  %v268 = vunpack.c.l.b16 %v38
  %v269 = vunpack.c.h.b16 %v38
  %v270 = vunpack.c.l.b16 %v39
  %v271 = vunpack.c.h.b16 %v39
  %v272 = vunpack.c.l.b16 %v40
  %v273 = vunpack.c.h.b16 %v40
  %v274 = vunpack.c.l.b16 %v41
  %v275 = vunpack.c.h.b16 %v41
  %v276 = vunpack.c.l.b16 %v42
  %v277 = vunpack.c.l.b16 %v43
  %v278 = vunpack.c.h.b16 %v43
  %v279 = vunpack.c.l.b16 %v44
  %v280 = vunpack.c.h.b16 %v44
  %v281 = vunpack.c.l.b16 %v45
  %v282 = vunpack.c.h.b16 %v45
  %v283 = vunpack.c.l.b16 %v46
  %v284 = vunpack.c.h.b16 %v46
  %v285 = vunpack.c.l.b16 %v47
  %v286 = vunpack.c.l.b16 %v48
  %v287 = vunpack.c.h.b16 %v48
  %v288 = vunpack.c.l.b16 %v49
  %v289 = vunpack.c.h.b16 %v49
  %v290 = vunpack.c.l.b16 %v50
  %v291 = vunpack.c.h.b16 %v50
  %v292 = vunpack.c.l.b16 %v51
  %v293 = vunpack.c.h.b16 %v51
  %v294 = vunpack.c.l.b16 %v52
  %v295 = vpack.c.b16 %v241, %v232
  %v296 = vpack.c.b16 %v242, %v233
  %v297 = vpack.c.b16 %v243, %v234
  %v298 = vpack.c.b16 %v244, %v235
  %v299 = vpack.c.b16 %v245, %v236
  %v300 = vpack.c.b16 %v246, %v237
  %v301 = vpack.c.b16 %v247, %v238
  %v302 = vpack.c.b16 %v248, %v239
  %v303 = vpack.c.b16 %v249, %v240
  %v304 = vpack.c.b16 %v259, %v250
  %v305 = vpack.c.b16 %v260, %v251
  %v306 = vpack.c.b16 %v261, %v252
  %v307 = vpack.c.b16 %v262, %v253
  %v308 = vpack.c.b16 %v263, %v254
  %v309 = vpack.c.b16 %v264, %v255
  %v310 = vpack.c.b16 %v265, %v256
  %v311 = vpack.c.b16 %v266, %v257
  %v312 = vpack.c.b16 %v267, %v258
  %v313 = vpack.c.b16 %v277, %v268
  %v314 = vpack.c.b16 %v278, %v269
  %v315 = vpack.c.b16 %v279, %v270
  %v316 = vpack.c.b16 %v280, %v271
  %v317 = vpack.c.b16 %v281, %v272
  %v318 = vpack.c.b16 %v282, %v273
  %v319 = vpack.c.b16 %v283, %v274
  %v320 = vpack.c.b16 %v284, %v275
  %v321 = vpack.c.b16 %v285, %v276
  %v322 = vpack.c.b16 %v286, %v286
  %v323 = vpack.c.b16 %v287, %v287
  %v324 = vpack.c.b16 %v288, %v288
  %v325 = vpack.c.b16 %v289, %v289
  %v326 = vpack.c.b16 %v290, %v290
  %v327 = vpack.c.b16 %v291, %v291
  %v328 = vpack.c.b16 %v292, %v292
  %v329 = vpack.c.b16 %v293, %v293
  %v330 = vpack.c.b16 %v294, %v294
  %v511 = vunpack.c.l.b16 %v53
  %v512 = vunpack.c.l.b16 %v54
  %v513 = vunpack.c.l.b16 %v55
  %v514 = vunpack.c.l.b16 %v56
  %v515 = vunpack.c.l.b16 %v57
  %v516 = vunpack.c.l.b16 %v58
  %v517 = vunpack.c.l.b16 %v59
  %v518 = vunpack.c.l.b16 %v60
  %v519 = vunpack.c.l.b16 %v61
  %v520 = vunpack.c.l.b16 %v62
  %v521 = vunpack.c.l.b16 %v63
  %v522 = vunpack.c.l.b16 %v64
  %v523 = vunpack.c.l.b16 %v65
  %v524 = vunpack.c.l.b16 %v66
  %v525 = vunpack.c.l.b16 %v67
  %v526 = vunpack.c.l.b16 %v68
  %v527 = vunpack.c.l.b16 %v69
  %v528 = vunpack.c.l.b16 %v70
  %v529 = vunpack.c.l.b16 %v71
  %v530 = vunpack.c.l.b16 %v72
  %v531 = vunpack.c.l.b16 %v73
  %v532 = vunpack.c.l.b16 %v74
  %v533 = vunpack.c.l.b16 %v75
  %v534 = vunpack.c.l.b16 %v76
  %v535 = vunpack.c.l.b16 %v77
  %v536 = vunpack.c.l.b16 %v78
  %v537 = vunpack.c.l.b16 %v79
  %v538 = vunpack.c.l.b16 %v80
  %v539 = vunpack.c.l.b16 %v81
  %v540 = vunpack.c.l.b16 %v82
  %v541 = vunpack.c.l.b16 %v83
  %v542 = vunpack.c.l.b16 %v84
  %v543 = vunpack.c.l.b16 %v85
  %v544 = vunpack.c.l.b16 %v86
  %v545 = vunpack.c.l.b16 %v87
  %v546 = vunpack.c.l.b16 %v88
  %v547 = vunpack.c.l.b16 %v89
  %v548 = vunpack.c.l.b16 %v90
  %v549 = vunpack.c.l.b16 %v91
  %v550 = vunpack.c.l.b16 %v92
  %v551 = vunpack.c.l.b16 %v93
  %v552 = vunpack.c.l.b16 %v94
  %v553 = vunpack.c.l.b16 %v95
  %v554 = vunpack.c.l.b16 %v96
  %v555 = vunpack.c.l.b16 %v97
  %v556 = vunpack.c.l.b16 %v98
  %v557 = vunpack.c.l.b16 %v99
  %v558 = vunpack.c.l.b16 %v100
  %v559 = vunpack.c.l.b16 %v101
  %v560 = vunpack.c.l.b16 %v102
  %v561 = vunpack.c.l.b16 %v103
  %v562 = vunpack.c.l.b16 %v104
  %v563 = vunpack.c.l.b16 %v105
  %v564 = vunpack.c.l.b16 %v106
  %v565 = vunpack.c.l.b16 %v107
  %v566 = vunpack.c.l.b16 %v108
  %v567 = vunpack.c.l.b16 %v109
  %v568 = vunpack.c.l.b16 %v110
  %v569 = vunpack.c.l.b16 %v111
  %v570 = vunpack.c.l.b16 %v112
  %v571 = vunpack.c.l.b16 %v113
  %v572 = vunpack.c.l.b16 %v114
  %v573 = vunpack.c.l.b16 %v115
  %v574 = vunpack.c.l.b16 %v116
  %v575 = vunpack.c.l.b16 %v117
  %v576 = vunpack.c.l.b16 %v118
  %v577 = vunpack.c.l.b16 %v119
  %v578 = vunpack.c.l.b16 %v120
  %v579 = vunpack.c.l.b16 %v121
  %v580 = vunpack.c.l.b16 %v122
  %v581 = vunpack.c.l.b16 %v123
  %v582 = vunpack.c.l.b16 %v124
  %v583 = vunpack.c.l.b16 %v125
  %v584 = vunpack.c.l.b16 %v126
  %v585 = vunpack.c.l.b16 %v127
  %v586 = vunpack.c.l.b16 %v128
  %v587 = vunpack.c.l.b16 %v129
  %v588 = vunpack.c.l.b16 %v130
  %v589 = vunpack.c.l.b16 %v131
  %v590 = vunpack.c.l.b16 %v132
  %v591 = vunpack.c.l.b16 %v133
  %v592 = vunpack.c.l.b16 %v134
  %v593 = vunpack.c.l.b16 %v135
  %v594 = vunpack.c.l.b16 %v136
  %v595 = vunpack.c.l.b16 %v137
  %v596 = vunpack.c.l.b16 %v138
  %v597 = vunpack.c.l.b16 %v139
  %v598 = vunpack.c.l.b16 %v140
  %v599 = vunpack.c.l.b16 %v141
  %v600 = vunpack.c.l.b16 %v142
  %v601 = vunpack.c.l.b16 %v143
  %v602 = vunpack.c.l.b16 %v144
  %v603 = vunpack.c.l.b16 %v145
  %v604 = vunpack.c.l.b16 %v146
  %v605 = vunpack.c.l.b16 %v147
  %v606 = vunpack.c.l.b16 %v148
  %v607 = vunpack.c.l.b16 %v149
  %v608 = vunpack.c.l.b16 %v150
  %v609 = vunpack.c.l.b16 %v151
  %v610 = vunpack.c.l.b16 %v152
  %v611 = vunpack.c.l.b16 %v153
  %v612 = vunpack.c.l.b16 %v154
  %v613 = vunpack.c.l.b16 %v155
  %v614 = vunpack.c.l.b16 %v156
  %v615 = vunpack.c.l.b16 %v157
  %v616 = vunpack.c.l.b16 %v158
  %v617 = vunpack.c.l.b16 %v159
  %v618 = vunpack.c.l.b16 %v160
  %v619 = vunpack.c.l.b16 %v161
  %v620 = vunpack.c.l.b16 %v162
  %v621 = vunpack.c.l.b16 %v163
  %v622 = vunpack.c.l.b16 %v164
  %v623 = vunpack.c.l.b16 %v165
  %v624 = vunpack.c.l.b16 %v166
  %v625 = vunpack.c.l.b16 %v167
  %v626 = vunpack.c.l.b16 %v168
  %v627 = vunpack.c.l.b16 %v169
  %v628 = vunpack.c.l.b16 %v170
  %v629 = vunpack.c.l.b16 %v171
  %v630 = vunpack.c.l.b16 %v172
  %v631 = vunpack.c.l.b16 %v173
  %v632 = vunpack.c.l.b16 %v174
  %v633 = vunpack.c.l.b16 %v175
  %v634 = vunpack.c.l.b16 %v176
  %v635 = vunpack.c.l.b16 %v177
  %v636 = vunpack.c.l.b16 %v178
  %v637 = vunpack.c.l.b16 %v179
  %v638 = vunpack.c.l.b16 %v180
  %v639 = vunpack.c.l.b16 %v181
  %v640 = vunpack.c.l.b16 %v182
  %v641 = vunpack.c.l.b16 %v183
  %v642 = vunpack.c.l.b16 %v184
  %v643 = vunpack.c.l.b16 %v185
  %v644 = vunpack.c.l.b16 %v186
  %v645 = vunpack.c.l.b16 %v187
  %v646 = vunpack.c.l.b16 %v188
  %v647 = vunpack.c.l.b16 %v189
  %v648 = vunpack.c.l.b16 %v190
  %v649 = vunpack.c.l.b16 %v191
  %v650 = vunpack.c.l.b16 %v192
  %v651 = vunpack.c.l.b16 %v193
  %v652 = vunpack.c.l.b16 %v194
  %v653 = vunpack.c.l.b16 %v195
  %v654 = vunpack.c.l.b16 %v196
  %v655 = vpack.c.b16 %v512, %v511
  %v656 = vpack.c.b16 %v514, %v513
  %v657 = vpack.c.b16 %v516, %v515
  %v658 = vpack.c.b16 %v518, %v517
  %v659 = vpack.c.b16 %v520, %v519
  %v660 = vpack.c.b16 %v522, %v521
  %v661 = vpack.c.b16 %v524, %v523
  %v662 = vpack.c.b16 %v526, %v525
  %v663 = vpack.c.b16 %v528, %v527
  %v664 = vpack.c.b16 %v530, %v529
  %v665 = vpack.c.b16 %v532, %v531
  %v666 = vpack.c.b16 %v534, %v533
  %v667 = vpack.c.b16 %v536, %v535
  %v668 = vpack.c.b16 %v538, %v537
  %v669 = vpack.c.b16 %v540, %v539
  %v670 = vpack.c.b16 %v542, %v541
  %v671 = vpack.c.b16 %v544, %v543
  %v672 = vpack.c.b16 %v546, %v545
  %v673 = vpack.c.b16 %v548, %v547
  %v674 = vpack.c.b16 %v550, %v549
  %v675 = vpack.c.b16 %v552, %v551
  %v676 = vpack.c.b16 %v554, %v553
  %v677 = vpack.c.b16 %v556, %v555
  %v678 = vpack.c.b16 %v558, %v557
  %v679 = vpack.c.b16 %v560, %v559
  %v680 = vpack.c.b16 %v562, %v561
  %v681 = vpack.c.b16 %v564, %v563
  %v682 = vpack.c.b16 %v566, %v565
  %v683 = vpack.c.b16 %v568, %v567
  %v684 = vpack.c.b16 %v570, %v569
  %v685 = vpack.c.b16 %v572, %v571
  %v686 = vpack.c.b16 %v574, %v573
  %v687 = vpack.c.b16 %v576, %v575
  %v688 = vpack.c.b16 %v578, %v577
  %v689 = vpack.c.b16 %v580, %v579
  %v690 = vpack.c.b16 %v582, %v581
  %v691 = vpack.c.b16 %v584, %v583
  %v692 = vpack.c.b16 %v586, %v585
  %v693 = vpack.c.b16 %v588, %v587
  %v694 = vpack.c.b16 %v590, %v589
  %v695 = vpack.c.b16 %v592, %v591
  %v696 = vpack.c.b16 %v594, %v593
  %v697 = vpack.c.b16 %v596, %v595
  %v698 = vpack.c.b16 %v598, %v597
  %v699 = vpack.c.b16 %v600, %v599
  %v700 = vpack.c.b16 %v602, %v601
  %v701 = vpack.c.b16 %v604, %v603
  %v702 = vpack.c.b16 %v606, %v605
  %v703 = vpack.c.b16 %v608, %v607
  %v704 = vpack.c.b16 %v610, %v609
  %v705 = vpack.c.b16 %v612, %v611
  %v706 = vpack.c.b16 %v614, %v613
  %v707 = vpack.c.b16 %v616, %v615
  %v708 = vpack.c.b16 %v618, %v617
  %v709 = vpack.c.b16 %v620, %v619
  %v710 = vpack.c.b16 %v622, %v621
  %v711 = vpack.c.b16 %v624, %v623
  %v712 = vpack.c.b16 %v626, %v625
  %v713 = vpack.c.b16 %v628, %v627
  %v714 = vpack.c.b16 %v630, %v629
  %v715 = vpack.c.b16 %v632, %v631
  %v716 = vpack.c.b16 %v634, %v633
  %v717 = vpack.c.b16 %v636, %v635
  %v718 = vpack.c.b16 %v638, %v637
  %v719 = vpack.c.b16 %v640, %v639
  %v720 = vpack.c.b16 %v642, %v641
  %v721 = vpack.c.b16 %v644, %v643
  %v722 = vpack.c.b16 %v646, %v645
  %v723 = vpack.c.b16 %v648, %v647
  %v724 = vpack.c.b16 %v650, %v649
  %v725 = vpack.c.b16 %v652, %v651
  %v726 = vpack.c.b16 %v654, %v653
  %799 = vmatprep.subr.bf16.mxu0 0
  %800 = vmatpush1.bf16.msra.mxu0 %v655
  %801 = vmatprep.subr.bf16.mxu0 0
  %802 = vmatpush1.bf16.msra.mxu0 %v656
  %803 = vmatprep.subr.bf16.mxu0 0
  %804 = vmatpush1.bf16.msra.mxu0 %v657
  %805 = vmatprep.subr.bf16.mxu0 0
  %806 = vmatpush1.bf16.msra.mxu0 %v658
  %807 = vmatprep.subr.bf16.mxu0 0
  %808 = vmatpush1.bf16.msra.mxu0 %v659
  %809 = vmatprep.subr.bf16.mxu0 0
  %810 = vmatpush1.bf16.msra.mxu0 %v660
  %811 = vmatprep.subr.bf16.mxu0 0
  %812 = vmatpush1.bf16.msra.mxu0 %v661
  %813 = vmatprep.subr.bf16.mxu0 0
  %814 = vmatpush1.bf16.msra.mxu0 %v662
  %815 = vmatprep.subr.bf16.mxu0 0
  %816 = vmatpush1.bf16.msra.mxu0 %v663
  %817 = vmatprep.subr.bf16.mxu0 0
  %818 = vmatpush1.bf16.msra.mxu0 %v664
  %819 = vmatprep.subr.bf16.mxu0 0
  %820 = vmatpush1.bf16.msra.mxu0 %v665
  %821 = vmatprep.subr.bf16.mxu0 0
  %822 = vmatpush1.bf16.msra.mxu0 %v666
  %823 = vmatprep.subr.bf16.mxu0 0
  %824 = vmatpush1.bf16.msra.mxu0 %v667
  %825 = vmatprep.subr.bf16.mxu0 0
  %826 = vmatpush1.bf16.msra.mxu0 %v668
  %827 = vmatprep.subr.bf16.mxu0 0
  %828 = vmatpush1.bf16.msra.mxu0 %v669
  %829 = vmatprep.subr.bf16.mxu0 0
  %830 = vmatpush1.bf16.msra.mxu0 %v670
  %831 = vmatprep.mubr.bf16.mxu0 %v296
  %832 = vmatmul.mubr.bf16.gmra.mrb[0].mxu0 %v295
  %v833 = vpop.f32.mrb[0].mxu0
  %v834 = vadd.f32 0.0, %v833
  %v835 = vpop.f32.mrb[0].mxu0
  %v836 = vpop.f32.mrb[0].mxu0
  %v837 = vadd.f32 0.0, %v836
  %v838 = vpop.f32.mrb[0].mxu0
  %839 = vmatprep.mubr.bf16.mxu0 %v305
  %840 = vmatmul.mubr.bf16.gmra.mrb[0].mxu0 %v304
  %v841 = vpop.f32.mrb[0].mxu0
  %v842 = vadd.f32 0.0, %v841
  %v843 = vpop.f32.mrb[0].mxu0
  %v844 = vpop.f32.mrb[0].mxu0
  %v845 = vadd.f32 0.0, %v844
  %v846 = vpop.f32.mrb[0].mxu0
  %847 = vmatprep.mubr.bf16.mxu0 %v314
  %848 = vmatmul.mubr.bf16.gmra.mrb[0].mxu0 %v313
  %v849 = vpop.f32.mrb[0].mxu0
  %v850 = vadd.f32 0.0, %v849
  %v851 = vpop.f32.mrb[0].mxu0
  %v852 = vpop.f32.mrb[0].mxu0
  %v853 = vadd.f32 0.0, %v852
  %v854 = vpop.f32.mrb[0].mxu0
  %855 = vmatprep.mubr.bf16.mxu0 %v323
  %856 = vmatmul.mubr.bf16.gmra.mrb[0].mxu0 %v322
  %v857 = vpop.f32.mrb[0].mxu0
  %v858 = vadd.f32 0.0, %v857
  %v859 = vpop.f32.mrb[0].mxu0
  %v860 = vpop.f32.mrb[0].mxu0
  %v861 = vpop.f32.mrb[0].mxu0
  %862 = vdwg.mxu0
  %863 = vmatprep.subr.bf16.mxu0 0
  %864 = vmatpush1.bf16.msra.mxu0 %v671
  %865 = vmatprep.subr.bf16.mxu0 0
  %866 = vmatpush1.bf16.msra.mxu0 %v672
  %867 = vmatprep.subr.bf16.mxu0 0
  %868 = vmatpush1.bf16.msra.mxu0 %v673
  %869 = vmatprep.subr.bf16.mxu0 0
  %870 = vmatpush1.bf16.msra.mxu0 %v674
  %871 = vmatprep.subr.bf16.mxu0 0
  %872 = vmatpush1.bf16.msra.mxu0 %v675
  %873 = vmatprep.subr.bf16.mxu0 0
  %874 = vmatpush1.bf16.msra.mxu0 %v676
  %875 = vmatprep.subr.bf16.mxu0 0
  %876 = vmatpush1.bf16.msra.mxu0 %v677
  %877 = vmatprep.subr.bf16.mxu0 0
  %878 = vmatpush1.bf16.msra.mxu0 %v678
  %879 = vmatprep.subr.bf16.mxu0 0
  %880 = vmatpush1.bf16.msra.mxu0 %v679
  %881 = vmatprep.subr.bf16.mxu0 0
  %882 = vmatpush1.bf16.msra.mxu0 %v680
  %883 = vmatprep.subr.bf16.mxu0 0
  %884 = vmatpush1.bf16.msra.mxu0 %v681
  %885 = vmatprep.subr.bf16.mxu0 0
  %886 = vmatpush1.bf16.msra.mxu0 %v682
  %887 = vmatprep.subr.bf16.mxu0 0
  %888 = vmatpush1.bf16.msra.mxu0 %v683
  %889 = vmatprep.subr.bf16.mxu0 0
  %890 = vmatpush1.bf16.msra.mxu0 %v684
  %891 = vmatprep.subr.bf16.mxu0 0
  %892 = vmatpush1.bf16.msra.mxu0 %v685
  %893 = vmatprep.subr.bf16.mxu0 0
  %894 = vmatpush1.bf16.msra.mxu0 %v686
  %895 = vmatprep.mubr.bf16.mxu0 %v298
  %896 = vmatmul.mubr.bf16.gmra.mrb[0].mxu0 %v297
  %v897 = vpop.f32.mrb[0].mxu0
  %v898 = vadd.f32 %v834, %v897
  %v899 = vpop.f32.mrb[0].mxu0
  %v900 = vpop.f32.mrb[0].mxu0
  %v901 = vadd.f32 %v837, %v900
  %v902 = vpop.f32.mrb[0].mxu0
  %903 = vmatprep.mubr.bf16.mxu0 %v307
  %904 = vmatmul.mubr.bf16.gmra.mrb[0].mxu0 %v306
  %v905 = vpop.f32.mrb[0].mxu0
  %v906 = vadd.f32 %v842, %v905
  %v907 = vpop.f32.mrb[0].mxu0
  %v908 = vpop.f32.mrb[0].mxu0
  %v909 = vadd.f32 %v845, %v908
  %v910 = vpop.f32.mrb[0].mxu0
  %911 = vmatprep.mubr.bf16.mxu0 %v316
  %912 = vmatmul.mubr.bf16.gmra.mrb[0].mxu0 %v315
  %v913 = vpop.f32.mrb[0].mxu0
  %v914 = vadd.f32 %v850, %v913
  %v915 = vpop.f32.mrb[0].mxu0
  %v916 = vpop.f32.mrb[0].mxu0
  %v917 = vadd.f32 %v853, %v916
  %v918 = vpop.f32.mrb[0].mxu0
  %919 = vmatprep.mubr.bf16.mxu0 %v325
  %920 = vmatmul.mubr.bf16.gmra.mrb[0].mxu0 %v324
  %v921 = vpop.f32.mrb[0].mxu0
  %v922 = vadd.f32 %v858, %v921
  %v923 = vpop.f32.mrb[0].mxu0
  %v924 = vpop.f32.mrb[0].mxu0
  %v925 = vpop.f32.mrb[0].mxu0
  %926 = vdwg.mxu0
  %927 = vmatprep.subr.bf16.mxu0 0
  %928 = vmatpush1.bf16.msra.mxu0 %v687
  %929 = vmatprep.subr.bf16.mxu0 0
  %930 = vmatpush1.bf16.msra.mxu0 %v688
  %931 = vmatprep.subr.bf16.mxu0 0
  %932 = vmatpush1.bf16.msra.mxu0 %v689
  %933 = vmatprep.subr.bf16.mxu0 0
  %934 = vmatpush1.bf16.msra.mxu0 %v690
  %935 = vmatprep.subr.bf16.mxu0 0
  %936 = vmatpush1.bf16.msra.mxu0 %v691
  %937 = vmatprep.subr.bf16.mxu0 0
  %938 = vmatpush1.bf16.msra.mxu0 %v692
  %939 = vmatprep.subr.bf16.mxu0 0
  %940 = vmatpush1.bf16.msra.mxu0 %v693
  %941 = vmatprep.subr.bf16.mxu0 0
  %942 = vmatpush1.bf16.msra.mxu0 %v694
  %943 = vmatprep.subr.bf16.mxu0 0
  %944 = vmatpush1.bf16.msra.mxu0 %v695
  %945 = vmatprep.subr.bf16.mxu0 0
  %946 = vmatpush1.bf16.msra.mxu0 %v696
  %947 = vmatprep.subr.bf16.mxu0 0
  %948 = vmatpush1.bf16.msra.mxu0 %v697
  %949 = vmatprep.subr.bf16.mxu0 0
  %950 = vmatpush1.bf16.msra.mxu0 %v698
  %951 = vmatprep.subr.bf16.mxu0 0
  %952 = vmatpush1.bf16.msra.mxu0 %v699
  %953 = vmatprep.subr.bf16.mxu0 0
  %954 = vmatpush1.bf16.msra.mxu0 %v700
  %955 = vmatprep.subr.bf16.mxu0 0
  %956 = vmatpush1.bf16.msra.mxu0 %v701
  %957 = vmatprep.subr.bf16.mxu0 0
  %958 = vmatpush1.bf16.msra.mxu0 %v702
  %959 = vmatprep.mubr.bf16.mxu0 %v300
  %960 = vmatmul.mubr.bf16.gmra.mrb[0].mxu0 %v299
  %v961 = vpop.f32.mrb[0].mxu0
  %v962 = vadd.f32 %v898, %v961
  %v963 = vpop.f32.mrb[0].mxu0
  %v964 = vpop.f32.mrb[0].mxu0
  %v965 = vadd.f32 %v901, %v964
  %v966 = vpop.f32.mrb[0].mxu0
  %967 = vmatprep.mubr.bf16.mxu0 %v309
  %968 = vmatmul.mubr.bf16.gmra.mrb[0].mxu0 %v308
  %v969 = vpop.f32.mrb[0].mxu0
  %v970 = vadd.f32 %v906, %v969
  %v971 = vpop.f32.mrb[0].mxu0
  %v972 = vpop.f32.mrb[0].mxu0
  %v973 = vadd.f32 %v909, %v972
  %v974 = vpop.f32.mrb[0].mxu0
  %975 = vmatprep.mubr.bf16.mxu0 %v318
  %976 = vmatmul.mubr.bf16.gmra.mrb[0].mxu0 %v317
  %v977 = vpop.f32.mrb[0].mxu0
  %v978 = vadd.f32 %v914, %v977
  %v979 = vpop.f32.mrb[0].mxu0
  %v980 = vpop.f32.mrb[0].mxu0
  %v981 = vadd.f32 %v917, %v980
  %v982 = vpop.f32.mrb[0].mxu0
  %983 = vmatprep.mubr.bf16.mxu0 %v327
  %984 = vmatmul.mubr.bf16.gmra.mrb[0].mxu0 %v326
  %v985 = vpop.f32.mrb[0].mxu0
  %v986 = vadd.f32 %v922, %v985
  %v987 = vpop.f32.mrb[0].mxu0
  %v988 = vpop.f32.mrb[0].mxu0
  %v989 = vpop.f32.mrb[0].mxu0
  %990 = vdwg.mxu0
  %991 = vmatprep.subr.bf16.mxu0 0
  %992 = vmatpush1.bf16.msra.mxu0 %v703
  %993 = vmatprep.subr.bf16.mxu0 0
  %994 = vmatpush1.bf16.msra.mxu0 %v704
  %995 = vmatprep.subr.bf16.mxu0 0
  %996 = vmatpush1.bf16.msra.mxu0 %v705
  %997 = vmatprep.subr.bf16.mxu0 0
  %998 = vmatpush1.bf16.msra.mxu0 %v706
  %999 = vmatprep.subr.bf16.mxu0 0
  %1000 = vmatpush1.bf16.msra.mxu0 %v707
  %1001 = vmatprep.subr.bf16.mxu0 0
  %1002 = vmatpush1.bf16.msra.mxu0 %v708
  %1003 = vmatprep.subr.bf16.mxu0 0
  %1004 = vmatpush1.bf16.msra.mxu0 %v709
  %1005 = vmatprep.subr.bf16.mxu0 0
  %1006 = vmatpush1.bf16.msra.mxu0 %v710
  %1007 = vmatprep.subr.bf16.mxu0 0
  %1008 = vmatpush1.bf16.msra.mxu0 %v711
  %1009 = vmatprep.subr.bf16.mxu0 0
  %1010 = vmatpush1.bf16.msra.mxu0 %v712
  %1011 = vmatprep.subr.bf16.mxu0 0
  %1012 = vmatpush1.bf16.msra.mxu0 %v713
  %1013 = vmatprep.subr.bf16.mxu0 0
  %1014 = vmatpush1.bf16.msra.mxu0 %v714
  %1015 = vmatprep.subr.bf16.mxu0 0
  %1016 = vmatpush1.bf16.msra.mxu0 %v715
  %1017 = vmatprep.subr.bf16.mxu0 0
  %1018 = vmatpush1.bf16.msra.mxu0 %v716
  %1019 = vmatprep.subr.bf16.mxu0 0
  %1020 = vmatpush1.bf16.msra.mxu0 %v717
  %1021 = vmatprep.subr.bf16.mxu0 0
  %1022 = vmatpush1.bf16.msra.mxu0 %v718
  %1023 = vmatprep.mubr.bf16.mxu0 %v302
  %1024 = vmatmul.mubr.bf16.gmra.mrb[0].mxu0 %v301
  %v1025 = vpop.f32.mrb[0].mxu0
  %v1026 = vadd.f32 %v962, %v1025
  %v1027 = vpop.f32.mrb[0].mxu0
  %v1028 = vpop.f32.mrb[0].mxu0
  %v1029 = vadd.f32 %v965, %v1028
  %v1030 = vpop.f32.mrb[0].mxu0
  %1031 = vmatprep.mubr.bf16.mxu0 %v311
  %1032 = vmatmul.mubr.bf16.gmra.mrb[0].mxu0 %v310
  %v1033 = vpop.f32.mrb[0].mxu0
  %v1034 = vadd.f32 %v970, %v1033
  %v1035 = vpop.f32.mrb[0].mxu0
  %v1036 = vpop.f32.mrb[0].mxu0
  %v1037 = vadd.f32 %v973, %v1036
  %v1038 = vpop.f32.mrb[0].mxu0
  %1039 = vmatprep.mubr.bf16.mxu0 %v320
  %1040 = vmatmul.mubr.bf16.gmra.mrb[0].mxu0 %v319
  %v1041 = vpop.f32.mrb[0].mxu0
  %v1042 = vadd.f32 %v978, %v1041
  %v1043 = vpop.f32.mrb[0].mxu0
  %v1044 = vpop.f32.mrb[0].mxu0
  %v1045 = vadd.f32 %v981, %v1044
  %v1046 = vpop.f32.mrb[0].mxu0
  %1047 = vmatprep.mubr.bf16.mxu0 %v329
  %1048 = vmatmul.mubr.bf16.gmra.mrb[0].mxu0 %v328
  %v1049 = vpop.f32.mrb[0].mxu0
  %v1050 = vadd.f32 %v986, %v1049
  %v1051 = vpop.f32.mrb[0].mxu0
  %v1052 = vpop.f32.mrb[0].mxu0
  %v1053 = vpop.f32.mrb[0].mxu0
  %1054 = vdwg.mxu0
  %1055 = vmatprep.subr.bf16.mxu0 0
  %1056 = vmatpush1.bf16.msra.mxu0 %v719
  %1057 = vmatprep.subr.bf16.mxu0 0
  %1058 = vmatpush1.bf16.msra.mxu0 %v720
  %1059 = vmatprep.subr.bf16.mxu0 0
  %1060 = vmatpush1.bf16.msra.mxu0 %v721
  %1061 = vmatprep.subr.bf16.mxu0 0
  %1062 = vmatpush1.bf16.msra.mxu0 %v722
  %1063 = vmatprep.subr.bf16.mxu0 0
  %1064 = vmatpush1.bf16.msra.mxu0 %v723
  %1065 = vmatprep.subr.bf16.mxu0 0
  %1066 = vmatpush1.bf16.msra.mxu0 %v724
  %1067 = vmatprep.subr.bf16.mxu0 0
  %1068 = vmatpush1.bf16.msra.mxu0 %v725
  %1069 = vmatprep.subr.bf16.mxu0 0
  %1070 = vmatpush1.bf16.msra.mxu0 %v726
  %1071 = vmatprep.subr.bf16.mxu0 0
  %1072 = vmatpush1.bf16.msra.mxu0 0
  %1073 = vmatprep.subr.bf16.mxu0 0
  %1074 = vmatpush1.bf16.msra.mxu0 0
  %1075 = vmatprep.subr.bf16.mxu0 0
  %1076 = vmatpush1.bf16.msra.mxu0 0
  %1077 = vmatprep.subr.bf16.mxu0 0
  %1078 = vmatpush1.bf16.msra.mxu0 0
  %1079 = vmatprep.subr.bf16.mxu0 0
  %1080 = vmatpush1.bf16.msra.mxu0 0
  %1081 = vmatprep.subr.bf16.mxu0 0
  %1082 = vmatpush1.bf16.msra.mxu0 0
  %1083 = vmatprep.subr.bf16.mxu0 0
  %1084 = vmatpush1.bf16.msra.mxu0 0
  %1085 = vmatprep.subr.bf16.mxu0 0
  %1086 = vmatpush1.bf16.msra.mxu0 0
  %1087 = vmatprep.mubr.bf16.mxu0 0
  %1088 = vmatmul.mubr.bf16.gmra.mrb[0].mxu0 %v303
  %v1089 = vpop.f32.mrb[0].mxu0
  %v1090 = vadd.f32 %v1026, %v1089
  %v1091 = vpop.f32.mrb[0].mxu0
  %v1092 = vpop.f32.mrb[0].mxu0
  %v1093 = vadd.f32 %v1029, %v1092
  %v1094 = vpop.f32.mrb[0].mxu0
  %1095 = vmatprep.mubr.bf16.mxu0 0
  %1096 = vmatmul.mubr.bf16.gmra.mrb[0].mxu0 %v312
  %v1097 = vpop.f32.mrb[0].mxu0
  %v1098 = vadd.f32 %v1034, %v1097
  %v1099 = vpop.f32.mrb[0].mxu0
  %v1100 = vpop.f32.mrb[0].mxu0
  %v1101 = vadd.f32 %v1037, %v1100
  %v1102 = vpop.f32.mrb[0].mxu0
  %1103 = vmatprep.mubr.bf16.mxu0 0
  %1104 = vmatmul.mubr.bf16.gmra.mrb[0].mxu0 %v321
  %v1105 = vpop.f32.mrb[0].mxu0
  %v1106 = vadd.f32 %v1042, %v1105
  %v1107 = vpop.f32.mrb[0].mxu0
  %v1108 = vpop.f32.mrb[0].mxu0
  %v1109 = vadd.f32 %v1045, %v1108
  %v1110 = vpop.f32.mrb[0].mxu0
  %1111 = vmatprep.mubr.bf16.mxu0 0
  %1112 = vmatmul.mubr.bf16.gmra.mrb[0].mxu0 %v330
  %v1113 = vpop.f32.mrb[0].mxu0
  %v1114 = vadd.f32 %v1050, %v1113
  %v1115 = vpop.f32.mrb[0].mxu0
  %v1116 = vpop.f32.mrb[0].mxu0
  %v1117 = vpop.f32.mrb[0].mxu0
  %1118 = vdwg.mxu0
  %vm1119 = vcmask 523264
  %v1120 = vsel %vm1119, %v1090, 0.0
  %v1121 = vsel %vm1119, %v1093, 0.0
  %v1122 = vadd.f32 %v1120, %v1121
  %v1123 = vsel %vm1119, %v1098, 0.0
  %v1124 = vadd.f32 %v1122, %v1123
  %v1125 = vsel %vm1119, %v1101, 0.0
  %v1126 = vadd.f32 %v1124, %v1125
  %v1127 = vsel %vm1119, %v1106, 0.0
  %v1128 = vadd.f32 %v1126, %v1127
  %v1129 = vsel %vm1119, %v1109, 0.0
  %v1130 = vadd.f32 %v1128, %v1129
  %vm1131 = vcmask 517120
  %v1132 = vsel %vm1131, %v1114, 0.0
  %v1133 = vadd.f32 %v1130, %v1132
  %v1134 = vrot.slane %v1133, 4
  %v1135 = vadd.f32 %v1133, %v1134
  %v1136 = vrot.slane %v1135, 2
  %v1137 = vadd.f32 %v1135, %v1136
  %v1138 = vrot.slane %v1137, 1
  %v1139 = vadd.f32 %v1137, %v1138
  %v1140 = vrcp.pop 50.0
  %v1141 = vmul.f32 %v1139, %v1140
  %v1142 = vmul.f32 %v1090, %v1090
  %v1143 = vmul.f32 %v1093, %v1093
  %v1144 = vmul.f32 %v1098, %v1098
  %v1145 = vmul.f32 %v1101, %v1101
  %v1146 = vmul.f32 %v1106, %v1106
  %v1147 = vmul.f32 %v1109, %v1109
  %v1148 = vmul.f32 %v1114, %v1114
  %v1149 = vsel %vm1119, %v1142, 0.0
  %v1150 = vsel %vm1119, %v1143, 0.0
  %v1151 = vadd.f32 %v1149, %v1150
  %v1152 = vsel %vm1119, %v1144, 0.0
  %v1153 = vadd.f32 %v1151, %v1152
  %v1154 = vsel %vm1119, %v1145, 0.0
  %v1155 = vadd.f32 %v1153, %v1154
  %v1156 = vsel %vm1119, %v1146, 0.0
  %v1157 = vadd.f32 %v1155, %v1156
  %v1158 = vsel %vm1119, %v1147, 0.0
  %v1159 = vadd.f32 %v1157, %v1158
  %v1160 = vsel %vm1131, %v1148, 0.0
  %v1161 = vadd.f32 %v1159, %v1160
  %v1162 = vrot.slane %v1161, 4
  %v1163 = vadd.f32 %v1161, %v1162
  %v1164 = vrot.slane %v1163, 2
  %v1165 = vadd.f32 %v1163, %v1164
  %v1166 = vrot.slane %v1165, 1
  %v1167 = vadd.f32 %v1165, %v1166
  %v1168 = vmul.f32 %v1167, %v1140
  %v1169 = vmul.f32 %v1141, %v1141
  %v1170 = vsub.f32 %v1168, %v1169
  %v1171 = vmax.f32 %v1170, 0.0
  %v1172 = vld [vmem:[%s2] sm:$0x1]
  %v1173 = vsub.f32 %v1090, %v1141
  %v1174 = vsub.f32 %v1093, %v1141
  %v1175 = vsub.f32 %v1098, %v1141
  %v1176 = vsub.f32 %v1101, %v1141
  %v1177 = vsub.f32 %v1106, %v1141
  %v1178 = vsub.f32 %v1109, %v1141
  %v1179 = vsub.f32 %v1114, %v1141
  %v1181 = vlaneseq
  %v1182 = vshrl.u32 %v1181, 7
  %v1183 = vsub.s32 0, %v1182
  %v1184 = vrot.slane %v1172, %v1183
  %v1186 = vmul.f32 %v1184, %v1173
  %v1187 = vmul.f32 %v1184, %v1174
  %v1188 = vmul.f32 %v1184, %v1175
  %v1189 = vmul.f32 %v1184, %v1176
  %v1190 = vmul.f32 %v1184, %v1177
  %v1191 = vmul.f32 %v1184, %v1178
  %v1192 = vmul.f32 %v1184, %v1179
  %v1193 = vadd.f32 %v1171, 1e-05
  %v1194 = vrsqrt.pop %v1193
  %v1195 = vmul.f32 %v1186, %v1194
  %v1196 = vmul.f32 %v1187, %v1194
  %v1197 = vmul.f32 %v1188, %v1194
  %v1198 = vmul.f32 %v1189, %v1194
  %v1199 = vmul.f32 %v1190, %v1194
  %v1200 = vmul.f32 %v1191, %v1194
  %v1201 = vmul.f32 %v1192, %v1194
  %v1202 = vld [vmem:[%s3] sm:$0x1]
  %v1204 = vlaneseq
  %v1205 = vshrl.u32 %v1204, 7
  %v1206 = vsub.s32 0, %v1205
  %v1207 = vrot.slane %v1202, %v1206
  %v1209 = vadd.f32 %v1195, %v1207
  %v1210 = vadd.f32 %v1196, %v1207
  %v1211 = vadd.f32 %v1197, %v1207
  %v1212 = vadd.f32 %v1198, %v1207
  %v1213 = vadd.f32 %v1199, %v1207
  %v1214 = vadd.f32 %v1200, %v1207
  %v1215 = vadd.f32 %v1201, %v1207
  %vm1216 = vcmp.ge.f32.partialorder %v1209, 0.0
  %vm1217 = vcmp.ge.f32.partialorder %v1210, 0.0
  %vm1218 = vcmp.ge.f32.partialorder %v1211, 0.0
  %vm1219 = vcmp.ge.f32.partialorder %v1212, 0.0
  %vm1220 = vcmp.ge.f32.partialorder %v1213, 0.0
  %vm1221 = vcmp.ge.f32.partialorder %v1214, 0.0
  %vm1222 = vcmp.ge.f32.partialorder %v1215, 0.0
  %v1223 = vmul.f32 %v1209, 0.01
  %v1224 = vmul.f32 %v1210, 0.01
  %v1225 = vmul.f32 %v1211, 0.01
  %v1226 = vmul.f32 %v1212, 0.01
  %v1227 = vmul.f32 %v1213, 0.01
  %v1228 = vmul.f32 %v1214, 0.01
  %v1229 = vmul.f32 %v1215, 0.01
  %v1230 = vsel %vm1216, %v1209, %v1223
  %v1231 = vsel %vm1217, %v1210, %v1224
  %v1232 = vsel %vm1218, %v1211, %v1225
  %v1233 = vsel %vm1219, %v1212, %v1226
  %v1234 = vsel %vm1220, %v1213, %v1227
  %v1235 = vsel %vm1221, %v1214, %v1228
  %v1236 = vsel %vm1222, %v1215, %v1229
  %1237 = vst.msk [vmem:[%s4] sm:$0xff] %vm1119, %v1230
  %1238 = vst.msk [vmem:[%s4 + $0x8] sm:$0xff] %vm1119, %v1231
  %1239 = vst.msk [vmem:[%s4 + $0x10] sm:$0xff] %vm1119, %v1232
  %1240 = vst.msk [vmem:[%s4 + $0x18] sm:$0xff] %vm1119, %v1233
  %1241 = vst.msk [vmem:[%s4 + $0x20] sm:$0xff] %vm1119, %v1234
  %1242 = vst.msk [vmem:[%s4 + $0x28] sm:$0xff] %vm1119, %v1235
  %1243 = vst.msk [vmem:[%s4 + $0x30] sm:$0x3] %vm1131, %v1236
  // Predicated region
  $region18: #{forward.6} parent=0 // pred_check
    _
  $region19: #{forward.6} parent=0 // pred_check_branch
    %1245 = sbr.rel (0) target = $region21
  $region20: #{forward.6} parent=0 // pred_region
    _
  $region21: #{forward.6} parent=0 // pred_fallthru
    _
  // Predicated region
  $region22: #{forward.6} parent=0 // pred_check
    _
  $region23: #{forward.6} parent=0 // pred_check_branch
    %1247 = sbr.rel (0) target = $region25
  $region24: #{forward.6} parent=0 // pred_region
    _
  $region25: #{forward.6} parent=0 // pred_fallthru
    _

// kernel: forward.7
$region0: #{forward.7}
  #allocation0 [shape = 'u32[]', space=smem, size = 0x4, offset = 0x4, fixed_abs, tag = 'smem constant byte address 0x4 - core index']
  #allocation1 [shape = 'u32[144,128]{1,0:T(1,128)}', space=vmem, size = 0x12000, scoped, tag = 'internal scratch']
  %s0 = inlined_call_operand.vmem [shape: bf16[200,1024], index: 0, kind: input, shape index: {}]
  %s1 = inlined_call_operand.vmem [shape: bf16[1024,32], index: 1, kind: input, shape index: {}]
  %s2 = inlined_call_operand.vmem [shape: f32[1,32], index: 2, kind: input, shape index: {}]
  %s3 = inlined_call_operand.vmem [shape: f32[1,32], index: 3, kind: input, shape index: {}]
  %s4 = inlined_call_operand.vmem [shape: f32[200,32], index: 4, kind: output, shape index: {}]
  %s5 = sld [smem:[#allocation0]]
  $region26: #{forward.7} parent=0
    _
  %s7 = ssub.s32 1, %s5
  %s8 = scalar_select 0, %s7, %s5
  // Predicated region
  $region2: #{forward.7} parent=0 // pred_check
    _
  $region3: #{forward.7} parent=0 // pred_check_branch
    %10 = sbr.rel (0) target = $region5
  $region4: #{forward.7} parent=0 // pred_region
    _
  $region5: #{forward.7} parent=0 // pred_fallthru
    _
  // Predicated region
  $region6: #{forward.7} parent=0 // pred_check
    _
  $region7: #{forward.7} parent=0 // pred_check_branch
    %12 = sbr.rel (0) target = $region9
  $region8: #{forward.7} parent=0 // pred_region
    _
  $region9: #{forward.7} parent=0 // pred_fallthru
    _
  // Predicated region
  $region10: #{forward.7} parent=0 // pred_check
    _
  $region11: #{forward.7} parent=0 // pred_check_branch
    %14 = sbr.rel (0) target = $region13
  $region12: #{forward.7} parent=0 // pred_region
    _
  $region13: #{forward.7} parent=0 // pred_fallthru
    _
  // Predicated region
  $region14: #{forward.7} parent=0 // pred_check
    _
  $region15: #{forward.7} parent=0 // pred_check_branch
    %16 = sbr.rel (0) target = $region17
  $region16: #{forward.7} parent=0 // pred_region
    _
  $region17: #{forward.7} parent=0 // pred_fallthru
    _
  %v18 = vld [vmem:[%s0] sm:$0xff]
  %v19 = vld [vmem:[%s0 + $0x8] sm:$0xff]
  %v20 = vld [vmem:[%s0 + $0x10] sm:$0xff]
  %v21 = vld [vmem:[%s0 + $0x18] sm:$0xff]
  %v22 = vld [vmem:[%s0 + $0x20] sm:$0xff]
  %v23 = vld [vmem:[%s0 + $0x28] sm:$0xff]
  %v24 = vld [vmem:[%s0 + $0x30] sm:$0xff]
  %v25 = vld [vmem:[%s0 + $0x38] sm:$0xff]
  %v26 = vld [vmem:[%s0 + $0x40] sm:$0xff]
  %v27 = vld [vmem:[%s0 + $0x48] sm:$0xff]
  %v28 = vld [vmem:[%s0 + $0x50] sm:$0xff]
  %v29 = vld [vmem:[%s0 + $0x58] sm:$0xff]
  %v30 = vld [vmem:[%s0 + $0x60] sm:$0xff]
  %v31 = vld [vmem:[%s0 + $0x68] sm:$0xff]
  %v32 = vld [vmem:[%s0 + $0x70] sm:$0xff]
  %v33 = vld [vmem:[%s0 + $0x78] sm:$0xff]
  %v34 = vld [vmem:[%s0 + $0x80] sm:$0xff]
  %v35 = vld [vmem:[%s0 + $0x88] sm:$0xff]
  %v36 = vld [vmem:[%s0 + $0x90] sm:$0xff]
  %v37 = vld [vmem:[%s0 + $0x98] sm:$0xff]
  %v38 = vld [vmem:[%s0 + $0xa0] sm:$0xff]
  %v39 = vld [vmem:[%s0 + $0xa8] sm:$0xff]
  %v40 = vld [vmem:[%s0 + $0xb0] sm:$0xff]
  %v41 = vld [vmem:[%s0 + $0xb8] sm:$0xff]
  %v42 = vld [vmem:[%s0 + $0xc0] sm:$0xff]
  %v43 = vld [vmem:[%s0 + $0xc8] sm:$0xff]
  %v44 = vld [vmem:[%s0 + $0xd0] sm:$0xff]
  %v45 = vld [vmem:[%s0 + $0xd8] sm:$0xff]
  %v46 = vld [vmem:[%s0 + $0xe0] sm:$0xff]
  %v47 = vld [vmem:[%s0 + $0xe8] sm:$0xff]
  %v48 = vld [vmem:[%s0 + $0xf0] sm:$0xff]
  %v49 = vld [vmem:[%s0 + $0xf8] sm:$0xff]
  %v50 = vld [vmem:[%s0 + $0x100] sm:$0xff]
  %v51 = vld [vmem:[%s0 + $0x108] sm:$0xff]
  %v52 = vld [vmem:[%s0 + $0x110] sm:$0xff]
  %v53 = vld [vmem:[%s0 + $0x118] sm:$0xff]
  %v54 = vld [vmem:[%s0 + $0x120] sm:$0xff]
  %v55 = vld [vmem:[%s0 + $0x128] sm:$0xff]
  %v56 = vld [vmem:[%s0 + $0x130] sm:$0xff]
  %v57 = vld [vmem:[%s0 + $0x138] sm:$0xff]
  %v58 = vld [vmem:[%s0 + $0x140] sm:$0xff]
  %v59 = vld [vmem:[%s0 + $0x148] sm:$0xff]
  %v60 = vld [vmem:[%s0 + $0x150] sm:$0xff]
  %v61 = vld [vmem:[%s0 + $0x158] sm:$0xff]
  %v62 = vld [vmem:[%s0 + $0x160] sm:$0xff]
  %v63 = vld [vmem:[%s0 + $0x168] sm:$0xff]
  %v64 = vld [vmem:[%s0 + $0x170] sm:$0xff]
  %v65 = vld [vmem:[%s0 + $0x178] sm:$0xff]
  %v66 = vld [vmem:[%s0 + $0x180] sm:$0xff]
  %v67 = vld [vmem:[%s0 + $0x188] sm:$0xff]
  %v68 = vld [vmem:[%s0 + $0x190] sm:$0xff]
  %v69 = vld [vmem:[%s0 + $0x198] sm:$0xff]
  %v70 = vld [vmem:[%s0 + $0x1a0] sm:$0xff]
  %v71 = vld [vmem:[%s0 + $0x1a8] sm:$0xff]
  %v72 = vld [vmem:[%s0 + $0x1b0] sm:$0xff]
  %v73 = vld [vmem:[%s0 + $0x1b8] sm:$0xff]
  %v74 = vld [vmem:[%s0 + $0x1c0] sm:$0xff]
  %v75 = vld [vmem:[%s0 + $0x1c8] sm:$0xff]
  %v76 = vld [vmem:[%s0 + $0x1d0] sm:$0xff]
  %v77 = vld [vmem:[%s0 + $0x1d8] sm:$0xff]
  %v78 = vld [vmem:[%s0 + $0x1e0] sm:$0xff]
  %v79 = vld [vmem:[%s0 + $0x1e8] sm:$0xff]
  %v80 = vld [vmem:[%s0 + $0x1f0] sm:$0xff]
  %v81 = vld [vmem:[%s0 + $0x1f8] sm:$0xff]
  %v82 = vld [vmem:[%s0 + $0x200] sm:$0xff]
  %v83 = vld [vmem:[%s0 + $0x208] sm:$0xff]
  %v84 = vld [vmem:[%s0 + $0x210] sm:$0xff]
  %v85 = vld [vmem:[%s0 + $0x218] sm:$0xff]
  %v86 = vld [vmem:[%s0 + $0x220] sm:$0xff]
  %v87 = vld [vmem:[%s0 + $0x228] sm:$0xff]
  %v88 = vld [vmem:[%s0 + $0x230] sm:$0xff]
  %v89 = vld [vmem:[%s0 + $0x238] sm:$0xff]
  %v90 = vld [vmem:[%s0 + $0x240] sm:$0xff]
  %v91 = vld [vmem:[%s0 + $0x248] sm:$0xff]
  %v92 = vld [vmem:[%s0 + $0x250] sm:$0xff]
  %v93 = vld [vmem:[%s0 + $0x258] sm:$0xff]
  %v94 = vld [vmem:[%s0 + $0x260] sm:$0xff]
  %v95 = vld [vmem:[%s0 + $0x268] sm:$0xff]
  %v96 = vld [vmem:[%s0 + $0x270] sm:$0xff]
  %v97 = vld [vmem:[%s0 + $0x278] sm:$0xff]
  %v98 = vld [vmem:[%s0 + $0x280] sm:$0xff]
  %v99 = vld [vmem:[%s0 + $0x288] sm:$0xff]
  %v100 = vld [vmem:[%s0 + $0x290] sm:$0xff]
  %v101 = vld [vmem:[%s0 + $0x298] sm:$0xff]
  %v102 = vld [vmem:[%s0 + $0x2a0] sm:$0xff]
  %v103 = vld [vmem:[%s0 + $0x2a8] sm:$0xff]
  %v104 = vld [vmem:[%s0 + $0x2b0] sm:$0xff]
  %v105 = vld [vmem:[%s0 + $0x2b8] sm:$0xff]
  %v106 = vld [vmem:[%s0 + $0x2c0] sm:$0xff]
  %v107 = vld [vmem:[%s0 + $0x2c8] sm:$0xff]
  %v108 = vld [vmem:[%s0 + $0x2d0] sm:$0xff]
  %v109 = vld [vmem:[%s0 + $0x2d8] sm:$0xff]
  %v110 = vld [vmem:[%s0 + $0x2e0] sm:$0xff]
  %v111 = vld [vmem:[%s0 + $0x2e8] sm:$0xff]
  %v112 = vld [vmem:[%s0 + $0x2f0] sm:$0xff]
  %v113 = vld [vmem:[%s0 + $0x2f8] sm:$0xff]
  %v114 = vld [vmem:[%s0 + $0x300] sm:$0xff]
  %v115 = vld [vmem:[%s0 + $0x308] sm:$0xff]
  %v116 = vld [vmem:[%s0 + $0x310] sm:$0xff]
  %v117 = vld [vmem:[%s0 + $0x318] sm:$0xff]
  %v118 = vld [vmem:[%s1] sm:$0xf]
  %v119 = vld [vmem:[%s1 + $0x4] sm:$0xf]
  %v120 = vld [vmem:[%s1 + $0x8] sm:$0xf]
  %v121 = vld [vmem:[%s1 + $0xc] sm:$0xf]
  %v122 = vld [vmem:[%s1 + $0x10] sm:$0xf]
  %v123 = vld [vmem:[%s1 + $0x14] sm:$0xf]
  %v124 = vld [vmem:[%s1 + $0x18] sm:$0xf]
  %v125 = vld [vmem:[%s1 + $0x1c] sm:$0xf]
  %v126 = vld [vmem:[%s1 + $0x20] sm:$0xf]
  %v127 = vld [vmem:[%s1 + $0x24] sm:$0xf]
  %v128 = vld [vmem:[%s1 + $0x28] sm:$0xf]
  %v129 = vld [vmem:[%s1 + $0x2c] sm:$0xf]
  %v130 = vld [vmem:[%s1 + $0x30] sm:$0xf]
  %v131 = vld [vmem:[%s1 + $0x34] sm:$0xf]
  %v132 = vld [vmem:[%s1 + $0x38] sm:$0xf]
  %v133 = vld [vmem:[%s1 + $0x3c] sm:$0xf]
  %v134 = vld [vmem:[%s1 + $0x40] sm:$0xf]
  %v135 = vld [vmem:[%s1 + $0x44] sm:$0xf]
  %v136 = vld [vmem:[%s1 + $0x48] sm:$0xf]
  %v137 = vld [vmem:[%s1 + $0x4c] sm:$0xf]
  %v138 = vld [vmem:[%s1 + $0x50] sm:$0xf]
  %v139 = vld [vmem:[%s1 + $0x54] sm:$0xf]
  %v140 = vld [vmem:[%s1 + $0x58] sm:$0xf]
  %v141 = vld [vmem:[%s1 + $0x5c] sm:$0xf]
  %v142 = vld [vmem:[%s1 + $0x60] sm:$0xf]
  %v143 = vld [vmem:[%s1 + $0x64] sm:$0xf]
  %v144 = vld [vmem:[%s1 + $0x68] sm:$0xf]
  %v145 = vld [vmem:[%s1 + $0x6c] sm:$0xf]
  %v146 = vld [vmem:[%s1 + $0x70] sm:$0xf]
  %v147 = vld [vmem:[%s1 + $0x74] sm:$0xf]
  %v148 = vld [vmem:[%s1 + $0x78] sm:$0xf]
  %v149 = vld [vmem:[%s1 + $0x7c] sm:$0xf]
  %v150 = vld [vmem:[%s1 + $0x80] sm:$0xf]
  %v151 = vld [vmem:[%s1 + $0x84] sm:$0xf]
  %v152 = vld [vmem:[%s1 + $0x88] sm:$0xf]
  %v153 = vld [vmem:[%s1 + $0x8c] sm:$0xf]
  %v154 = vld [vmem:[%s1 + $0x90] sm:$0xf]
  %v155 = vld [vmem:[%s1 + $0x94] sm:$0xf]
  %v156 = vld [vmem:[%s1 + $0x98] sm:$0xf]
  %v157 = vld [vmem:[%s1 + $0x9c] sm:$0xf]
  %v158 = vld [vmem:[%s1 + $0xa0] sm:$0xf]
  %v159 = vld [vmem:[%s1 + $0xa4] sm:$0xf]
  %v160 = vld [vmem:[%s1 + $0xa8] sm:$0xf]
  %v161 = vld [vmem:[%s1 + $0xac] sm:$0xf]
  %v162 = vld [vmem:[%s1 + $0xb0] sm:$0xf]
  %v163 = vld [vmem:[%s1 + $0xb4] sm:$0xf]
  %v164 = vld [vmem:[%s1 + $0xb8] sm:$0xf]
  %v165 = vld [vmem:[%s1 + $0xbc] sm:$0xf]
  %v166 = vld [vmem:[%s1 + $0xc0] sm:$0xf]
  %v167 = vld [vmem:[%s1 + $0xc4] sm:$0xf]
  %v168 = vld [vmem:[%s1 + $0xc8] sm:$0xf]
  %v169 = vld [vmem:[%s1 + $0xcc] sm:$0xf]
  %v170 = vld [vmem:[%s1 + $0xd0] sm:$0xf]
  %v171 = vld [vmem:[%s1 + $0xd4] sm:$0xf]
  %v172 = vld [vmem:[%s1 + $0xd8] sm:$0xf]
  %v173 = vld [vmem:[%s1 + $0xdc] sm:$0xf]
  %v174 = vld [vmem:[%s1 + $0xe0] sm:$0xf]
  %v175 = vld [vmem:[%s1 + $0xe4] sm:$0xf]
  %v176 = vld [vmem:[%s1 + $0xe8] sm:$0xf]
  %v177 = vld [vmem:[%s1 + $0xec] sm:$0xf]
  %v178 = vld [vmem:[%s1 + $0xf0] sm:$0xf]
  %v179 = vld [vmem:[%s1 + $0xf4] sm:$0xf]
  %v180 = vld [vmem:[%s1 + $0xf8] sm:$0xf]
  %v181 = vld [vmem:[%s1 + $0xfc] sm:$0xf]
  %v182 = vld [vmem:[%s1 + $0x100] sm:$0xf]
  %v183 = vld [vmem:[%s1 + $0x104] sm:$0xf]
  %v184 = vld [vmem:[%s1 + $0x108] sm:$0xf]
  %v185 = vld [vmem:[%s1 + $0x10c] sm:$0xf]
  %v186 = vld [vmem:[%s1 + $0x110] sm:$0xf]
  %v187 = vld [vmem:[%s1 + $0x114] sm:$0xf]
  %v188 = vld [vmem:[%s1 + $0x118] sm:$0xf]
  %v189 = vld [vmem:[%s1 + $0x11c] sm:$0xf]
  %v190 = vld [vmem:[%s1 + $0x120] sm:$0xf]
  %v191 = vld [vmem:[%s1 + $0x124] sm:$0xf]
  %v192 = vld [vmem:[%s1 + $0x128] sm:$0xf]
  %v193 = vld [vmem:[%s1 + $0x12c] sm:$0xf]
  %v194 = vld [vmem:[%s1 + $0x130] sm:$0xf]
  %v195 = vld [vmem:[%s1 + $0x134] sm:$0xf]
  %v196 = vld [vmem:[%s1 + $0x138] sm:$0xf]
  %v197 = vld [vmem:[%s1 + $0x13c] sm:$0xf]
  %v198 = vld [vmem:[%s1 + $0x140] sm:$0xf]
  %v199 = vld [vmem:[%s1 + $0x144] sm:$0xf]
  %v200 = vld [vmem:[%s1 + $0x148] sm:$0xf]
  %v201 = vld [vmem:[%s1 + $0x14c] sm:$0xf]
  %v202 = vld [vmem:[%s1 + $0x150] sm:$0xf]
  %v203 = vld [vmem:[%s1 + $0x154] sm:$0xf]
  %v204 = vld [vmem:[%s1 + $0x158] sm:$0xf]
  %v205 = vld [vmem:[%s1 + $0x15c] sm:$0xf]
  %v206 = vld [vmem:[%s1 + $0x160] sm:$0xf]
  %v207 = vld [vmem:[%s1 + $0x164] sm:$0xf]
  %v208 = vld [vmem:[%s1 + $0x168] sm:$0xf]
  %v209 = vld [vmem:[%s1 + $0x16c] sm:$0xf]
  %v210 = vld [vmem:[%s1 + $0x170] sm:$0xf]
  %v211 = vld [vmem:[%s1 + $0x174] sm:$0xf]
  %v212 = vld [vmem:[%s1 + $0x178] sm:$0xf]
  %v213 = vld [vmem:[%s1 + $0x17c] sm:$0xf]
  %v214 = vld [vmem:[%s1 + $0x180] sm:$0xf]
  %v215 = vld [vmem:[%s1 + $0x184] sm:$0xf]
  %v216 = vld [vmem:[%s1 + $0x188] sm:$0xf]
  %v217 = vld [vmem:[%s1 + $0x18c] sm:$0xf]
  %v218 = vld [vmem:[%s1 + $0x190] sm:$0xf]
  %v219 = vld [vmem:[%s1 + $0x194] sm:$0xf]
  %v220 = vld [vmem:[%s1 + $0x198] sm:$0xf]
  %v221 = vld [vmem:[%s1 + $0x19c] sm:$0xf]
  %v222 = vld [vmem:[%s1 + $0x1a0] sm:$0xf]
  %v223 = vld [vmem:[%s1 + $0x1a4] sm:$0xf]
  %v224 = vld [vmem:[%s1 + $0x1a8] sm:$0xf]
  %v225 = vld [vmem:[%s1 + $0x1ac] sm:$0xf]
  %v226 = vld [vmem:[%s1 + $0x1b0] sm:$0xf]
  %v227 = vld [vmem:[%s1 + $0x1b4] sm:$0xf]
  %v228 = vld [vmem:[%s1 + $0x1b8] sm:$0xf]
  %v229 = vld [vmem:[%s1 + $0x1bc] sm:$0xf]
  %v230 = vld [vmem:[%s1 + $0x1c0] sm:$0xf]
  %v231 = vld [vmem:[%s1 + $0x1c4] sm:$0xf]
  %v232 = vld [vmem:[%s1 + $0x1c8] sm:$0xf]
  %v233 = vld [vmem:[%s1 + $0x1cc] sm:$0xf]
  %v234 = vld [vmem:[%s1 + $0x1d0] sm:$0xf]
  %v235 = vld [vmem:[%s1 + $0x1d4] sm:$0xf]
  %v236 = vld [vmem:[%s1 + $0x1d8] sm:$0xf]
  %v237 = vld [vmem:[%s1 + $0x1dc] sm:$0xf]
  %v238 = vld [vmem:[%s1 + $0x1e0] sm:$0xf]
  %v239 = vld [vmem:[%s1 + $0x1e4] sm:$0xf]
  %v240 = vld [vmem:[%s1 + $0x1e8] sm:$0xf]
  %v241 = vld [vmem:[%s1 + $0x1ec] sm:$0xf]
  %v242 = vld [vmem:[%s1 + $0x1f0] sm:$0xf]
  %v243 = vld [vmem:[%s1 + $0x1f4] sm:$0xf]
  %v244 = vld [vmem:[%s1 + $0x1f8] sm:$0xf]
  %v245 = vld [vmem:[%s1 + $0x1fc] sm:$0xf]
  %v346 = vunpack.c.l.b16 %v18
  %v347 = vunpack.c.h.b16 %v18
  %v348 = vunpack.c.l.b16 %v19
  %v349 = vunpack.c.h.b16 %v19
  %v350 = vunpack.c.l.b16 %v20
  %v351 = vunpack.c.h.b16 %v20
  %v352 = vunpack.c.l.b16 %v21
  %v353 = vunpack.c.h.b16 %v21
  %v354 = vunpack.c.l.b16 %v22
  %v355 = vunpack.c.h.b16 %v22
  %v356 = vunpack.c.l.b16 %v23
  %v357 = vunpack.c.h.b16 %v23
  %v358 = vunpack.c.l.b16 %v24
  %v359 = vunpack.c.h.b16 %v24
  %v360 = vunpack.c.l.b16 %v25
  %v361 = vunpack.c.h.b16 %v25
  %v362 = vunpack.c.l.b16 %v26
  %v363 = vunpack.c.h.b16 %v26
  %v364 = vunpack.c.l.b16 %v27
  %v365 = vunpack.c.h.b16 %v27
  %v366 = vunpack.c.l.b16 %v28
  %v367 = vunpack.c.h.b16 %v28
  %v368 = vunpack.c.l.b16 %v29
  %v369 = vunpack.c.h.b16 %v29
  %v370 = vunpack.c.l.b16 %v30
  %v371 = vunpack.c.h.b16 %v30
  %v372 = vunpack.c.l.b16 %v31
  %v373 = vunpack.c.h.b16 %v31
  %v374 = vunpack.c.l.b16 %v32
  %v375 = vunpack.c.h.b16 %v32
  %v376 = vunpack.c.l.b16 %v33
  %v377 = vunpack.c.h.b16 %v33
  %v378 = vunpack.c.l.b16 %v34
  %v379 = vunpack.c.h.b16 %v34
  %v380 = vunpack.c.l.b16 %v35
  %v381 = vunpack.c.h.b16 %v35
  %v382 = vunpack.c.l.b16 %v36
  %v383 = vunpack.c.h.b16 %v36
  %v384 = vunpack.c.l.b16 %v37
  %v385 = vunpack.c.h.b16 %v37
  %v386 = vunpack.c.l.b16 %v38
  %v387 = vunpack.c.h.b16 %v38
  %v388 = vunpack.c.l.b16 %v39
  %v389 = vunpack.c.h.b16 %v39
  %v390 = vunpack.c.l.b16 %v40
  %v391 = vunpack.c.h.b16 %v40
  %v392 = vunpack.c.l.b16 %v41
  %v393 = vunpack.c.h.b16 %v41
  %v394 = vunpack.c.l.b16 %v42
  %v395 = vunpack.c.h.b16 %v42
  %v396 = vunpack.c.l.b16 %v43
  %v397 = vunpack.c.h.b16 %v43
  %v398 = vunpack.c.l.b16 %v44
  %v399 = vunpack.c.h.b16 %v44
  %v400 = vunpack.c.l.b16 %v45
  %v401 = vunpack.c.h.b16 %v45
  %v402 = vunpack.c.l.b16 %v46
  %v403 = vunpack.c.h.b16 %v46
  %v404 = vunpack.c.l.b16 %v47
  %v405 = vunpack.c.h.b16 %v47
  %v406 = vunpack.c.l.b16 %v48
  %v407 = vunpack.c.h.b16 %v48
  %v408 = vunpack.c.l.b16 %v49
  %v409 = vunpack.c.h.b16 %v49
  %v410 = vunpack.c.l.b16 %v50
  %v411 = vunpack.c.h.b16 %v50
  %v412 = vunpack.c.l.b16 %v51
  %v413 = vunpack.c.h.b16 %v51
  %v414 = vunpack.c.l.b16 %v52
  %v415 = vunpack.c.h.b16 %v52
  %v416 = vunpack.c.l.b16 %v53
  %v417 = vunpack.c.h.b16 %v53
  %v418 = vunpack.c.l.b16 %v54
  %v419 = vunpack.c.h.b16 %v54
  %v420 = vunpack.c.l.b16 %v55
  %v421 = vunpack.c.h.b16 %v55
  %v422 = vunpack.c.l.b16 %v56
  %v423 = vunpack.c.h.b16 %v56
  %v424 = vunpack.c.l.b16 %v57
  %v425 = vunpack.c.h.b16 %v57
  %v426 = vunpack.c.l.b16 %v58
  %v427 = vunpack.c.h.b16 %v58
  %v428 = vunpack.c.l.b16 %v59
  %v429 = vunpack.c.h.b16 %v59
  %v430 = vunpack.c.l.b16 %v60
  %v431 = vunpack.c.h.b16 %v60
  %v432 = vunpack.c.l.b16 %v61
  %v433 = vunpack.c.h.b16 %v61
  %v434 = vunpack.c.l.b16 %v62
  %v435 = vunpack.c.h.b16 %v62
  %v436 = vunpack.c.l.b16 %v63
  %v437 = vunpack.c.h.b16 %v63
  %v438 = vunpack.c.l.b16 %v64
  %v439 = vunpack.c.h.b16 %v64
  %v440 = vunpack.c.l.b16 %v65
  %v441 = vunpack.c.h.b16 %v65
  %v442 = vunpack.c.l.b16 %v66
  %v443 = vunpack.c.h.b16 %v66
  %v444 = vunpack.c.l.b16 %v67
  %v445 = vunpack.c.h.b16 %v67
  %v446 = vunpack.c.l.b16 %v68
  %v447 = vunpack.c.h.b16 %v68
  %v448 = vunpack.c.l.b16 %v69
  %v449 = vunpack.c.h.b16 %v69
  %v450 = vunpack.c.l.b16 %v70
  %v451 = vunpack.c.h.b16 %v70
  %v452 = vunpack.c.l.b16 %v71
  %v453 = vunpack.c.h.b16 %v71
  %v454 = vunpack.c.l.b16 %v72
  %v455 = vunpack.c.h.b16 %v72
  %v456 = vunpack.c.l.b16 %v73
  %v457 = vunpack.c.h.b16 %v73
  %v458 = vunpack.c.l.b16 %v74
  %v459 = vunpack.c.h.b16 %v74
  %v460 = vunpack.c.l.b16 %v75
  %v461 = vunpack.c.h.b16 %v75
  %v462 = vunpack.c.l.b16 %v76
  %v463 = vunpack.c.h.b16 %v76
  %v464 = vunpack.c.l.b16 %v77
  %v465 = vunpack.c.h.b16 %v77
  %v466 = vunpack.c.l.b16 %v78
  %v467 = vunpack.c.h.b16 %v78
  %v468 = vunpack.c.l.b16 %v79
  %v469 = vunpack.c.h.b16 %v79
  %v470 = vunpack.c.l.b16 %v80
  %v471 = vunpack.c.h.b16 %v80
  %v472 = vunpack.c.l.b16 %v81
  %v473 = vunpack.c.h.b16 %v81
  %v474 = vunpack.c.l.b16 %v82
  %v475 = vunpack.c.h.b16 %v82
  %v476 = vunpack.c.l.b16 %v83
  %v477 = vunpack.c.h.b16 %v83
  %v478 = vunpack.c.l.b16 %v84
  %v479 = vunpack.c.h.b16 %v84
  %v480 = vunpack.c.l.b16 %v85
  %v481 = vunpack.c.h.b16 %v85
  %v482 = vunpack.c.l.b16 %v86
  %v483 = vunpack.c.h.b16 %v86
  %v484 = vunpack.c.l.b16 %v87
  %v485 = vunpack.c.h.b16 %v87
  %v486 = vunpack.c.l.b16 %v88
  %v487 = vunpack.c.h.b16 %v88
  %v488 = vunpack.c.l.b16 %v89
  %v489 = vunpack.c.h.b16 %v89
  %v490 = vunpack.c.l.b16 %v90
  %v491 = vunpack.c.h.b16 %v90
  %v492 = vunpack.c.l.b16 %v91
  %v493 = vunpack.c.h.b16 %v91
  %v494 = vunpack.c.l.b16 %v92
  %v495 = vunpack.c.h.b16 %v92
  %v496 = vunpack.c.l.b16 %v93
  %v497 = vunpack.c.h.b16 %v93
  %v498 = vunpack.c.l.b16 %v94
  %v499 = vunpack.c.h.b16 %v94
  %v500 = vunpack.c.l.b16 %v95
  %v501 = vunpack.c.h.b16 %v95
  %v502 = vunpack.c.l.b16 %v96
  %v503 = vunpack.c.h.b16 %v96
  %v504 = vunpack.c.l.b16 %v97
  %v505 = vunpack.c.h.b16 %v97
  %v506 = vunpack.c.l.b16 %v98
  %v507 = vunpack.c.h.b16 %v98
  %v508 = vunpack.c.l.b16 %v99
  %v509 = vunpack.c.h.b16 %v99
  %v510 = vunpack.c.l.b16 %v100
  %v511 = vunpack.c.h.b16 %v100
  %v512 = vunpack.c.l.b16 %v101
  %v513 = vunpack.c.h.b16 %v101
  %v514 = vunpack.c.l.b16 %v102
  %v515 = vunpack.c.h.b16 %v102
  %v516 = vunpack.c.l.b16 %v103
  %v517 = vunpack.c.h.b16 %v103
  %v518 = vunpack.c.l.b16 %v104
  %v519 = vunpack.c.h.b16 %v104
  %v520 = vunpack.c.l.b16 %v105
  %v521 = vunpack.c.h.b16 %v105
  %v522 = vunpack.c.l.b16 %v106
  %v523 = vunpack.c.h.b16 %v106
  %v524 = vunpack.c.l.b16 %v107
  %v525 = vunpack.c.h.b16 %v107
  %v526 = vunpack.c.l.b16 %v108
  %v527 = vunpack.c.h.b16 %v108
  %v528 = vunpack.c.l.b16 %v109
  %v529 = vunpack.c.h.b16 %v109
  %v530 = vunpack.c.l.b16 %v110
  %v531 = vunpack.c.h.b16 %v110
  %v532 = vunpack.c.l.b16 %v111
  %v533 = vunpack.c.h.b16 %v111
  %v534 = vunpack.c.l.b16 %v112
  %v535 = vunpack.c.h.b16 %v112
  %v536 = vunpack.c.l.b16 %v113
  %v537 = vunpack.c.h.b16 %v113
  %v538 = vunpack.c.l.b16 %v114
  %v539 = vunpack.c.h.b16 %v114
  %v540 = vunpack.c.l.b16 %v115
  %v541 = vunpack.c.h.b16 %v115
  %v542 = vunpack.c.l.b16 %v116
  %v543 = vunpack.c.h.b16 %v116
  %v544 = vunpack.c.l.b16 %v117
  %v545 = vunpack.c.h.b16 %v117
  %v546 = vpack.c.b16 %v354, %v346
  %v547 = vpack.c.b16 %v355, %v347
  %v548 = vpack.c.b16 %v356, %v348
  %v549 = vpack.c.b16 %v357, %v349
  %v550 = vpack.c.b16 %v358, %v350
  %v551 = vpack.c.b16 %v359, %v351
  %v552 = vpack.c.b16 %v360, %v352
  %v553 = vpack.c.b16 %v361, %v353
  %v554 = vpack.c.b16 %v370, %v362
  %v555 = vpack.c.b16 %v371, %v363
  %v556 = vpack.c.b16 %v372, %v364
  %v557 = vpack.c.b16 %v373, %v365
  %v558 = vpack.c.b16 %v374, %v366
  %v559 = vpack.c.b16 %v375, %v367
  %v560 = vpack.c.b16 %v376, %v368
  %v561 = vpack.c.b16 %v377, %v369
  %v562 = vpack.c.b16 %v386, %v378
  %v563 = vpack.c.b16 %v387, %v379
  %v564 = vpack.c.b16 %v388, %v380
  %v565 = vpack.c.b16 %v389, %v381
  %v566 = vpack.c.b16 %v390, %v382
  %v567 = vpack.c.b16 %v391, %v383
  %v568 = vpack.c.b16 %v392, %v384
  %v569 = vpack.c.b16 %v393, %v385
  %v570 = vpack.c.b16 %v402, %v394
  %v571 = vpack.c.b16 %v403, %v395
  %v572 = vpack.c.b16 %v404, %v396
  %v573 = vpack.c.b16 %v405, %v397
  %v574 = vpack.c.b16 %v406, %v398
  %v575 = vpack.c.b16 %v407, %v399
  %v576 = vpack.c.b16 %v408, %v400
  %v577 = vpack.c.b16 %v409, %v401
  %v578 = vpack.c.b16 %v418, %v410
  %v579 = vpack.c.b16 %v419, %v411
  %v580 = vpack.c.b16 %v420, %v412
  %v581 = vpack.c.b16 %v421, %v413
  %v582 = vpack.c.b16 %v422, %v414
  %v583 = vpack.c.b16 %v423, %v415
  %v584 = vpack.c.b16 %v424, %v416
  %v585 = vpack.c.b16 %v425, %v417
  %v586 = vpack.c.b16 %v434, %v426
  %v587 = vpack.c.b16 %v435, %v427
  %v588 = vpack.c.b16 %v436, %v428
  %v589 = vpack.c.b16 %v437, %v429
  %v590 = vpack.c.b16 %v438, %v430
  %v591 = vpack.c.b16 %v439, %v431
  %v592 = vpack.c.b16 %v440, %v432
  %v593 = vpack.c.b16 %v441, %v433
  %v594 = vpack.c.b16 %v450, %v442
  %v595 = vpack.c.b16 %v451, %v443
  %v596 = vpack.c.b16 %v452, %v444
  %v597 = vpack.c.b16 %v453, %v445
  %v598 = vpack.c.b16 %v454, %v446
  %v599 = vpack.c.b16 %v455, %v447
  %v600 = vpack.c.b16 %v456, %v448
  %v601 = vpack.c.b16 %v457, %v449
  %v602 = vpack.c.b16 %v466, %v458
  %v603 = vpack.c.b16 %v467, %v459
  %v604 = vpack.c.b16 %v468, %v460
  %v605 = vpack.c.b16 %v469, %v461
  %v606 = vpack.c.b16 %v470, %v462
  %v607 = vpack.c.b16 %v471, %v463
  %v608 = vpack.c.b16 %v472, %v464
  %v609 = vpack.c.b16 %v473, %v465
  %v610 = vpack.c.b16 %v482, %v474
  %v611 = vpack.c.b16 %v483, %v475
  %v612 = vpack.c.b16 %v484, %v476
  %v613 = vpack.c.b16 %v485, %v477
  %v614 = vpack.c.b16 %v486, %v478
  %v615 = vpack.c.b16 %v487, %v479
  %v616 = vpack.c.b16 %v488, %v480
  %v617 = vpack.c.b16 %v489, %v481
  %v618 = vpack.c.b16 %v498, %v490
  %v619 = vpack.c.b16 %v499, %v491
  %v620 = vpack.c.b16 %v500, %v492
  %v621 = vpack.c.b16 %v501, %v493
  %v622 = vpack.c.b16 %v502, %v494
  %v623 = vpack.c.b16 %v503, %v495
  %v624 = vpack.c.b16 %v504, %v496
  %v625 = vpack.c.b16 %v505, %v497
  %v626 = vpack.c.b16 %v514, %v506
  %v627 = vpack.c.b16 %v515, %v507
  %v628 = vpack.c.b16 %v516, %v508
  %v629 = vpack.c.b16 %v517, %v509
  %v630 = vpack.c.b16 %v518, %v510
  %v631 = vpack.c.b16 %v519, %v511
  %v632 = vpack.c.b16 %v520, %v512
  %v633 = vpack.c.b16 %v521, %v513
  %v634 = vpack.c.b16 %v530, %v522
  %v635 = vpack.c.b16 %v531, %v523
  %v636 = vpack.c.b16 %v532, %v524
  %v637 = vpack.c.b16 %v533, %v525
  %v638 = vpack.c.b16 %v534, %v526
  %v639 = vpack.c.b16 %v535, %v527
  %v640 = vpack.c.b16 %v536, %v528
  %v641 = vpack.c.b16 %v537, %v529
  %v642 = vpack.c.b16 %v538, %v538
  %v643 = vpack.c.b16 %v539, %v539
  %v644 = vpack.c.b16 %v540, %v540
  %v645 = vpack.c.b16 %v541, %v541
  %v646 = vpack.c.b16 %v542, %v542
  %v647 = vpack.c.b16 %v543, %v543
  %v648 = vpack.c.b16 %v544, %v544
  %v649 = vpack.c.b16 %v545, %v545
  %v882 = vunpack.c.l.b16 %v118
  %v883 = vunpack.c.l.b16 %v119
  %v884 = vunpack.c.l.b16 %v120
  %v885 = vunpack.c.l.b16 %v121
  %v886 = vunpack.c.l.b16 %v122
  %v887 = vunpack.c.l.b16 %v123
  %v888 = vunpack.c.l.b16 %v124
  %v889 = vunpack.c.l.b16 %v125
  %v890 = vunpack.c.l.b16 %v126
  %v891 = vunpack.c.l.b16 %v127
  %v892 = vunpack.c.l.b16 %v128
  %v893 = vunpack.c.l.b16 %v129
  %v894 = vunpack.c.l.b16 %v130
  %v895 = vunpack.c.l.b16 %v131
  %v896 = vunpack.c.l.b16 %v132
  %v897 = vunpack.c.l.b16 %v133
  %v898 = vunpack.c.l.b16 %v134
  %v899 = vunpack.c.l.b16 %v135
  %v900 = vunpack.c.l.b16 %v136
  %v901 = vunpack.c.l.b16 %v137
  %v902 = vunpack.c.l.b16 %v138
  %v903 = vunpack.c.l.b16 %v139
  %v904 = vunpack.c.l.b16 %v140
  %v905 = vunpack.c.l.b16 %v141
  %v906 = vunpack.c.l.b16 %v142
  %v907 = vunpack.c.l.b16 %v143
  %v908 = vunpack.c.l.b16 %v144
  %v909 = vunpack.c.l.b16 %v145
  %v910 = vunpack.c.l.b16 %v146
  %v911 = vunpack.c.l.b16 %v147
  %v912 = vunpack.c.l.b16 %v148
  %v913 = vunpack.c.l.b16 %v149
  %v914 = vunpack.c.l.b16 %v150
  %v915 = vunpack.c.l.b16 %v151
  %v916 = vunpack.c.l.b16 %v152
  %v917 = vunpack.c.l.b16 %v153
  %v918 = vunpack.c.l.b16 %v154
  %v919 = vunpack.c.l.b16 %v155
  %v920 = vunpack.c.l.b16 %v156
  %v921 = vunpack.c.l.b16 %v157
  %v922 = vunpack.c.l.b16 %v158
  %v923 = vunpack.c.l.b16 %v159
  %v924 = vunpack.c.l.b16 %v160
  %v925 = vunpack.c.l.b16 %v161
  %v926 = vunpack.c.l.b16 %v162
  %v927 = vunpack.c.l.b16 %v163
  %v928 = vunpack.c.l.b16 %v164
  %v929 = vunpack.c.l.b16 %v165
  %v930 = vunpack.c.l.b16 %v166
  %v931 = vunpack.c.l.b16 %v167
  %v932 = vunpack.c.l.b16 %v168
  %v933 = vunpack.c.l.b16 %v169
  %v934 = vunpack.c.l.b16 %v170
  %v935 = vunpack.c.l.b16 %v171
  %v936 = vunpack.c.l.b16 %v172
  %v937 = vunpack.c.l.b16 %v173
  %v938 = vunpack.c.l.b16 %v174
  %v939 = vunpack.c.l.b16 %v175
  %v940 = vunpack.c.l.b16 %v176
  %v941 = vunpack.c.l.b16 %v177
  %v942 = vunpack.c.l.b16 %v178
  %v943 = vunpack.c.l.b16 %v179
  %v944 = vunpack.c.l.b16 %v180
  %v945 = vunpack.c.l.b16 %v181
  %v946 = vunpack.c.l.b16 %v182
  %v947 = vunpack.c.l.b16 %v183
  %v948 = vunpack.c.l.b16 %v184
  %v949 = vunpack.c.l.b16 %v185
  %v950 = vunpack.c.l.b16 %v186
  %v951 = vunpack.c.l.b16 %v187
  %v952 = vunpack.c.l.b16 %v188
  %v953 = vunpack.c.l.b16 %v189
  %v954 = vunpack.c.l.b16 %v190
  %v955 = vunpack.c.l.b16 %v191
  %v956 = vunpack.c.l.b16 %v192
  %v957 = vunpack.c.l.b16 %v193
  %v958 = vunpack.c.l.b16 %v194
  %v959 = vunpack.c.l.b16 %v195
  %v960 = vunpack.c.l.b16 %v196
  %v961 = vunpack.c.l.b16 %v197
  %v962 = vunpack.c.l.b16 %v198
  %v963 = vunpack.c.l.b16 %v199
  %v964 = vunpack.c.l.b16 %v200
  %v965 = vunpack.c.l.b16 %v201
  %v966 = vunpack.c.l.b16 %v202
  %v967 = vunpack.c.l.b16 %v203
  %v968 = vunpack.c.l.b16 %v204
  %v969 = vunpack.c.l.b16 %v205
  %v970 = vunpack.c.l.b16 %v206
  %v971 = vunpack.c.l.b16 %v207
  %v972 = vunpack.c.l.b16 %v208
  %v973 = vunpack.c.l.b16 %v209
  %v974 = vunpack.c.l.b16 %v210
  %v975 = vunpack.c.l.b16 %v211
  %v976 = vunpack.c.l.b16 %v212
  %v977 = vunpack.c.l.b16 %v213
  %v978 = vunpack.c.l.b16 %v214
  %v979 = vunpack.c.l.b16 %v215
  %v980 = vunpack.c.l.b16 %v216
  %v981 = vunpack.c.l.b16 %v217
  %v982 = vunpack.c.l.b16 %v218
  %v983 = vunpack.c.l.b16 %v219
  %v984 = vunpack.c.l.b16 %v220
  %v985 = vunpack.c.l.b16 %v221
  %v986 = vunpack.c.l.b16 %v222
  %v987 = vunpack.c.l.b16 %v223
  %v988 = vunpack.c.l.b16 %v224
  %v989 = vunpack.c.l.b16 %v225
  %v990 = vunpack.c.l.b16 %v226
  %v991 = vunpack.c.l.b16 %v227
  %v992 = vunpack.c.l.b16 %v228
  %v993 = vunpack.c.l.b16 %v229
  %v994 = vunpack.c.l.b16 %v230
  %v995 = vunpack.c.l.b16 %v231
  %v996 = vunpack.c.l.b16 %v232
  %v997 = vunpack.c.l.b16 %v233
  %v998 = vunpack.c.l.b16 %v234
  %v999 = vunpack.c.l.b16 %v235
  %v1000 = vunpack.c.l.b16 %v236
  %v1001 = vunpack.c.l.b16 %v237
  %v1002 = vunpack.c.l.b16 %v238
  %v1003 = vunpack.c.l.b16 %v239
  %v1004 = vunpack.c.l.b16 %v240
  %v1005 = vunpack.c.l.b16 %v241
  %v1006 = vunpack.c.l.b16 %v242
  %v1007 = vunpack.c.l.b16 %v243
  %v1008 = vunpack.c.l.b16 %v244
  %v1009 = vunpack.c.l.b16 %v245
  %v1010 = vpack.c.b16 %v883, %v882
  %v1011 = vpack.c.b16 %v885, %v884
  %v1012 = vpack.c.b16 %v887, %v886
  %v1013 = vpack.c.b16 %v889, %v888
  %v1014 = vpack.c.b16 %v891, %v890
  %v1015 = vpack.c.b16 %v893, %v892
  %v1016 = vpack.c.b16 %v895, %v894
  %v1017 = vpack.c.b16 %v897, %v896
  %v1018 = vpack.c.b16 %v899, %v898
  %v1019 = vpack.c.b16 %v901, %v900
  %v1020 = vpack.c.b16 %v903, %v902
  %v1021 = vpack.c.b16 %v905, %v904
  %v1022 = vpack.c.b16 %v907, %v906
  %v1023 = vpack.c.b16 %v909, %v908
  %v1024 = vpack.c.b16 %v911, %v910
  %v1025 = vpack.c.b16 %v913, %v912
  %v1026 = vpack.c.b16 %v915, %v914
  %v1027 = vpack.c.b16 %v917, %v916
  %v1028 = vpack.c.b16 %v919, %v918
  %v1029 = vpack.c.b16 %v921, %v920
  %v1030 = vpack.c.b16 %v923, %v922
  %v1031 = vpack.c.b16 %v925, %v924
  %v1032 = vpack.c.b16 %v927, %v926
  %v1033 = vpack.c.b16 %v929, %v928
  %v1034 = vpack.c.b16 %v931, %v930
  %v1035 = vpack.c.b16 %v933, %v932
  %v1036 = vpack.c.b16 %v935, %v934
  %v1037 = vpack.c.b16 %v937, %v936
  %v1038 = vpack.c.b16 %v939, %v938
  %v1039 = vpack.c.b16 %v941, %v940
  %v1040 = vpack.c.b16 %v943, %v942
  %v1041 = vpack.c.b16 %v945, %v944
  %v1042 = vpack.c.b16 %v947, %v946
  %v1043 = vpack.c.b16 %v949, %v948
  %v1044 = vpack.c.b16 %v951, %v950
  %v1045 = vpack.c.b16 %v953, %v952
  %v1046 = vpack.c.b16 %v955, %v954
  %v1047 = vpack.c.b16 %v957, %v956
  %v1048 = vpack.c.b16 %v959, %v958
  %v1049 = vpack.c.b16 %v961, %v960
  %v1050 = vpack.c.b16 %v963, %v962
  %v1051 = vpack.c.b16 %v965, %v964
  %v1052 = vpack.c.b16 %v967, %v966
  %v1053 = vpack.c.b16 %v969, %v968
  %v1054 = vpack.c.b16 %v971, %v970
  %v1055 = vpack.c.b16 %v973, %v972
  %v1056 = vpack.c.b16 %v975, %v974
  %v1057 = vpack.c.b16 %v977, %v976
  %v1058 = vpack.c.b16 %v979, %v978
  %v1059 = vpack.c.b16 %v981, %v980
  %v1060 = vpack.c.b16 %v983, %v982
  %v1061 = vpack.c.b16 %v985, %v984
  %v1062 = vpack.c.b16 %v987, %v986
  %v1063 = vpack.c.b16 %v989, %v988
  %v1064 = vpack.c.b16 %v991, %v990
  %v1065 = vpack.c.b16 %v993, %v992
  %v1066 = vpack.c.b16 %v995, %v994
  %v1067 = vpack.c.b16 %v997, %v996
  %v1068 = vpack.c.b16 %v999, %v998
  %v1069 = vpack.c.b16 %v1001, %v1000
  %v1070 = vpack.c.b16 %v1003, %v1002
  %v1071 = vpack.c.b16 %v1005, %v1004
  %v1072 = vpack.c.b16 %v1007, %v1006
  %v1073 = vpack.c.b16 %v1009, %v1008
  %1138 = vmatprep.subr.bf16.mxu0 0
  %1139 = vmatpush1.bf16.msra.mxu0 %v1010
  %1140 = vmatprep.subr.bf16.mxu0 0
  %1141 = vmatpush1.bf16.msra.mxu0 %v1011
  %1142 = vmatprep.subr.bf16.mxu0 0
  %1143 = vmatpush1.bf16.msra.mxu0 %v1012
  %1144 = vmatprep.subr.bf16.mxu0 0
  %1145 = vmatpush1.bf16.msra.mxu0 %v1013
  %1146 = vmatprep.subr.bf16.mxu0 0
  %1147 = vmatpush1.bf16.msra.mxu0 %v1014
  %1148 = vmatprep.subr.bf16.mxu0 0
  %1149 = vmatpush1.bf16.msra.mxu0 %v1015
  %1150 = vmatprep.subr.bf16.mxu0 0
  %1151 = vmatpush1.bf16.msra.mxu0 %v1016
  %1152 = vmatprep.subr.bf16.mxu0 0
  %1153 = vmatpush1.bf16.msra.mxu0 %v1017
  %1154 = vmatprep.subr.bf16.mxu0 0
  %1155 = vmatpush1.bf16.msra.mxu0 %v1018
  %1156 = vmatprep.subr.bf16.mxu0 0
  %1157 = vmatpush1.bf16.msra.mxu0 %v1019
  %1158 = vmatprep.subr.bf16.mxu0 0
  %1159 = vmatpush1.bf16.msra.mxu0 %v1020
  %1160 = vmatprep.subr.bf16.mxu0 0
  %1161 = vmatpush1.bf16.msra.mxu0 %v1021
  %1162 = vmatprep.subr.bf16.mxu0 0
  %1163 = vmatpush1.bf16.msra.mxu0 %v1022
  %1164 = vmatprep.subr.bf16.mxu0 0
  %1165 = vmatpush1.bf16.msra.mxu0 %v1023
  %1166 = vmatprep.subr.bf16.mxu0 0
  %1167 = vmatpush1.bf16.msra.mxu0 %v1024
  %1168 = vmatprep.subr.bf16.mxu0 0
  %1169 = vmatpush1.bf16.msra.mxu0 %v1025
  %1170 = vmatprep.mubr.bf16.mxu0 %v547
  %1171 = vmatmul.mubr.bf16.gmra.mrb[0].mxu0 %v546
  %v1172 = vpop.f32.mrb[0].mxu0
  %v1173 = vadd.f32 0.0, %v1172
  %v1174 = vpop.f32.mrb[0].mxu0
  %v1175 = vpop.f32.mrb[0].mxu0
  %v1176 = vadd.f32 0.0, %v1175
  %v1177 = vpop.f32.mrb[0].mxu0
  %1178 = vmatprep.mubr.bf16.mxu0 %v555
  %1179 = vmatmul.mubr.bf16.gmra.mrb[0].mxu0 %v554
  %v1180 = vpop.f32.mrb[0].mxu0
  %v1181 = vadd.f32 0.0, %v1180
  %v1182 = vpop.f32.mrb[0].mxu0
  %v1183 = vpop.f32.mrb[0].mxu0
  %v1184 = vadd.f32 0.0, %v1183
  %v1185 = vpop.f32.mrb[0].mxu0
  %1186 = vmatprep.mubr.bf16.mxu0 %v563
  %1187 = vmatmul.mubr.bf16.gmra.mrb[0].mxu0 %v562
  %v1188 = vpop.f32.mrb[0].mxu0
  %v1189 = vadd.f32 0.0, %v1188
  %v1190 = vpop.f32.mrb[0].mxu0
  %v1191 = vpop.f32.mrb[0].mxu0
  %v1192 = vadd.f32 0.0, %v1191
  %v1193 = vpop.f32.mrb[0].mxu0
  %1194 = vmatprep.mubr.bf16.mxu0 %v571
  %1195 = vmatmul.mubr.bf16.gmra.mrb[0].mxu0 %v570
  %v1196 = vpop.f32.mrb[0].mxu0
  %v1197 = vadd.f32 0.0, %v1196
  %v1198 = vpop.f32.mrb[0].mxu0
  %v1199 = vpop.f32.mrb[0].mxu0
  %v1200 = vadd.f32 0.0, %v1199
  %v1201 = vpop.f32.mrb[0].mxu0
  %1202 = vmatprep.mubr.bf16.mxu0 %v579
  %1203 = vmatmul.mubr.bf16.gmra.mrb[0].mxu0 %v578
  %v1204 = vpop.f32.mrb[0].mxu0
  %v1205 = vadd.f32 0.0, %v1204
  %v1206 = vpop.f32.mrb[0].mxu0
  %v1207 = vpop.f32.mrb[0].mxu0
  %v1208 = vadd.f32 0.0, %v1207
  %v1209 = vpop.f32.mrb[0].mxu0
  %1210 = vmatprep.mubr.bf16.mxu0 %v587
  %1211 = vmatmul.mubr.bf16.gmra.mrb[0].mxu0 %v586
  %v1212 = vpop.f32.mrb[0].mxu0
  %v1213 = vadd.f32 0.0, %v1212
  %v1214 = vpop.f32.mrb[0].mxu0
  %v1215 = vpop.f32.mrb[0].mxu0
  %v1216 = vadd.f32 0.0, %v1215
  %v1217 = vpop.f32.mrb[0].mxu0
  %1218 = vmatprep.mubr.bf16.mxu0 %v595
  %1219 = vmatmul.mubr.bf16.gmra.mrb[0].mxu0 %v594
  %v1220 = vpop.f32.mrb[0].mxu0
  %v1221 = vadd.f32 0.0, %v1220
  %v1222 = vpop.f32.mrb[0].mxu0
  %v1223 = vpop.f32.mrb[0].mxu0
  %v1224 = vadd.f32 0.0, %v1223
  %v1225 = vpop.f32.mrb[0].mxu0
  %1226 = vmatprep.mubr.bf16.mxu0 %v603
  %1227 = vmatmul.mubr.bf16.gmra.mrb[0].mxu0 %v602
  %v1228 = vpop.f32.mrb[0].mxu0
  %v1229 = vadd.f32 0.0, %v1228
  %v1230 = vpop.f32.mrb[0].mxu0
  %v1231 = vpop.f32.mrb[0].mxu0
  %v1232 = vadd.f32 0.0, %v1231
  %v1233 = vpop.f32.mrb[0].mxu0
  %1234 = vmatprep.mubr.bf16.mxu0 %v611
  %1235 = vmatmul.mubr.bf16.gmra.mrb[0].mxu0 %v610
  %v1236 = vpop.f32.mrb[0].mxu0
  %v1237 = vadd.f32 0.0, %v1236
  %v1238 = vpop.f32.mrb[0].mxu0
  %v1239 = vpop.f32.mrb[0].mxu0
  %v1240 = vadd.f32 0.0, %v1239
  %v1241 = vpop.f32.mrb[0].mxu0
  %1242 = vmatprep.mubr.bf16.mxu0 %v619
  %1243 = vmatmul.mubr.bf16.gmra.mrb[0].mxu0 %v618
  %v1244 = vpop.f32.mrb[0].mxu0
  %v1245 = vadd.f32 0.0, %v1244
  %v1246 = vpop.f32.mrb[0].mxu0
  %v1247 = vpop.f32.mrb[0].mxu0
  %v1248 = vadd.f32 0.0, %v1247
  %v1249 = vpop.f32.mrb[0].mxu0
  %1250 = vmatprep.mubr.bf16.mxu0 %v627
  %1251 = vmatmul.mubr.bf16.gmra.mrb[0].mxu0 %v626
  %v1252 = vpop.f32.mrb[0].mxu0
  %v1253 = vadd.f32 0.0, %v1252
  %v1254 = vpop.f32.mrb[0].mxu0
  %v1255 = vpop.f32.mrb[0].mxu0
  %v1256 = vadd.f32 0.0, %v1255
  %v1257 = vpop.f32.mrb[0].mxu0
  %1258 = vmatprep.mubr.bf16.mxu0 %v635
  %1259 = vmatmul.mubr.bf16.gmra.mrb[0].mxu0 %v634
  %v1260 = vpop.f32.mrb[0].mxu0
  %v1261 = vadd.f32 0.0, %v1260
  %v1262 = vpop.f32.mrb[0].mxu0
  %v1263 = vpop.f32.mrb[0].mxu0
  %v1264 = vadd.f32 0.0, %v1263
  %v1265 = vpop.f32.mrb[0].mxu0
  %1266 = vmatprep.mubr.bf16.mxu0 %v643
  %1267 = vmatmul.mubr.bf16.gmra.mrb[0].mxu0 %v642
  %v1268 = vpop.f32.mrb[0].mxu0
  %v1269 = vadd.f32 0.0, %v1268
  %v1270 = vpop.f32.mrb[0].mxu0
  %v1271 = vpop.f32.mrb[0].mxu0
  %v1272 = vpop.f32.mrb[0].mxu0
  %1273 = vdwg.mxu0
  %1274 = vmatprep.subr.bf16.mxu0 0
  %1275 = vmatpush1.bf16.msra.mxu0 %v1026
  %1276 = vmatprep.subr.bf16.mxu0 0
  %1277 = vmatpush1.bf16.msra.mxu0 %v1027
  %1278 = vmatprep.subr.bf16.mxu0 0
  %1279 = vmatpush1.bf16.msra.mxu0 %v1028
  %1280 = vmatprep.subr.bf16.mxu0 0
  %1281 = vmatpush1.bf16.msra.mxu0 %v1029
  %1282 = vmatprep.subr.bf16.mxu0 0
  %1283 = vmatpush1.bf16.msra.mxu0 %v1030
  %1284 = vmatprep.subr.bf16.mxu0 0
  %1285 = vmatpush1.bf16.msra.mxu0 %v1031
  %1286 = vmatprep.subr.bf16.mxu0 0
  %1287 = vmatpush1.bf16.msra.mxu0 %v1032
  %1288 = vmatprep.subr.bf16.mxu0 0
  %1289 = vmatpush1.bf16.msra.mxu0 %v1033
  %1290 = vmatprep.subr.bf16.mxu0 0
  %1291 = vmatpush1.bf16.msra.mxu0 %v1034
  %1292 = vmatprep.subr.bf16.mxu0 0
  %1293 = vmatpush1.bf16.msra.mxu0 %v1035
  %1294 = vmatprep.subr.bf16.mxu0 0
  %1295 = vmatpush1.bf16.msra.mxu0 %v1036
  %1296 = vmatprep.subr.bf16.mxu0 0
  %1297 = vmatpush1.bf16.msra.mxu0 %v1037
  %1298 = vmatprep.subr.bf16.mxu0 0
  %1299 = vmatpush1.bf16.msra.mxu0 %v1038
  %1300 = vmatprep.subr.bf16.mxu0 0
  %1301 = vmatpush1.bf16.msra.mxu0 %v1039
  %1302 = vmatprep.subr.bf16.mxu0 0
  %1303 = vmatpush1.bf16.msra.mxu0 %v1040
  %1304 = vmatprep.subr.bf16.mxu0 0
  %1305 = vmatpush1.bf16.msra.mxu0 %v1041
  %1306 = vmatprep.mubr.bf16.mxu0 %v549
  %1307 = vmatmul.mubr.bf16.gmra.mrb[0].mxu0 %v548
  %v1308 = vpop.f32.mrb[0].mxu0
  %v1309 = vadd.f32 %v1173, %v1308
  %v1310 = vpop.f32.mrb[0].mxu0
  %v1311 = vpop.f32.mrb[0].mxu0
  %v1312 = vadd.f32 %v1176, %v1311
  %v1313 = vpop.f32.mrb[0].mxu0
  %1314 = vmatprep.mubr.bf16.mxu0 %v557
  %1315 = vmatmul.mubr.bf16.gmra.mrb[0].mxu0 %v556
  %v1316 = vpop.f32.mrb[0].mxu0
  %v1317 = vadd.f32 %v1181, %v1316
  %v1318 = vpop.f32.mrb[0].mxu0
  %v1319 = vpop.f32.mrb[0].mxu0
  %v1320 = vadd.f32 %v1184, %v1319
  %v1321 = vpop.f32.mrb[0].mxu0
  %1322 = vmatprep.mubr.bf16.mxu0 %v565
  %1323 = vmatmul.mubr.bf16.gmra.mrb[0].mxu0 %v564
  %v1324 = vpop.f32.mrb[0].mxu0
  %v1325 = vadd.f32 %v1189, %v1324
  %v1326 = vpop.f32.mrb[0].mxu0
  %v1327 = vpop.f32.mrb[0].mxu0
  %v1328 = vadd.f32 %v1192, %v1327
  %v1329 = vpop.f32.mrb[0].mxu0
  %1330 = vmatprep.mubr.bf16.mxu0 %v573
  %1331 = vmatmul.mubr.bf16.gmra.mrb[0].mxu0 %v572
  %v1332 = vpop.f32.mrb[0].mxu0
  %v1333 = vadd.f32 %v1197, %v1332
  %v1334 = vpop.f32.mrb[0].mxu0
  %v1335 = vpop.f32.mrb[0].mxu0
  %v1336 = vadd.f32 %v1200, %v1335
  %v1337 = vpop.f32.mrb[0].mxu0
  %1338 = vmatprep.mubr.bf16.mxu0 %v581
  %1339 = vmatmul.mubr.bf16.gmra.mrb[0].mxu0 %v580
  %v1340 = vpop.f32.mrb[0].mxu0
  %v1341 = vadd.f32 %v1205, %v1340
  %v1342 = vpop.f32.mrb[0].mxu0
  %v1343 = vpop.f32.mrb[0].mxu0
  %v1344 = vadd.f32 %v1208, %v1343
  %v1345 = vpop.f32.mrb[0].mxu0
  %1346 = vmatprep.mubr.bf16.mxu0 %v589
  %1347 = vmatmul.mubr.bf16.gmra.mrb[0].mxu0 %v588
  %v1348 = vpop.f32.mrb[0].mxu0
  %v1349 = vadd.f32 %v1213, %v1348
  %v1350 = vpop.f32.mrb[0].mxu0
  %v1351 = vpop.f32.mrb[0].mxu0
  %v1352 = vadd.f32 %v1216, %v1351
  %v1353 = vpop.f32.mrb[0].mxu0
  %1354 = vmatprep.mubr.bf16.mxu0 %v597
  %1355 = vmatmul.mubr.bf16.gmra.mrb[0].mxu0 %v596
  %v1356 = vpop.f32.mrb[0].mxu0
  %v1357 = vadd.f32 %v1221, %v1356
  %v1358 = vpop.f32.mrb[0].mxu0
  %v1359 = vpop.f32.mrb[0].mxu0
  %v1360 = vadd.f32 %v1224, %v1359
  %v1361 = vpop.f32.mrb[0].mxu0
  %1362 = vmatprep.mubr.bf16.mxu0 %v605
  %1363 = vmatmul.mubr.bf16.gmra.mrb[0].mxu0 %v604
  %v1364 = vpop.f32.mrb[0].mxu0
  %v1365 = vadd.f32 %v1229, %v1364
  %v1366 = vpop.f32.mrb[0].mxu0
  %v1367 = vpop.f32.mrb[0].mxu0
  %v1368 = vadd.f32 %v1232, %v1367
  %v1369 = vpop.f32.mrb[0].mxu0
  %1370 = vmatprep.mubr.bf16.mxu0 %v613
  %1371 = vmatmul.mubr.bf16.gmra.mrb[0].mxu0 %v612
  %v1372 = vpop.f32.mrb[0].mxu0
  %v1373 = vadd.f32 %v1237, %v1372
  %v1374 = vpop.f32.mrb[0].mxu0
  %v1375 = vpop.f32.mrb[0].mxu0
  %v1376 = vadd.f32 %v1240, %v1375
  %v1377 = vpop.f32.mrb[0].mxu0
  %1378 = vmatprep.mubr.bf16.mxu0 %v621
  %1379 = vmatmul.mubr.bf16.gmra.mrb[0].mxu0 %v620
  %v1380 = vpop.f32.mrb[0].mxu0
  %v1381 = vadd.f32 %v1245, %v1380
  %v1382 = vpop.f32.mrb[0].mxu0
  %v1383 = vpop.f32.mrb[0].mxu0
  %v1384 = vadd.f32 %v1248, %v1383
  %v1385 = vpop.f32.mrb[0].mxu0
  %1386 = vmatprep.mubr.bf16.mxu0 %v629
  %1387 = vmatmul.mubr.bf16.gmra.mrb[0].mxu0 %v628
  %v1388 = vpop.f32.mrb[0].mxu0
  %v1389 = vadd.f32 %v1253, %v1388
  %v1390 = vpop.f32.mrb[0].mxu0
  %v1391 = vpop.f32.mrb[0].mxu0
  %v1392 = vadd.f32 %v1256, %v1391
  %v1393 = vpop.f32.mrb[0].mxu0
  %1394 = vmatprep.mubr.bf16.mxu0 %v637
  %1395 = vmatmul.mubr.bf16.gmra.mrb[0].mxu0 %v636
  %v1396 = vpop.f32.mrb[0].mxu0
  %v1397 = vadd.f32 %v1261, %v1396
  %v1398 = vpop.f32.mrb[0].mxu0
  %v1399 = vpop.f32.mrb[0].mxu0
  %v1400 = vadd.f32 %v1264, %v1399
  %v1401 = vpop.f32.mrb[0].mxu0
  %1402 = vmatprep.mubr.bf16.mxu0 %v645
  %1403 = vmatmul.mubr.bf16.gmra.mrb[0].mxu0 %v644
  %v1404 = vpop.f32.mrb[0].mxu0
  %v1405 = vadd.f32 %v1269, %v1404
  %v1406 = vpop.f32.mrb[0].mxu0
  %v1407 = vpop.f32.mrb[0].mxu0
  %v1408 = vpop.f32.mrb[0].mxu0
  %1409 = vdwg.mxu0
  %1410 = vmatprep.subr.bf16.mxu0 0
  %1411 = vmatpush1.bf16.msra.mxu0 %v1042
  %1412 = vmatprep.subr.bf16.mxu0 0
  %1413 = vmatpush1.bf16.msra.mxu0 %v1043
  %1414 = vmatprep.subr.bf16.mxu0 0
  %1415 = vmatpush1.bf16.msra.mxu0 %v1044
  %1416 = vmatprep.subr.bf16.mxu0 0
  %1417 = vmatpush1.bf16.msra.mxu0 %v1045
  %1418 = vmatprep.subr.bf16.mxu0 0
  %1419 = vmatpush1.bf16.msra.mxu0 %v1046
  %1420 = vmatprep.subr.bf16.mxu0 0
  %1421 = vmatpush1.bf16.msra.mxu0 %v1047
  %1422 = vmatprep.subr.bf16.mxu0 0
  %1423 = vmatpush1.bf16.msra.mxu0 %v1048
  %1424 = vmatprep.subr.bf16.mxu0 0
  %1425 = vmatpush1.bf16.msra.mxu0 %v1049
  %1426 = vmatprep.subr.bf16.mxu0 0
  %1427 = vmatpush1.bf16.msra.mxu0 %v1050
  %1428 = vmatprep.subr.bf16.mxu0 0
  %1429 = vmatpush1.bf16.msra.mxu0 %v1051
  %1430 = vmatprep.subr.bf16.mxu0 0
  %1431 = vmatpush1.bf16.msra.mxu0 %v1052
  %1432 = vmatprep.subr.bf16.mxu0 0
  %1433 = vmatpush1.bf16.msra.mxu0 %v1053
  %1434 = vmatprep.subr.bf16.mxu0 0
  %1435 = vmatpush1.bf16.msra.mxu0 %v1054
  %1436 = vmatprep.subr.bf16.mxu0 0
  %1437 = vmatpush1.bf16.msra.mxu0 %v1055
  %1438 = vmatprep.subr.bf16.mxu0 0
  %1439 = vmatpush1.bf16.msra.mxu0 %v1056
  %1440 = vmatprep.subr.bf16.mxu0 0
  %1441 = vmatpush1.bf16.msra.mxu0 %v1057
  %1442 = vmatprep.mubr.bf16.mxu0 %v551
  %1443 = vmatmul.mubr.bf16.gmra.mrb[0].mxu0 %v550
  %v1444 = vpop.f32.mrb[0].mxu0
  %v1445 = vadd.f32 %v1309, %v1444
  %v1446 = vpop.f32.mrb[0].mxu0
  %v1447 = vpop.f32.mrb[0].mxu0
  %v1448 = vadd.f32 %v1312, %v1447
  %v1449 = vpop.f32.mrb[0].mxu0
  %1450 = vmatprep.mubr.bf16.mxu0 %v559
  %1451 = vmatmul.mubr.bf16.gmra.mrb[0].mxu0 %v558
  %v1452 = vpop.f32.mrb[0].mxu0
  %v1453 = vadd.f32 %v1317, %v1452
  %v1454 = vpop.f32.mrb[0].mxu0
  %v1455 = vpop.f32.mrb[0].mxu0
  %v1456 = vadd.f32 %v1320, %v1455
  %v1457 = vpop.f32.mrb[0].mxu0
  %1458 = vmatprep.mubr.bf16.mxu0 %v567
  %1459 = vmatmul.mubr.bf16.gmra.mrb[0].mxu0 %v566
  %v1460 = vpop.f32.mrb[0].mxu0
  %v1461 = vadd.f32 %v1325, %v1460
  %v1462 = vpop.f32.mrb[0].mxu0
  %v1463 = vpop.f32.mrb[0].mxu0
  %v1464 = vadd.f32 %v1328, %v1463
  %v1465 = vpop.f32.mrb[0].mxu0
  %1466 = vmatprep.mubr.bf16.mxu0 %v575
  %1467 = vmatmul.mubr.bf16.gmra.mrb[0].mxu0 %v574
  %v1468 = vpop.f32.mrb[0].mxu0
  %v1469 = vadd.f32 %v1333, %v1468
  %v1470 = vpop.f32.mrb[0].mxu0
  %v1471 = vpop.f32.mrb[0].mxu0
  %v1472 = vadd.f32 %v1336, %v1471
  %v1473 = vpop.f32.mrb[0].mxu0
  %1474 = vmatprep.mubr.bf16.mxu0 %v583
  %1475 = vmatmul.mubr.bf16.gmra.mrb[0].mxu0 %v582
  %v1476 = vpop.f32.mrb[0].mxu0
  %v1477 = vadd.f32 %v1341, %v1476
  %v1478 = vpop.f32.mrb[0].mxu0
  %v1479 = vpop.f32.mrb[0].mxu0
  %v1480 = vadd.f32 %v1344, %v1479
  %v1481 = vpop.f32.mrb[0].mxu0
  %1482 = vmatprep.mubr.bf16.mxu0 %v591
  %1483 = vmatmul.mubr.bf16.gmra.mrb[0].mxu0 %v590
  %v1484 = vpop.f32.mrb[0].mxu0
  %v1485 = vadd.f32 %v1349, %v1484
  %v1486 = vpop.f32.mrb[0].mxu0
  %v1487 = vpop.f32.mrb[0].mxu0
  %v1488 = vadd.f32 %v1352, %v1487
  %v1489 = vpop.f32.mrb[0].mxu0
  %1490 = vmatprep.mubr.bf16.mxu0 %v599
  %1491 = vmatmul.mubr.bf16.gmra.mrb[0].mxu0 %v598
  %v1492 = vpop.f32.mrb[0].mxu0
  %v1493 = vadd.f32 %v1357, %v1492
  %v1494 = vpop.f32.mrb[0].mxu0
  %v1495 = vpop.f32.mrb[0].mxu0
  %v1496 = vadd.f32 %v1360, %v1495
  %v1497 = vpop.f32.mrb[0].mxu0
  %1498 = vmatprep.mubr.bf16.mxu0 %v607
  %1499 = vmatmul.mubr.bf16.gmra.mrb[0].mxu0 %v606
  %v1500 = vpop.f32.mrb[0].mxu0
  %v1501 = vadd.f32 %v1365, %v1500
  %v1502 = vpop.f32.mrb[0].mxu0
  %v1503 = vpop.f32.mrb[0].mxu0
  %v1504 = vadd.f32 %v1368, %v1503
  %v1505 = vpop.f32.mrb[0].mxu0
  %1506 = vmatprep.mubr.bf16.mxu0 %v615
  %1507 = vmatmul.mubr.bf16.gmra.mrb[0].mxu0 %v614
  %v1508 = vpop.f32.mrb[0].mxu0
  %v1509 = vadd.f32 %v1373, %v1508
  %v1510 = vpop.f32.mrb[0].mxu0
  %v1511 = vpop.f32.mrb[0].mxu0
  %v1512 = vadd.f32 %v1376, %v1511
  %v1513 = vpop.f32.mrb[0].mxu0
  %1514 = vmatprep.mubr.bf16.mxu0 %v623
  %1515 = vmatmul.mubr.bf16.gmra.mrb[0].mxu0 %v622
  %v1516 = vpop.f32.mrb[0].mxu0
  %v1517 = vadd.f32 %v1381, %v1516
  %v1518 = vpop.f32.mrb[0].mxu0
  %v1519 = vpop.f32.mrb[0].mxu0
  %v1520 = vadd.f32 %v1384, %v1519
  %v1521 = vpop.f32.mrb[0].mxu0
  %1522 = vmatprep.mubr.bf16.mxu0 %v631
  %1523 = vmatmul.mubr.bf16.gmra.mrb[0].mxu0 %v630
  %v1524 = vpop.f32.mrb[0].mxu0
  %v1525 = vadd.f32 %v1389, %v1524
  %v1526 = vpop.f32.mrb[0].mxu0
  %v1527 = vpop.f32.mrb[0].mxu0
  %v1528 = vadd.f32 %v1392, %v1527
  %v1529 = vpop.f32.mrb[0].mxu0
  %1530 = vmatprep.mubr.bf16.mxu0 %v639
  %1531 = vmatmul.mubr.bf16.gmra.mrb[0].mxu0 %v638
  %v1532 = vpop.f32.mrb[0].mxu0
  %v1533 = vadd.f32 %v1397, %v1532
  %v1534 = vpop.f32.mrb[0].mxu0
  %v1535 = vpop.f32.mrb[0].mxu0
  %v1536 = vadd.f32 %v1400, %v1535
  %v1537 = vpop.f32.mrb[0].mxu0
  %1538 = vmatprep.mubr.bf16.mxu0 %v647
  %1539 = vmatmul.mubr.bf16.gmra.mrb[0].mxu0 %v646
  %v1540 = vpop.f32.mrb[0].mxu0
  %v1541 = vadd.f32 %v1405, %v1540
  %v1542 = vpop.f32.mrb[0].mxu0
  %v1543 = vpop.f32.mrb[0].mxu0
  %v1544 = vpop.f32.mrb[0].mxu0
  %1545 = vdwg.mxu0
  %1546 = vmatprep.subr.bf16.mxu0 0
  %1547 = vmatpush1.bf16.msra.mxu0 %v1058
  %1548 = vmatprep.subr.bf16.mxu0 0
  %1549 = vmatpush1.bf16.msra.mxu0 %v1059
  %1550 = vmatprep.subr.bf16.mxu0 0
  %1551 = vmatpush1.bf16.msra.mxu0 %v1060
  %1552 = vmatprep.subr.bf16.mxu0 0
  %1553 = vmatpush1.bf16.msra.mxu0 %v1061
  %1554 = vmatprep.subr.bf16.mxu0 0
  %1555 = vmatpush1.bf16.msra.mxu0 %v1062
  %1556 = vmatprep.subr.bf16.mxu0 0
  %1557 = vmatpush1.bf16.msra.mxu0 %v1063
  %1558 = vmatprep.subr.bf16.mxu0 0
  %1559 = vmatpush1.bf16.msra.mxu0 %v1064
  %1560 = vmatprep.subr.bf16.mxu0 0
  %1561 = vmatpush1.bf16.msra.mxu0 %v1065
  %1562 = vmatprep.subr.bf16.mxu0 0
  %1563 = vmatpush1.bf16.msra.mxu0 %v1066
  %1564 = vmatprep.subr.bf16.mxu0 0
  %1565 = vmatpush1.bf16.msra.mxu0 %v1067
  %1566 = vmatprep.subr.bf16.mxu0 0
  %1567 = vmatpush1.bf16.msra.mxu0 %v1068
  %1568 = vmatprep.subr.bf16.mxu0 0
  %1569 = vmatpush1.bf16.msra.mxu0 %v1069
  %1570 = vmatprep.subr.bf16.mxu0 0
  %1571 = vmatpush1.bf16.msra.mxu0 %v1070
  %1572 = vmatprep.subr.bf16.mxu0 0
  %1573 = vmatpush1.bf16.msra.mxu0 %v1071
  %1574 = vmatprep.subr.bf16.mxu0 0
  %1575 = vmatpush1.bf16.msra.mxu0 %v1072
  %1576 = vmatprep.subr.bf16.mxu0 0
  %1577 = vmatpush1.bf16.msra.mxu0 %v1073
  %1578 = vmatprep.mubr.bf16.mxu0 %v553
  %1579 = vmatmul.mubr.bf16.gmra.mrb[0].mxu0 %v552
  %v1580 = vpop.f32.mrb[0].mxu0
  %v1581 = vadd.f32 %v1445, %v1580
  %v1582 = vpop.f32.mrb[0].mxu0
  %v1583 = vpop.f32.mrb[0].mxu0
  %v1584 = vadd.f32 %v1448, %v1583
  %v1585 = vpop.f32.mrb[0].mxu0
  %1586 = vmatprep.mubr.bf16.mxu0 %v561
  %1587 = vmatmul.mubr.bf16.gmra.mrb[0].mxu0 %v560
  %v1588 = vpop.f32.mrb[0].mxu0
  %v1589 = vadd.f32 %v1453, %v1588
  %v1590 = vpop.f32.mrb[0].mxu0
  %v1591 = vpop.f32.mrb[0].mxu0
  %v1592 = vadd.f32 %v1456, %v1591
  %v1593 = vpop.f32.mrb[0].mxu0
  %1594 = vmatprep.mubr.bf16.mxu0 %v569
  %1595 = vmatmul.mubr.bf16.gmra.mrb[0].mxu0 %v568
  %v1596 = vpop.f32.mrb[0].mxu0
  %v1597 = vadd.f32 %v1461, %v1596
  %v1598 = vpop.f32.mrb[0].mxu0
  %v1599 = vpop.f32.mrb[0].mxu0
  %v1600 = vadd.f32 %v1464, %v1599
  %v1601 = vpop.f32.mrb[0].mxu0
  %1602 = vmatprep.mubr.bf16.mxu0 %v577
  %1603 = vmatmul.mubr.bf16.gmra.mrb[0].mxu0 %v576
  %v1604 = vpop.f32.mrb[0].mxu0
  %v1605 = vadd.f32 %v1469, %v1604
  %v1606 = vpop.f32.mrb[0].mxu0
  %v1607 = vpop.f32.mrb[0].mxu0
  %v1608 = vadd.f32 %v1472, %v1607
  %v1609 = vpop.f32.mrb[0].mxu0
  %1610 = vmatprep.mubr.bf16.mxu0 %v585
  %1611 = vmatmul.mubr.bf16.gmra.mrb[0].mxu0 %v584
  %v1612 = vpop.f32.mrb[0].mxu0
  %v1613 = vadd.f32 %v1477, %v1612
  %v1614 = vpop.f32.mrb[0].mxu0
  %v1615 = vpop.f32.mrb[0].mxu0
  %v1616 = vadd.f32 %v1480, %v1615
  %v1617 = vpop.f32.mrb[0].mxu0
  %1618 = vmatprep.mubr.bf16.mxu0 %v593
  %1619 = vmatmul.mubr.bf16.gmra.mrb[0].mxu0 %v592
  %v1620 = vpop.f32.mrb[0].mxu0
  %v1621 = vadd.f32 %v1485, %v1620
  %v1622 = vpop.f32.mrb[0].mxu0
  %v1623 = vpop.f32.mrb[0].mxu0
  %v1624 = vadd.f32 %v1488, %v1623
  %v1625 = vpop.f32.mrb[0].mxu0
  %1626 = vmatprep.mubr.bf16.mxu0 %v601
  %1627 = vmatmul.mubr.bf16.gmra.mrb[0].mxu0 %v600
  %v1628 = vpop.f32.mrb[0].mxu0
  %v1629 = vadd.f32 %v1493, %v1628
  %v1630 = vpop.f32.mrb[0].mxu0
  %v1631 = vpop.f32.mrb[0].mxu0
  %v1632 = vadd.f32 %v1496, %v1631
  %v1633 = vpop.f32.mrb[0].mxu0
  %1634 = vmatprep.mubr.bf16.mxu0 %v609
  %1635 = vmatmul.mubr.bf16.gmra.mrb[0].mxu0 %v608
  %v1636 = vpop.f32.mrb[0].mxu0
  %v1637 = vadd.f32 %v1501, %v1636
  %v1638 = vpop.f32.mrb[0].mxu0
  %v1639 = vpop.f32.mrb[0].mxu0
  %v1640 = vadd.f32 %v1504, %v1639
  %v1641 = vpop.f32.mrb[0].mxu0
  %1642 = vmatprep.mubr.bf16.mxu0 %v617
  %1643 = vmatmul.mubr.bf16.gmra.mrb[0].mxu0 %v616
  %v1644 = vpop.f32.mrb[0].mxu0
  %v1645 = vadd.f32 %v1509, %v1644
  %v1646 = vpop.f32.mrb[0].mxu0
  %v1647 = vpop.f32.mrb[0].mxu0
  %v1648 = vadd.f32 %v1512, %v1647
  %v1649 = vpop.f32.mrb[0].mxu0
  %1650 = vmatprep.mubr.bf16.mxu0 %v625
  %1651 = vmatmul.mubr.bf16.gmra.mrb[0].mxu0 %v624
  %v1652 = vpop.f32.mrb[0].mxu0
  %v1653 = vadd.f32 %v1517, %v1652
  %v1654 = vpop.f32.mrb[0].mxu0
  %v1655 = vpop.f32.mrb[0].mxu0
  %v1656 = vadd.f32 %v1520, %v1655
  %v1657 = vpop.f32.mrb[0].mxu0
  %1658 = vmatprep.mubr.bf16.mxu0 %v633
  %1659 = vmatmul.mubr.bf16.gmra.mrb[0].mxu0 %v632
  %v1660 = vpop.f32.mrb[0].mxu0
  %v1661 = vadd.f32 %v1525, %v1660
  %v1662 = vpop.f32.mrb[0].mxu0
  %v1663 = vpop.f32.mrb[0].mxu0
  %v1664 = vadd.f32 %v1528, %v1663
  %v1665 = vpop.f32.mrb[0].mxu0
  %1666 = vmatprep.mubr.bf16.mxu0 %v641
  %1667 = vmatmul.mubr.bf16.gmra.mrb[0].mxu0 %v640
  %v1668 = vpop.f32.mrb[0].mxu0
  %v1669 = vadd.f32 %v1533, %v1668
  %v1670 = vpop.f32.mrb[0].mxu0
  %v1671 = vpop.f32.mrb[0].mxu0
  %v1672 = vadd.f32 %v1536, %v1671
  %v1673 = vpop.f32.mrb[0].mxu0
  %1674 = vmatprep.mubr.bf16.mxu0 %v649
  %1675 = vmatmul.mubr.bf16.gmra.mrb[0].mxu0 %v648
  %v1676 = vpop.f32.mrb[0].mxu0
  %v1677 = vadd.f32 %v1541, %v1676
  %v1678 = vpop.f32.mrb[0].mxu0
  %v1679 = vpop.f32.mrb[0].mxu0
  %v1680 = vpop.f32.mrb[0].mxu0
  %1681 = vdwg.mxu0
  %vm1682 = vcmask 261120
  %v1683 = vsel %vm1682, %v1581, 0.0
  %v1684 = vsel %vm1682, %v1584, 0.0
  %v1685 = vadd.f32 %v1683, %v1684
  %v1686 = vsel %vm1682, %v1589, 0.0
  %v1687 = vadd.f32 %v1685, %v1686
  %v1688 = vsel %vm1682, %v1592, 0.0
  %v1689 = vadd.f32 %v1687, %v1688
  %v1690 = vsel %vm1682, %v1597, 0.0
  %v1691 = vadd.f32 %v1689, %v1690
  %v1692 = vsel %vm1682, %v1600, 0.0
  %v1693 = vadd.f32 %v1691, %v1692
  %v1694 = vsel %vm1682, %v1605, 0.0
  %v1695 = vadd.f32 %v1693, %v1694
  %v1696 = vsel %vm1682, %v1608, 0.0
  %v1697 = vadd.f32 %v1695, %v1696
  %v1698 = vsel %vm1682, %v1613, 0.0
  %v1699 = vadd.f32 %v1697, %v1698
  %v1700 = vsel %vm1682, %v1616, 0.0
  %v1701 = vadd.f32 %v1699, %v1700
  %v1702 = vsel %vm1682, %v1621, 0.0
  %v1703 = vadd.f32 %v1701, %v1702
  %v1704 = vsel %vm1682, %v1624, 0.0
  %v1705 = vadd.f32 %v1703, %v1704
  %v1706 = vsel %vm1682, %v1629, 0.0
  %v1707 = vadd.f32 %v1705, %v1706
  %v1708 = vsel %vm1682, %v1632, 0.0
  %v1709 = vadd.f32 %v1707, %v1708
  %v1710 = vsel %vm1682, %v1637, 0.0
  %v1711 = vadd.f32 %v1709, %v1710
  %v1712 = vsel %vm1682, %v1640, 0.0
  %v1713 = vadd.f32 %v1711, %v1712
  %v1714 = vsel %vm1682, %v1645, 0.0
  %v1715 = vadd.f32 %v1713, %v1714
  %v1716 = vsel %vm1682, %v1648, 0.0
  %v1717 = vadd.f32 %v1715, %v1716
  %v1718 = vsel %vm1682, %v1653, 0.0
  %v1719 = vadd.f32 %v1717, %v1718
  %v1720 = vsel %vm1682, %v1656, 0.0
  %v1721 = vadd.f32 %v1719, %v1720
  %v1722 = vsel %vm1682, %v1661, 0.0
  %v1723 = vadd.f32 %v1721, %v1722
  %v1724 = vsel %vm1682, %v1664, 0.0
  %v1725 = vadd.f32 %v1723, %v1724
  %v1726 = vsel %vm1682, %v1669, 0.0
  %v1727 = vadd.f32 %v1725, %v1726
  %v1728 = vsel %vm1682, %v1672, 0.0
  %v1729 = vadd.f32 %v1727, %v1728
  %v1730 = vsel %vm1682, %v1677, 0.0
  %v1731 = vadd.f32 %v1729, %v1730
  %v1732 = vrot.slane %v1731, 4
  %v1733 = vadd.f32 %v1731, %v1732
  %v1734 = vrot.slane %v1733, 2
  %v1735 = vadd.f32 %v1733, %v1734
  %v1736 = vrot.slane %v1735, 1
  %v1737 = vadd.f32 %v1735, %v1736
  %v1738 = vrcp.pop 200.0
  %v1739 = vmul.f32 %v1737, %v1738
  %v1740 = vmul.f32 %v1581, %v1581
  %v1741 = vmul.f32 %v1584, %v1584
  %v1742 = vmul.f32 %v1589, %v1589
  %v1743 = vmul.f32 %v1592, %v1592
  %v1744 = vmul.f32 %v1597, %v1597
  %v1745 = vmul.f32 %v1600, %v1600
  %v1746 = vmul.f32 %v1605, %v1605
  %v1747 = vmul.f32 %v1608, %v1608
  %v1748 = vmul.f32 %v1613, %v1613
  %v1749 = vmul.f32 %v1616, %v1616
  %v1750 = vmul.f32 %v1621, %v1621
  %v1751 = vmul.f32 %v1624, %v1624
  %v1752 = vmul.f32 %v1629, %v1629
  %v1753 = vmul.f32 %v1632, %v1632
  %v1754 = vmul.f32 %v1637, %v1637
  %v1755 = vmul.f32 %v1640, %v1640
  %v1756 = vmul.f32 %v1645, %v1645
  %v1757 = vmul.f32 %v1648, %v1648
  %v1758 = vmul.f32 %v1653, %v1653
  %v1759 = vmul.f32 %v1656, %v1656
  %v1760 = vmul.f32 %v1661, %v1661
  %v1761 = vmul.f32 %v1664, %v1664
  %v1762 = vmul.f32 %v1669, %v1669
  %v1763 = vmul.f32 %v1672, %v1672
  %v1764 = vmul.f32 %v1677, %v1677
  %v1765 = vsel %vm1682, %v1740, 0.0
  %v1766 = vsel %vm1682, %v1741, 0.0
  %v1767 = vadd.f32 %v1765, %v1766
  %v1768 = vsel %vm1682, %v1742, 0.0
  %v1769 = vadd.f32 %v1767, %v1768
  %v1770 = vsel %vm1682, %v1743, 0.0
  %v1771 = vadd.f32 %v1769, %v1770
  %v1772 = vsel %vm1682, %v1744, 0.0
  %v1773 = vadd.f32 %v1771, %v1772
  %v1774 = vsel %vm1682, %v1745, 0.0
  %v1775 = vadd.f32 %v1773, %v1774
  %v1776 = vsel %vm1682, %v1746, 0.0
  %v1777 = vadd.f32 %v1775, %v1776
  %v1778 = vsel %vm1682, %v1747, 0.0
  %v1779 = vadd.f32 %v1777, %v1778
  %v1780 = vsel %vm1682, %v1748, 0.0
  %v1781 = vadd.f32 %v1779, %v1780
  %v1782 = vsel %vm1682, %v1749, 0.0
  %v1783 = vadd.f32 %v1781, %v1782
  %v1784 = vsel %vm1682, %v1750, 0.0
  %v1785 = vadd.f32 %v1783, %v1784
  %v1786 = vsel %vm1682, %v1751, 0.0
  %v1787 = vadd.f32 %v1785, %v1786
  %v1788 = vsel %vm1682, %v1752, 0.0
  %v1789 = vadd.f32 %v1787, %v1788
  %v1790 = vsel %vm1682, %v1753, 0.0
  %v1791 = vadd.f32 %v1789, %v1790
  %v1792 = vsel %vm1682, %v1754, 0.0
  %v1793 = vadd.f32 %v1791, %v1792
  %v1794 = vsel %vm1682, %v1755, 0.0
  %v1795 = vadd.f32 %v1793, %v1794
  %v1796 = vsel %vm1682, %v1756, 0.0
  %v1797 = vadd.f32 %v1795, %v1796
  %v1798 = vsel %vm1682, %v1757, 0.0
  %v1799 = vadd.f32 %v1797, %v1798
  %v1800 = vsel %vm1682, %v1758, 0.0
  %v1801 = vadd.f32 %v1799, %v1800
  %v1802 = vsel %vm1682, %v1759, 0.0
  %v1803 = vadd.f32 %v1801, %v1802
  %v1804 = vsel %vm1682, %v1760, 0.0
  %v1805 = vadd.f32 %v1803, %v1804
  %v1806 = vsel %vm1682, %v1761, 0.0
  %v1807 = vadd.f32 %v1805, %v1806
  %v1808 = vsel %vm1682, %v1762, 0.0
  %v1809 = vadd.f32 %v1807, %v1808
  %v1810 = vsel %vm1682, %v1763, 0.0
  %v1811 = vadd.f32 %v1809, %v1810
  %v1812 = vsel %vm1682, %v1764, 0.0
  %v1813 = vadd.f32 %v1811, %v1812
  %v1814 = vrot.slane %v1813, 4
  %v1815 = vadd.f32 %v1813, %v1814
  %v1816 = vrot.slane %v1815, 2
  %v1817 = vadd.f32 %v1815, %v1816
  %v1818 = vrot.slane %v1817, 1
  %v1819 = vadd.f32 %v1817, %v1818
  %v1820 = vmul.f32 %v1819, %v1738
  %v1821 = vmul.f32 %v1739, %v1739
  %v1822 = vsub.f32 %v1820, %v1821
  %v1823 = vmax.f32 %v1822, 0.0
  %v1824 = vld [vmem:[%s2] sm:$0x1]
  %v1825 = vsub.f32 %v1581, %v1739
  %v1826 = vsub.f32 %v1584, %v1739
  %v1827 = vsub.f32 %v1589, %v1739
  %v1828 = vsub.f32 %v1592, %v1739
  %v1829 = vsub.f32 %v1597, %v1739
  %v1830 = vsub.f32 %v1600, %v1739
  %v1831 = vsub.f32 %v1605, %v1739
  %v1832 = vsub.f32 %v1608, %v1739
  %v1833 = vsub.f32 %v1613, %v1739
  %v1834 = vsub.f32 %v1616, %v1739
  %v1835 = vsub.f32 %v1621, %v1739
  %v1836 = vsub.f32 %v1624, %v1739
  %v1837 = vsub.f32 %v1629, %v1739
  %v1838 = vsub.f32 %v1632, %v1739
  %v1839 = vsub.f32 %v1637, %v1739
  %v1840 = vsub.f32 %v1640, %v1739
  %v1841 = vsub.f32 %v1645, %v1739
  %v1842 = vsub.f32 %v1648, %v1739
  %v1843 = vsub.f32 %v1653, %v1739
  %v1844 = vsub.f32 %v1656, %v1739
  %v1845 = vsub.f32 %v1661, %v1739
  %v1846 = vsub.f32 %v1664, %v1739
  %v1847 = vsub.f32 %v1669, %v1739
  %v1848 = vsub.f32 %v1672, %v1739
  %v1849 = vsub.f32 %v1677, %v1739
  %v1851 = vlaneseq
  %v1852 = vshrl.u32 %v1851, 7
  %v1853 = vsub.s32 0, %v1852
  %v1854 = vrot.slane %v1824, %v1853
  %v1856 = vmul.f32 %v1854, %v1825
  %v1857 = vmul.f32 %v1854, %v1826
  %v1858 = vmul.f32 %v1854, %v1827
  %v1859 = vmul.f32 %v1854, %v1828
  %v1860 = vmul.f32 %v1854, %v1829
  %v1861 = vmul.f32 %v1854, %v1830
  %v1862 = vmul.f32 %v1854, %v1831
  %v1863 = vmul.f32 %v1854, %v1832
  %v1864 = vmul.f32 %v1854, %v1833
  %v1865 = vmul.f32 %v1854, %v1834
  %v1866 = vmul.f32 %v1854, %v1835
  %v1867 = vmul.f32 %v1854, %v1836
  %v1868 = vmul.f32 %v1854, %v1837
  %v1869 = vmul.f32 %v1854, %v1838
  %v1870 = vmul.f32 %v1854, %v1839
  %v1871 = vmul.f32 %v1854, %v1840
  %v1872 = vmul.f32 %v1854, %v1841
  %v1873 = vmul.f32 %v1854, %v1842
  %v1874 = vmul.f32 %v1854, %v1843
  %v1875 = vmul.f32 %v1854, %v1844
  %v1876 = vmul.f32 %v1854, %v1845
  %v1877 = vmul.f32 %v1854, %v1846
  %v1878 = vmul.f32 %v1854, %v1847
  %v1879 = vmul.f32 %v1854, %v1848
  %v1880 = vmul.f32 %v1854, %v1849
  %v1881 = vadd.f32 %v1823, 1e-05
  %v1882 = vrsqrt.pop %v1881
  %v1883 = vmul.f32 %v1856, %v1882
  %v1884 = vmul.f32 %v1857, %v1882
  %v1885 = vmul.f32 %v1858, %v1882
  %v1886 = vmul.f32 %v1859, %v1882
  %v1887 = vmul.f32 %v1860, %v1882
  %v1888 = vmul.f32 %v1861, %v1882
  %v1889 = vmul.f32 %v1862, %v1882
  %v1890 = vmul.f32 %v1863, %v1882
  %v1891 = vmul.f32 %v1864, %v1882
  %v1892 = vmul.f32 %v1865, %v1882
  %v1893 = vmul.f32 %v1866, %v1882
  %v1894 = vmul.f32 %v1867, %v1882
  %v1895 = vmul.f32 %v1868, %v1882
  %v1896 = vmul.f32 %v1869, %v1882
  %v1897 = vmul.f32 %v1870, %v1882
  %v1898 = vmul.f32 %v1871, %v1882
  %v1899 = vmul.f32 %v1872, %v1882
  %v1900 = vmul.f32 %v1873, %v1882
  %v1901 = vmul.f32 %v1874, %v1882
  %v1902 = vmul.f32 %v1875, %v1882
  %v1903 = vmul.f32 %v1876, %v1882
  %v1904 = vmul.f32 %v1877, %v1882
  %v1905 = vmul.f32 %v1878, %v1882
  %v1906 = vmul.f32 %v1879, %v1882
  %v1907 = vmul.f32 %v1880, %v1882
  %v1908 = vld [vmem:[%s3] sm:$0x1]
  %v1910 = vlaneseq
  %v1911 = vshrl.u32 %v1910, 7
  %v1912 = vsub.s32 0, %v1911
  %v1913 = vrot.slane %v1908, %v1912
  %v1915 = vadd.f32 %v1883, %v1913
  %v1916 = vadd.f32 %v1884, %v1913
  %v1917 = vadd.f32 %v1885, %v1913
  %v1918 = vadd.f32 %v1886, %v1913
  %v1919 = vadd.f32 %v1887, %v1913
  %v1920 = vadd.f32 %v1888, %v1913
  %v1921 = vadd.f32 %v1889, %v1913
  %v1922 = vadd.f32 %v1890, %v1913
  %v1923 = vadd.f32 %v1891, %v1913
  %v1924 = vadd.f32 %v1892, %v1913
  %v1925 = vadd.f32 %v1893, %v1913
  %v1926 = vadd.f32 %v1894, %v1913
  %v1927 = vadd.f32 %v1895, %v1913
  %v1928 = vadd.f32 %v1896, %v1913
  %v1929 = vadd.f32 %v1897, %v1913
  %v1930 = vadd.f32 %v1898, %v1913
  %v1931 = vadd.f32 %v1899, %v1913
  %v1932 = vadd.f32 %v1900, %v1913
  %v1933 = vadd.f32 %v1901, %v1913
  %v1934 = vadd.f32 %v1902, %v1913
  %v1935 = vadd.f32 %v1903, %v1913
  %v1936 = vadd.f32 %v1904, %v1913
  %v1937 = vadd.f32 %v1905, %v1913
  %v1938 = vadd.f32 %v1906, %v1913
  %v1939 = vadd.f32 %v1907, %v1913
  %vm1940 = vcmp.ge.f32.partialorder %v1915, 0.0
  %vm1941 = vcmp.ge.f32.partialorder %v1916, 0.0
  %vm1942 = vcmp.ge.f32.partialorder %v1917, 0.0
  %vm1943 = vcmp.ge.f32.partialorder %v1918, 0.0
  %vm1944 = vcmp.ge.f32.partialorder %v1919, 0.0
  %vm1945 = vcmp.ge.f32.partialorder %v1920, 0.0
  %vm1946 = vcmp.ge.f32.partialorder %v1921, 0.0
  %vm1947 = vcmp.ge.f32.partialorder %v1922, 0.0
  %vm1948 = vcmp.ge.f32.partialorder %v1923, 0.0
  %vm1949 = vcmp.ge.f32.partialorder %v1924, 0.0
  %vm1950 = vcmp.ge.f32.partialorder %v1925, 0.0
  %vm1951 = vcmp.ge.f32.partialorder %v1926, 0.0
  %vm1952 = vcmp.ge.f32.partialorder %v1927, 0.0
  %vm1953 = vcmp.ge.f32.partialorder %v1928, 0.0
  %vm1954 = vcmp.ge.f32.partialorder %v1929, 0.0
  %vm1955 = vcmp.ge.f32.partialorder %v1930, 0.0
  %vm1956 = vcmp.ge.f32.partialorder %v1931, 0.0
  %vm1957 = vcmp.ge.f32.partialorder %v1932, 0.0
  %vm1958 = vcmp.ge.f32.partialorder %v1933, 0.0
  %vm1959 = vcmp.ge.f32.partialorder %v1934, 0.0
  %vm1960 = vcmp.ge.f32.partialorder %v1935, 0.0
  %vm1961 = vcmp.ge.f32.partialorder %v1936, 0.0
  %vm1962 = vcmp.ge.f32.partialorder %v1937, 0.0
  %vm1963 = vcmp.ge.f32.partialorder %v1938, 0.0
  %vm1964 = vcmp.ge.f32.partialorder %v1939, 0.0
  %v1965 = vmul.f32 %v1915, 0.01
  %v1966 = vmul.f32 %v1916, 0.01
  %v1967 = vmul.f32 %v1917, 0.01
  %v1968 = vmul.f32 %v1918, 0.01
  %v1969 = vmul.f32 %v1919, 0.01
  %v1970 = vmul.f32 %v1920, 0.01
  %v1971 = vmul.f32 %v1921, 0.01
  %v1972 = vmul.f32 %v1922, 0.01
  %v1973 = vmul.f32 %v1923, 0.01
  %v1974 = vmul.f32 %v1924, 0.01
  %v1975 = vmul.f32 %v1925, 0.01
  %v1976 = vmul.f32 %v1926, 0.01
  %v1977 = vmul.f32 %v1927, 0.01
  %v1978 = vmul.f32 %v1928, 0.01
  %v1979 = vmul.f32 %v1929, 0.01
  %v1980 = vmul.f32 %v1930, 0.01
  %v1981 = vmul.f32 %v1931, 0.01
  %v1982 = vmul.f32 %v1932, 0.01
  %v1983 = vmul.f32 %v1933, 0.01
  %v1984 = vmul.f32 %v1934, 0.01
  %v1985 = vmul.f32 %v1935, 0.01
  %v1986 = vmul.f32 %v1936, 0.01
  %v1987 = vmul.f32 %v1937, 0.01
  %v1988 = vmul.f32 %v1938, 0.01
  %v1989 = vmul.f32 %v1939, 0.01
  %v1990 = vsel %vm1940, %v1915, %v1965
  %v1991 = vsel %vm1941, %v1916, %v1966
  %v1992 = vsel %vm1942, %v1917, %v1967
  %v1993 = vsel %vm1943, %v1918, %v1968
  %v1994 = vsel %vm1944, %v1919, %v1969
  %v1995 = vsel %vm1945, %v1920, %v1970
  %v1996 = vsel %vm1946, %v1921, %v1971
  %v1997 = vsel %vm1947, %v1922, %v1972
  %v1998 = vsel %vm1948, %v1923, %v1973
  %v1999 = vsel %vm1949, %v1924, %v1974
  %v2000 = vsel %vm1950, %v1925, %v1975
  %v2001 = vsel %vm1951, %v1926, %v1976
  %v2002 = vsel %vm1952, %v1927, %v1977
  %v2003 = vsel %vm1953, %v1928, %v1978
  %v2004 = vsel %vm1954, %v1929, %v1979
  %v2005 = vsel %vm1955, %v1930, %v1980
  %v2006 = vsel %vm1956, %v1931, %v1981
  %v2007 = vsel %vm1957, %v1932, %v1982
  %v2008 = vsel %vm1958, %v1933, %v1983
  %v2009 = vsel %vm1959, %v1934, %v1984
  %v2010 = vsel %vm1960, %v1935, %v1985
  %v2011 = vsel %vm1961, %v1936, %v1986
  %v2012 = vsel %vm1962, %v1937, %v1987
  %v2013 = vsel %vm1963, %v1938, %v1988
  %v2014 = vsel %vm1964, %v1939, %v1989
  %2015 = vst.msk [vmem:[%s4] sm:$0xff] %vm1682, %v1990
  %2016 = vst.msk [vmem:[%s4 + $0x8] sm:$0xff] %vm1682, %v1991
  %2017 = vst.msk [vmem:[%s4 + $0x10] sm:$0xff] %vm1682, %v1992
  %2018 = vst.msk [vmem:[%s4 + $0x18] sm:$0xff] %vm1682, %v1993
  %2019 = vst.msk [vmem:[%s4 + $0x20] sm:$0xff] %vm1682, %v1994
  %2020 = vst.msk [vmem:[%s4 + $0x28] sm:$0xff] %vm1682, %v1995
  %2021 = vst.msk [vmem:[%s4 + $0x30] sm:$0xff] %vm1682, %v1996
  %2022 = vst.msk [vmem:[%s4 + $0x38] sm:$0xff] %vm1682, %v1997
  %2023 = vst.msk [vmem:[%s4 + $0x40] sm:$0xff] %vm1682, %v1998
  %2024 = vst.msk [vmem:[%s4 + $0x48] sm:$0xff] %vm1682, %v1999
  %2025 = vst.msk [vmem:[%s4 + $0x50] sm:$0xff] %vm1682, %v2000
  %2026 = vst.msk [vmem:[%s4 + $0x58] sm:$0xff] %vm1682, %v2001
  %2027 = vst.msk [vmem:[%s4 + $0x60] sm:$0xff] %vm1682, %v2002
  %2028 = vst.msk [vmem:[%s4 + $0x68] sm:$0xff] %vm1682, %v2003
  %2029 = vst.msk [vmem:[%s4 + $0x70] sm:$0xff] %vm1682, %v2004
  %2030 = vst.msk [vmem:[%s4 + $0x78] sm:$0xff] %vm1682, %v2005
  %2031 = vst.msk [vmem:[%s4 + $0x80] sm:$0xff] %vm1682, %v2006
  %2032 = vst.msk [vmem:[%s4 + $0x88] sm:$0xff] %vm1682, %v2007
  %2033 = vst.msk [vmem:[%s4 + $0x90] sm:$0xff] %vm1682, %v2008
  %2034 = vst.msk [vmem:[%s4 + $0x98] sm:$0xff] %vm1682, %v2009
  %2035 = vst.msk [vmem:[%s4 + $0xa0] sm:$0xff] %vm1682, %v2010
  %2036 = vst.msk [vmem:[%s4 + $0xa8] sm:$0xff] %vm1682, %v2011
  %2037 = vst.msk [vmem:[%s4 + $0xb0] sm:$0xff] %vm1682, %v2012
  %2038 = vst.msk [vmem:[%s4 + $0xb8] sm:$0xff] %vm1682, %v2013
  %2039 = vst.msk [vmem:[%s4 + $0xc0] sm:$0xff] %vm1682, %v2014
  // Predicated region
  $region18: #{forward.7} parent=0 // pred_check
    _
  $region19: #{forward.7} parent=0 // pred_check_branch
    %2041 = sbr.rel (0) target = $region21
  $region20: #{forward.7} parent=0 // pred_region
    _
  $region21: #{forward.7} parent=0 // pred_fallthru
    _
  // Predicated region
  $region22: #{forward.7} parent=0 // pred_check
    _
  $region23: #{forward.7} parent=0 // pred_check_branch
    %2043 = sbr.rel (0) target = $region25
  $region24: #{forward.7} parent=0 // pred_region
    _
  $region25: #{forward.7} parent=0 // pred_fallthru
    _

// kernel: forward.8
$region0: #{forward.8}
  #allocation0 [shape = 'u32[]', space=smem, size = 0x4, offset = 0x4, fixed_abs, tag = 'smem constant byte address 0x4 - core index']
  #allocation1 [shape = 'u32[144,128]{1,0:T(1,128)}', space=vmem, size = 0x12000, scoped, tag = 'internal scratch']
  %s0 = inlined_call_operand.vmem [shape: bf16[800,512], index: 0, kind: input, shape index: {}]
  %s1 = inlined_call_operand.vmem [shape: bf16[512,16], index: 1, kind: input, shape index: {}]
  %s2 = inlined_call_operand.vmem [shape: f32[1,16], index: 2, kind: input, shape index: {}]
  %s3 = inlined_call_operand.vmem [shape: f32[1,16], index: 3, kind: input, shape index: {}]
  %s4 = inlined_call_operand.vmem [shape: f32[800,16], index: 4, kind: output, shape index: {}]
  %s5 = sld [smem:[#allocation0]]
  $region26: #{forward.8} parent=0
    _
  %s7 = ssub.s32 1, %s5
  %s8 = scalar_select 0, %s7, %s5
  // Predicated region
  $region2: #{forward.8} parent=0 // pred_check
    _
  $region3: #{forward.8} parent=0 // pred_check_branch
    %10 = sbr.rel (0) target = $region5
  $region4: #{forward.8} parent=0 // pred_region
    _
  $region5: #{forward.8} parent=0 // pred_fallthru
    _
  // Predicated region
  $region6: #{forward.8} parent=0 // pred_check
    _
  $region7: #{forward.8} parent=0 // pred_check_branch
    %12 = sbr.rel (0) target = $region9
  $region8: #{forward.8} parent=0 // pred_region
    _
  $region9: #{forward.8} parent=0 // pred_fallthru
    _
  // Predicated region
  $region10: #{forward.8} parent=0 // pred_check
    _
  $region11: #{forward.8} parent=0 // pred_check_branch
    %14 = sbr.rel (0) target = $region13
  $region12: #{forward.8} parent=0 // pred_region
    _
  $region13: #{forward.8} parent=0 // pred_fallthru
    _
  // Predicated region
  $region14: #{forward.8} parent=0 // pred_check
    _
  $region15: #{forward.8} parent=0 // pred_check_branch
    %16 = sbr.rel (0) target = $region17
  $region16: #{forward.8} parent=0 // pred_region
    _
  $region17: #{forward.8} parent=0 // pred_fallthru
    _
  %v18 = vld [vmem:[%s0] sm:$0xff]
  %v19 = vld [vmem:[%s0 + $0x8] sm:$0xff]
  %v20 = vld [vmem:[%s0 + $0x10] sm:$0xff]
  %v21 = vld [vmem:[%s0 + $0x18] sm:$0xff]
  %v22 = vld [vmem:[%s0 + $0x20] sm:$0xff]
  %v23 = vld [vmem:[%s0 + $0x28] sm:$0xff]
  %v24 = vld [vmem:[%s0 + $0x30] sm:$0xff]
  %v25 = vld [vmem:[%s0 + $0x38] sm:$0xff]
  %v26 = vld [vmem:[%s0 + $0x40] sm:$0xff]
  %v27 = vld [vmem:[%s0 + $0x48] sm:$0xff]
  %v28 = vld [vmem:[%s0 + $0x50] sm:$0xff]
  %v29 = vld [vmem:[%s0 + $0x58] sm:$0xff]
  %v30 = vld [vmem:[%s0 + $0x60] sm:$0xff]
  %v31 = vld [vmem:[%s0 + $0x68] sm:$0xff]
  %v32 = vld [vmem:[%s0 + $0x70] sm:$0xff]
  %v33 = vld [vmem:[%s0 + $0x78] sm:$0xff]
  %v34 = vld [vmem:[%s0 + $0x80] sm:$0xff]
  %v35 = vld [vmem:[%s0 + $0x88] sm:$0xff]
  %v36 = vld [vmem:[%s0 + $0x90] sm:$0xff]
  %v37 = vld [vmem:[%s0 + $0x98] sm:$0xff]
  %v38 = vld [vmem:[%s0 + $0xa0] sm:$0xff]
  %v39 = vld [vmem:[%s0 + $0xa8] sm:$0xff]
  %v40 = vld [vmem:[%s0 + $0xb0] sm:$0xff]
  %v41 = vld [vmem:[%s0 + $0xb8] sm:$0xff]
  %v42 = vld [vmem:[%s0 + $0xc0] sm:$0xff]
  %v43 = vld [vmem:[%s0 + $0xc8] sm:$0xff]
  %v44 = vld [vmem:[%s0 + $0xd0] sm:$0xff]
  %v45 = vld [vmem:[%s0 + $0xd8] sm:$0xff]
  %v46 = vld [vmem:[%s0 + $0xe0] sm:$0xff]
  %v47 = vld [vmem:[%s0 + $0xe8] sm:$0xff]
  %v48 = vld [vmem:[%s0 + $0xf0] sm:$0xff]
  %v49 = vld [vmem:[%s0 + $0xf8] sm:$0xff]
  %v50 = vld [vmem:[%s0 + $0x100] sm:$0xff]
  %v51 = vld [vmem:[%s0 + $0x108] sm:$0xff]
  %v52 = vld [vmem:[%s0 + $0x110] sm:$0xff]
  %v53 = vld [vmem:[%s0 + $0x118] sm:$0xff]
  %v54 = vld [vmem:[%s0 + $0x120] sm:$0xff]
  %v55 = vld [vmem:[%s0 + $0x128] sm:$0xff]
  %v56 = vld [vmem:[%s0 + $0x130] sm:$0xff]
  %v57 = vld [vmem:[%s0 + $0x138] sm:$0xff]
  %v58 = vld [vmem:[%s0 + $0x140] sm:$0xff]
  %v59 = vld [vmem:[%s0 + $0x148] sm:$0xff]
  %v60 = vld [vmem:[%s0 + $0x150] sm:$0xff]
  %v61 = vld [vmem:[%s0 + $0x158] sm:$0xff]
  %v62 = vld [vmem:[%s0 + $0x160] sm:$0xff]
  %v63 = vld [vmem:[%s0 + $0x168] sm:$0xff]
  %v64 = vld [vmem:[%s0 + $0x170] sm:$0xff]
  %v65 = vld [vmem:[%s0 + $0x178] sm:$0xff]
  %v66 = vld [vmem:[%s0 + $0x180] sm:$0xff]
  %v67 = vld [vmem:[%s0 + $0x188] sm:$0xff]
  %v68 = vld [vmem:[%s0 + $0x190] sm:$0xff]
  %v69 = vld [vmem:[%s0 + $0x198] sm:$0xff]
  %v70 = vld [vmem:[%s0 + $0x1a0] sm:$0xff]
  %v71 = vld [vmem:[%s0 + $0x1a8] sm:$0xff]
  %v72 = vld [vmem:[%s0 + $0x1b0] sm:$0xff]
  %v73 = vld [vmem:[%s0 + $0x1b8] sm:$0xff]
  %v74 = vld [vmem:[%s0 + $0x1c0] sm:$0xff]
  %v75 = vld [vmem:[%s0 + $0x1c8] sm:$0xff]
  %v76 = vld [vmem:[%s0 + $0x1d0] sm:$0xff]
  %v77 = vld [vmem:[%s0 + $0x1d8] sm:$0xff]
  %v78 = vld [vmem:[%s0 + $0x1e0] sm:$0xff]
  %v79 = vld [vmem:[%s0 + $0x1e8] sm:$0xff]
  %v80 = vld [vmem:[%s0 + $0x1f0] sm:$0xff]
  %v81 = vld [vmem:[%s0 + $0x1f8] sm:$0xff]
  %v82 = vld [vmem:[%s0 + $0x200] sm:$0xff]
  %v83 = vld [vmem:[%s0 + $0x208] sm:$0xff]
  %v84 = vld [vmem:[%s0 + $0x210] sm:$0xff]
  %v85 = vld [vmem:[%s0 + $0x218] sm:$0xff]
  %v86 = vld [vmem:[%s0 + $0x220] sm:$0xff]
  %v87 = vld [vmem:[%s0 + $0x228] sm:$0xff]
  %v88 = vld [vmem:[%s0 + $0x230] sm:$0xff]
  %v89 = vld [vmem:[%s0 + $0x238] sm:$0xff]
  %v90 = vld [vmem:[%s0 + $0x240] sm:$0xff]
  %v91 = vld [vmem:[%s0 + $0x248] sm:$0xff]
  %v92 = vld [vmem:[%s0 + $0x250] sm:$0xff]
  %v93 = vld [vmem:[%s0 + $0x258] sm:$0xff]
  %v94 = vld [vmem:[%s0 + $0x260] sm:$0xff]
  %v95 = vld [vmem:[%s0 + $0x268] sm:$0xff]
  %v96 = vld [vmem:[%s0 + $0x270] sm:$0xff]
  %v97 = vld [vmem:[%s0 + $0x278] sm:$0xff]
  %v98 = vld [vmem:[%s0 + $0x280] sm:$0xff]
  %v99 = vld [vmem:[%s0 + $0x288] sm:$0xff]
  %v100 = vld [vmem:[%s0 + $0x290] sm:$0xff]
  %v101 = vld [vmem:[%s0 + $0x298] sm:$0xff]
  %v102 = vld [vmem:[%s0 + $0x2a0] sm:$0xff]
  %v103 = vld [vmem:[%s0 + $0x2a8] sm:$0xff]
  %v104 = vld [vmem:[%s0 + $0x2b0] sm:$0xff]
  %v105 = vld [vmem:[%s0 + $0x2b8] sm:$0xff]
  %v106 = vld [vmem:[%s0 + $0x2c0] sm:$0xff]
  %v107 = vld [vmem:[%s0 + $0x2c8] sm:$0xff]
  %v108 = vld [vmem:[%s0 + $0x2d0] sm:$0xff]
  %v109 = vld [vmem:[%s0 + $0x2d8] sm:$0xff]
  %v110 = vld [vmem:[%s0 + $0x2e0] sm:$0xff]
  %v111 = vld [vmem:[%s0 + $0x2e8] sm:$0xff]
  %v112 = vld [vmem:[%s0 + $0x2f0] sm:$0xff]
  %v113 = vld [vmem:[%s0 + $0x2f8] sm:$0xff]
  %v114 = vld [vmem:[%s0 + $0x300] sm:$0xff]
  %v115 = vld [vmem:[%s0 + $0x308] sm:$0xff]
  %v116 = vld [vmem:[%s0 + $0x310] sm:$0xff]
  %v117 = vld [vmem:[%s0 + $0x318] sm:$0xff]
  %v118 = vld [vmem:[%s0 + $0x320] sm:$0xff]
  %v119 = vld [vmem:[%s0 + $0x328] sm:$0xff]
  %v120 = vld [vmem:[%s0 + $0x330] sm:$0xff]
  %v121 = vld [vmem:[%s0 + $0x338] sm:$0xff]
  %v122 = vld [vmem:[%s0 + $0x340] sm:$0xff]
  %v123 = vld [vmem:[%s0 + $0x348] sm:$0xff]
  %v124 = vld [vmem:[%s0 + $0x350] sm:$0xff]
  %v125 = vld [vmem:[%s0 + $0x358] sm:$0xff]
  %v126 = vld [vmem:[%s0 + $0x360] sm:$0xff]
  %v127 = vld [vmem:[%s0 + $0x368] sm:$0xff]
  %v128 = vld [vmem:[%s0 + $0x370] sm:$0xff]
  %v129 = vld [vmem:[%s0 + $0x378] sm:$0xff]
  %v130 = vld [vmem:[%s0 + $0x380] sm:$0xff]
  %v131 = vld [vmem:[%s0 + $0x388] sm:$0xff]
  %v132 = vld [vmem:[%s0 + $0x390] sm:$0xff]
  %v133 = vld [vmem:[%s0 + $0x398] sm:$0xff]
  %v134 = vld [vmem:[%s0 + $0x3a0] sm:$0xff]
  %v135 = vld [vmem:[%s0 + $0x3a8] sm:$0xff]
  %v136 = vld [vmem:[%s0 + $0x3b0] sm:$0xff]
  %v137 = vld [vmem:[%s0 + $0x3b8] sm:$0xff]
  %v138 = vld [vmem:[%s0 + $0x3c0] sm:$0xff]
  %v139 = vld [vmem:[%s0 + $0x3c8] sm:$0xff]
  %v140 = vld [vmem:[%s0 + $0x3d0] sm:$0xff]
  %v141 = vld [vmem:[%s0 + $0x3d8] sm:$0xff]
  %v142 = vld [vmem:[%s0 + $0x3e0] sm:$0xff]
  %v143 = vld [vmem:[%s0 + $0x3e8] sm:$0xff]
  %v144 = vld [vmem:[%s0 + $0x3f0] sm:$0xff]
  %v145 = vld [vmem:[%s0 + $0x3f8] sm:$0xff]
  %v146 = vld [vmem:[%s0 + $0x400] sm:$0xff]
  %v147 = vld [vmem:[%s0 + $0x408] sm:$0xff]
  %v148 = vld [vmem:[%s0 + $0x410] sm:$0xff]
  %v149 = vld [vmem:[%s0 + $0x418] sm:$0xff]
  %v150 = vld [vmem:[%s0 + $0x420] sm:$0xff]
  %v151 = vld [vmem:[%s0 + $0x428] sm:$0xff]
  %v152 = vld [vmem:[%s0 + $0x430] sm:$0xff]
  %v153 = vld [vmem:[%s0 + $0x438] sm:$0xff]
  %v154 = vld [vmem:[%s0 + $0x440] sm:$0xff]
  %v155 = vld [vmem:[%s0 + $0x448] sm:$0xff]
  %v156 = vld [vmem:[%s0 + $0x450] sm:$0xff]
  %v157 = vld [vmem:[%s0 + $0x458] sm:$0xff]
  %v158 = vld [vmem:[%s0 + $0x460] sm:$0xff]
  %v159 = vld [vmem:[%s0 + $0x468] sm:$0xff]
  %v160 = vld [vmem:[%s0 + $0x470] sm:$0xff]
  %v161 = vld [vmem:[%s0 + $0x478] sm:$0xff]
  %v162 = vld [vmem:[%s0 + $0x480] sm:$0xff]
  %v163 = vld [vmem:[%s0 + $0x488] sm:$0xff]
  %v164 = vld [vmem:[%s0 + $0x490] sm:$0xff]
  %v165 = vld [vmem:[%s0 + $0x498] sm:$0xff]
  %v166 = vld [vmem:[%s0 + $0x4a0] sm:$0xff]
  %v167 = vld [vmem:[%s0 + $0x4a8] sm:$0xff]
  %v168 = vld [vmem:[%s0 + $0x4b0] sm:$0xff]
  %v169 = vld [vmem:[%s0 + $0x4b8] sm:$0xff]
  %v170 = vld [vmem:[%s0 + $0x4c0] sm:$0xff]
  %v171 = vld [vmem:[%s0 + $0x4c8] sm:$0xff]
  %v172 = vld [vmem:[%s0 + $0x4d0] sm:$0xff]
  %v173 = vld [vmem:[%s0 + $0x4d8] sm:$0xff]
  %v174 = vld [vmem:[%s0 + $0x4e0] sm:$0xff]
  %v175 = vld [vmem:[%s0 + $0x4e8] sm:$0xff]
  %v176 = vld [vmem:[%s0 + $0x4f0] sm:$0xff]
  %v177 = vld [vmem:[%s0 + $0x4f8] sm:$0xff]
  %v178 = vld [vmem:[%s0 + $0x500] sm:$0xff]
  %v179 = vld [vmem:[%s0 + $0x508] sm:$0xff]
  %v180 = vld [vmem:[%s0 + $0x510] sm:$0xff]
  %v181 = vld [vmem:[%s0 + $0x518] sm:$0xff]
  %v182 = vld [vmem:[%s0 + $0x520] sm:$0xff]
  %v183 = vld [vmem:[%s0 + $0x528] sm:$0xff]
  %v184 = vld [vmem:[%s0 + $0x530] sm:$0xff]
  %v185 = vld [vmem:[%s0 + $0x538] sm:$0xff]
  %v186 = vld [vmem:[%s0 + $0x540] sm:$0xff]
  %v187 = vld [vmem:[%s0 + $0x548] sm:$0xff]
  %v188 = vld [vmem:[%s0 + $0x550] sm:$0xff]
  %v189 = vld [vmem:[%s0 + $0x558] sm:$0xff]
  %v190 = vld [vmem:[%s0 + $0x560] sm:$0xff]
  %v191 = vld [vmem:[%s0 + $0x568] sm:$0xff]
  %v192 = vld [vmem:[%s0 + $0x570] sm:$0xff]
  %v193 = vld [vmem:[%s0 + $0x578] sm:$0xff]
  %v194 = vld [vmem:[%s0 + $0x580] sm:$0xff]
  %v195 = vld [vmem:[%s0 + $0x588] sm:$0xff]
  %v196 = vld [vmem:[%s0 + $0x590] sm:$0xff]
  %v197 = vld [vmem:[%s0 + $0x598] sm:$0xff]
  %v198 = vld [vmem:[%s0 + $0x5a0] sm:$0xff]
  %v199 = vld [vmem:[%s0 + $0x5a8] sm:$0xff]
  %v200 = vld [vmem:[%s0 + $0x5b0] sm:$0xff]
  %v201 = vld [vmem:[%s0 + $0x5b8] sm:$0xff]
  %v202 = vld [vmem:[%s0 + $0x5c0] sm:$0xff]
  %v203 = vld [vmem:[%s0 + $0x5c8] sm:$0xff]
  %v204 = vld [vmem:[%s0 + $0x5d0] sm:$0xff]
  %v205 = vld [vmem:[%s0 + $0x5d8] sm:$0xff]
  %v206 = vld [vmem:[%s0 + $0x5e0] sm:$0xff]
  %v207 = vld [vmem:[%s0 + $0x5e8] sm:$0xff]
  %v208 = vld [vmem:[%s0 + $0x5f0] sm:$0xff]
  %v209 = vld [vmem:[%s0 + $0x5f8] sm:$0xff]
  %v210 = vld [vmem:[%s0 + $0x600] sm:$0xff]
  %v211 = vld [vmem:[%s0 + $0x608] sm:$0xff]
  %v212 = vld [vmem:[%s0 + $0x610] sm:$0xff]
  %v213 = vld [vmem:[%s0 + $0x618] sm:$0xff]
  %v214 = vld [vmem:[%s0 + $0x620] sm:$0xff]
  %v215 = vld [vmem:[%s0 + $0x628] sm:$0xff]
  %v216 = vld [vmem:[%s0 + $0x630] sm:$0xff]
  %v217 = vld [vmem:[%s0 + $0x638] sm:$0xff]
  %v218 = vld [vmem:[%s1] sm:$0xf]
  %v219 = vld [vmem:[%s1 + $0x4] sm:$0xf]
  %v220 = vld [vmem:[%s1 + $0x8] sm:$0xf]
  %v221 = vld [vmem:[%s1 + $0xc] sm:$0xf]
  %v222 = vld [vmem:[%s1 + $0x10] sm:$0xf]
  %v223 = vld [vmem:[%s1 + $0x14] sm:$0xf]
  %v224 = vld [vmem:[%s1 + $0x18] sm:$0xf]
  %v225 = vld [vmem:[%s1 + $0x1c] sm:$0xf]
  %v226 = vld [vmem:[%s1 + $0x20] sm:$0xf]
  %v227 = vld [vmem:[%s1 + $0x24] sm:$0xf]
  %v228 = vld [vmem:[%s1 + $0x28] sm:$0xf]
  %v229 = vld [vmem:[%s1 + $0x2c] sm:$0xf]
  %v230 = vld [vmem:[%s1 + $0x30] sm:$0xf]
  %v231 = vld [vmem:[%s1 + $0x34] sm:$0xf]
  %v232 = vld [vmem:[%s1 + $0x38] sm:$0xf]
  %v233 = vld [vmem:[%s1 + $0x3c] sm:$0xf]
  %v234 = vld [vmem:[%s1 + $0x40] sm:$0xf]
  %v235 = vld [vmem:[%s1 + $0x44] sm:$0xf]
  %v236 = vld [vmem:[%s1 + $0x48] sm:$0xf]
  %v237 = vld [vmem:[%s1 + $0x4c] sm:$0xf]
  %v238 = vld [vmem:[%s1 + $0x50] sm:$0xf]
  %v239 = vld [vmem:[%s1 + $0x54] sm:$0xf]
  %v240 = vld [vmem:[%s1 + $0x58] sm:$0xf]
  %v241 = vld [vmem:[%s1 + $0x5c] sm:$0xf]
  %v242 = vld [vmem:[%s1 + $0x60] sm:$0xf]
  %v243 = vld [vmem:[%s1 + $0x64] sm:$0xf]
  %v244 = vld [vmem:[%s1 + $0x68] sm:$0xf]
  %v245 = vld [vmem:[%s1 + $0x6c] sm:$0xf]
  %v246 = vld [vmem:[%s1 + $0x70] sm:$0xf]
  %v247 = vld [vmem:[%s1 + $0x74] sm:$0xf]
  %v248 = vld [vmem:[%s1 + $0x78] sm:$0xf]
  %v249 = vld [vmem:[%s1 + $0x7c] sm:$0xf]
  %v250 = vld [vmem:[%s1 + $0x80] sm:$0xf]
  %v251 = vld [vmem:[%s1 + $0x84] sm:$0xf]
  %v252 = vld [vmem:[%s1 + $0x88] sm:$0xf]
  %v253 = vld [vmem:[%s1 + $0x8c] sm:$0xf]
  %v254 = vld [vmem:[%s1 + $0x90] sm:$0xf]
  %v255 = vld [vmem:[%s1 + $0x94] sm:$0xf]
  %v256 = vld [vmem:[%s1 + $0x98] sm:$0xf]
  %v257 = vld [vmem:[%s1 + $0x9c] sm:$0xf]
  %v258 = vld [vmem:[%s1 + $0xa0] sm:$0xf]
  %v259 = vld [vmem:[%s1 + $0xa4] sm:$0xf]
  %v260 = vld [vmem:[%s1 + $0xa8] sm:$0xf]
  %v261 = vld [vmem:[%s1 + $0xac] sm:$0xf]
  %v262 = vld [vmem:[%s1 + $0xb0] sm:$0xf]
  %v263 = vld [vmem:[%s1 + $0xb4] sm:$0xf]
  %v264 = vld [vmem:[%s1 + $0xb8] sm:$0xf]
  %v265 = vld [vmem:[%s1 + $0xbc] sm:$0xf]
  %v266 = vld [vmem:[%s1 + $0xc0] sm:$0xf]
  %v267 = vld [vmem:[%s1 + $0xc4] sm:$0xf]
  %v268 = vld [vmem:[%s1 + $0xc8] sm:$0xf]
  %v269 = vld [vmem:[%s1 + $0xcc] sm:$0xf]
  %v270 = vld [vmem:[%s1 + $0xd0] sm:$0xf]
  %v271 = vld [vmem:[%s1 + $0xd4] sm:$0xf]
  %v272 = vld [vmem:[%s1 + $0xd8] sm:$0xf]
  %v273 = vld [vmem:[%s1 + $0xdc] sm:$0xf]
  %v274 = vld [vmem:[%s1 + $0xe0] sm:$0xf]
  %v275 = vld [vmem:[%s1 + $0xe4] sm:$0xf]
  %v276 = vld [vmem:[%s1 + $0xe8] sm:$0xf]
  %v277 = vld [vmem:[%s1 + $0xec] sm:$0xf]
  %v278 = vld [vmem:[%s1 + $0xf0] sm:$0xf]
  %v279 = vld [vmem:[%s1 + $0xf4] sm:$0xf]
  %v280 = vld [vmem:[%s1 + $0xf8] sm:$0xf]
  %v281 = vld [vmem:[%s1 + $0xfc] sm:$0xf]
  %v482 = vunpack.c.l.b16 %v18
  %v483 = vunpack.c.h.b16 %v18
  %v484 = vunpack.c.l.b16 %v19
  %v485 = vunpack.c.h.b16 %v19
  %v486 = vunpack.c.l.b16 %v20
  %v487 = vunpack.c.h.b16 %v20
  %v488 = vunpack.c.l.b16 %v21
  %v489 = vunpack.c.h.b16 %v21
  %v490 = vunpack.c.l.b16 %v22
  %v491 = vunpack.c.h.b16 %v22
  %v492 = vunpack.c.l.b16 %v23
  %v493 = vunpack.c.h.b16 %v23
  %v494 = vunpack.c.l.b16 %v24
  %v495 = vunpack.c.h.b16 %v24
  %v496 = vunpack.c.l.b16 %v25
  %v497 = vunpack.c.h.b16 %v25
  %v498 = vunpack.c.l.b16 %v26
  %v499 = vunpack.c.h.b16 %v26
  %v500 = vunpack.c.l.b16 %v27
  %v501 = vunpack.c.h.b16 %v27
  %v502 = vunpack.c.l.b16 %v28
  %v503 = vunpack.c.h.b16 %v28
  %v504 = vunpack.c.l.b16 %v29
  %v505 = vunpack.c.h.b16 %v29
  %v506 = vunpack.c.l.b16 %v30
  %v507 = vunpack.c.h.b16 %v30
  %v508 = vunpack.c.l.b16 %v31
  %v509 = vunpack.c.h.b16 %v31
  %v510 = vunpack.c.l.b16 %v32
  %v511 = vunpack.c.h.b16 %v32
  %v512 = vunpack.c.l.b16 %v33
  %v513 = vunpack.c.h.b16 %v33
  %v514 = vunpack.c.l.b16 %v34
  %v515 = vunpack.c.h.b16 %v34
  %v516 = vunpack.c.l.b16 %v35
  %v517 = vunpack.c.h.b16 %v35
  %v518 = vunpack.c.l.b16 %v36
  %v519 = vunpack.c.h.b16 %v36
  %v520 = vunpack.c.l.b16 %v37
  %v521 = vunpack.c.h.b16 %v37
  %v522 = vunpack.c.l.b16 %v38
  %v523 = vunpack.c.h.b16 %v38
  %v524 = vunpack.c.l.b16 %v39
  %v525 = vunpack.c.h.b16 %v39
  %v526 = vunpack.c.l.b16 %v40
  %v527 = vunpack.c.h.b16 %v40
  %v528 = vunpack.c.l.b16 %v41
  %v529 = vunpack.c.h.b16 %v41
  %v530 = vunpack.c.l.b16 %v42
  %v531 = vunpack.c.h.b16 %v42
  %v532 = vunpack.c.l.b16 %v43
  %v533 = vunpack.c.h.b16 %v43
  %v534 = vunpack.c.l.b16 %v44
  %v535 = vunpack.c.h.b16 %v44
  %v536 = vunpack.c.l.b16 %v45
  %v537 = vunpack.c.h.b16 %v45
  %v538 = vunpack.c.l.b16 %v46
  %v539 = vunpack.c.h.b16 %v46
  %v540 = vunpack.c.l.b16 %v47
  %v541 = vunpack.c.h.b16 %v47
  %v542 = vunpack.c.l.b16 %v48
  %v543 = vunpack.c.h.b16 %v48
  %v544 = vunpack.c.l.b16 %v49
  %v545 = vunpack.c.h.b16 %v49
  %v546 = vunpack.c.l.b16 %v50
  %v547 = vunpack.c.h.b16 %v50
  %v548 = vunpack.c.l.b16 %v51
  %v549 = vunpack.c.h.b16 %v51
  %v550 = vunpack.c.l.b16 %v52
  %v551 = vunpack.c.h.b16 %v52
  %v552 = vunpack.c.l.b16 %v53
  %v553 = vunpack.c.h.b16 %v53
  %v554 = vunpack.c.l.b16 %v54
  %v555 = vunpack.c.h.b16 %v54
  %v556 = vunpack.c.l.b16 %v55
  %v557 = vunpack.c.h.b16 %v55
  %v558 = vunpack.c.l.b16 %v56
  %v559 = vunpack.c.h.b16 %v56
  %v560 = vunpack.c.l.b16 %v57
  %v561 = vunpack.c.h.b16 %v57
  %v562 = vunpack.c.l.b16 %v58
  %v563 = vunpack.c.h.b16 %v58
  %v564 = vunpack.c.l.b16 %v59
  %v565 = vunpack.c.h.b16 %v59
  %v566 = vunpack.c.l.b16 %v60
  %v567 = vunpack.c.h.b16 %v60
  %v568 = vunpack.c.l.b16 %v61
  %v569 = vunpack.c.h.b16 %v61
  %v570 = vunpack.c.l.b16 %v62
  %v571 = vunpack.c.h.b16 %v62
  %v572 = vunpack.c.l.b16 %v63
  %v573 = vunpack.c.h.b16 %v63
  %v574 = vunpack.c.l.b16 %v64
  %v575 = vunpack.c.h.b16 %v64
  %v576 = vunpack.c.l.b16 %v65
  %v577 = vunpack.c.h.b16 %v65
  %v578 = vunpack.c.l.b16 %v66
  %v579 = vunpack.c.h.b16 %v66
  %v580 = vunpack.c.l.b16 %v67
  %v581 = vunpack.c.h.b16 %v67
  %v582 = vunpack.c.l.b16 %v68
  %v583 = vunpack.c.h.b16 %v68
  %v584 = vunpack.c.l.b16 %v69
  %v585 = vunpack.c.h.b16 %v69
  %v586 = vunpack.c.l.b16 %v70
  %v587 = vunpack.c.h.b16 %v70
  %v588 = vunpack.c.l.b16 %v71
  %v589 = vunpack.c.h.b16 %v71
  %v590 = vunpack.c.l.b16 %v72
  %v591 = vunpack.c.h.b16 %v72
  %v592 = vunpack.c.l.b16 %v73
  %v593 = vunpack.c.h.b16 %v73
  %v594 = vunpack.c.l.b16 %v74
  %v595 = vunpack.c.h.b16 %v74
  %v596 = vunpack.c.l.b16 %v75
  %v597 = vunpack.c.h.b16 %v75
  %v598 = vunpack.c.l.b16 %v76
  %v599 = vunpack.c.h.b16 %v76
  %v600 = vunpack.c.l.b16 %v77
  %v601 = vunpack.c.h.b16 %v77
  %v602 = vunpack.c.l.b16 %v78
  %v603 = vunpack.c.h.b16 %v78
  %v604 = vunpack.c.l.b16 %v79
  %v605 = vunpack.c.h.b16 %v79
  %v606 = vunpack.c.l.b16 %v80
  %v607 = vunpack.c.h.b16 %v80
  %v608 = vunpack.c.l.b16 %v81
  %v609 = vunpack.c.h.b16 %v81
  %v610 = vunpack.c.l.b16 %v82
  %v611 = vunpack.c.h.b16 %v82
  %v612 = vunpack.c.l.b16 %v83
  %v613 = vunpack.c.h.b16 %v83
  %v614 = vunpack.c.l.b16 %v84
  %v615 = vunpack.c.h.b16 %v84
  %v616 = vunpack.c.l.b16 %v85
  %v617 = vunpack.c.h.b16 %v85
  %v618 = vunpack.c.l.b16 %v86
  %v619 = vunpack.c.h.b16 %v86
  %v620 = vunpack.c.l.b16 %v87
  %v621 = vunpack.c.h.b16 %v87
  %v622 = vunpack.c.l.b16 %v88
  %v623 = vunpack.c.h.b16 %v88
  %v624 = vunpack.c.l.b16 %v89
  %v625 = vunpack.c.h.b16 %v89
  %v626 = vunpack.c.l.b16 %v90
  %v627 = vunpack.c.h.b16 %v90
  %v628 = vunpack.c.l.b16 %v91
  %v629 = vunpack.c.h.b16 %v91
  %v630 = vunpack.c.l.b16 %v92
  %v631 = vunpack.c.h.b16 %v92
  %v632 = vunpack.c.l.b16 %v93
  %v633 = vunpack.c.h.b16 %v93
  %v634 = vunpack.c.l.b16 %v94
  %v635 = vunpack.c.h.b16 %v94
  %v636 = vunpack.c.l.b16 %v95
  %v637 = vunpack.c.h.b16 %v95
  %v638 = vunpack.c.l.b16 %v96
  %v639 = vunpack.c.h.b16 %v96
  %v640 = vunpack.c.l.b16 %v97
  %v641 = vunpack.c.h.b16 %v97
  %v642 = vunpack.c.l.b16 %v98
  %v643 = vunpack.c.h.b16 %v98
  %v644 = vunpack.c.l.b16 %v99
  %v645 = vunpack.c.h.b16 %v99
  %v646 = vunpack.c.l.b16 %v100
  %v647 = vunpack.c.h.b16 %v100
  %v648 = vunpack.c.l.b16 %v101
  %v649 = vunpack.c.h.b16 %v101
  %v650 = vunpack.c.l.b16 %v102
  %v651 = vunpack.c.h.b16 %v102
  %v652 = vunpack.c.l.b16 %v103
  %v653 = vunpack.c.h.b16 %v103
  %v654 = vunpack.c.l.b16 %v104
  %v655 = vunpack.c.h.b16 %v104
  %v656 = vunpack.c.l.b16 %v105
  %v657 = vunpack.c.h.b16 %v105
  %v658 = vunpack.c.l.b16 %v106
  %v659 = vunpack.c.h.b16 %v106
  %v660 = vunpack.c.l.b16 %v107
  %v661 = vunpack.c.h.b16 %v107
  %v662 = vunpack.c.l.b16 %v108
  %v663 = vunpack.c.h.b16 %v108
  %v664 = vunpack.c.l.b16 %v109
  %v665 = vunpack.c.h.b16 %v109
  %v666 = vunpack.c.l.b16 %v110
  %v667 = vunpack.c.h.b16 %v110
  %v668 = vunpack.c.l.b16 %v111
  %v669 = vunpack.c.h.b16 %v111
  %v670 = vunpack.c.l.b16 %v112
  %v671 = vunpack.c.h.b16 %v112
  %v672 = vunpack.c.l.b16 %v113
  %v673 = vunpack.c.h.b16 %v113
  %v674 = vunpack.c.l.b16 %v114
  %v675 = vunpack.c.h.b16 %v114
  %v676 = vunpack.c.l.b16 %v115
  %v677 = vunpack.c.h.b16 %v115
  %v678 = vunpack.c.l.b16 %v116
  %v679 = vunpack.c.h.b16 %v116
  %v680 = vunpack.c.l.b16 %v117
  %v681 = vunpack.c.h.b16 %v117
  %v682 = vunpack.c.l.b16 %v118
  %v683 = vunpack.c.h.b16 %v118
  %v684 = vunpack.c.l.b16 %v119
  %v685 = vunpack.c.h.b16 %v119
  %v686 = vunpack.c.l.b16 %v120
  %v687 = vunpack.c.h.b16 %v120
  %v688 = vunpack.c.l.b16 %v121
  %v689 = vunpack.c.h.b16 %v121
  %v690 = vunpack.c.l.b16 %v122
  %v691 = vunpack.c.h.b16 %v122
  %v692 = vunpack.c.l.b16 %v123
  %v693 = vunpack.c.h.b16 %v123
  %v694 = vunpack.c.l.b16 %v124
  %v695 = vunpack.c.h.b16 %v124
  %v696 = vunpack.c.l.b16 %v125
  %v697 = vunpack.c.h.b16 %v125
  %v698 = vunpack.c.l.b16 %v126
  %v699 = vunpack.c.h.b16 %v126
  %v700 = vunpack.c.l.b16 %v127
  %v701 = vunpack.c.h.b16 %v127
  %v702 = vunpack.c.l.b16 %v128
  %v703 = vunpack.c.h.b16 %v128
  %v704 = vunpack.c.l.b16 %v129
  %v705 = vunpack.c.h.b16 %v129
  %v706 = vunpack.c.l.b16 %v130
  %v707 = vunpack.c.h.b16 %v130
  %v708 = vunpack.c.l.b16 %v131
  %v709 = vunpack.c.h.b16 %v131
  %v710 = vunpack.c.l.b16 %v132
  %v711 = vunpack.c.h.b16 %v132
  %v712 = vunpack.c.l.b16 %v133
  %v713 = vunpack.c.h.b16 %v133
  %v714 = vunpack.c.l.b16 %v134
  %v715 = vunpack.c.h.b16 %v134
  %v716 = vunpack.c.l.b16 %v135
  %v717 = vunpack.c.h.b16 %v135
  %v718 = vunpack.c.l.b16 %v136
  %v719 = vunpack.c.h.b16 %v136
  %v720 = vunpack.c.l.b16 %v137
  %v721 = vunpack.c.h.b16 %v137
  %v722 = vunpack.c.l.b16 %v138
  %v723 = vunpack.c.h.b16 %v138
  %v724 = vunpack.c.l.b16 %v139
  %v725 = vunpack.c.h.b16 %v139
  %v726 = vunpack.c.l.b16 %v140
  %v727 = vunpack.c.h.b16 %v140
  %v728 = vunpack.c.l.b16 %v141
  %v729 = vunpack.c.h.b16 %v141
  %v730 = vunpack.c.l.b16 %v142
  %v731 = vunpack.c.h.b16 %v142
  %v732 = vunpack.c.l.b16 %v143
  %v733 = vunpack.c.h.b16 %v143
  %v734 = vunpack.c.l.b16 %v144
  %v735 = vunpack.c.h.b16 %v144
  %v736 = vunpack.c.l.b16 %v145
  %v737 = vunpack.c.h.b16 %v145
  %v738 = vunpack.c.l.b16 %v146
  %v739 = vunpack.c.h.b16 %v146
  %v740 = vunpack.c.l.b16 %v147
  %v741 = vunpack.c.h.b16 %v147
  %v742 = vunpack.c.l.b16 %v148
  %v743 = vunpack.c.h.b16 %v148
  %v744 = vunpack.c.l.b16 %v149
  %v745 = vunpack.c.h.b16 %v149
  %v746 = vunpack.c.l.b16 %v150
  %v747 = vunpack.c.h.b16 %v150
  %v748 = vunpack.c.l.b16 %v151
  %v749 = vunpack.c.h.b16 %v151
  %v750 = vunpack.c.l.b16 %v152
  %v751 = vunpack.c.h.b16 %v152
  %v752 = vunpack.c.l.b16 %v153
  %v753 = vunpack.c.h.b16 %v153
  %v754 = vunpack.c.l.b16 %v154
  %v755 = vunpack.c.h.b16 %v154
  %v756 = vunpack.c.l.b16 %v155
  %v757 = vunpack.c.h.b16 %v155
  %v758 = vunpack.c.l.b16 %v156
  %v759 = vunpack.c.h.b16 %v156
  %v760 = vunpack.c.l.b16 %v157
  %v761 = vunpack.c.h.b16 %v157
  %v762 = vunpack.c.l.b16 %v158
  %v763 = vunpack.c.h.b16 %v158
  %v764 = vunpack.c.l.b16 %v159
  %v765 = vunpack.c.h.b16 %v159
  %v766 = vunpack.c.l.b16 %v160
  %v767 = vunpack.c.h.b16 %v160
  %v768 = vunpack.c.l.b16 %v161
  %v769 = vunpack.c.h.b16 %v161
  %v770 = vunpack.c.l.b16 %v162
  %v771 = vunpack.c.h.b16 %v162
  %v772 = vunpack.c.l.b16 %v163
  %v773 = vunpack.c.h.b16 %v163
  %v774 = vunpack.c.l.b16 %v164
  %v775 = vunpack.c.h.b16 %v164
  %v776 = vunpack.c.l.b16 %v165
  %v777 = vunpack.c.h.b16 %v165
  %v778 = vunpack.c.l.b16 %v166
  %v779 = vunpack.c.h.b16 %v166
  %v780 = vunpack.c.l.b16 %v167
  %v781 = vunpack.c.h.b16 %v167
  %v782 = vunpack.c.l.b16 %v168
  %v783 = vunpack.c.h.b16 %v168
  %v784 = vunpack.c.l.b16 %v169
  %v785 = vunpack.c.h.b16 %v169
  %v786 = vunpack.c.l.b16 %v170
  %v787 = vunpack.c.h.b16 %v170
  %v788 = vunpack.c.l.b16 %v171
  %v789 = vunpack.c.h.b16 %v171
  %v790 = vunpack.c.l.b16 %v172
  %v791 = vunpack.c.h.b16 %v172
  %v792 = vunpack.c.l.b16 %v173
  %v793 = vunpack.c.h.b16 %v173
  %v794 = vunpack.c.l.b16 %v174
  %v795 = vunpack.c.h.b16 %v174
  %v796 = vunpack.c.l.b16 %v175
  %v797 = vunpack.c.h.b16 %v175
  %v798 = vunpack.c.l.b16 %v176
  %v799 = vunpack.c.h.b16 %v176
  %v800 = vunpack.c.l.b16 %v177
  %v801 = vunpack.c.h.b16 %v177
  %v802 = vunpack.c.l.b16 %v178
  %v803 = vunpack.c.h.b16 %v178
  %v804 = vunpack.c.l.b16 %v179
  %v805 = vunpack.c.h.b16 %v179
  %v806 = vunpack.c.l.b16 %v180
  %v807 = vunpack.c.h.b16 %v180
  %v808 = vunpack.c.l.b16 %v181
  %v809 = vunpack.c.h.b16 %v181
  %v810 = vunpack.c.l.b16 %v182
  %v811 = vunpack.c.h.b16 %v182
  %v812 = vunpack.c.l.b16 %v183
  %v813 = vunpack.c.h.b16 %v183
  %v814 = vunpack.c.l.b16 %v184
  %v815 = vunpack.c.h.b16 %v184
  %v816 = vunpack.c.l.b16 %v185
  %v817 = vunpack.c.h.b16 %v185
  %v818 = vunpack.c.l.b16 %v186
  %v819 = vunpack.c.h.b16 %v186
  %v820 = vunpack.c.l.b16 %v187
  %v821 = vunpack.c.h.b16 %v187
  %v822 = vunpack.c.l.b16 %v188
  %v823 = vunpack.c.h.b16 %v188
  %v824 = vunpack.c.l.b16 %v189
  %v825 = vunpack.c.h.b16 %v189
  %v826 = vunpack.c.l.b16 %v190
  %v827 = vunpack.c.h.b16 %v190
  %v828 = vunpack.c.l.b16 %v191
  %v829 = vunpack.c.h.b16 %v191
  %v830 = vunpack.c.l.b16 %v192
  %v831 = vunpack.c.h.b16 %v192
  %v832 = vunpack.c.l.b16 %v193
  %v833 = vunpack.c.h.b16 %v193
  %v834 = vunpack.c.l.b16 %v194
  %v835 = vunpack.c.h.b16 %v194
  %v836 = vunpack.c.l.b16 %v195
  %v837 = vunpack.c.h.b16 %v195
  %v838 = vunpack.c.l.b16 %v196
  %v839 = vunpack.c.h.b16 %v196
  %v840 = vunpack.c.l.b16 %v197
  %v841 = vunpack.c.h.b16 %v197
  %v842 = vunpack.c.l.b16 %v198
  %v843 = vunpack.c.h.b16 %v198
  %v844 = vunpack.c.l.b16 %v199
  %v845 = vunpack.c.h.b16 %v199
  %v846 = vunpack.c.l.b16 %v200
  %v847 = vunpack.c.h.b16 %v200
  %v848 = vunpack.c.l.b16 %v201
  %v849 = vunpack.c.h.b16 %v201
  %v850 = vunpack.c.l.b16 %v202
  %v851 = vunpack.c.h.b16 %v202
  %v852 = vunpack.c.l.b16 %v203
  %v853 = vunpack.c.h.b16 %v203
  %v854 = vunpack.c.l.b16 %v204
  %v855 = vunpack.c.h.b16 %v204
  %v856 = vunpack.c.l.b16 %v205
  %v857 = vunpack.c.h.b16 %v205
  %v858 = vunpack.c.l.b16 %v206
  %v859 = vunpack.c.h.b16 %v206
  %v860 = vunpack.c.l.b16 %v207
  %v861 = vunpack.c.h.b16 %v207
  %v862 = vunpack.c.l.b16 %v208
  %v863 = vunpack.c.h.b16 %v208
  %v864 = vunpack.c.l.b16 %v209
  %v865 = vunpack.c.h.b16 %v209
  %v866 = vunpack.c.l.b16 %v210
  %v867 = vunpack.c.h.b16 %v210
  %v868 = vunpack.c.l.b16 %v211
  %v869 = vunpack.c.h.b16 %v211
  %v870 = vunpack.c.l.b16 %v212
  %v871 = vunpack.c.h.b16 %v212
  %v872 = vunpack.c.l.b16 %v213
  %v873 = vunpack.c.h.b16 %v213
  %v874 = vunpack.c.l.b16 %v214
  %v875 = vunpack.c.h.b16 %v214
  %v876 = vunpack.c.l.b16 %v215
  %v877 = vunpack.c.h.b16 %v215
  %v878 = vunpack.c.l.b16 %v216
  %v879 = vunpack.c.h.b16 %v216
  %v880 = vunpack.c.l.b16 %v217
  %v881 = vunpack.c.h.b16 %v217
  %v882 = vpack.c.b16 %v486, %v482
  %v883 = vpack.c.b16 %v487, %v483
  %v884 = vpack.c.b16 %v488, %v484
  %v885 = vpack.c.b16 %v489, %v485
  %v886 = vpack.c.b16 %v494, %v490
  %v887 = vpack.c.b16 %v495, %v491
  %v888 = vpack.c.b16 %v496, %v492
  %v889 = vpack.c.b16 %v497, %v493
  %v890 = vpack.c.b16 %v502, %v498
  %v891 = vpack.c.b16 %v503, %v499
  %v892 = vpack.c.b16 %v504, %v500
  %v893 = vpack.c.b16 %v505, %v501
  %v894 = vpack.c.b16 %v510, %v506
  %v895 = vpack.c.b16 %v511, %v507
  %v896 = vpack.c.b16 %v512, %v508
  %v897 = vpack.c.b16 %v513, %v509
  %v898 = vpack.c.b16 %v518, %v514
  %v899 = vpack.c.b16 %v519, %v515
  %v900 = vpack.c.b16 %v520, %v516
  %v901 = vpack.c.b16 %v521, %v517
  %v902 = vpack.c.b16 %v526, %v522
  %v903 = vpack.c.b16 %v527, %v523
  %v904 = vpack.c.b16 %v528, %v524
  %v905 = vpack.c.b16 %v529, %v525
  %v906 = vpack.c.b16 %v534, %v530
  %v907 = vpack.c.b16 %v535, %v531
  %v908 = vpack.c.b16 %v536, %v532
  %v909 = vpack.c.b16 %v537, %v533
  %v910 = vpack.c.b16 %v542, %v538
  %v911 = vpack.c.b16 %v543, %v539
  %v912 = vpack.c.b16 %v544, %v540
  %v913 = vpack.c.b16 %v545, %v541
  %v914 = vpack.c.b16 %v550, %v546
  %v915 = vpack.c.b16 %v551, %v547
  %v916 = vpack.c.b16 %v552, %v548
  %v917 = vpack.c.b16 %v553, %v549
  %v918 = vpack.c.b16 %v558, %v554
  %v919 = vpack.c.b16 %v559, %v555
  %v920 = vpack.c.b16 %v560, %v556
  %v921 = vpack.c.b16 %v561, %v557
  %v922 = vpack.c.b16 %v566, %v562
  %v923 = vpack.c.b16 %v567, %v563
  %v924 = vpack.c.b16 %v568, %v564
  %v925 = vpack.c.b16 %v569, %v565
  %v926 = vpack.c.b16 %v574, %v570
  %v927 = vpack.c.b16 %v575, %v571
  %v928 = vpack.c.b16 %v576, %v572
  %v929 = vpack.c.b16 %v577, %v573
  %v930 = vpack.c.b16 %v582, %v578
  %v931 = vpack.c.b16 %v583, %v579
  %v932 = vpack.c.b16 %v584, %v580
  %v933 = vpack.c.b16 %v585, %v581
  %v934 = vpack.c.b16 %v590, %v586
  %v935 = vpack.c.b16 %v591, %v587
  %v936 = vpack.c.b16 %v592, %v588
  %v937 = vpack.c.b16 %v593, %v589
  %v938 = vpack.c.b16 %v598, %v594
  %v939 = vpack.c.b16 %v599, %v595
  %v940 = vpack.c.b16 %v600, %v596
  %v941 = vpack.c.b16 %v601, %v597
  %v942 = vpack.c.b16 %v606, %v602
  %v943 = vpack.c.b16 %v607, %v603
  %v944 = vpack.c.b16 %v608, %v604
  %v945 = vpack.c.b16 %v609, %v605
  %v946 = vpack.c.b16 %v614, %v610
  %v947 = vpack.c.b16 %v615, %v611
  %v948 = vpack.c.b16 %v616, %v612
  %v949 = vpack.c.b16 %v617, %v613
  %v950 = vpack.c.b16 %v622, %v618
  %v951 = vpack.c.b16 %v623, %v619
  %v952 = vpack.c.b16 %v624, %v620
  %v953 = vpack.c.b16 %v625, %v621
  %v954 = vpack.c.b16 %v630, %v626
  %v955 = vpack.c.b16 %v631, %v627
  %v956 = vpack.c.b16 %v632, %v628
  %v957 = vpack.c.b16 %v633, %v629
  %v958 = vpack.c.b16 %v638, %v634
  %v959 = vpack.c.b16 %v639, %v635
  %v960 = vpack.c.b16 %v640, %v636
  %v961 = vpack.c.b16 %v641, %v637
  %v962 = vpack.c.b16 %v646, %v642
  %v963 = vpack.c.b16 %v647, %v643
  %v964 = vpack.c.b16 %v648, %v644
  %v965 = vpack.c.b16 %v649, %v645
  %v966 = vpack.c.b16 %v654, %v650
  %v967 = vpack.c.b16 %v655, %v651
  %v968 = vpack.c.b16 %v656, %v652
  %v969 = vpack.c.b16 %v657, %v653
  %v970 = vpack.c.b16 %v662, %v658
  %v971 = vpack.c.b16 %v663, %v659
  %v972 = vpack.c.b16 %v664, %v660
  %v973 = vpack.c.b16 %v665, %v661
  %v974 = vpack.c.b16 %v670, %v666
  %v975 = vpack.c.b16 %v671, %v667
  %v976 = vpack.c.b16 %v672, %v668
  %v977 = vpack.c.b16 %v673, %v669
  %v978 = vpack.c.b16 %v678, %v674
  %v979 = vpack.c.b16 %v679, %v675
  %v980 = vpack.c.b16 %v680, %v676
  %v981 = vpack.c.b16 %v681, %v677
  %v982 = vpack.c.b16 %v686, %v682
  %v983 = vpack.c.b16 %v687, %v683
  %v984 = vpack.c.b16 %v688, %v684
  %v985 = vpack.c.b16 %v689, %v685
  %v986 = vpack.c.b16 %v694, %v690
  %v987 = vpack.c.b16 %v695, %v691
  %v988 = vpack.c.b16 %v696, %v692
  %v989 = vpack.c.b16 %v697, %v693
  %v990 = vpack.c.b16 %v702, %v698
  %v991 = vpack.c.b16 %v703, %v699
  %v992 = vpack.c.b16 %v704, %v700
  %v993 = vpack.c.b16 %v705, %v701
  %v994 = vpack.c.b16 %v710, %v706
  %v995 = vpack.c.b16 %v711, %v707
  %v996 = vpack.c.b16 %v712, %v708
  %v997 = vpack.c.b16 %v713, %v709
  %v998 = vpack.c.b16 %v718, %v714
  %v999 = vpack.c.b16 %v719, %v715
  %v1000 = vpack.c.b16 %v720, %v716
  %v1001 = vpack.c.b16 %v721, %v717
  %v1002 = vpack.c.b16 %v726, %v722
  %v1003 = vpack.c.b16 %v727, %v723
  %v1004 = vpack.c.b16 %v728, %v724
  %v1005 = vpack.c.b16 %v729, %v725
  %v1006 = vpack.c.b16 %v734, %v730
  %v1007 = vpack.c.b16 %v735, %v731
  %v1008 = vpack.c.b16 %v736, %v732
  %v1009 = vpack.c.b16 %v737, %v733
  %v1010 = vpack.c.b16 %v742, %v738
  %v1011 = vpack.c.b16 %v743, %v739
  %v1012 = vpack.c.b16 %v744, %v740
  %v1013 = vpack.c.b16 %v745, %v741
  %v1014 = vpack.c.b16 %v750, %v746
  %v1015 = vpack.c.b16 %v751, %v747
  %v1016 = vpack.c.b16 %v752, %v748
  %v1017 = vpack.c.b16 %v753, %v749
  %v1018 = vpack.c.b16 %v758, %v754
  %v1019 = vpack.c.b16 %v759, %v755
  %v1020 = vpack.c.b16 %v760, %v756
  %v1021 = vpack.c.b16 %v761, %v757
  %v1022 = vpack.c.b16 %v766, %v762
  %v1023 = vpack.c.b16 %v767, %v763
  %v1024 = vpack.c.b16 %v768, %v764
  %v1025 = vpack.c.b16 %v769, %v765
  %v1026 = vpack.c.b16 %v774, %v770
  %v1027 = vpack.c.b16 %v775, %v771
  %v1028 = vpack.c.b16 %v776, %v772
  %v1029 = vpack.c.b16 %v777, %v773
  %v1030 = vpack.c.b16 %v782, %v778
  %v1031 = vpack.c.b16 %v783, %v779
  %v1032 = vpack.c.b16 %v784, %v780
  %v1033 = vpack.c.b16 %v785, %v781
  %v1034 = vpack.c.b16 %v790, %v786
  %v1035 = vpack.c.b16 %v791, %v787
  %v1036 = vpack.c.b16 %v792, %v788
  %v1037 = vpack.c.b16 %v793, %v789
  %v1038 = vpack.c.b16 %v798, %v794
  %v1039 = vpack.c.b16 %v799, %v795
  %v1040 = vpack.c.b16 %v800, %v796
  %v1041 = vpack.c.b16 %v801, %v797
  %v1042 = vpack.c.b16 %v806, %v802
  %v1043 = vpack.c.b16 %v807, %v803
  %v1044 = vpack.c.b16 %v808, %v804
  %v1045 = vpack.c.b16 %v809, %v805
  %v1046 = vpack.c.b16 %v814, %v810
  %v1047 = vpack.c.b16 %v815, %v811
  %v1048 = vpack.c.b16 %v816, %v812
  %v1049 = vpack.c.b16 %v817, %v813
  %v1050 = vpack.c.b16 %v822, %v818
  %v1051 = vpack.c.b16 %v823, %v819
  %v1052 = vpack.c.b16 %v824, %v820
  %v1053 = vpack.c.b16 %v825, %v821
  %v1054 = vpack.c.b16 %v830, %v826
  %v1055 = vpack.c.b16 %v831, %v827
  %v1056 = vpack.c.b16 %v832, %v828
  %v1057 = vpack.c.b16 %v833, %v829
  %v1058 = vpack.c.b16 %v838, %v834
  %v1059 = vpack.c.b16 %v839, %v835
  %v1060 = vpack.c.b16 %v840, %v836
  %v1061 = vpack.c.b16 %v841, %v837
  %v1062 = vpack.c.b16 %v846, %v842
  %v1063 = vpack.c.b16 %v847, %v843
  %v1064 = vpack.c.b16 %v848, %v844
  %v1065 = vpack.c.b16 %v849, %v845
  %v1066 = vpack.c.b16 %v854, %v850
  %v1067 = vpack.c.b16 %v855, %v851
  %v1068 = vpack.c.b16 %v856, %v852
  %v1069 = vpack.c.b16 %v857, %v853
  %v1070 = vpack.c.b16 %v862, %v858
  %v1071 = vpack.c.b16 %v863, %v859
  %v1072 = vpack.c.b16 %v864, %v860
  %v1073 = vpack.c.b16 %v865, %v861
  %v1074 = vpack.c.b16 %v870, %v866
  %v1075 = vpack.c.b16 %v871, %v867
  %v1076 = vpack.c.b16 %v872, %v868
  %v1077 = vpack.c.b16 %v873, %v869
  %v1078 = vpack.c.b16 %v878, %v874
  %v1079 = vpack.c.b16 %v879, %v875
  %v1080 = vpack.c.b16 %v880, %v876
  %v1081 = vpack.c.b16 %v881, %v877
  %v1346 = vunpack.c.l.b16 %v218
  %v1347 = vunpack.c.l.b16 %v219
  %v1348 = vunpack.c.l.b16 %v220
  %v1349 = vunpack.c.l.b16 %v221
  %v1350 = vunpack.c.l.b16 %v222
  %v1351 = vunpack.c.l.b16 %v223
  %v1352 = vunpack.c.l.b16 %v224
  %v1353 = vunpack.c.l.b16 %v225
  %v1354 = vunpack.c.l.b16 %v226
  %v1355 = vunpack.c.l.b16 %v227
  %v1356 = vunpack.c.l.b16 %v228
  %v1357 = vunpack.c.l.b16 %v229
  %v1358 = vunpack.c.l.b16 %v230
  %v1359 = vunpack.c.l.b16 %v231
  %v1360 = vunpack.c.l.b16 %v232
  %v1361 = vunpack.c.l.b16 %v233
  %v1362 = vunpack.c.l.b16 %v234
  %v1363 = vunpack.c.l.b16 %v235
  %v1364 = vunpack.c.l.b16 %v236
  %v1365 = vunpack.c.l.b16 %v237
  %v1366 = vunpack.c.l.b16 %v238
  %v1367 = vunpack.c.l.b16 %v239
  %v1368 = vunpack.c.l.b16 %v240
  %v1369 = vunpack.c.l.b16 %v241
  %v1370 = vunpack.c.l.b16 %v242
  %v1371 = vunpack.c.l.b16 %v243
  %v1372 = vunpack.c.l.b16 %v244
  %v1373 = vunpack.c.l.b16 %v245
  %v1374 = vunpack.c.l.b16 %v246
  %v1375 = vunpack.c.l.b16 %v247
  %v1376 = vunpack.c.l.b16 %v248
  %v1377 = vunpack.c.l.b16 %v249
  %v1378 = vunpack.c.l.b16 %v250
  %v1379 = vunpack.c.l.b16 %v251
  %v1380 = vunpack.c.l.b16 %v252
  %v1381 = vunpack.c.l.b16 %v253
  %v1382 = vunpack.c.l.b16 %v254
  %v1383 = vunpack.c.l.b16 %v255
  %v1384 = vunpack.c.l.b16 %v256
  %v1385 = vunpack.c.l.b16 %v257
  %v1386 = vunpack.c.l.b16 %v258
  %v1387 = vunpack.c.l.b16 %v259
  %v1388 = vunpack.c.l.b16 %v260
  %v1389 = vunpack.c.l.b16 %v261
  %v1390 = vunpack.c.l.b16 %v262
  %v1391 = vunpack.c.l.b16 %v263
  %v1392 = vunpack.c.l.b16 %v264
  %v1393 = vunpack.c.l.b16 %v265
  %v1394 = vunpack.c.l.b16 %v266
  %v1395 = vunpack.c.l.b16 %v267
  %v1396 = vunpack.c.l.b16 %v268
  %v1397 = vunpack.c.l.b16 %v269
  %v1398 = vunpack.c.l.b16 %v270
  %v1399 = vunpack.c.l.b16 %v271
  %v1400 = vunpack.c.l.b16 %v272
  %v1401 = vunpack.c.l.b16 %v273
  %v1402 = vunpack.c.l.b16 %v274
  %v1403 = vunpack.c.l.b16 %v275
  %v1404 = vunpack.c.l.b16 %v276
  %v1405 = vunpack.c.l.b16 %v277
  %v1406 = vunpack.c.l.b16 %v278
  %v1407 = vunpack.c.l.b16 %v279
  %v1408 = vunpack.c.l.b16 %v280
  %v1409 = vunpack.c.l.b16 %v281
  %v1410 = vpack.c.b16 %v1347, %v1346
  %v1411 = vpack.c.b16 %v1349, %v1348
  %v1412 = vpack.c.b16 %v1351, %v1350
  %v1413 = vpack.c.b16 %v1353, %v1352
  %v1414 = vpack.c.b16 %v1355, %v1354
  %v1415 = vpack.c.b16 %v1357, %v1356
  %v1416 = vpack.c.b16 %v1359, %v1358
  %v1417 = vpack.c.b16 %v1361, %v1360
  %v1418 = vpack.c.b16 %v1363, %v1362
  %v1419 = vpack.c.b16 %v1365, %v1364
  %v1420 = vpack.c.b16 %v1367, %v1366
  %v1421 = vpack.c.b16 %v1369, %v1368
  %v1422 = vpack.c.b16 %v1371, %v1370
  %v1423 = vpack.c.b16 %v1373, %v1372
  %v1424 = vpack.c.b16 %v1375, %v1374
  %v1425 = vpack.c.b16 %v1377, %v1376
  %v1426 = vpack.c.b16 %v1379, %v1378
  %v1427 = vpack.c.b16 %v1381, %v1380
  %v1428 = vpack.c.b16 %v1383, %v1382
  %v1429 = vpack.c.b16 %v1385, %v1384
  %v1430 = vpack.c.b16 %v1387, %v1386
  %v1431 = vpack.c.b16 %v1389, %v1388
  %v1432 = vpack.c.b16 %v1391, %v1390
  %v1433 = vpack.c.b16 %v1393, %v1392
  %v1434 = vpack.c.b16 %v1395, %v1394
  %v1435 = vpack.c.b16 %v1397, %v1396
  %v1436 = vpack.c.b16 %v1399, %v1398
  %v1437 = vpack.c.b16 %v1401, %v1400
  %v1438 = vpack.c.b16 %v1403, %v1402
  %v1439 = vpack.c.b16 %v1405, %v1404
  %v1440 = vpack.c.b16 %v1407, %v1406
  %v1441 = vpack.c.b16 %v1409, %v1408
  %1474 = vmatprep.subr.bf16.mxu0 0
  %1475 = vmatpush1.bf16.msra.mxu0 %v1410
  %1476 = vmatprep.subr.bf16.mxu0 0
  %1477 = vmatpush1.bf16.msra.mxu0 %v1411
  %1478 = vmatprep.subr.bf16.mxu0 0
  %1479 = vmatpush1.bf16.msra.mxu0 %v1412
  %1480 = vmatprep.subr.bf16.mxu0 0
  %1481 = vmatpush1.bf16.msra.mxu0 %v1413
  %1482 = vmatprep.subr.bf16.mxu0 0
  %1483 = vmatpush1.bf16.msra.mxu0 %v1414
  %1484 = vmatprep.subr.bf16.mxu0 0
  %1485 = vmatpush1.bf16.msra.mxu0 %v1415
  %1486 = vmatprep.subr.bf16.mxu0 0
  %1487 = vmatpush1.bf16.msra.mxu0 %v1416
  %1488 = vmatprep.subr.bf16.mxu0 0
  %1489 = vmatpush1.bf16.msra.mxu0 %v1417
  %1490 = vmatprep.subr.bf16.mxu0 0
  %1491 = vmatpush1.bf16.msra.mxu0 %v1418
  %1492 = vmatprep.subr.bf16.mxu0 0
  %1493 = vmatpush1.bf16.msra.mxu0 %v1419
  %1494 = vmatprep.subr.bf16.mxu0 0
  %1495 = vmatpush1.bf16.msra.mxu0 %v1420
  %1496 = vmatprep.subr.bf16.mxu0 0
  %1497 = vmatpush1.bf16.msra.mxu0 %v1421
  %1498 = vmatprep.subr.bf16.mxu0 0
  %1499 = vmatpush1.bf16.msra.mxu0 %v1422
  %1500 = vmatprep.subr.bf16.mxu0 0
  %1501 = vmatpush1.bf16.msra.mxu0 %v1423
  %1502 = vmatprep.subr.bf16.mxu0 0
  %1503 = vmatpush1.bf16.msra.mxu0 %v1424
  %1504 = vmatprep.subr.bf16.mxu0 0
  %1505 = vmatpush1.bf16.msra.mxu0 %v1425
  %1506 = vmatprep.mubr.bf16.mxu0 %v883
  %1507 = vmatmul.mubr.bf16.gmra.mrb[0].mxu0 %v882
  %v1508 = vpop.f32.mrb[0].mxu0
  %v1509 = vadd.f32 0.0, %v1508
  %v1510 = vpop.f32.mrb[0].mxu0
  %v1511 = vpop.f32.mrb[0].mxu0
  %v1512 = vadd.f32 0.0, %v1511
  %v1513 = vpop.f32.mrb[0].mxu0
  %1514 = vmatprep.mubr.bf16.mxu0 %v887
  %1515 = vmatmul.mubr.bf16.gmra.mrb[0].mxu0 %v886
  %v1516 = vpop.f32.mrb[0].mxu0
  %v1517 = vadd.f32 0.0, %v1516
  %v1518 = vpop.f32.mrb[0].mxu0
  %v1519 = vpop.f32.mrb[0].mxu0
  %v1520 = vadd.f32 0.0, %v1519
  %v1521 = vpop.f32.mrb[0].mxu0
  %1522 = vmatprep.mubr.bf16.mxu0 %v891
  %1523 = vmatmul.mubr.bf16.gmra.mrb[0].mxu0 %v890
  %v1524 = vpop.f32.mrb[0].mxu0
  %v1525 = vadd.f32 0.0, %v1524
  %v1526 = vpop.f32.mrb[0].mxu0
  %v1527 = vpop.f32.mrb[0].mxu0
  %v1528 = vadd.f32 0.0, %v1527
  %v1529 = vpop.f32.mrb[0].mxu0
  %1530 = vmatprep.mubr.bf16.mxu0 %v895
  %1531 = vmatmul.mubr.bf16.gmra.mrb[0].mxu0 %v894
  %v1532 = vpop.f32.mrb[0].mxu0
  %v1533 = vadd.f32 0.0, %v1532
  %v1534 = vpop.f32.mrb[0].mxu0
  %v1535 = vpop.f32.mrb[0].mxu0
  %v1536 = vadd.f32 0.0, %v1535
  %v1537 = vpop.f32.mrb[0].mxu0
  %1538 = vmatprep.mubr.bf16.mxu0 %v899
  %1539 = vmatmul.mubr.bf16.gmra.mrb[0].mxu0 %v898
  %v1540 = vpop.f32.mrb[0].mxu0
  %v1541 = vadd.f32 0.0, %v1540
  %v1542 = vpop.f32.mrb[0].mxu0
  %v1543 = vpop.f32.mrb[0].mxu0
  %v1544 = vadd.f32 0.0, %v1543
  %v1545 = vpop.f32.mrb[0].mxu0
  %1546 = vmatprep.mubr.bf16.mxu0 %v903
  %1547 = vmatmul.mubr.bf16.gmra.mrb[0].mxu0 %v902
  %v1548 = vpop.f32.mrb[0].mxu0
  %v1549 = vadd.f32 0.0, %v1548
  %v1550 = vpop.f32.mrb[0].mxu0
  %v1551 = vpop.f32.mrb[0].mxu0
  %v1552 = vadd.f32 0.0, %v1551
  %v1553 = vpop.f32.mrb[0].mxu0
  %1554 = vmatprep.mubr.bf16.mxu0 %v907
  %1555 = vmatmul.mubr.bf16.gmra.mrb[0].mxu0 %v906
  %v1556 = vpop.f32.mrb[0].mxu0
  %v1557 = vadd.f32 0.0, %v1556
  %v1558 = vpop.f32.mrb[0].mxu0
  %v1559 = vpop.f32.mrb[0].mxu0
  %v1560 = vadd.f32 0.0, %v1559
  %v1561 = vpop.f32.mrb[0].mxu0
  %1562 = vmatprep.mubr.bf16.mxu0 %v911
  %1563 = vmatmul.mubr.bf16.gmra.mrb[0].mxu0 %v910
  %v1564 = vpop.f32.mrb[0].mxu0
  %v1565 = vadd.f32 0.0, %v1564
  %v1566 = vpop.f32.mrb[0].mxu0
  %v1567 = vpop.f32.mrb[0].mxu0
  %v1568 = vadd.f32 0.0, %v1567
  %v1569 = vpop.f32.mrb[0].mxu0
  %1570 = vmatprep.mubr.bf16.mxu0 %v915
  %1571 = vmatmul.mubr.bf16.gmra.mrb[0].mxu0 %v914
  %v1572 = vpop.f32.mrb[0].mxu0
  %v1573 = vadd.f32 0.0, %v1572
  %v1574 = vpop.f32.mrb[0].mxu0
  %v1575 = vpop.f32.mrb[0].mxu0
  %v1576 = vadd.f32 0.0, %v1575
  %v1577 = vpop.f32.mrb[0].mxu0
  %1578 = vmatprep.mubr.bf16.mxu0 %v919
  %1579 = vmatmul.mubr.bf16.gmra.mrb[0].mxu0 %v918
  %v1580 = vpop.f32.mrb[0].mxu0
  %v1581 = vadd.f32 0.0, %v1580
  %v1582 = vpop.f32.mrb[0].mxu0
  %v1583 = vpop.f32.mrb[0].mxu0
  %v1584 = vadd.f32 0.0, %v1583
  %v1585 = vpop.f32.mrb[0].mxu0
  %1586 = vmatprep.mubr.bf16.mxu0 %v923
  %1587 = vmatmul.mubr.bf16.gmra.mrb[0].mxu0 %v922
  %v1588 = vpop.f32.mrb[0].mxu0
  %v1589 = vadd.f32 0.0, %v1588
  %v1590 = vpop.f32.mrb[0].mxu0
  %v1591 = vpop.f32.mrb[0].mxu0
  %v1592 = vadd.f32 0.0, %v1591
  %v1593 = vpop.f32.mrb[0].mxu0
  %1594 = vmatprep.mubr.bf16.mxu0 %v927
  %1595 = vmatmul.mubr.bf16.gmra.mrb[0].mxu0 %v926
  %v1596 = vpop.f32.mrb[0].mxu0
  %v1597 = vadd.f32 0.0, %v1596
  %v1598 = vpop.f32.mrb[0].mxu0
  %v1599 = vpop.f32.mrb[0].mxu0
  %v1600 = vadd.f32 0.0, %v1599
  %v1601 = vpop.f32.mrb[0].mxu0
  %1602 = vmatprep.mubr.bf16.mxu0 %v931
  %1603 = vmatmul.mubr.bf16.gmra.mrb[0].mxu0 %v930
  %v1604 = vpop.f32.mrb[0].mxu0
  %v1605 = vadd.f32 0.0, %v1604
  %v1606 = vpop.f32.mrb[0].mxu0
  %v1607 = vpop.f32.mrb[0].mxu0
  %v1608 = vadd.f32 0.0, %v1607
  %v1609 = vpop.f32.mrb[0].mxu0
  %1610 = vmatprep.mubr.bf16.mxu0 %v935
  %1611 = vmatmul.mubr.bf16.gmra.mrb[0].mxu0 %v934
  %v1612 = vpop.f32.mrb[0].mxu0
  %v1613 = vadd.f32 0.0, %v1612
  %v1614 = vpop.f32.mrb[0].mxu0
  %v1615 = vpop.f32.mrb[0].mxu0
  %v1616 = vadd.f32 0.0, %v1615
  %v1617 = vpop.f32.mrb[0].mxu0
  %1618 = vmatprep.mubr.bf16.mxu0 %v939
  %1619 = vmatmul.mubr.bf16.gmra.mrb[0].mxu0 %v938
  %v1620 = vpop.f32.mrb[0].mxu0
  %v1621 = vadd.f32 0.0, %v1620
  %v1622 = vpop.f32.mrb[0].mxu0
  %v1623 = vpop.f32.mrb[0].mxu0
  %v1624 = vadd.f32 0.0, %v1623
  %v1625 = vpop.f32.mrb[0].mxu0
  %1626 = vmatprep.mubr.bf16.mxu0 %v943
  %1627 = vmatmul.mubr.bf16.gmra.mrb[0].mxu0 %v942
  %v1628 = vpop.f32.mrb[0].mxu0
  %v1629 = vadd.f32 0.0, %v1628
  %v1630 = vpop.f32.mrb[0].mxu0
  %v1631 = vpop.f32.mrb[0].mxu0
  %v1632 = vadd.f32 0.0, %v1631
  %v1633 = vpop.f32.mrb[0].mxu0
  %1634 = vmatprep.mubr.bf16.mxu0 %v947
  %1635 = vmatmul.mubr.bf16.gmra.mrb[0].mxu0 %v946
  %v1636 = vpop.f32.mrb[0].mxu0
  %v1637 = vadd.f32 0.0, %v1636
  %v1638 = vpop.f32.mrb[0].mxu0
  %v1639 = vpop.f32.mrb[0].mxu0
  %v1640 = vadd.f32 0.0, %v1639
  %v1641 = vpop.f32.mrb[0].mxu0
  %1642 = vmatprep.mubr.bf16.mxu0 %v951
  %1643 = vmatmul.mubr.bf16.gmra.mrb[0].mxu0 %v950
  %v1644 = vpop.f32.mrb[0].mxu0
  %v1645 = vadd.f32 0.0, %v1644
  %v1646 = vpop.f32.mrb[0].mxu0
  %v1647 = vpop.f32.mrb[0].mxu0
  %v1648 = vadd.f32 0.0, %v1647
  %v1649 = vpop.f32.mrb[0].mxu0
  %1650 = vmatprep.mubr.bf16.mxu0 %v955
  %1651 = vmatmul.mubr.bf16.gmra.mrb[0].mxu0 %v954
  %v1652 = vpop.f32.mrb[0].mxu0
  %v1653 = vadd.f32 0.0, %v1652
  %v1654 = vpop.f32.mrb[0].mxu0
  %v1655 = vpop.f32.mrb[0].mxu0
  %v1656 = vadd.f32 0.0, %v1655
  %v1657 = vpop.f32.mrb[0].mxu0
  %1658 = vmatprep.mubr.bf16.mxu0 %v959
  %1659 = vmatmul.mubr.bf16.gmra.mrb[0].mxu0 %v958
  %v1660 = vpop.f32.mrb[0].mxu0
  %v1661 = vadd.f32 0.0, %v1660
  %v1662 = vpop.f32.mrb[0].mxu0
  %v1663 = vpop.f32.mrb[0].mxu0
  %v1664 = vadd.f32 0.0, %v1663
  %v1665 = vpop.f32.mrb[0].mxu0
  %1666 = vmatprep.mubr.bf16.mxu0 %v963
  %1667 = vmatmul.mubr.bf16.gmra.mrb[0].mxu0 %v962
  %v1668 = vpop.f32.mrb[0].mxu0
  %v1669 = vadd.f32 0.0, %v1668
  %v1670 = vpop.f32.mrb[0].mxu0
  %v1671 = vpop.f32.mrb[0].mxu0
  %v1672 = vadd.f32 0.0, %v1671
  %v1673 = vpop.f32.mrb[0].mxu0
  %1674 = vmatprep.mubr.bf16.mxu0 %v967
  %1675 = vmatmul.mubr.bf16.gmra.mrb[0].mxu0 %v966
  %v1676 = vpop.f32.mrb[0].mxu0
  %v1677 = vadd.f32 0.0, %v1676
  %v1678 = vpop.f32.mrb[0].mxu0
  %v1679 = vpop.f32.mrb[0].mxu0
  %v1680 = vadd.f32 0.0, %v1679
  %v1681 = vpop.f32.mrb[0].mxu0
  %1682 = vmatprep.mubr.bf16.mxu0 %v971
  %1683 = vmatmul.mubr.bf16.gmra.mrb[0].mxu0 %v970
  %v1684 = vpop.f32.mrb[0].mxu0
  %v1685 = vadd.f32 0.0, %v1684
  %v1686 = vpop.f32.mrb[0].mxu0
  %v1687 = vpop.f32.mrb[0].mxu0
  %v1688 = vadd.f32 0.0, %v1687
  %v1689 = vpop.f32.mrb[0].mxu0
  %1690 = vmatprep.mubr.bf16.mxu0 %v975
  %1691 = vmatmul.mubr.bf16.gmra.mrb[0].mxu0 %v974
  %v1692 = vpop.f32.mrb[0].mxu0
  %v1693 = vadd.f32 0.0, %v1692
  %v1694 = vpop.f32.mrb[0].mxu0
  %v1695 = vpop.f32.mrb[0].mxu0
  %v1696 = vadd.f32 0.0, %v1695
  %v1697 = vpop.f32.mrb[0].mxu0
  %1698 = vmatprep.mubr.bf16.mxu0 %v979
  %1699 = vmatmul.mubr.bf16.gmra.mrb[0].mxu0 %v978
  %v1700 = vpop.f32.mrb[0].mxu0
  %v1701 = vadd.f32 0.0, %v1700
  %v1702 = vpop.f32.mrb[0].mxu0
  %v1703 = vpop.f32.mrb[0].mxu0
  %v1704 = vadd.f32 0.0, %v1703
  %v1705 = vpop.f32.mrb[0].mxu0
  %1706 = vmatprep.mubr.bf16.mxu0 %v983
  %1707 = vmatmul.mubr.bf16.gmra.mrb[0].mxu0 %v982
  %v1708 = vpop.f32.mrb[0].mxu0
  %v1709 = vadd.f32 0.0, %v1708
  %v1710 = vpop.f32.mrb[0].mxu0
  %v1711 = vpop.f32.mrb[0].mxu0
  %v1712 = vadd.f32 0.0, %v1711
  %v1713 = vpop.f32.mrb[0].mxu0
  %1714 = vmatprep.mubr.bf16.mxu0 %v987
  %1715 = vmatmul.mubr.bf16.gmra.mrb[0].mxu0 %v986
  %v1716 = vpop.f32.mrb[0].mxu0
  %v1717 = vadd.f32 0.0, %v1716
  %v1718 = vpop.f32.mrb[0].mxu0
  %v1719 = vpop.f32.mrb[0].mxu0
  %v1720 = vadd.f32 0.0, %v1719
  %v1721 = vpop.f32.mrb[0].mxu0
  %1722 = vmatprep.mubr.bf16.mxu0 %v991
  %1723 = vmatmul.mubr.bf16.gmra.mrb[0].mxu0 %v990
  %v1724 = vpop.f32.mrb[0].mxu0
  %v1725 = vadd.f32 0.0, %v1724
  %v1726 = vpop.f32.mrb[0].mxu0
  %v1727 = vpop.f32.mrb[0].mxu0
  %v1728 = vadd.f32 0.0, %v1727
  %v1729 = vpop.f32.mrb[0].mxu0
  %1730 = vmatprep.mubr.bf16.mxu0 %v995
  %1731 = vmatmul.mubr.bf16.gmra.mrb[0].mxu0 %v994
  %v1732 = vpop.f32.mrb[0].mxu0
  %v1733 = vadd.f32 0.0, %v1732
  %v1734 = vpop.f32.mrb[0].mxu0
  %v1735 = vpop.f32.mrb[0].mxu0
  %v1736 = vadd.f32 0.0, %v1735
  %v1737 = vpop.f32.mrb[0].mxu0
  %1738 = vmatprep.mubr.bf16.mxu0 %v999
  %1739 = vmatmul.mubr.bf16.gmra.mrb[0].mxu0 %v998
  %v1740 = vpop.f32.mrb[0].mxu0
  %v1741 = vadd.f32 0.0, %v1740
  %v1742 = vpop.f32.mrb[0].mxu0
  %v1743 = vpop.f32.mrb[0].mxu0
  %v1744 = vadd.f32 0.0, %v1743
  %v1745 = vpop.f32.mrb[0].mxu0
  %1746 = vmatprep.mubr.bf16.mxu0 %v1003
  %1747 = vmatmul.mubr.bf16.gmra.mrb[0].mxu0 %v1002
  %v1748 = vpop.f32.mrb[0].mxu0
  %v1749 = vadd.f32 0.0, %v1748
  %v1750 = vpop.f32.mrb[0].mxu0
  %v1751 = vpop.f32.mrb[0].mxu0
  %v1752 = vadd.f32 0.0, %v1751
  %v1753 = vpop.f32.mrb[0].mxu0
  %1754 = vmatprep.mubr.bf16.mxu0 %v1007
  %1755 = vmatmul.mubr.bf16.gmra.mrb[0].mxu0 %v1006
  %v1756 = vpop.f32.mrb[0].mxu0
  %v1757 = vadd.f32 0.0, %v1756
  %v1758 = vpop.f32.mrb[0].mxu0
  %v1759 = vpop.f32.mrb[0].mxu0
  %v1760 = vadd.f32 0.0, %v1759
  %v1761 = vpop.f32.mrb[0].mxu0
  %1762 = vmatprep.mubr.bf16.mxu0 %v1011
  %1763 = vmatmul.mubr.bf16.gmra.mrb[0].mxu0 %v1010
  %v1764 = vpop.f32.mrb[0].mxu0
  %v1765 = vadd.f32 0.0, %v1764
  %v1766 = vpop.f32.mrb[0].mxu0
  %v1767 = vpop.f32.mrb[0].mxu0
  %v1768 = vadd.f32 0.0, %v1767
  %v1769 = vpop.f32.mrb[0].mxu0
  %1770 = vmatprep.mubr.bf16.mxu0 %v1015
  %1771 = vmatmul.mubr.bf16.gmra.mrb[0].mxu0 %v1014
  %v1772 = vpop.f32.mrb[0].mxu0
  %v1773 = vadd.f32 0.0, %v1772
  %v1774 = vpop.f32.mrb[0].mxu0
  %v1775 = vpop.f32.mrb[0].mxu0
  %v1776 = vadd.f32 0.0, %v1775
  %v1777 = vpop.f32.mrb[0].mxu0
  %1778 = vmatprep.mubr.bf16.mxu0 %v1019
  %1779 = vmatmul.mubr.bf16.gmra.mrb[0].mxu0 %v1018
  %v1780 = vpop.f32.mrb[0].mxu0
  %v1781 = vadd.f32 0.0, %v1780
  %v1782 = vpop.f32.mrb[0].mxu0
  %v1783 = vpop.f32.mrb[0].mxu0
  %v1784 = vadd.f32 0.0, %v1783
  %v1785 = vpop.f32.mrb[0].mxu0
  %1786 = vmatprep.mubr.bf16.mxu0 %v1023
  %1787 = vmatmul.mubr.bf16.gmra.mrb[0].mxu0 %v1022
  %v1788 = vpop.f32.mrb[0].mxu0
  %v1789 = vadd.f32 0.0, %v1788
  %v1790 = vpop.f32.mrb[0].mxu0
  %v1791 = vpop.f32.mrb[0].mxu0
  %v1792 = vadd.f32 0.0, %v1791
  %v1793 = vpop.f32.mrb[0].mxu0
  %1794 = vmatprep.mubr.bf16.mxu0 %v1027
  %1795 = vmatmul.mubr.bf16.gmra.mrb[0].mxu0 %v1026
  %v1796 = vpop.f32.mrb[0].mxu0
  %v1797 = vadd.f32 0.0, %v1796
  %v1798 = vpop.f32.mrb[0].mxu0
  %v1799 = vpop.f32.mrb[0].mxu0
  %v1800 = vadd.f32 0.0, %v1799
  %v1801 = vpop.f32.mrb[0].mxu0
  %1802 = vmatprep.mubr.bf16.mxu0 %v1031
  %1803 = vmatmul.mubr.bf16.gmra.mrb[0].mxu0 %v1030
  %v1804 = vpop.f32.mrb[0].mxu0
  %v1805 = vadd.f32 0.0, %v1804
  %v1806 = vpop.f32.mrb[0].mxu0
  %v1807 = vpop.f32.mrb[0].mxu0
  %v1808 = vadd.f32 0.0, %v1807
  %v1809 = vpop.f32.mrb[0].mxu0
  %1810 = vmatprep.mubr.bf16.mxu0 %v1035
  %1811 = vmatmul.mubr.bf16.gmra.mrb[0].mxu0 %v1034
  %v1812 = vpop.f32.mrb[0].mxu0
  %v1813 = vadd.f32 0.0, %v1812
  %v1814 = vpop.f32.mrb[0].mxu0
  %v1815 = vpop.f32.mrb[0].mxu0
  %v1816 = vadd.f32 0.0, %v1815
  %v1817 = vpop.f32.mrb[0].mxu0
  %1818 = vmatprep.mubr.bf16.mxu0 %v1039
  %1819 = vmatmul.mubr.bf16.gmra.mrb[0].mxu0 %v1038
  %v1820 = vpop.f32.mrb[0].mxu0
  %v1821 = vadd.f32 0.0, %v1820
  %v1822 = vpop.f32.mrb[0].mxu0
  %v1823 = vpop.f32.mrb[0].mxu0
  %v1824 = vadd.f32 0.0, %v1823
  %v1825 = vpop.f32.mrb[0].mxu0
  %1826 = vmatprep.mubr.bf16.mxu0 %v1043
  %1827 = vmatmul.mubr.bf16.gmra.mrb[0].mxu0 %v1042
  %v1828 = vpop.f32.mrb[0].mxu0
  %v1829 = vadd.f32 0.0, %v1828
  %v1830 = vpop.f32.mrb[0].mxu0
  %v1831 = vpop.f32.mrb[0].mxu0
  %v1832 = vadd.f32 0.0, %v1831
  %v1833 = vpop.f32.mrb[0].mxu0
  %1834 = vmatprep.mubr.bf16.mxu0 %v1047
  %1835 = vmatmul.mubr.bf16.gmra.mrb[0].mxu0 %v1046
  %v1836 = vpop.f32.mrb[0].mxu0
  %v1837 = vadd.f32 0.0, %v1836
  %v1838 = vpop.f32.mrb[0].mxu0
  %v1839 = vpop.f32.mrb[0].mxu0
  %v1840 = vadd.f32 0.0, %v1839
  %v1841 = vpop.f32.mrb[0].mxu0
  %1842 = vmatprep.mubr.bf16.mxu0 %v1051
  %1843 = vmatmul.mubr.bf16.gmra.mrb[0].mxu0 %v1050
  %v1844 = vpop.f32.mrb[0].mxu0
  %v1845 = vadd.f32 0.0, %v1844
  %v1846 = vpop.f32.mrb[0].mxu0
  %v1847 = vpop.f32.mrb[0].mxu0
  %v1848 = vadd.f32 0.0, %v1847
  %v1849 = vpop.f32.mrb[0].mxu0
  %1850 = vmatprep.mubr.bf16.mxu0 %v1055
  %1851 = vmatmul.mubr.bf16.gmra.mrb[0].mxu0 %v1054
  %v1852 = vpop.f32.mrb[0].mxu0
  %v1853 = vadd.f32 0.0, %v1852
  %v1854 = vpop.f32.mrb[0].mxu0
  %v1855 = vpop.f32.mrb[0].mxu0
  %v1856 = vadd.f32 0.0, %v1855
  %v1857 = vpop.f32.mrb[0].mxu0
  %1858 = vmatprep.mubr.bf16.mxu0 %v1059
  %1859 = vmatmul.mubr.bf16.gmra.mrb[0].mxu0 %v1058
  %v1860 = vpop.f32.mrb[0].mxu0
  %v1861 = vadd.f32 0.0, %v1860
  %v1862 = vpop.f32.mrb[0].mxu0
  %v1863 = vpop.f32.mrb[0].mxu0
  %v1864 = vadd.f32 0.0, %v1863
  %v1865 = vpop.f32.mrb[0].mxu0
  %1866 = vmatprep.mubr.bf16.mxu0 %v1063
  %1867 = vmatmul.mubr.bf16.gmra.mrb[0].mxu0 %v1062
  %v1868 = vpop.f32.mrb[0].mxu0
  %v1869 = vadd.f32 0.0, %v1868
  %v1870 = vpop.f32.mrb[0].mxu0
  %v1871 = vpop.f32.mrb[0].mxu0
  %v1872 = vadd.f32 0.0, %v1871
  %v1873 = vpop.f32.mrb[0].mxu0
  %1874 = vmatprep.mubr.bf16.mxu0 %v1067
  %1875 = vmatmul.mubr.bf16.gmra.mrb[0].mxu0 %v1066
  %v1876 = vpop.f32.mrb[0].mxu0
  %v1877 = vadd.f32 0.0, %v1876
  %v1878 = vpop.f32.mrb[0].mxu0
  %v1879 = vpop.f32.mrb[0].mxu0
  %v1880 = vadd.f32 0.0, %v1879
  %v1881 = vpop.f32.mrb[0].mxu0
  %1882 = vmatprep.mubr.bf16.mxu0 %v1071
  %1883 = vmatmul.mubr.bf16.gmra.mrb[0].mxu0 %v1070
  %v1884 = vpop.f32.mrb[0].mxu0
  %v1885 = vadd.f32 0.0, %v1884
  %v1886 = vpop.f32.mrb[0].mxu0
  %v1887 = vpop.f32.mrb[0].mxu0
  %v1888 = vadd.f32 0.0, %v1887
  %v1889 = vpop.f32.mrb[0].mxu0
  %1890 = vmatprep.mubr.bf16.mxu0 %v1075
  %1891 = vmatmul.mubr.bf16.gmra.mrb[0].mxu0 %v1074
  %v1892 = vpop.f32.mrb[0].mxu0
  %v1893 = vadd.f32 0.0, %v1892
  %v1894 = vpop.f32.mrb[0].mxu0
  %v1895 = vpop.f32.mrb[0].mxu0
  %v1896 = vadd.f32 0.0, %v1895
  %v1897 = vpop.f32.mrb[0].mxu0
  %1898 = vmatprep.mubr.bf16.mxu0 %v1079
  %1899 = vmatmul.mubr.bf16.gmra.mrb[0].mxu0 %v1078
  %v1900 = vpop.f32.mrb[0].mxu0
  %v1901 = vadd.f32 0.0, %v1900
  %v1902 = vpop.f32.mrb[0].mxu0
  %v1903 = vpop.f32.mrb[0].mxu0
  %v1904 = vadd.f32 0.0, %v1903
  %v1905 = vpop.f32.mrb[0].mxu0
  %1906 = vdwg.mxu0
  %1907 = vmatprep.subr.bf16.mxu0 0
  %1908 = vmatpush1.bf16.msra.mxu0 %v1426
  %1909 = vmatprep.subr.bf16.mxu0 0
  %1910 = vmatpush1.bf16.msra.mxu0 %v1427
  %1911 = vmatprep.subr.bf16.mxu0 0
  %1912 = vmatpush1.bf16.msra.mxu0 %v1428
  %1913 = vmatprep.subr.bf16.mxu0 0
  %1914 = vmatpush1.bf16.msra.mxu0 %v1429
  %1915 = vmatprep.subr.bf16.mxu0 0
  %1916 = vmatpush1.bf16.msra.mxu0 %v1430
  %1917 = vmatprep.subr.bf16.mxu0 0
  %1918 = vmatpush1.bf16.msra.mxu0 %v1431
  %1919 = vmatprep.subr.bf16.mxu0 0
  %1920 = vmatpush1.bf16.msra.mxu0 %v1432
  %1921 = vmatprep.subr.bf16.mxu0 0
  %1922 = vmatpush1.bf16.msra.mxu0 %v1433
  %1923 = vmatprep.subr.bf16.mxu0 0
  %1924 = vmatpush1.bf16.msra.mxu0 %v1434
  %1925 = vmatprep.subr.bf16.mxu0 0
  %1926 = vmatpush1.bf16.msra.mxu0 %v1435
  %1927 = vmatprep.subr.bf16.mxu0 0
  %1928 = vmatpush1.bf16.msra.mxu0 %v1436
  %1929 = vmatprep.subr.bf16.mxu0 0
  %1930 = vmatpush1.bf16.msra.mxu0 %v1437
  %1931 = vmatprep.subr.bf16.mxu0 0
  %1932 = vmatpush1.bf16.msra.mxu0 %v1438
  %1933 = vmatprep.subr.bf16.mxu0 0
  %1934 = vmatpush1.bf16.msra.mxu0 %v1439
  %1935 = vmatprep.subr.bf16.mxu0 0
  %1936 = vmatpush1.bf16.msra.mxu0 %v1440
  %1937 = vmatprep.subr.bf16.mxu0 0
  %1938 = vmatpush1.bf16.msra.mxu0 %v1441
  %1939 = vmatprep.mubr.bf16.mxu0 %v885
  %1940 = vmatmul.mubr.bf16.gmra.mrb[0].mxu0 %v884
  %v1941 = vpop.f32.mrb[0].mxu0
  %v1942 = vadd.f32 %v1509, %v1941
  %v1943 = vpop.f32.mrb[0].mxu0
  %v1944 = vpop.f32.mrb[0].mxu0
  %v1945 = vadd.f32 %v1512, %v1944
  %v1946 = vpop.f32.mrb[0].mxu0
  %1947 = vmatprep.mubr.bf16.mxu0 %v889
  %1948 = vmatmul.mubr.bf16.gmra.mrb[0].mxu0 %v888
  %v1949 = vpop.f32.mrb[0].mxu0
  %v1950 = vadd.f32 %v1517, %v1949
  %v1951 = vpop.f32.mrb[0].mxu0
  %v1952 = vpop.f32.mrb[0].mxu0
  %v1953 = vadd.f32 %v1520, %v1952
  %v1954 = vpop.f32.mrb[0].mxu0
  %1955 = vmatprep.mubr.bf16.mxu0 %v893
  %1956 = vmatmul.mubr.bf16.gmra.mrb[0].mxu0 %v892
  %v1957 = vpop.f32.mrb[0].mxu0
  %v1958 = vadd.f32 %v1525, %v1957
  %v1959 = vpop.f32.mrb[0].mxu0
  %v1960 = vpop.f32.mrb[0].mxu0
  %v1961 = vadd.f32 %v1528, %v1960
  %v1962 = vpop.f32.mrb[0].mxu0
  %1963 = vmatprep.mubr.bf16.mxu0 %v897
  %1964 = vmatmul.mubr.bf16.gmra.mrb[0].mxu0 %v896
  %v1965 = vpop.f32.mrb[0].mxu0
  %v1966 = vadd.f32 %v1533, %v1965
  %v1967 = vpop.f32.mrb[0].mxu0
  %v1968 = vpop.f32.mrb[0].mxu0
  %v1969 = vadd.f32 %v1536, %v1968
  %v1970 = vpop.f32.mrb[0].mxu0
  %1971 = vmatprep.mubr.bf16.mxu0 %v901
  %1972 = vmatmul.mubr.bf16.gmra.mrb[0].mxu0 %v900
  %v1973 = vpop.f32.mrb[0].mxu0
  %v1974 = vadd.f32 %v1541, %v1973
  %v1975 = vpop.f32.mrb[0].mxu0
  %v1976 = vpop.f32.mrb[0].mxu0
  %v1977 = vadd.f32 %v1544, %v1976
  %v1978 = vpop.f32.mrb[0].mxu0
  %1979 = vmatprep.mubr.bf16.mxu0 %v905
  %1980 = vmatmul.mubr.bf16.gmra.mrb[0].mxu0 %v904
  %v1981 = vpop.f32.mrb[0].mxu0
  %v1982 = vadd.f32 %v1549, %v1981
  %v1983 = vpop.f32.mrb[0].mxu0
  %v1984 = vpop.f32.mrb[0].mxu0
  %v1985 = vadd.f32 %v1552, %v1984
  %v1986 = vpop.f32.mrb[0].mxu0
  %1987 = vmatprep.mubr.bf16.mxu0 %v909
  %1988 = vmatmul.mubr.bf16.gmra.mrb[0].mxu0 %v908
  %v1989 = vpop.f32.mrb[0].mxu0
  %v1990 = vadd.f32 %v1557, %v1989
  %v1991 = vpop.f32.mrb[0].mxu0
  %v1992 = vpop.f32.mrb[0].mxu0
  %v1993 = vadd.f32 %v1560, %v1992
  %v1994 = vpop.f32.mrb[0].mxu0
  %1995 = vmatprep.mubr.bf16.mxu0 %v913
  %1996 = vmatmul.mubr.bf16.gmra.mrb[0].mxu0 %v912
  %v1997 = vpop.f32.mrb[0].mxu0
  %v1998 = vadd.f32 %v1565, %v1997
  %v1999 = vpop.f32.mrb[0].mxu0
  %v2000 = vpop.f32.mrb[0].mxu0
  %v2001 = vadd.f32 %v1568, %v2000
  %v2002 = vpop.f32.mrb[0].mxu0
  %2003 = vmatprep.mubr.bf16.mxu0 %v917
  %2004 = vmatmul.mubr.bf16.gmra.mrb[0].mxu0 %v916
  %v2005 = vpop.f32.mrb[0].mxu0
  %v2006 = vadd.f32 %v1573, %v2005
  %v2007 = vpop.f32.mrb[0].mxu0
  %v2008 = vpop.f32.mrb[0].mxu0
  %v2009 = vadd.f32 %v1576, %v2008
  %v2010 = vpop.f32.mrb[0].mxu0
  %2011 = vmatprep.mubr.bf16.mxu0 %v921
  %2012 = vmatmul.mubr.bf16.gmra.mrb[0].mxu0 %v920
  %v2013 = vpop.f32.mrb[0].mxu0
  %v2014 = vadd.f32 %v1581, %v2013
  %v2015 = vpop.f32.mrb[0].mxu0
  %v2016 = vpop.f32.mrb[0].mxu0
  %v2017 = vadd.f32 %v1584, %v2016
  %v2018 = vpop.f32.mrb[0].mxu0
  %2019 = vmatprep.mubr.bf16.mxu0 %v925
  %2020 = vmatmul.mubr.bf16.gmra.mrb[0].mxu0 %v924
  %v2021 = vpop.f32.mrb[0].mxu0
  %v2022 = vadd.f32 %v1589, %v2021
  %v2023 = vpop.f32.mrb[0].mxu0
  %v2024 = vpop.f32.mrb[0].mxu0
  %v2025 = vadd.f32 %v1592, %v2024
  %v2026 = vpop.f32.mrb[0].mxu0
  %2027 = vmatprep.mubr.bf16.mxu0 %v929
  %2028 = vmatmul.mubr.bf16.gmra.mrb[0].mxu0 %v928
  %v2029 = vpop.f32.mrb[0].mxu0
  %v2030 = vadd.f32 %v1597, %v2029
  %v2031 = vpop.f32.mrb[0].mxu0
  %v2032 = vpop.f32.mrb[0].mxu0
  %v2033 = vadd.f32 %v1600, %v2032
  %v2034 = vpop.f32.mrb[0].mxu0
  %2035 = vmatprep.mubr.bf16.mxu0 %v933
  %2036 = vmatmul.mubr.bf16.gmra.mrb[0].mxu0 %v932
  %v2037 = vpop.f32.mrb[0].mxu0
  %v2038 = vadd.f32 %v1605, %v2037
  %v2039 = vpop.f32.mrb[0].mxu0
  %v2040 = vpop.f32.mrb[0].mxu0
  %v2041 = vadd.f32 %v1608, %v2040
  %v2042 = vpop.f32.mrb[0].mxu0
  %2043 = vmatprep.mubr.bf16.mxu0 %v937
  %2044 = vmatmul.mubr.bf16.gmra.mrb[0].mxu0 %v936
  %v2045 = vpop.f32.mrb[0].mxu0
  %v2046 = vadd.f32 %v1613, %v2045
  %v2047 = vpop.f32.mrb[0].mxu0
  %v2048 = vpop.f32.mrb[0].mxu0
  %v2049 = vadd.f32 %v1616, %v2048
  %v2050 = vpop.f32.mrb[0].mxu0
  %2051 = vmatprep.mubr.bf16.mxu0 %v941
  %2052 = vmatmul.mubr.bf16.gmra.mrb[0].mxu0 %v940
  %v2053 = vpop.f32.mrb[0].mxu0
  %v2054 = vadd.f32 %v1621, %v2053
  %v2055 = vpop.f32.mrb[0].mxu0
  %v2056 = vpop.f32.mrb[0].mxu0
  %v2057 = vadd.f32 %v1624, %v2056
  %v2058 = vpop.f32.mrb[0].mxu0
  %2059 = vmatprep.mubr.bf16.mxu0 %v945
  %2060 = vmatmul.mubr.bf16.gmra.mrb[0].mxu0 %v944
  %v2061 = vpop.f32.mrb[0].mxu0
  %v2062 = vadd.f32 %v1629, %v2061
  %v2063 = vpop.f32.mrb[0].mxu0
  %v2064 = vpop.f32.mrb[0].mxu0
  %v2065 = vadd.f32 %v1632, %v2064
  %v2066 = vpop.f32.mrb[0].mxu0
  %2067 = vmatprep.mubr.bf16.mxu0 %v949
  %2068 = vmatmul.mubr.bf16.gmra.mrb[0].mxu0 %v948
  %v2069 = vpop.f32.mrb[0].mxu0
  %v2070 = vadd.f32 %v1637, %v2069
  %v2071 = vpop.f32.mrb[0].mxu0
  %v2072 = vpop.f32.mrb[0].mxu0
  %v2073 = vadd.f32 %v1640, %v2072
  %v2074 = vpop.f32.mrb[0].mxu0
  %2075 = vmatprep.mubr.bf16.mxu0 %v953
  %2076 = vmatmul.mubr.bf16.gmra.mrb[0].mxu0 %v952
  %v2077 = vpop.f32.mrb[0].mxu0
  %v2078 = vadd.f32 %v1645, %v2077
  %v2079 = vpop.f32.mrb[0].mxu0
  %v2080 = vpop.f32.mrb[0].mxu0
  %v2081 = vadd.f32 %v1648, %v2080
  %v2082 = vpop.f32.mrb[0].mxu0
  %2083 = vmatprep.mubr.bf16.mxu0 %v957
  %2084 = vmatmul.mubr.bf16.gmra.mrb[0].mxu0 %v956
  %v2085 = vpop.f32.mrb[0].mxu0
  %v2086 = vadd.f32 %v1653, %v2085
  %v2087 = vpop.f32.mrb[0].mxu0
  %v2088 = vpop.f32.mrb[0].mxu0
  %v2089 = vadd.f32 %v1656, %v2088
  %v2090 = vpop.f32.mrb[0].mxu0
  %2091 = vmatprep.mubr.bf16.mxu0 %v961
  %2092 = vmatmul.mubr.bf16.gmra.mrb[0].mxu0 %v960
  %v2093 = vpop.f32.mrb[0].mxu0
  %v2094 = vadd.f32 %v1661, %v2093
  %v2095 = vpop.f32.mrb[0].mxu0
  %v2096 = vpop.f32.mrb[0].mxu0
  %v2097 = vadd.f32 %v1664, %v2096
  %v2098 = vpop.f32.mrb[0].mxu0
  %2099 = vmatprep.mubr.bf16.mxu0 %v965
  %2100 = vmatmul.mubr.bf16.gmra.mrb[0].mxu0 %v964
  %v2101 = vpop.f32.mrb[0].mxu0
  %v2102 = vadd.f32 %v1669, %v2101
  %v2103 = vpop.f32.mrb[0].mxu0
  %v2104 = vpop.f32.mrb[0].mxu0
  %v2105 = vadd.f32 %v1672, %v2104
  %v2106 = vpop.f32.mrb[0].mxu0
  %2107 = vmatprep.mubr.bf16.mxu0 %v969
  %2108 = vmatmul.mubr.bf16.gmra.mrb[0].mxu0 %v968
  %v2109 = vpop.f32.mrb[0].mxu0
  %v2110 = vadd.f32 %v1677, %v2109
  %v2111 = vpop.f32.mrb[0].mxu0
  %v2112 = vpop.f32.mrb[0].mxu0
  %v2113 = vadd.f32 %v1680, %v2112
  %v2114 = vpop.f32.mrb[0].mxu0
  %2115 = vmatprep.mubr.bf16.mxu0 %v973
  %2116 = vmatmul.mubr.bf16.gmra.mrb[0].mxu0 %v972
  %v2117 = vpop.f32.mrb[0].mxu0
  %v2118 = vadd.f32 %v1685, %v2117
  %v2119 = vpop.f32.mrb[0].mxu0
  %v2120 = vpop.f32.mrb[0].mxu0
  %v2121 = vadd.f32 %v1688, %v2120
  %v2122 = vpop.f32.mrb[0].mxu0
  %2123 = vmatprep.mubr.bf16.mxu0 %v977
  %2124 = vmatmul.mubr.bf16.gmra.mrb[0].mxu0 %v976
  %v2125 = vpop.f32.mrb[0].mxu0
  %v2126 = vadd.f32 %v1693, %v2125
  %v2127 = vpop.f32.mrb[0].mxu0
  %v2128 = vpop.f32.mrb[0].mxu0
  %v2129 = vadd.f32 %v1696, %v2128
  %v2130 = vpop.f32.mrb[0].mxu0
  %2131 = vmatprep.mubr.bf16.mxu0 %v981
  %2132 = vmatmul.mubr.bf16.gmra.mrb[0].mxu0 %v980
  %v2133 = vpop.f32.mrb[0].mxu0
  %v2134 = vadd.f32 %v1701, %v2133
  %v2135 = vpop.f32.mrb[0].mxu0
  %v2136 = vpop.f32.mrb[0].mxu0
  %v2137 = vadd.f32 %v1704, %v2136
  %v2138 = vpop.f32.mrb[0].mxu0
  %2139 = vmatprep.mubr.bf16.mxu0 %v985
  %2140 = vmatmul.mubr.bf16.gmra.mrb[0].mxu0 %v984
  %v2141 = vpop.f32.mrb[0].mxu0
  %v2142 = vadd.f32 %v1709, %v2141
  %v2143 = vpop.f32.mrb[0].mxu0
  %v2144 = vpop.f32.mrb[0].mxu0
  %v2145 = vadd.f32 %v1712, %v2144
  %v2146 = vpop.f32.mrb[0].mxu0
  %2147 = vmatprep.mubr.bf16.mxu0 %v989
  %2148 = vmatmul.mubr.bf16.gmra.mrb[0].mxu0 %v988
  %v2149 = vpop.f32.mrb[0].mxu0
  %v2150 = vadd.f32 %v1717, %v2149
  %v2151 = vpop.f32.mrb[0].mxu0
  %v2152 = vpop.f32.mrb[0].mxu0
  %v2153 = vadd.f32 %v1720, %v2152
  %v2154 = vpop.f32.mrb[0].mxu0
  %2155 = vmatprep.mubr.bf16.mxu0 %v993
  %2156 = vmatmul.mubr.bf16.gmra.mrb[0].mxu0 %v992
  %v2157 = vpop.f32.mrb[0].mxu0
  %v2158 = vadd.f32 %v1725, %v2157
  %v2159 = vpop.f32.mrb[0].mxu0
  %v2160 = vpop.f32.mrb[0].mxu0
  %v2161 = vadd.f32 %v1728, %v2160
  %v2162 = vpop.f32.mrb[0].mxu0
  %2163 = vmatprep.mubr.bf16.mxu0 %v997
  %2164 = vmatmul.mubr.bf16.gmra.mrb[0].mxu0 %v996
  %v2165 = vpop.f32.mrb[0].mxu0
  %v2166 = vadd.f32 %v1733, %v2165
  %v2167 = vpop.f32.mrb[0].mxu0
  %v2168 = vpop.f32.mrb[0].mxu0
  %v2169 = vadd.f32 %v1736, %v2168
  %v2170 = vpop.f32.mrb[0].mxu0
  %2171 = vmatprep.mubr.bf16.mxu0 %v1001
  %2172 = vmatmul.mubr.bf16.gmra.mrb[0].mxu0 %v1000
  %v2173 = vpop.f32.mrb[0].mxu0
  %v2174 = vadd.f32 %v1741, %v2173
  %v2175 = vpop.f32.mrb[0].mxu0
  %v2176 = vpop.f32.mrb[0].mxu0
  %v2177 = vadd.f32 %v1744, %v2176
  %v2178 = vpop.f32.mrb[0].mxu0
  %2179 = vmatprep.mubr.bf16.mxu0 %v1005
  %2180 = vmatmul.mubr.bf16.gmra.mrb[0].mxu0 %v1004
  %v2181 = vpop.f32.mrb[0].mxu0
  %v2182 = vadd.f32 %v1749, %v2181
  %v2183 = vpop.f32.mrb[0].mxu0
  %v2184 = vpop.f32.mrb[0].mxu0
  %v2185 = vadd.f32 %v1752, %v2184
  %v2186 = vpop.f32.mrb[0].mxu0
  %2187 = vmatprep.mubr.bf16.mxu0 %v1009
  %2188 = vmatmul.mubr.bf16.gmra.mrb[0].mxu0 %v1008
  %v2189 = vpop.f32.mrb[0].mxu0
  %v2190 = vadd.f32 %v1757, %v2189
  %v2191 = vpop.f32.mrb[0].mxu0
  %v2192 = vpop.f32.mrb[0].mxu0
  %v2193 = vadd.f32 %v1760, %v2192
  %v2194 = vpop.f32.mrb[0].mxu0
  %2195 = vmatprep.mubr.bf16.mxu0 %v1013
  %2196 = vmatmul.mubr.bf16.gmra.mrb[0].mxu0 %v1012
  %v2197 = vpop.f32.mrb[0].mxu0
  %v2198 = vadd.f32 %v1765, %v2197
  %v2199 = vpop.f32.mrb[0].mxu0
  %v2200 = vpop.f32.mrb[0].mxu0
  %v2201 = vadd.f32 %v1768, %v2200
  %v2202 = vpop.f32.mrb[0].mxu0
  %2203 = vmatprep.mubr.bf16.mxu0 %v1017
  %2204 = vmatmul.mubr.bf16.gmra.mrb[0].mxu0 %v1016
  %v2205 = vpop.f32.mrb[0].mxu0
  %v2206 = vadd.f32 %v1773, %v2205
  %v2207 = vpop.f32.mrb[0].mxu0
  %v2208 = vpop.f32.mrb[0].mxu0
  %v2209 = vadd.f32 %v1776, %v2208
  %v2210 = vpop.f32.mrb[0].mxu0
  %2211 = vmatprep.mubr.bf16.mxu0 %v1021
  %2212 = vmatmul.mubr.bf16.gmra.mrb[0].mxu0 %v1020
  %v2213 = vpop.f32.mrb[0].mxu0
  %v2214 = vadd.f32 %v1781, %v2213
  %v2215 = vpop.f32.mrb[0].mxu0
  %v2216 = vpop.f32.mrb[0].mxu0
  %v2217 = vadd.f32 %v1784, %v2216
  %v2218 = vpop.f32.mrb[0].mxu0
  %2219 = vmatprep.mubr.bf16.mxu0 %v1025
  %2220 = vmatmul.mubr.bf16.gmra.mrb[0].mxu0 %v1024
  %v2221 = vpop.f32.mrb[0].mxu0
  %v2222 = vadd.f32 %v1789, %v2221
  %v2223 = vpop.f32.mrb[0].mxu0
  %v2224 = vpop.f32.mrb[0].mxu0
  %v2225 = vadd.f32 %v1792, %v2224
  %v2226 = vpop.f32.mrb[0].mxu0
  %2227 = vmatprep.mubr.bf16.mxu0 %v1029
  %2228 = vmatmul.mubr.bf16.gmra.mrb[0].mxu0 %v1028
  %v2229 = vpop.f32.mrb[0].mxu0
  %v2230 = vadd.f32 %v1797, %v2229
  %v2231 = vpop.f32.mrb[0].mxu0
  %v2232 = vpop.f32.mrb[0].mxu0
  %v2233 = vadd.f32 %v1800, %v2232
  %v2234 = vpop.f32.mrb[0].mxu0
  %2235 = vmatprep.mubr.bf16.mxu0 %v1033
  %2236 = vmatmul.mubr.bf16.gmra.mrb[0].mxu0 %v1032
  %v2237 = vpop.f32.mrb[0].mxu0
  %v2238 = vadd.f32 %v1805, %v2237
  %v2239 = vpop.f32.mrb[0].mxu0
  %v2240 = vpop.f32.mrb[0].mxu0
  %v2241 = vadd.f32 %v1808, %v2240
  %v2242 = vpop.f32.mrb[0].mxu0
  %2243 = vmatprep.mubr.bf16.mxu0 %v1037
  %2244 = vmatmul.mubr.bf16.gmra.mrb[0].mxu0 %v1036
  %v2245 = vpop.f32.mrb[0].mxu0
  %v2246 = vadd.f32 %v1813, %v2245
  %v2247 = vpop.f32.mrb[0].mxu0
  %v2248 = vpop.f32.mrb[0].mxu0
  %v2249 = vadd.f32 %v1816, %v2248
  %v2250 = vpop.f32.mrb[0].mxu0
  %2251 = vmatprep.mubr.bf16.mxu0 %v1041
  %2252 = vmatmul.mubr.bf16.gmra.mrb[0].mxu0 %v1040
  %v2253 = vpop.f32.mrb[0].mxu0
  %v2254 = vadd.f32 %v1821, %v2253
  %v2255 = vpop.f32.mrb[0].mxu0
  %v2256 = vpop.f32.mrb[0].mxu0
  %v2257 = vadd.f32 %v1824, %v2256
  %v2258 = vpop.f32.mrb[0].mxu0
  %2259 = vmatprep.mubr.bf16.mxu0 %v1045
  %2260 = vmatmul.mubr.bf16.gmra.mrb[0].mxu0 %v1044
  %v2261 = vpop.f32.mrb[0].mxu0
  %v2262 = vadd.f32 %v1829, %v2261
  %v2263 = vpop.f32.mrb[0].mxu0
  %v2264 = vpop.f32.mrb[0].mxu0
  %v2265 = vadd.f32 %v1832, %v2264
  %v2266 = vpop.f32.mrb[0].mxu0
  %2267 = vmatprep.mubr.bf16.mxu0 %v1049
  %2268 = vmatmul.mubr.bf16.gmra.mrb[0].mxu0 %v1048
  %v2269 = vpop.f32.mrb[0].mxu0
  %v2270 = vadd.f32 %v1837, %v2269
  %v2271 = vpop.f32.mrb[0].mxu0
  %v2272 = vpop.f32.mrb[0].mxu0
  %v2273 = vadd.f32 %v1840, %v2272
  %v2274 = vpop.f32.mrb[0].mxu0
  %2275 = vmatprep.mubr.bf16.mxu0 %v1053
  %2276 = vmatmul.mubr.bf16.gmra.mrb[0].mxu0 %v1052
  %v2277 = vpop.f32.mrb[0].mxu0
  %v2278 = vadd.f32 %v1845, %v2277
  %v2279 = vpop.f32.mrb[0].mxu0
  %v2280 = vpop.f32.mrb[0].mxu0
  %v2281 = vadd.f32 %v1848, %v2280
  %v2282 = vpop.f32.mrb[0].mxu0
  %2283 = vmatprep.mubr.bf16.mxu0 %v1057
  %2284 = vmatmul.mubr.bf16.gmra.mrb[0].mxu0 %v1056
  %v2285 = vpop.f32.mrb[0].mxu0
  %v2286 = vadd.f32 %v1853, %v2285
  %v2287 = vpop.f32.mrb[0].mxu0
  %v2288 = vpop.f32.mrb[0].mxu0
  %v2289 = vadd.f32 %v1856, %v2288
  %v2290 = vpop.f32.mrb[0].mxu0
  %2291 = vmatprep.mubr.bf16.mxu0 %v1061
  %2292 = vmatmul.mubr.bf16.gmra.mrb[0].mxu0 %v1060
  %v2293 = vpop.f32.mrb[0].mxu0
  %v2294 = vadd.f32 %v1861, %v2293
  %v2295 = vpop.f32.mrb[0].mxu0
  %v2296 = vpop.f32.mrb[0].mxu0
  %v2297 = vadd.f32 %v1864, %v2296
  %v2298 = vpop.f32.mrb[0].mxu0
  %2299 = vmatprep.mubr.bf16.mxu0 %v1065
  %2300 = vmatmul.mubr.bf16.gmra.mrb[0].mxu0 %v1064
  %v2301 = vpop.f32.mrb[0].mxu0
  %v2302 = vadd.f32 %v1869, %v2301
  %v2303 = vpop.f32.mrb[0].mxu0
  %v2304 = vpop.f32.mrb[0].mxu0
  %v2305 = vadd.f32 %v1872, %v2304
  %v2306 = vpop.f32.mrb[0].mxu0
  %2307 = vmatprep.mubr.bf16.mxu0 %v1069
  %2308 = vmatmul.mubr.bf16.gmra.mrb[0].mxu0 %v1068
  %v2309 = vpop.f32.mrb[0].mxu0
  %v2310 = vadd.f32 %v1877, %v2309
  %v2311 = vpop.f32.mrb[0].mxu0
  %v2312 = vpop.f32.mrb[0].mxu0
  %v2313 = vadd.f32 %v1880, %v2312
  %v2314 = vpop.f32.mrb[0].mxu0
  %2315 = vmatprep.mubr.bf16.mxu0 %v1073
  %2316 = vmatmul.mubr.bf16.gmra.mrb[0].mxu0 %v1072
  %v2317 = vpop.f32.mrb[0].mxu0
  %v2318 = vadd.f32 %v1885, %v2317
  %v2319 = vpop.f32.mrb[0].mxu0
  %v2320 = vpop.f32.mrb[0].mxu0
  %v2321 = vadd.f32 %v1888, %v2320
  %v2322 = vpop.f32.mrb[0].mxu0
  %2323 = vmatprep.mubr.bf16.mxu0 %v1077
  %2324 = vmatmul.mubr.bf16.gmra.mrb[0].mxu0 %v1076
  %v2325 = vpop.f32.mrb[0].mxu0
  %v2326 = vadd.f32 %v1893, %v2325
  %v2327 = vpop.f32.mrb[0].mxu0
  %v2328 = vpop.f32.mrb[0].mxu0
  %v2329 = vadd.f32 %v1896, %v2328
  %v2330 = vpop.f32.mrb[0].mxu0
  %2331 = vmatprep.mubr.bf16.mxu0 %v1081
  %2332 = vmatmul.mubr.bf16.gmra.mrb[0].mxu0 %v1080
  %v2333 = vpop.f32.mrb[0].mxu0
  %v2334 = vadd.f32 %v1901, %v2333
  %v2335 = vpop.f32.mrb[0].mxu0
  %v2336 = vpop.f32.mrb[0].mxu0
  %v2337 = vadd.f32 %v1904, %v2336
  %v2338 = vpop.f32.mrb[0].mxu0
  %2339 = vdwg.mxu0
  %vm2340 = vcmask 130048
  %v2341 = vsel %vm2340, %v1942, 0.0
  %v2342 = vsel %vm2340, %v1945, 0.0
  %v2343 = vadd.f32 %v2341, %v2342
  %v2344 = vsel %vm2340, %v1950, 0.0
  %v2345 = vadd.f32 %v2343, %v2344
  %v2346 = vsel %vm2340, %v1953, 0.0
  %v2347 = vadd.f32 %v2345, %v2346
  %v2348 = vsel %vm2340, %v1958, 0.0
  %v2349 = vadd.f32 %v2347, %v2348
  %v2350 = vsel %vm2340, %v1961, 0.0
  %v2351 = vadd.f32 %v2349, %v2350
  %v2352 = vsel %vm2340, %v1966, 0.0
  %v2353 = vadd.f32 %v2351, %v2352
  %v2354 = vsel %vm2340, %v1969, 0.0
  %v2355 = vadd.f32 %v2353, %v2354
  %v2356 = vsel %vm2340, %v1974, 0.0
  %v2357 = vadd.f32 %v2355, %v2356
  %v2358 = vsel %vm2340, %v1977, 0.0
  %v2359 = vadd.f32 %v2357, %v2358
  %v2360 = vsel %vm2340, %v1982, 0.0
  %v2361 = vadd.f32 %v2359, %v2360
  %v2362 = vsel %vm2340, %v1985, 0.0
  %v2363 = vadd.f32 %v2361, %v2362
  %v2364 = vsel %vm2340, %v1990, 0.0
  %v2365 = vadd.f32 %v2363, %v2364
  %v2366 = vsel %vm2340, %v1993, 0.0
  %v2367 = vadd.f32 %v2365, %v2366
  %v2368 = vsel %vm2340, %v1998, 0.0
  %v2369 = vadd.f32 %v2367, %v2368
  %v2370 = vsel %vm2340, %v2001, 0.0
  %v2371 = vadd.f32 %v2369, %v2370
  %v2372 = vsel %vm2340, %v2006, 0.0
  %v2373 = vadd.f32 %v2371, %v2372
  %v2374 = vsel %vm2340, %v2009, 0.0
  %v2375 = vadd.f32 %v2373, %v2374
  %v2376 = vsel %vm2340, %v2014, 0.0
  %v2377 = vadd.f32 %v2375, %v2376
  %v2378 = vsel %vm2340, %v2017, 0.0
  %v2379 = vadd.f32 %v2377, %v2378
  %v2380 = vsel %vm2340, %v2022, 0.0
  %v2381 = vadd.f32 %v2379, %v2380
  %v2382 = vsel %vm2340, %v2025, 0.0
  %v2383 = vadd.f32 %v2381, %v2382
  %v2384 = vsel %vm2340, %v2030, 0.0
  %v2385 = vadd.f32 %v2383, %v2384
  %v2386 = vsel %vm2340, %v2033, 0.0
  %v2387 = vadd.f32 %v2385, %v2386
  %v2388 = vsel %vm2340, %v2038, 0.0
  %v2389 = vadd.f32 %v2387, %v2388
  %v2390 = vsel %vm2340, %v2041, 0.0
  %v2391 = vadd.f32 %v2389, %v2390
  %v2392 = vsel %vm2340, %v2046, 0.0
  %v2393 = vadd.f32 %v2391, %v2392
  %v2394 = vsel %vm2340, %v2049, 0.0
  %v2395 = vadd.f32 %v2393, %v2394
  %v2396 = vsel %vm2340, %v2054, 0.0
  %v2397 = vadd.f32 %v2395, %v2396
  %v2398 = vsel %vm2340, %v2057, 0.0
  %v2399 = vadd.f32 %v2397, %v2398
  %v2400 = vsel %vm2340, %v2062, 0.0
  %v2401 = vadd.f32 %v2399, %v2400
  %v2402 = vsel %vm2340, %v2065, 0.0
  %v2403 = vadd.f32 %v2401, %v2402
  %v2404 = vsel %vm2340, %v2070, 0.0
  %v2405 = vadd.f32 %v2403, %v2404
  %v2406 = vsel %vm2340, %v2073, 0.0
  %v2407 = vadd.f32 %v2405, %v2406
  %v2408 = vsel %vm2340, %v2078, 0.0
  %v2409 = vadd.f32 %v2407, %v2408
  %v2410 = vsel %vm2340, %v2081, 0.0
  %v2411 = vadd.f32 %v2409, %v2410
  %v2412 = vsel %vm2340, %v2086, 0.0
  %v2413 = vadd.f32 %v2411, %v2412
  %v2414 = vsel %vm2340, %v2089, 0.0
  %v2415 = vadd.f32 %v2413, %v2414
  %v2416 = vsel %vm2340, %v2094, 0.0
  %v2417 = vadd.f32 %v2415, %v2416
  %v2418 = vsel %vm2340, %v2097, 0.0
  %v2419 = vadd.f32 %v2417, %v2418
  %v2420 = vsel %vm2340, %v2102, 0.0
  %v2421 = vadd.f32 %v2419, %v2420
  %v2422 = vsel %vm2340, %v2105, 0.0
  %v2423 = vadd.f32 %v2421, %v2422
  %v2424 = vsel %vm2340, %v2110, 0.0
  %v2425 = vadd.f32 %v2423, %v2424
  %v2426 = vsel %vm2340, %v2113, 0.0
  %v2427 = vadd.f32 %v2425, %v2426
  %v2428 = vsel %vm2340, %v2118, 0.0
  %v2429 = vadd.f32 %v2427, %v2428
  %v2430 = vsel %vm2340, %v2121, 0.0
  %v2431 = vadd.f32 %v2429, %v2430
  %v2432 = vsel %vm2340, %v2126, 0.0
  %v2433 = vadd.f32 %v2431, %v2432
  %v2434 = vsel %vm2340, %v2129, 0.0
  %v2435 = vadd.f32 %v2433, %v2434
  %v2436 = vsel %vm2340, %v2134, 0.0
  %v2437 = vadd.f32 %v2435, %v2436
  %v2438 = vsel %vm2340, %v2137, 0.0
  %v2439 = vadd.f32 %v2437, %v2438
  %v2440 = vsel %vm2340, %v2142, 0.0
  %v2441 = vadd.f32 %v2439, %v2440
  %v2442 = vsel %vm2340, %v2145, 0.0
  %v2443 = vadd.f32 %v2441, %v2442
  %v2444 = vsel %vm2340, %v2150, 0.0
  %v2445 = vadd.f32 %v2443, %v2444
  %v2446 = vsel %vm2340, %v2153, 0.0
  %v2447 = vadd.f32 %v2445, %v2446
  %v2448 = vsel %vm2340, %v2158, 0.0
  %v2449 = vadd.f32 %v2447, %v2448
  %v2450 = vsel %vm2340, %v2161, 0.0
  %v2451 = vadd.f32 %v2449, %v2450
  %v2452 = vsel %vm2340, %v2166, 0.0
  %v2453 = vadd.f32 %v2451, %v2452
  %v2454 = vsel %vm2340, %v2169, 0.0
  %v2455 = vadd.f32 %v2453, %v2454
  %v2456 = vsel %vm2340, %v2174, 0.0
  %v2457 = vadd.f32 %v2455, %v2456
  %v2458 = vsel %vm2340, %v2177, 0.0
  %v2459 = vadd.f32 %v2457, %v2458
  %v2460 = vsel %vm2340, %v2182, 0.0
  %v2461 = vadd.f32 %v2459, %v2460
  %v2462 = vsel %vm2340, %v2185, 0.0
  %v2463 = vadd.f32 %v2461, %v2462
  %v2464 = vsel %vm2340, %v2190, 0.0
  %v2465 = vadd.f32 %v2463, %v2464
  %v2466 = vsel %vm2340, %v2193, 0.0
  %v2467 = vadd.f32 %v2465, %v2466
  %v2468 = vsel %vm2340, %v2198, 0.0
  %v2469 = vadd.f32 %v2467, %v2468
  %v2470 = vsel %vm2340, %v2201, 0.0
  %v2471 = vadd.f32 %v2469, %v2470
  %v2472 = vsel %vm2340, %v2206, 0.0
  %v2473 = vadd.f32 %v2471, %v2472
  %v2474 = vsel %vm2340, %v2209, 0.0
  %v2475 = vadd.f32 %v2473, %v2474
  %v2476 = vsel %vm2340, %v2214, 0.0
  %v2477 = vadd.f32 %v2475, %v2476
  %v2478 = vsel %vm2340, %v2217, 0.0
  %v2479 = vadd.f32 %v2477, %v2478
  %v2480 = vsel %vm2340, %v2222, 0.0
  %v2481 = vadd.f32 %v2479, %v2480
  %v2482 = vsel %vm2340, %v2225, 0.0
  %v2483 = vadd.f32 %v2481, %v2482
  %v2484 = vsel %vm2340, %v2230, 0.0
  %v2485 = vadd.f32 %v2483, %v2484
  %v2486 = vsel %vm2340, %v2233, 0.0
  %v2487 = vadd.f32 %v2485, %v2486
  %v2488 = vsel %vm2340, %v2238, 0.0
  %v2489 = vadd.f32 %v2487, %v2488
  %v2490 = vsel %vm2340, %v2241, 0.0
  %v2491 = vadd.f32 %v2489, %v2490
  %v2492 = vsel %vm2340, %v2246, 0.0
  %v2493 = vadd.f32 %v2491, %v2492
  %v2494 = vsel %vm2340, %v2249, 0.0
  %v2495 = vadd.f32 %v2493, %v2494
  %v2496 = vsel %vm2340, %v2254, 0.0
  %v2497 = vadd.f32 %v2495, %v2496
  %v2498 = vsel %vm2340, %v2257, 0.0
  %v2499 = vadd.f32 %v2497, %v2498
  %v2500 = vsel %vm2340, %v2262, 0.0
  %v2501 = vadd.f32 %v2499, %v2500
  %v2502 = vsel %vm2340, %v2265, 0.0
  %v2503 = vadd.f32 %v2501, %v2502
  %v2504 = vsel %vm2340, %v2270, 0.0
  %v2505 = vadd.f32 %v2503, %v2504
  %v2506 = vsel %vm2340, %v2273, 0.0
  %v2507 = vadd.f32 %v2505, %v2506
  %v2508 = vsel %vm2340, %v2278, 0.0
  %v2509 = vadd.f32 %v2507, %v2508
  %v2510 = vsel %vm2340, %v2281, 0.0
  %v2511 = vadd.f32 %v2509, %v2510
  %v2512 = vsel %vm2340, %v2286, 0.0
  %v2513 = vadd.f32 %v2511, %v2512
  %v2514 = vsel %vm2340, %v2289, 0.0
  %v2515 = vadd.f32 %v2513, %v2514
  %v2516 = vsel %vm2340, %v2294, 0.0
  %v2517 = vadd.f32 %v2515, %v2516
  %v2518 = vsel %vm2340, %v2297, 0.0
  %v2519 = vadd.f32 %v2517, %v2518
  %v2520 = vsel %vm2340, %v2302, 0.0
  %v2521 = vadd.f32 %v2519, %v2520
  %v2522 = vsel %vm2340, %v2305, 0.0
  %v2523 = vadd.f32 %v2521, %v2522
  %v2524 = vsel %vm2340, %v2310, 0.0
  %v2525 = vadd.f32 %v2523, %v2524
  %v2526 = vsel %vm2340, %v2313, 0.0
  %v2527 = vadd.f32 %v2525, %v2526
  %v2528 = vsel %vm2340, %v2318, 0.0
  %v2529 = vadd.f32 %v2527, %v2528
  %v2530 = vsel %vm2340, %v2321, 0.0
  %v2531 = vadd.f32 %v2529, %v2530
  %v2532 = vsel %vm2340, %v2326, 0.0
  %v2533 = vadd.f32 %v2531, %v2532
  %v2534 = vsel %vm2340, %v2329, 0.0
  %v2535 = vadd.f32 %v2533, %v2534
  %v2536 = vsel %vm2340, %v2334, 0.0
  %v2537 = vadd.f32 %v2535, %v2536
  %v2538 = vsel %vm2340, %v2337, 0.0
  %v2539 = vadd.f32 %v2537, %v2538
  %v2540 = vrot.slane %v2539, 4
  %v2541 = vadd.f32 %v2539, %v2540
  %v2542 = vrot.slane %v2541, 2
  %v2543 = vadd.f32 %v2541, %v2542
  %v2544 = vrot.slane %v2543, 1
  %v2545 = vadd.f32 %v2543, %v2544
  %v2546 = vrcp.pop 800.0
  %v2547 = vmul.f32 %v2545, %v2546
  %v2548 = vmul.f32 %v1942, %v1942
  %v2549 = vmul.f32 %v1945, %v1945
  %v2550 = vmul.f32 %v1950, %v1950
  %v2551 = vmul.f32 %v1953, %v1953
  %v2552 = vmul.f32 %v1958, %v1958
  %v2553 = vmul.f32 %v1961, %v1961
  %v2554 = vmul.f32 %v1966, %v1966
  %v2555 = vmul.f32 %v1969, %v1969
  %v2556 = vmul.f32 %v1974, %v1974
  %v2557 = vmul.f32 %v1977, %v1977
  %v2558 = vmul.f32 %v1982, %v1982
  %v2559 = vmul.f32 %v1985, %v1985
  %v2560 = vmul.f32 %v1990, %v1990
  %v2561 = vmul.f32 %v1993, %v1993
  %v2562 = vmul.f32 %v1998, %v1998
  %v2563 = vmul.f32 %v2001, %v2001
  %v2564 = vmul.f32 %v2006, %v2006
  %v2565 = vmul.f32 %v2009, %v2009
  %v2566 = vmul.f32 %v2014, %v2014
  %v2567 = vmul.f32 %v2017, %v2017
  %v2568 = vmul.f32 %v2022, %v2022
  %v2569 = vmul.f32 %v2025, %v2025
  %v2570 = vmul.f32 %v2030, %v2030
  %v2571 = vmul.f32 %v2033, %v2033
  %v2572 = vmul.f32 %v2038, %v2038
  %v2573 = vmul.f32 %v2041, %v2041
  %v2574 = vmul.f32 %v2046, %v2046
  %v2575 = vmul.f32 %v2049, %v2049
  %v2576 = vmul.f32 %v2054, %v2054
  %v2577 = vmul.f32 %v2057, %v2057
  %v2578 = vmul.f32 %v2062, %v2062
  %v2579 = vmul.f32 %v2065, %v2065
  %v2580 = vmul.f32 %v2070, %v2070
  %v2581 = vmul.f32 %v2073, %v2073
  %v2582 = vmul.f32 %v2078, %v2078
  %v2583 = vmul.f32 %v2081, %v2081
  %v2584 = vmul.f32 %v2086, %v2086
  %v2585 = vmul.f32 %v2089, %v2089
  %v2586 = vmul.f32 %v2094, %v2094
  %v2587 = vmul.f32 %v2097, %v2097
  %v2588 = vmul.f32 %v2102, %v2102
  %v2589 = vmul.f32 %v2105, %v2105
  %v2590 = vmul.f32 %v2110, %v2110
  %v2591 = vmul.f32 %v2113, %v2113
  %v2592 = vmul.f32 %v2118, %v2118
  %v2593 = vmul.f32 %v2121, %v2121
  %v2594 = vmul.f32 %v2126, %v2126
  %v2595 = vmul.f32 %v2129, %v2129
  %v2596 = vmul.f32 %v2134, %v2134
  %v2597 = vmul.f32 %v2137, %v2137
  %v2598 = vmul.f32 %v2142, %v2142
  %v2599 = vmul.f32 %v2145, %v2145
  %v2600 = vmul.f32 %v2150, %v2150
  %v2601 = vmul.f32 %v2153, %v2153
  %v2602 = vmul.f32 %v2158, %v2158
  %v2603 = vmul.f32 %v2161, %v2161
  %v2604 = vmul.f32 %v2166, %v2166
  %v2605 = vmul.f32 %v2169, %v2169
  %v2606 = vmul.f32 %v2174, %v2174
  %v2607 = vmul.f32 %v2177, %v2177
  %v2608 = vmul.f32 %v2182, %v2182
  %v2609 = vmul.f32 %v2185, %v2185
  %v2610 = vmul.f32 %v2190, %v2190
  %v2611 = vmul.f32 %v2193, %v2193
  %v2612 = vmul.f32 %v2198, %v2198
  %v2613 = vmul.f32 %v2201, %v2201
  %v2614 = vmul.f32 %v2206, %v2206
  %v2615 = vmul.f32 %v2209, %v2209
  %v2616 = vmul.f32 %v2214, %v2214
  %v2617 = vmul.f32 %v2217, %v2217
  %v2618 = vmul.f32 %v2222, %v2222
  %v2619 = vmul.f32 %v2225, %v2225
  %v2620 = vmul.f32 %v2230, %v2230
  %v2621 = vmul.f32 %v2233, %v2233
  %v2622 = vmul.f32 %v2238, %v2238
  %v2623 = vmul.f32 %v2241, %v2241
  %v2624 = vmul.f32 %v2246, %v2246
  %v2625 = vmul.f32 %v2249, %v2249
  %v2626 = vmul.f32 %v2254, %v2254
  %v2627 = vmul.f32 %v2257, %v2257
  %v2628 = vmul.f32 %v2262, %v2262
  %v2629 = vmul.f32 %v2265, %v2265
  %v2630 = vmul.f32 %v2270, %v2270
  %v2631 = vmul.f32 %v2273, %v2273
  %v2632 = vmul.f32 %v2278, %v2278
  %v2633 = vmul.f32 %v2281, %v2281
  %v2634 = vmul.f32 %v2286, %v2286
  %v2635 = vmul.f32 %v2289, %v2289
  %v2636 = vmul.f32 %v2294, %v2294
  %v2637 = vmul.f32 %v2297, %v2297
  %v2638 = vmul.f32 %v2302, %v2302
  %v2639 = vmul.f32 %v2305, %v2305
  %v2640 = vmul.f32 %v2310, %v2310
  %v2641 = vmul.f32 %v2313, %v2313
  %v2642 = vmul.f32 %v2318, %v2318
  %v2643 = vmul.f32 %v2321, %v2321
  %v2644 = vmul.f32 %v2326, %v2326
  %v2645 = vmul.f32 %v2329, %v2329
  %v2646 = vmul.f32 %v2334, %v2334
  %v2647 = vmul.f32 %v2337, %v2337
  %v2648 = vsel %vm2340, %v2548, 0.0
  %v2649 = vsel %vm2340, %v2549, 0.0
  %v2650 = vadd.f32 %v2648, %v2649
  %v2651 = vsel %vm2340, %v2550, 0.0
  %v2652 = vadd.f32 %v2650, %v2651
  %v2653 = vsel %vm2340, %v2551, 0.0
  %v2654 = vadd.f32 %v2652, %v2653
  %v2655 = vsel %vm2340, %v2552, 0.0
  %v2656 = vadd.f32 %v2654, %v2655
  %v2657 = vsel %vm2340, %v2553, 0.0
  %v2658 = vadd.f32 %v2656, %v2657
  %v2659 = vsel %vm2340, %v2554, 0.0
  %v2660 = vadd.f32 %v2658, %v2659
  %v2661 = vsel %vm2340, %v2555, 0.0
  %v2662 = vadd.f32 %v2660, %v2661
  %v2663 = vsel %vm2340, %v2556, 0.0
  %v2664 = vadd.f32 %v2662, %v2663
  %v2665 = vsel %vm2340, %v2557, 0.0
  %v2666 = vadd.f32 %v2664, %v2665
  %v2667 = vsel %vm2340, %v2558, 0.0
  %v2668 = vadd.f32 %v2666, %v2667
  %v2669 = vsel %vm2340, %v2559, 0.0
  %v2670 = vadd.f32 %v2668, %v2669
  %v2671 = vsel %vm2340, %v2560, 0.0
  %v2672 = vadd.f32 %v2670, %v2671
  %v2673 = vsel %vm2340, %v2561, 0.0
  %v2674 = vadd.f32 %v2672, %v2673
  %v2675 = vsel %vm2340, %v2562, 0.0
  %v2676 = vadd.f32 %v2674, %v2675
  %v2677 = vsel %vm2340, %v2563, 0.0
  %v2678 = vadd.f32 %v2676, %v2677
  %v2679 = vsel %vm2340, %v2564, 0.0
  %v2680 = vadd.f32 %v2678, %v2679
  %v2681 = vsel %vm2340, %v2565, 0.0
  %v2682 = vadd.f32 %v2680, %v2681
  %v2683 = vsel %vm2340, %v2566, 0.0
  %v2684 = vadd.f32 %v2682, %v2683
  %v2685 = vsel %vm2340, %v2567, 0.0
  %v2686 = vadd.f32 %v2684, %v2685
  %v2687 = vsel %vm2340, %v2568, 0.0
  %v2688 = vadd.f32 %v2686, %v2687
  %v2689 = vsel %vm2340, %v2569, 0.0
  %v2690 = vadd.f32 %v2688, %v2689
  %v2691 = vsel %vm2340, %v2570, 0.0
  %v2692 = vadd.f32 %v2690, %v2691
  %v2693 = vsel %vm2340, %v2571, 0.0
  %v2694 = vadd.f32 %v2692, %v2693
  %v2695 = vsel %vm2340, %v2572, 0.0
  %v2696 = vadd.f32 %v2694, %v2695
  %v2697 = vsel %vm2340, %v2573, 0.0
  %v2698 = vadd.f32 %v2696, %v2697
  %v2699 = vsel %vm2340, %v2574, 0.0
  %v2700 = vadd.f32 %v2698, %v2699
  %v2701 = vsel %vm2340, %v2575, 0.0
  %v2702 = vadd.f32 %v2700, %v2701
  %v2703 = vsel %vm2340, %v2576, 0.0
  %v2704 = vadd.f32 %v2702, %v2703
  %v2705 = vsel %vm2340, %v2577, 0.0
  %v2706 = vadd.f32 %v2704, %v2705
  %v2707 = vsel %vm2340, %v2578, 0.0
  %v2708 = vadd.f32 %v2706, %v2707
  %v2709 = vsel %vm2340, %v2579, 0.0
  %v2710 = vadd.f32 %v2708, %v2709
  %v2711 = vsel %vm2340, %v2580, 0.0
  %v2712 = vadd.f32 %v2710, %v2711
  %v2713 = vsel %vm2340, %v2581, 0.0
  %v2714 = vadd.f32 %v2712, %v2713
  %v2715 = vsel %vm2340, %v2582, 0.0
  %v2716 = vadd.f32 %v2714, %v2715
  %v2717 = vsel %vm2340, %v2583, 0.0
  %v2718 = vadd.f32 %v2716, %v2717
  %v2719 = vsel %vm2340, %v2584, 0.0
  %v2720 = vadd.f32 %v2718, %v2719
  %v2721 = vsel %vm2340, %v2585, 0.0
  %v2722 = vadd.f32 %v2720, %v2721
  %v2723 = vsel %vm2340, %v2586, 0.0
  %v2724 = vadd.f32 %v2722, %v2723
  %v2725 = vsel %vm2340, %v2587, 0.0
  %v2726 = vadd.f32 %v2724, %v2725
  %v2727 = vsel %vm2340, %v2588, 0.0
  %v2728 = vadd.f32 %v2726, %v2727
  %v2729 = vsel %vm2340, %v2589, 0.0
  %v2730 = vadd.f32 %v2728, %v2729
  %v2731 = vsel %vm2340, %v2590, 0.0
  %v2732 = vadd.f32 %v2730, %v2731
  %v2733 = vsel %vm2340, %v2591, 0.0
  %v2734 = vadd.f32 %v2732, %v2733
  %v2735 = vsel %vm2340, %v2592, 0.0
  %v2736 = vadd.f32 %v2734, %v2735
  %v2737 = vsel %vm2340, %v2593, 0.0
  %v2738 = vadd.f32 %v2736, %v2737
  %v2739 = vsel %vm2340, %v2594, 0.0
  %v2740 = vadd.f32 %v2738, %v2739
  %v2741 = vsel %vm2340, %v2595, 0.0
  %v2742 = vadd.f32 %v2740, %v2741
  %v2743 = vsel %vm2340, %v2596, 0.0
  %v2744 = vadd.f32 %v2742, %v2743
  %v2745 = vsel %vm2340, %v2597, 0.0
  %v2746 = vadd.f32 %v2744, %v2745
  %v2747 = vsel %vm2340, %v2598, 0.0
  %v2748 = vadd.f32 %v2746, %v2747
  %v2749 = vsel %vm2340, %v2599, 0.0
  %v2750 = vadd.f32 %v2748, %v2749
  %v2751 = vsel %vm2340, %v2600, 0.0
  %v2752 = vadd.f32 %v2750, %v2751
  %v2753 = vsel %vm2340, %v2601, 0.0
  %v2754 = vadd.f32 %v2752, %v2753
  %v2755 = vsel %vm2340, %v2602, 0.0
  %v2756 = vadd.f32 %v2754, %v2755
  %v2757 = vsel %vm2340, %v2603, 0.0
  %v2758 = vadd.f32 %v2756, %v2757
  %v2759 = vsel %vm2340, %v2604, 0.0
  %v2760 = vadd.f32 %v2758, %v2759
  %v2761 = vsel %vm2340, %v2605, 0.0
  %v2762 = vadd.f32 %v2760, %v2761
  %v2763 = vsel %vm2340, %v2606, 0.0
  %v2764 = vadd.f32 %v2762, %v2763
  %v2765 = vsel %vm2340, %v2607, 0.0
  %v2766 = vadd.f32 %v2764, %v2765
  %v2767 = vsel %vm2340, %v2608, 0.0
  %v2768 = vadd.f32 %v2766, %v2767
  %v2769 = vsel %vm2340, %v2609, 0.0
  %v2770 = vadd.f32 %v2768, %v2769
  %v2771 = vsel %vm2340, %v2610, 0.0
  %v2772 = vadd.f32 %v2770, %v2771
  %v2773 = vsel %vm2340, %v2611, 0.0
  %v2774 = vadd.f32 %v2772, %v2773
  %v2775 = vsel %vm2340, %v2612, 0.0
  %v2776 = vadd.f32 %v2774, %v2775
  %v2777 = vsel %vm2340, %v2613, 0.0
  %v2778 = vadd.f32 %v2776, %v2777
  %v2779 = vsel %vm2340, %v2614, 0.0
  %v2780 = vadd.f32 %v2778, %v2779
  %v2781 = vsel %vm2340, %v2615, 0.0
  %v2782 = vadd.f32 %v2780, %v2781
  %v2783 = vsel %vm2340, %v2616, 0.0
  %v2784 = vadd.f32 %v2782, %v2783
  %v2785 = vsel %vm2340, %v2617, 0.0
  %v2786 = vadd.f32 %v2784, %v2785
  %v2787 = vsel %vm2340, %v2618, 0.0
  %v2788 = vadd.f32 %v2786, %v2787
  %v2789 = vsel %vm2340, %v2619, 0.0
  %v2790 = vadd.f32 %v2788, %v2789
  %v2791 = vsel %vm2340, %v2620, 0.0
  %v2792 = vadd.f32 %v2790, %v2791
  %v2793 = vsel %vm2340, %v2621, 0.0
  %v2794 = vadd.f32 %v2792, %v2793
  %v2795 = vsel %vm2340, %v2622, 0.0
  %v2796 = vadd.f32 %v2794, %v2795
  %v2797 = vsel %vm2340, %v2623, 0.0
  %v2798 = vadd.f32 %v2796, %v2797
  %v2799 = vsel %vm2340, %v2624, 0.0
  %v2800 = vadd.f32 %v2798, %v2799
  %v2801 = vsel %vm2340, %v2625, 0.0
  %v2802 = vadd.f32 %v2800, %v2801
  %v2803 = vsel %vm2340, %v2626, 0.0
  %v2804 = vadd.f32 %v2802, %v2803
  %v2805 = vsel %vm2340, %v2627, 0.0
  %v2806 = vadd.f32 %v2804, %v2805
  %v2807 = vsel %vm2340, %v2628, 0.0
  %v2808 = vadd.f32 %v2806, %v2807
  %v2809 = vsel %vm2340, %v2629, 0.0
  %v2810 = vadd.f32 %v2808, %v2809
  %v2811 = vsel %vm2340, %v2630, 0.0
  %v2812 = vadd.f32 %v2810, %v2811
  %v2813 = vsel %vm2340, %v2631, 0.0
  %v2814 = vadd.f32 %v2812, %v2813
  %v2815 = vsel %vm2340, %v2632, 0.0
  %v2816 = vadd.f32 %v2814, %v2815
  %v2817 = vsel %vm2340, %v2633, 0.0
  %v2818 = vadd.f32 %v2816, %v2817
  %v2819 = vsel %vm2340, %v2634, 0.0
  %v2820 = vadd.f32 %v2818, %v2819
  %v2821 = vsel %vm2340, %v2635, 0.0
  %v2822 = vadd.f32 %v2820, %v2821
  %v2823 = vsel %vm2340, %v2636, 0.0
  %v2824 = vadd.f32 %v2822, %v2823
  %v2825 = vsel %vm2340, %v2637, 0.0
  %v2826 = vadd.f32 %v2824, %v2825
  %v2827 = vsel %vm2340, %v2638, 0.0
  %v2828 = vadd.f32 %v2826, %v2827
  %v2829 = vsel %vm2340, %v2639, 0.0
  %v2830 = vadd.f32 %v2828, %v2829
  %v2831 = vsel %vm2340, %v2640, 0.0
  %v2832 = vadd.f32 %v2830, %v2831
  %v2833 = vsel %vm2340, %v2641, 0.0
  %v2834 = vadd.f32 %v2832, %v2833
  %v2835 = vsel %vm2340, %v2642, 0.0
  %v2836 = vadd.f32 %v2834, %v2835
  %v2837 = vsel %vm2340, %v2643, 0.0
  %v2838 = vadd.f32 %v2836, %v2837
  %v2839 = vsel %vm2340, %v2644, 0.0
  %v2840 = vadd.f32 %v2838, %v2839
  %v2841 = vsel %vm2340, %v2645, 0.0
  %v2842 = vadd.f32 %v2840, %v2841
  %v2843 = vsel %vm2340, %v2646, 0.0
  %v2844 = vadd.f32 %v2842, %v2843
  %v2845 = vsel %vm2340, %v2647, 0.0
  %v2846 = vadd.f32 %v2844, %v2845
  %v2847 = vrot.slane %v2846, 4
  %v2848 = vadd.f32 %v2846, %v2847
  %v2849 = vrot.slane %v2848, 2
  %v2850 = vadd.f32 %v2848, %v2849
  %v2851 = vrot.slane %v2850, 1
  %v2852 = vadd.f32 %v2850, %v2851
  %v2853 = vmul.f32 %v2852, %v2546
  %v2854 = vmul.f32 %v2547, %v2547
  %v2855 = vsub.f32 %v2853, %v2854
  %v2856 = vmax.f32 %v2855, 0.0
  %v2857 = vld [vmem:[%s2] sm:$0x1]
  %v2858 = vsub.f32 %v1942, %v2547
  %v2859 = vsub.f32 %v1945, %v2547
  %v2860 = vsub.f32 %v1950, %v2547
  %v2861 = vsub.f32 %v1953, %v2547
  %v2862 = vsub.f32 %v1958, %v2547
  %v2863 = vsub.f32 %v1961, %v2547
  %v2864 = vsub.f32 %v1966, %v2547
  %v2865 = vsub.f32 %v1969, %v2547
  %v2866 = vsub.f32 %v1974, %v2547
  %v2867 = vsub.f32 %v1977, %v2547
  %v2868 = vsub.f32 %v1982, %v2547
  %v2869 = vsub.f32 %v1985, %v2547
  %v2870 = vsub.f32 %v1990, %v2547
  %v2871 = vsub.f32 %v1993, %v2547
  %v2872 = vsub.f32 %v1998, %v2547
  %v2873 = vsub.f32 %v2001, %v2547
  %v2874 = vsub.f32 %v2006, %v2547
  %v2875 = vsub.f32 %v2009, %v2547
  %v2876 = vsub.f32 %v2014, %v2547
  %v2877 = vsub.f32 %v2017, %v2547
  %v2878 = vsub.f32 %v2022, %v2547
  %v2879 = vsub.f32 %v2025, %v2547
  %v2880 = vsub.f32 %v2030, %v2547
  %v2881 = vsub.f32 %v2033, %v2547
  %v2882 = vsub.f32 %v2038, %v2547
  %v2883 = vsub.f32 %v2041, %v2547
  %v2884 = vsub.f32 %v2046, %v2547
  %v2885 = vsub.f32 %v2049, %v2547
  %v2886 = vsub.f32 %v2054, %v2547
  %v2887 = vsub.f32 %v2057, %v2547
  %v2888 = vsub.f32 %v2062, %v2547
  %v2889 = vsub.f32 %v2065, %v2547
  %v2890 = vsub.f32 %v2070, %v2547
  %v2891 = vsub.f32 %v2073, %v2547
  %v2892 = vsub.f32 %v2078, %v2547
  %v2893 = vsub.f32 %v2081, %v2547
  %v2894 = vsub.f32 %v2086, %v2547
  %v2895 = vsub.f32 %v2089, %v2547
  %v2896 = vsub.f32 %v2094, %v2547
  %v2897 = vsub.f32 %v2097, %v2547
  %v2898 = vsub.f32 %v2102, %v2547
  %v2899 = vsub.f32 %v2105, %v2547
  %v2900 = vsub.f32 %v2110, %v2547
  %v2901 = vsub.f32 %v2113, %v2547
  %v2902 = vsub.f32 %v2118, %v2547
  %v2903 = vsub.f32 %v2121, %v2547
  %v2904 = vsub.f32 %v2126, %v2547
  %v2905 = vsub.f32 %v2129, %v2547
  %v2906 = vsub.f32 %v2134, %v2547
  %v2907 = vsub.f32 %v2137, %v2547
  %v2908 = vsub.f32 %v2142, %v2547
  %v2909 = vsub.f32 %v2145, %v2547
  %v2910 = vsub.f32 %v2150, %v2547
  %v2911 = vsub.f32 %v2153, %v2547
  %v2912 = vsub.f32 %v2158, %v2547
  %v2913 = vsub.f32 %v2161, %v2547
  %v2914 = vsub.f32 %v2166, %v2547
  %v2915 = vsub.f32 %v2169, %v2547
  %v2916 = vsub.f32 %v2174, %v2547
  %v2917 = vsub.f32 %v2177, %v2547
  %v2918 = vsub.f32 %v2182, %v2547
  %v2919 = vsub.f32 %v2185, %v2547
  %v2920 = vsub.f32 %v2190, %v2547
  %v2921 = vsub.f32 %v2193, %v2547
  %v2922 = vsub.f32 %v2198, %v2547
  %v2923 = vsub.f32 %v2201, %v2547
  %v2924 = vsub.f32 %v2206, %v2547
  %v2925 = vsub.f32 %v2209, %v2547
  %v2926 = vsub.f32 %v2214, %v2547
  %v2927 = vsub.f32 %v2217, %v2547
  %v2928 = vsub.f32 %v2222, %v2547
  %v2929 = vsub.f32 %v2225, %v2547
  %v2930 = vsub.f32 %v2230, %v2547
  %v2931 = vsub.f32 %v2233, %v2547
  %v2932 = vsub.f32 %v2238, %v2547
  %v2933 = vsub.f32 %v2241, %v2547
  %v2934 = vsub.f32 %v2246, %v2547
  %v2935 = vsub.f32 %v2249, %v2547
  %v2936 = vsub.f32 %v2254, %v2547
  %v2937 = vsub.f32 %v2257, %v2547
  %v2938 = vsub.f32 %v2262, %v2547
  %v2939 = vsub.f32 %v2265, %v2547
  %v2940 = vsub.f32 %v2270, %v2547
  %v2941 = vsub.f32 %v2273, %v2547
  %v2942 = vsub.f32 %v2278, %v2547
  %v2943 = vsub.f32 %v2281, %v2547
  %v2944 = vsub.f32 %v2286, %v2547
  %v2945 = vsub.f32 %v2289, %v2547
  %v2946 = vsub.f32 %v2294, %v2547
  %v2947 = vsub.f32 %v2297, %v2547
  %v2948 = vsub.f32 %v2302, %v2547
  %v2949 = vsub.f32 %v2305, %v2547
  %v2950 = vsub.f32 %v2310, %v2547
  %v2951 = vsub.f32 %v2313, %v2547
  %v2952 = vsub.f32 %v2318, %v2547
  %v2953 = vsub.f32 %v2321, %v2547
  %v2954 = vsub.f32 %v2326, %v2547
  %v2955 = vsub.f32 %v2329, %v2547
  %v2956 = vsub.f32 %v2334, %v2547
  %v2957 = vsub.f32 %v2337, %v2547
  %v2959 = vlaneseq
  %v2960 = vshrl.u32 %v2959, 7
  %v2961 = vsub.s32 0, %v2960
  %v2962 = vrot.slane %v2857, %v2961
  %v2964 = vmul.f32 %v2962, %v2858
  %v2965 = vmul.f32 %v2962, %v2859
  %v2966 = vmul.f32 %v2962, %v2860
  %v2967 = vmul.f32 %v2962, %v2861
  %v2968 = vmul.f32 %v2962, %v2862
  %v2969 = vmul.f32 %v2962, %v2863
  %v2970 = vmul.f32 %v2962, %v2864
  %v2971 = vmul.f32 %v2962, %v2865
  %v2972 = vmul.f32 %v2962, %v2866
  %v2973 = vmul.f32 %v2962, %v2867
  %v2974 = vmul.f32 %v2962, %v2868
  %v2975 = vmul.f32 %v2962, %v2869
  %v2976 = vmul.f32 %v2962, %v2870
  %v2977 = vmul.f32 %v2962, %v2871
  %v2978 = vmul.f32 %v2962, %v2872
  %v2979 = vmul.f32 %v2962, %v2873
  %v2980 = vmul.f32 %v2962, %v2874
  %v2981 = vmul.f32 %v2962, %v2875
  %v2982 = vmul.f32 %v2962, %v2876
  %v2983 = vmul.f32 %v2962, %v2877
  %v2984 = vmul.f32 %v2962, %v2878
  %v2985 = vmul.f32 %v2962, %v2879
  %v2986 = vmul.f32 %v2962, %v2880
  %v2987 = vmul.f32 %v2962, %v2881
  %v2988 = vmul.f32 %v2962, %v2882
  %v2989 = vmul.f32 %v2962, %v2883
  %v2990 = vmul.f32 %v2962, %v2884
  %v2991 = vmul.f32 %v2962, %v2885
  %v2992 = vmul.f32 %v2962, %v2886
  %v2993 = vmul.f32 %v2962, %v2887
  %v2994 = vmul.f32 %v2962, %v2888
  %v2995 = vmul.f32 %v2962, %v2889
  %v2996 = vmul.f32 %v2962, %v2890
  %v2997 = vmul.f32 %v2962, %v2891
  %v2998 = vmul.f32 %v2962, %v2892
  %v2999 = vmul.f32 %v2962, %v2893
  %v3000 = vmul.f32 %v2962, %v2894
  %v3001 = vmul.f32 %v2962, %v2895
  %v3002 = vmul.f32 %v2962, %v2896
  %v3003 = vmul.f32 %v2962, %v2897
  %v3004 = vmul.f32 %v2962, %v2898
  %v3005 = vmul.f32 %v2962, %v2899
  %v3006 = vmul.f32 %v2962, %v2900
  %v3007 = vmul.f32 %v2962, %v2901
  %v3008 = vmul.f32 %v2962, %v2902
  %v3009 = vmul.f32 %v2962, %v2903
  %v3010 = vmul.f32 %v2962, %v2904
  %v3011 = vmul.f32 %v2962, %v2905
  %v3012 = vmul.f32 %v2962, %v2906
  %v3013 = vmul.f32 %v2962, %v2907
  %v3014 = vmul.f32 %v2962, %v2908
  %v3015 = vmul.f32 %v2962, %v2909
  %v3016 = vmul.f32 %v2962, %v2910
  %v3017 = vmul.f32 %v2962, %v2911
  %v3018 = vmul.f32 %v2962, %v2912
  %v3019 = vmul.f32 %v2962, %v2913
  %v3020 = vmul.f32 %v2962, %v2914
  %v3021 = vmul.f32 %v2962, %v2915
  %v3022 = vmul.f32 %v2962, %v2916
  %v3023 = vmul.f32 %v2962, %v2917
  %v3024 = vmul.f32 %v2962, %v2918
  %v3025 = vmul.f32 %v2962, %v2919
  %v3026 = vmul.f32 %v2962, %v2920
  %v3027 = vmul.f32 %v2962, %v2921
  %v3028 = vmul.f32 %v2962, %v2922
  %v3029 = vmul.f32 %v2962, %v2923
  %v3030 = vmul.f32 %v2962, %v2924
  %v3031 = vmul.f32 %v2962, %v2925
  %v3032 = vmul.f32 %v2962, %v2926
  %v3033 = vmul.f32 %v2962, %v2927
  %v3034 = vmul.f32 %v2962, %v2928
  %v3035 = vmul.f32 %v2962, %v2929
  %v3036 = vmul.f32 %v2962, %v2930
  %v3037 = vmul.f32 %v2962, %v2931
  %v3038 = vmul.f32 %v2962, %v2932
  %v3039 = vmul.f32 %v2962, %v2933
  %v3040 = vmul.f32 %v2962, %v2934
  %v3041 = vmul.f32 %v2962, %v2935
  %v3042 = vmul.f32 %v2962, %v2936
  %v3043 = vmul.f32 %v2962, %v2937
  %v3044 = vmul.f32 %v2962, %v2938
  %v3045 = vmul.f32 %v2962, %v2939
  %v3046 = vmul.f32 %v2962, %v2940
  %v3047 = vmul.f32 %v2962, %v2941
  %v3048 = vmul.f32 %v2962, %v2942
  %v3049 = vmul.f32 %v2962, %v2943
  %v3050 = vmul.f32 %v2962, %v2944
  %v3051 = vmul.f32 %v2962, %v2945
  %v3052 = vmul.f32 %v2962, %v2946
  %v3053 = vmul.f32 %v2962, %v2947
  %v3054 = vmul.f32 %v2962, %v2948
  %v3055 = vmul.f32 %v2962, %v2949
  %v3056 = vmul.f32 %v2962, %v2950
  %v3057 = vmul.f32 %v2962, %v2951
  %v3058 = vmul.f32 %v2962, %v2952
  %v3059 = vmul.f32 %v2962, %v2953
  %v3060 = vmul.f32 %v2962, %v2954
  %v3061 = vmul.f32 %v2962, %v2955
  %v3062 = vmul.f32 %v2962, %v2956
  %v3063 = vmul.f32 %v2962, %v2957
  %v3064 = vadd.f32 %v2856, 1e-05
  %v3065 = vrsqrt.pop %v3064
  %v3066 = vmul.f32 %v2964, %v3065
  %v3067 = vmul.f32 %v2965, %v3065
  %v3068 = vmul.f32 %v2966, %v3065
  %v3069 = vmul.f32 %v2967, %v3065
  %v3070 = vmul.f32 %v2968, %v3065
  %v3071 = vmul.f32 %v2969, %v3065
  %v3072 = vmul.f32 %v2970, %v3065
  %v3073 = vmul.f32 %v2971, %v3065
  %v3074 = vmul.f32 %v2972, %v3065
  %v3075 = vmul.f32 %v2973, %v3065
  %v3076 = vmul.f32 %v2974, %v3065
  %v3077 = vmul.f32 %v2975, %v3065
  %v3078 = vmul.f32 %v2976, %v3065
  %v3079 = vmul.f32 %v2977, %v3065
  %v3080 = vmul.f32 %v2978, %v3065
  %v3081 = vmul.f32 %v2979, %v3065
  %v3082 = vmul.f32 %v2980, %v3065
  %v3083 = vmul.f32 %v2981, %v3065
  %v3084 = vmul.f32 %v2982, %v3065
  %v3085 = vmul.f32 %v2983, %v3065
  %v3086 = vmul.f32 %v2984, %v3065
  %v3087 = vmul.f32 %v2985, %v3065
  %v3088 = vmul.f32 %v2986, %v3065
  %v3089 = vmul.f32 %v2987, %v3065
  %v3090 = vmul.f32 %v2988, %v3065
  %v3091 = vmul.f32 %v2989, %v3065
  %v3092 = vmul.f32 %v2990, %v3065
  %v3093 = vmul.f32 %v2991, %v3065
  %v3094 = vmul.f32 %v2992, %v3065
  %v3095 = vmul.f32 %v2993, %v3065
  %v3096 = vmul.f32 %v2994, %v3065
  %v3097 = vmul.f32 %v2995, %v3065
  %v3098 = vmul.f32 %v2996, %v3065
  %v3099 = vmul.f32 %v2997, %v3065
  %v3100 = vmul.f32 %v2998, %v3065
  %v3101 = vmul.f32 %v2999, %v3065
  %v3102 = vmul.f32 %v3000, %v3065
  %v3103 = vmul.f32 %v3001, %v3065
  %v3104 = vmul.f32 %v3002, %v3065
  %v3105 = vmul.f32 %v3003, %v3065
  %v3106 = vmul.f32 %v3004, %v3065
  %v3107 = vmul.f32 %v3005, %v3065
  %v3108 = vmul.f32 %v3006, %v3065
  %v3109 = vmul.f32 %v3007, %v3065
  %v3110 = vmul.f32 %v3008, %v3065
  %v3111 = vmul.f32 %v3009, %v3065
  %v3112 = vmul.f32 %v3010, %v3065
  %v3113 = vmul.f32 %v3011, %v3065
  %v3114 = vmul.f32 %v3012, %v3065
  %v3115 = vmul.f32 %v3013, %v3065
  %v3116 = vmul.f32 %v3014, %v3065
  %v3117 = vmul.f32 %v3015, %v3065
  %v3118 = vmul.f32 %v3016, %v3065
  %v3119 = vmul.f32 %v3017, %v3065
  %v3120 = vmul.f32 %v3018, %v3065
  %v3121 = vmul.f32 %v3019, %v3065
  %v3122 = vmul.f32 %v3020, %v3065
  %v3123 = vmul.f32 %v3021, %v3065
  %v3124 = vmul.f32 %v3022, %v3065
  %v3125 = vmul.f32 %v3023, %v3065
  %v3126 = vmul.f32 %v3024, %v3065
  %v3127 = vmul.f32 %v3025, %v3065
  %v3128 = vmul.f32 %v3026, %v3065
  %v3129 = vmul.f32 %v3027, %v3065
  %v3130 = vmul.f32 %v3028, %v3065
  %v3131 = vmul.f32 %v3029, %v3065
  %v3132 = vmul.f32 %v3030, %v3065
  %v3133 = vmul.f32 %v3031, %v3065
  %v3134 = vmul.f32 %v3032, %v3065
  %v3135 = vmul.f32 %v3033, %v3065
  %v3136 = vmul.f32 %v3034, %v3065
  %v3137 = vmul.f32 %v3035, %v3065
  %v3138 = vmul.f32 %v3036, %v3065
  %v3139 = vmul.f32 %v3037, %v3065
  %v3140 = vmul.f32 %v3038, %v3065
  %v3141 = vmul.f32 %v3039, %v3065
  %v3142 = vmul.f32 %v3040, %v3065
  %v3143 = vmul.f32 %v3041, %v3065
  %v3144 = vmul.f32 %v3042, %v3065
  %v3145 = vmul.f32 %v3043, %v3065
  %v3146 = vmul.f32 %v3044, %v3065
  %v3147 = vmul.f32 %v3045, %v3065
  %v3148 = vmul.f32 %v3046, %v3065
  %v3149 = vmul.f32 %v3047, %v3065
  %v3150 = vmul.f32 %v3048, %v3065
  %v3151 = vmul.f32 %v3049, %v3065
  %v3152 = vmul.f32 %v3050, %v3065
  %v3153 = vmul.f32 %v3051, %v3065
  %v3154 = vmul.f32 %v3052, %v3065
  %v3155 = vmul.f32 %v3053, %v3065
  %v3156 = vmul.f32 %v3054, %v3065
  %v3157 = vmul.f32 %v3055, %v3065
  %v3158 = vmul.f32 %v3056, %v3065
  %v3159 = vmul.f32 %v3057, %v3065
  %v3160 = vmul.f32 %v3058, %v3065
  %v3161 = vmul.f32 %v3059, %v3065
  %v3162 = vmul.f32 %v3060, %v3065
  %v3163 = vmul.f32 %v3061, %v3065
  %v3164 = vmul.f32 %v3062, %v3065
  %v3165 = vmul.f32 %v3063, %v3065
  %v3166 = vld [vmem:[%s3] sm:$0x1]
  %v3168 = vlaneseq
  %v3169 = vshrl.u32 %v3168, 7
  %v3170 = vsub.s32 0, %v3169
  %v3171 = vrot.slane %v3166, %v3170
  %v3173 = vadd.f32 %v3066, %v3171
  %v3174 = vadd.f32 %v3067, %v3171
  %v3175 = vadd.f32 %v3068, %v3171
  %v3176 = vadd.f32 %v3069, %v3171
  %v3177 = vadd.f32 %v3070, %v3171
  %v3178 = vadd.f32 %v3071, %v3171
  %v3179 = vadd.f32 %v3072, %v3171
  %v3180 = vadd.f32 %v3073, %v3171
  %v3181 = vadd.f32 %v3074, %v3171
  %v3182 = vadd.f32 %v3075, %v3171
  %v3183 = vadd.f32 %v3076, %v3171
  %v3184 = vadd.f32 %v3077, %v3171
  %v3185 = vadd.f32 %v3078, %v3171
  %v3186 = vadd.f32 %v3079, %v3171
  %v3187 = vadd.f32 %v3080, %v3171
  %v3188 = vadd.f32 %v3081, %v3171
  %v3189 = vadd.f32 %v3082, %v3171
  %v3190 = vadd.f32 %v3083, %v3171
  %v3191 = vadd.f32 %v3084, %v3171
  %v3192 = vadd.f32 %v3085, %v3171
  %v3193 = vadd.f32 %v3086, %v3171
  %v3194 = vadd.f32 %v3087, %v3171
  %v3195 = vadd.f32 %v3088, %v3171
  %v3196 = vadd.f32 %v3089, %v3171
  %v3197 = vadd.f32 %v3090, %v3171
  %v3198 = vadd.f32 %v3091, %v3171
  %v3199 = vadd.f32 %v3092, %v3171
  %v3200 = vadd.f32 %v3093, %v3171
  %v3201 = vadd.f32 %v3094, %v3171
  %v3202 = vadd.f32 %v3095, %v3171
  %v3203 = vadd.f32 %v3096, %v3171
  %v3204 = vadd.f32 %v3097, %v3171
  %v3205 = vadd.f32 %v3098, %v3171
  %v3206 = vadd.f32 %v3099, %v3171
  %v3207 = vadd.f32 %v3100, %v3171
  %v3208 = vadd.f32 %v3101, %v3171
  %v3209 = vadd.f32 %v3102, %v3171
  %v3210 = vadd.f32 %v3103, %v3171
  %v3211 = vadd.f32 %v3104, %v3171
  %v3212 = vadd.f32 %v3105, %v3171
  %v3213 = vadd.f32 %v3106, %v3171
  %v3214 = vadd.f32 %v3107, %v3171
  %v3215 = vadd.f32 %v3108, %v3171
  %v3216 = vadd.f32 %v3109, %v3171
  %v3217 = vadd.f32 %v3110, %v3171
  %v3218 = vadd.f32 %v3111, %v3171
  %v3219 = vadd.f32 %v3112, %v3171
  %v3220 = vadd.f32 %v3113, %v3171
  %v3221 = vadd.f32 %v3114, %v3171
  %v3222 = vadd.f32 %v3115, %v3171
  %v3223 = vadd.f32 %v3116, %v3171
  %v3224 = vadd.f32 %v3117, %v3171
  %v3225 = vadd.f32 %v3118, %v3171
  %v3226 = vadd.f32 %v3119, %v3171
  %v3227 = vadd.f32 %v3120, %v3171
  %v3228 = vadd.f32 %v3121, %v3171
  %v3229 = vadd.f32 %v3122, %v3171
  %v3230 = vadd.f32 %v3123, %v3171
  %v3231 = vadd.f32 %v3124, %v3171
  %v3232 = vadd.f32 %v3125, %v3171
  %v3233 = vadd.f32 %v3126, %v3171
  %v3234 = vadd.f32 %v3127, %v3171
  %v3235 = vadd.f32 %v3128, %v3171
  %v3236 = vadd.f32 %v3129, %v3171
  %v3237 = vadd.f32 %v3130, %v3171
  %v3238 = vadd.f32 %v3131, %v3171
  %v3239 = vadd.f32 %v3132, %v3171
  %v3240 = vadd.f32 %v3133, %v3171
  %v3241 = vadd.f32 %v3134, %v3171
  %v3242 = vadd.f32 %v3135, %v3171
  %v3243 = vadd.f32 %v3136, %v3171
  %v3244 = vadd.f32 %v3137, %v3171
  %v3245 = vadd.f32 %v3138, %v3171
  %v3246 = vadd.f32 %v3139, %v3171
  %v3247 = vadd.f32 %v3140, %v3171
  %v3248 = vadd.f32 %v3141, %v3171
  %v3249 = vadd.f32 %v3142, %v3171
  %v3250 = vadd.f32 %v3143, %v3171
  %v3251 = vadd.f32 %v3144, %v3171
  %v3252 = vadd.f32 %v3145, %v3171
  %v3253 = vadd.f32 %v3146, %v3171
  %v3254 = vadd.f32 %v3147, %v3171
  %v3255 = vadd.f32 %v3148, %v3171
  %v3256 = vadd.f32 %v3149, %v3171
  %v3257 = vadd.f32 %v3150, %v3171
  %v3258 = vadd.f32 %v3151, %v3171
  %v3259 = vadd.f32 %v3152, %v3171
  %v3260 = vadd.f32 %v3153, %v3171
  %v3261 = vadd.f32 %v3154, %v3171
  %v3262 = vadd.f32 %v3155, %v3171
  %v3263 = vadd.f32 %v3156, %v3171
  %v3264 = vadd.f32 %v3157, %v3171
  %v3265 = vadd.f32 %v3158, %v3171
  %v3266 = vadd.f32 %v3159, %v3171
  %v3267 = vadd.f32 %v3160, %v3171
  %v3268 = vadd.f32 %v3161, %v3171
  %v3269 = vadd.f32 %v3162, %v3171
  %v3270 = vadd.f32 %v3163, %v3171
  %v3271 = vadd.f32 %v3164, %v3171
  %v3272 = vadd.f32 %v3165, %v3171
  %vm3273 = vcmp.ge.f32.partialorder %v3173, 0.0
  %vm3274 = vcmp.ge.f32.partialorder %v3174, 0.0
  %vm3275 = vcmp.ge.f32.partialorder %v3175, 0.0
  %vm3276 = vcmp.ge.f32.partialorder %v3176, 0.0
  %vm3277 = vcmp.ge.f32.partialorder %v3177, 0.0
  %vm3278 = vcmp.ge.f32.partialorder %v3178, 0.0
  %vm3279 = vcmp.ge.f32.partialorder %v3179, 0.0
  %vm3280 = vcmp.ge.f32.partialorder %v3180, 0.0
  %vm3281 = vcmp.ge.f32.partialorder %v3181, 0.0
  %vm3282 = vcmp.ge.f32.partialorder %v3182, 0.0
  %vm3283 = vcmp.ge.f32.partialorder %v3183, 0.0
  %vm3284 = vcmp.ge.f32.partialorder %v3184, 0.0
  %vm3285 = vcmp.ge.f32.partialorder %v3185, 0.0
  %vm3286 = vcmp.ge.f32.partialorder %v3186, 0.0
  %vm3287 = vcmp.ge.f32.partialorder %v3187, 0.0
  %vm3288 = vcmp.ge.f32.partialorder %v3188, 0.0
  %vm3289 = vcmp.ge.f32.partialorder %v3189, 0.0
  %vm3290 = vcmp.ge.f32.partialorder %v3190, 0.0
  %vm3291 = vcmp.ge.f32.partialorder %v3191, 0.0
  %vm3292 = vcmp.ge.f32.partialorder %v3192, 0.0
  %vm3293 = vcmp.ge.f32.partialorder %v3193, 0.0
  %vm3294 = vcmp.ge.f32.partialorder %v3194, 0.0
  %vm3295 = vcmp.ge.f32.partialorder %v3195, 0.0
  %vm3296 = vcmp.ge.f32.partialorder %v3196, 0.0
  %vm3297 = vcmp.ge.f32.partialorder %v3197, 0.0
  %vm3298 = vcmp.ge.f32.partialorder %v3198, 0.0
  %vm3299 = vcmp.ge.f32.partialorder %v3199, 0.0
  %vm3300 = vcmp.ge.f32.partialorder %v3200, 0.0
  %vm3301 = vcmp.ge.f32.partialorder %v3201, 0.0
  %vm3302 = vcmp.ge.f32.partialorder %v3202, 0.0
  %vm3303 = vcmp.ge.f32.partialorder %v3203, 0.0
  %vm3304 = vcmp.ge.f32.partialorder %v3204, 0.0
  %vm3305 = vcmp.ge.f32.partialorder %v3205, 0.0
  %vm3306 = vcmp.ge.f32.partialorder %v3206, 0.0
  %vm3307 = vcmp.ge.f32.partialorder %v3207, 0.0
  %vm3308 = vcmp.ge.f32.partialorder %v3208, 0.0
  %vm3309 = vcmp.ge.f32.partialorder %v3209, 0.0
  %vm3310 = vcmp.ge.f32.partialorder %v3210, 0.0
  %vm3311 = vcmp.ge.f32.partialorder %v3211, 0.0
  %vm3312 = vcmp.ge.f32.partialorder %v3212, 0.0
  %vm3313 = vcmp.ge.f32.partialorder %v3213, 0.0
  %vm3314 = vcmp.ge.f32.partialorder %v3214, 0.0
  %vm3315 = vcmp.ge.f32.partialorder %v3215, 0.0
  %vm3316 = vcmp.ge.f32.partialorder %v3216, 0.0
  %vm3317 = vcmp.ge.f32.partialorder %v3217, 0.0
  %vm3318 = vcmp.ge.f32.partialorder %v3218, 0.0
  %vm3319 = vcmp.ge.f32.partialorder %v3219, 0.0
  %vm3320 = vcmp.ge.f32.partialorder %v3220, 0.0
  %vm3321 = vcmp.ge.f32.partialorder %v3221, 0.0
  %vm3322 = vcmp.ge.f32.partialorder %v3222, 0.0
  %vm3323 = vcmp.ge.f32.partialorder %v3223, 0.0
  %vm3324 = vcmp.ge.f32.partialorder %v3224, 0.0
  %vm3325 = vcmp.ge.f32.partialorder %v3225, 0.0
  %vm3326 = vcmp.ge.f32.partialorder %v3226, 0.0
  %vm3327 = vcmp.ge.f32.partialorder %v3227, 0.0
  %vm3328 = vcmp.ge.f32.partialorder %v3228, 0.0
  %vm3329 = vcmp.ge.f32.partialorder %v3229, 0.0
  %vm3330 = vcmp.ge.f32.partialorder %v3230, 0.0
  %vm3331 = vcmp.ge.f32.partialorder %v3231, 0.0
  %vm3332 = vcmp.ge.f32.partialorder %v3232, 0.0
  %vm3333 = vcmp.ge.f32.partialorder %v3233, 0.0
  %vm3334 = vcmp.ge.f32.partialorder %v3234, 0.0
  %vm3335 = vcmp.ge.f32.partialorder %v3235, 0.0
  %vm3336 = vcmp.ge.f32.partialorder %v3236, 0.0
  %vm3337 = vcmp.ge.f32.partialorder %v3237, 0.0
  %vm3338 = vcmp.ge.f32.partialorder %v3238, 0.0
  %vm3339 = vcmp.ge.f32.partialorder %v3239, 0.0
  %vm3340 = vcmp.ge.f32.partialorder %v3240, 0.0
  %vm3341 = vcmp.ge.f32.partialorder %v3241, 0.0
  %vm3342 = vcmp.ge.f32.partialorder %v3242, 0.0
  %vm3343 = vcmp.ge.f32.partialorder %v3243, 0.0
  %vm3344 = vcmp.ge.f32.partialorder %v3244, 0.0
  %vm3345 = vcmp.ge.f32.partialorder %v3245, 0.0
  %vm3346 = vcmp.ge.f32.partialorder %v3246, 0.0
  %vm3347 = vcmp.ge.f32.partialorder %v3247, 0.0
  %vm3348 = vcmp.ge.f32.partialorder %v3248, 0.0
  %vm3349 = vcmp.ge.f32.partialorder %v3249, 0.0
  %vm3350 = vcmp.ge.f32.partialorder %v3250, 0.0
  %vm3351 = vcmp.ge.f32.partialorder %v3251, 0.0
  %vm3352 = vcmp.ge.f32.partialorder %v3252, 0.0
  %vm3353 = vcmp.ge.f32.partialorder %v3253, 0.0
  %vm3354 = vcmp.ge.f32.partialorder %v3254, 0.0
  %vm3355 = vcmp.ge.f32.partialorder %v3255, 0.0
  %vm3356 = vcmp.ge.f32.partialorder %v3256, 0.0
  %vm3357 = vcmp.ge.f32.partialorder %v3257, 0.0
  %vm3358 = vcmp.ge.f32.partialorder %v3258, 0.0
  %vm3359 = vcmp.ge.f32.partialorder %v3259, 0.0
  %vm3360 = vcmp.ge.f32.partialorder %v3260, 0.0
  %vm3361 = vcmp.ge.f32.partialorder %v3261, 0.0
  %vm3362 = vcmp.ge.f32.partialorder %v3262, 0.0
  %vm3363 = vcmp.ge.f32.partialorder %v3263, 0.0
  %vm3364 = vcmp.ge.f32.partialorder %v3264, 0.0
  %vm3365 = vcmp.ge.f32.partialorder %v3265, 0.0
  %vm3366 = vcmp.ge.f32.partialorder %v3266, 0.0
  %vm3367 = vcmp.ge.f32.partialorder %v3267, 0.0
  %vm3368 = vcmp.ge.f32.partialorder %v3268, 0.0
  %vm3369 = vcmp.ge.f32.partialorder %v3269, 0.0
  %vm3370 = vcmp.ge.f32.partialorder %v3270, 0.0
  %vm3371 = vcmp.ge.f32.partialorder %v3271, 0.0
  %vm3372 = vcmp.ge.f32.partialorder %v3272, 0.0
  %v3373 = vmul.f32 %v3173, 0.01
  %v3374 = vmul.f32 %v3174, 0.01
  %v3375 = vmul.f32 %v3175, 0.01
  %v3376 = vmul.f32 %v3176, 0.01
  %v3377 = vmul.f32 %v3177, 0.01
  %v3378 = vmul.f32 %v3178, 0.01
  %v3379 = vmul.f32 %v3179, 0.01
  %v3380 = vmul.f32 %v3180, 0.01
  %v3381 = vmul.f32 %v3181, 0.01
  %v3382 = vmul.f32 %v3182, 0.01
  %v3383 = vmul.f32 %v3183, 0.01
  %v3384 = vmul.f32 %v3184, 0.01
  %v3385 = vmul.f32 %v3185, 0.01
  %v3386 = vmul.f32 %v3186, 0.01
  %v3387 = vmul.f32 %v3187, 0.01
  %v3388 = vmul.f32 %v3188, 0.01
  %v3389 = vmul.f32 %v3189, 0.01
  %v3390 = vmul.f32 %v3190, 0.01
  %v3391 = vmul.f32 %v3191, 0.01
  %v3392 = vmul.f32 %v3192, 0.01
  %v3393 = vmul.f32 %v3193, 0.01
  %v3394 = vmul.f32 %v3194, 0.01
  %v3395 = vmul.f32 %v3195, 0.01
  %v3396 = vmul.f32 %v3196, 0.01
  %v3397 = vmul.f32 %v3197, 0.01
  %v3398 = vmul.f32 %v3198, 0.01
  %v3399 = vmul.f32 %v3199, 0.01
  %v3400 = vmul.f32 %v3200, 0.01
  %v3401 = vmul.f32 %v3201, 0.01
  %v3402 = vmul.f32 %v3202, 0.01
  %v3403 = vmul.f32 %v3203, 0.01
  %v3404 = vmul.f32 %v3204, 0.01
  %v3405 = vmul.f32 %v3205, 0.01
  %v3406 = vmul.f32 %v3206, 0.01
  %v3407 = vmul.f32 %v3207, 0.01
  %v3408 = vmul.f32 %v3208, 0.01
  %v3409 = vmul.f32 %v3209, 0.01
  %v3410 = vmul.f32 %v3210, 0.01
  %v3411 = vmul.f32 %v3211, 0.01
  %v3412 = vmul.f32 %v3212, 0.01
  %v3413 = vmul.f32 %v3213, 0.01
  %v3414 = vmul.f32 %v3214, 0.01
  %v3415 = vmul.f32 %v3215, 0.01
  %v3416 = vmul.f32 %v3216, 0.01
  %v3417 = vmul.f32 %v3217, 0.01
  %v3418 = vmul.f32 %v3218, 0.01
  %v3419 = vmul.f32 %v3219, 0.01
  %v3420 = vmul.f32 %v3220, 0.01
  %v3421 = vmul.f32 %v3221, 0.01
  %v3422 = vmul.f32 %v3222, 0.01
  %v3423 = vmul.f32 %v3223, 0.01
  %v3424 = vmul.f32 %v3224, 0.01
  %v3425 = vmul.f32 %v3225, 0.01
  %v3426 = vmul.f32 %v3226, 0.01
  %v3427 = vmul.f32 %v3227, 0.01
  %v3428 = vmul.f32 %v3228, 0.01
  %v3429 = vmul.f32 %v3229, 0.01
  %v3430 = vmul.f32 %v3230, 0.01
  %v3431 = vmul.f32 %v3231, 0.01
  %v3432 = vmul.f32 %v3232, 0.01
  %v3433 = vmul.f32 %v3233, 0.01
  %v3434 = vmul.f32 %v3234, 0.01
  %v3435 = vmul.f32 %v3235, 0.01
  %v3436 = vmul.f32 %v3236, 0.01
  %v3437 = vmul.f32 %v3237, 0.01
  %v3438 = vmul.f32 %v3238, 0.01
  %v3439 = vmul.f32 %v3239, 0.01
  %v3440 = vmul.f32 %v3240, 0.01
  %v3441 = vmul.f32 %v3241, 0.01
  %v3442 = vmul.f32 %v3242, 0.01
  %v3443 = vmul.f32 %v3243, 0.01
  %v3444 = vmul.f32 %v3244, 0.01
  %v3445 = vmul.f32 %v3245, 0.01
  %v3446 = vmul.f32 %v3246, 0.01
  %v3447 = vmul.f32 %v3247, 0.01
  %v3448 = vmul.f32 %v3248, 0.01
  %v3449 = vmul.f32 %v3249, 0.01
  %v3450 = vmul.f32 %v3250, 0.01
  %v3451 = vmul.f32 %v3251, 0.01
  %v3452 = vmul.f32 %v3252, 0.01
  %v3453 = vmul.f32 %v3253, 0.01
  %v3454 = vmul.f32 %v3254, 0.01
  %v3455 = vmul.f32 %v3255, 0.01
  %v3456 = vmul.f32 %v3256, 0.01
  %v3457 = vmul.f32 %v3257, 0.01
  %v3458 = vmul.f32 %v3258, 0.01
  %v3459 = vmul.f32 %v3259, 0.01
  %v3460 = vmul.f32 %v3260, 0.01
  %v3461 = vmul.f32 %v3261, 0.01
  %v3462 = vmul.f32 %v3262, 0.01
  %v3463 = vmul.f32 %v3263, 0.01
  %v3464 = vmul.f32 %v3264, 0.01
  %v3465 = vmul.f32 %v3265, 0.01
  %v3466 = vmul.f32 %v3266, 0.01
  %v3467 = vmul.f32 %v3267, 0.01
  %v3468 = vmul.f32 %v3268, 0.01
  %v3469 = vmul.f32 %v3269, 0.01
  %v3470 = vmul.f32 %v3270, 0.01
  %v3471 = vmul.f32 %v3271, 0.01
  %v3472 = vmul.f32 %v3272, 0.01
  %v3473 = vsel %vm3273, %v3173, %v3373
  %v3474 = vsel %vm3274, %v3174, %v3374
  %v3475 = vsel %vm3275, %v3175, %v3375
  %v3476 = vsel %vm3276, %v3176, %v3376
  %v3477 = vsel %vm3277, %v3177, %v3377
  %v3478 = vsel %vm3278, %v3178, %v3378
  %v3479 = vsel %vm3279, %v3179, %v3379
  %v3480 = vsel %vm3280, %v3180, %v3380
  %v3481 = vsel %vm3281, %v3181, %v3381
  %v3482 = vsel %vm3282, %v3182, %v3382
  %v3483 = vsel %vm3283, %v3183, %v3383
  %v3484 = vsel %vm3284, %v3184, %v3384
  %v3485 = vsel %vm3285, %v3185, %v3385
  %v3486 = vsel %vm3286, %v3186, %v3386
  %v3487 = vsel %vm3287, %v3187, %v3387
  %v3488 = vsel %vm3288, %v3188, %v3388
  %v3489 = vsel %vm3289, %v3189, %v3389
  %v3490 = vsel %vm3290, %v3190, %v3390
  %v3491 = vsel %vm3291, %v3191, %v3391
  %v3492 = vsel %vm3292, %v3192, %v3392
  %v3493 = vsel %vm3293, %v3193, %v3393
  %v3494 = vsel %vm3294, %v3194, %v3394
  %v3495 = vsel %vm3295, %v3195, %v3395
  %v3496 = vsel %vm3296, %v3196, %v3396
  %v3497 = vsel %vm3297, %v3197, %v3397
  %v3498 = vsel %vm3298, %v3198, %v3398
  %v3499 = vsel %vm3299, %v3199, %v3399
  %v3500 = vsel %vm3300, %v3200, %v3400
  %v3501 = vsel %vm3301, %v3201, %v3401
  %v3502 = vsel %vm3302, %v3202, %v3402
  %v3503 = vsel %vm3303, %v3203, %v3403
  %v3504 = vsel %vm3304, %v3204, %v3404
  %v3505 = vsel %vm3305, %v3205, %v3405
  %v3506 = vsel %vm3306, %v3206, %v3406
  %v3507 = vsel %vm3307, %v3207, %v3407
  %v3508 = vsel %vm3308, %v3208, %v3408
  %v3509 = vsel %vm3309, %v3209, %v3409
  %v3510 = vsel %vm3310, %v3210, %v3410
  %v3511 = vsel %vm3311, %v3211, %v3411
  %v3512 = vsel %vm3312, %v3212, %v3412
  %v3513 = vsel %vm3313, %v3213, %v3413
  %v3514 = vsel %vm3314, %v3214, %v3414
  %v3515 = vsel %vm3315, %v3215, %v3415
  %v3516 = vsel %vm3316, %v3216, %v3416
  %v3517 = vsel %vm3317, %v3217, %v3417
  %v3518 = vsel %vm3318, %v3218, %v3418
  %v3519 = vsel %vm3319, %v3219, %v3419
  %v3520 = vsel %vm3320, %v3220, %v3420
  %v3521 = vsel %vm3321, %v3221, %v3421
  %v3522 = vsel %vm3322, %v3222, %v3422
  %v3523 = vsel %vm3323, %v3223, %v3423
  %v3524 = vsel %vm3324, %v3224, %v3424
  %v3525 = vsel %vm3325, %v3225, %v3425
  %v3526 = vsel %vm3326, %v3226, %v3426
  %v3527 = vsel %vm3327, %v3227, %v3427
  %v3528 = vsel %vm3328, %v3228, %v3428
  %v3529 = vsel %vm3329, %v3229, %v3429
  %v3530 = vsel %vm3330, %v3230, %v3430
  %v3531 = vsel %vm3331, %v3231, %v3431
  %v3532 = vsel %vm3332, %v3232, %v3432
  %v3533 = vsel %vm3333, %v3233, %v3433
  %v3534 = vsel %vm3334, %v3234, %v3434
  %v3535 = vsel %vm3335, %v3235, %v3435
  %v3536 = vsel %vm3336, %v3236, %v3436
  %v3537 = vsel %vm3337, %v3237, %v3437
  %v3538 = vsel %vm3338, %v3238, %v3438
  %v3539 = vsel %vm3339, %v3239, %v3439
  %v3540 = vsel %vm3340, %v3240, %v3440
  %v3541 = vsel %vm3341, %v3241, %v3441
  %v3542 = vsel %vm3342, %v3242, %v3442
  %v3543 = vsel %vm3343, %v3243, %v3443
  %v3544 = vsel %vm3344, %v3244, %v3444
  %v3545 = vsel %vm3345, %v3245, %v3445
  %v3546 = vsel %vm3346, %v3246, %v3446
  %v3547 = vsel %vm3347, %v3247, %v3447
  %v3548 = vsel %vm3348, %v3248, %v3448
  %v3549 = vsel %vm3349, %v3249, %v3449
  %v3550 = vsel %vm3350, %v3250, %v3450
  %v3551 = vsel %vm3351, %v3251, %v3451
  %v3552 = vsel %vm3352, %v3252, %v3452
  %v3553 = vsel %vm3353, %v3253, %v3453
  %v3554 = vsel %vm3354, %v3254, %v3454
  %v3555 = vsel %vm3355, %v3255, %v3455
  %v3556 = vsel %vm3356, %v3256, %v3456
  %v3557 = vsel %vm3357, %v3257, %v3457
  %v3558 = vsel %vm3358, %v3258, %v3458
  %v3559 = vsel %vm3359, %v3259, %v3459
  %v3560 = vsel %vm3360, %v3260, %v3460
  %v3561 = vsel %vm3361, %v3261, %v3461
  %v3562 = vsel %vm3362, %v3262, %v3462
  %v3563 = vsel %vm3363, %v3263, %v3463
  %v3564 = vsel %vm3364, %v3264, %v3464
  %v3565 = vsel %vm3365, %v3265, %v3465
  %v3566 = vsel %vm3366, %v3266, %v3466
  %v3567 = vsel %vm3367, %v3267, %v3467
  %v3568 = vsel %vm3368, %v3268, %v3468
  %v3569 = vsel %vm3369, %v3269, %v3469
  %v3570 = vsel %vm3370, %v3270, %v3470
  %v3571 = vsel %vm3371, %v3271, %v3471
  %v3572 = vsel %vm3372, %v3272, %v3472
  %3573 = vst.msk [vmem:[%s4] sm:$0xff] %vm2340, %v3473
  %3574 = vst.msk [vmem:[%s4 + $0x8] sm:$0xff] %vm2340, %v3474
  %3575 = vst.msk [vmem:[%s4 + $0x10] sm:$0xff] %vm2340, %v3475
  %3576 = vst.msk [vmem:[%s4 + $0x18] sm:$0xff] %vm2340, %v3476
  %3577 = vst.msk [vmem:[%s4 + $0x20] sm:$0xff] %vm2340, %v3477
  %3578 = vst.msk [vmem:[%s4 + $0x28] sm:$0xff] %vm2340, %v3478
  %3579 = vst.msk [vmem:[%s4 + $0x30] sm:$0xff] %vm2340, %v3479
  %3580 = vst.msk [vmem:[%s4 + $0x38] sm:$0xff] %vm2340, %v3480
  %3581 = vst.msk [vmem:[%s4 + $0x40] sm:$0xff] %vm2340, %v3481
  %3582 = vst.msk [vmem:[%s4 + $0x48] sm:$0xff] %vm2340, %v3482
  %3583 = vst.msk [vmem:[%s4 + $0x50] sm:$0xff] %vm2340, %v3483
  %3584 = vst.msk [vmem:[%s4 + $0x58] sm:$0xff] %vm2340, %v3484
  %3585 = vst.msk [vmem:[%s4 + $0x60] sm:$0xff] %vm2340, %v3485
  %3586 = vst.msk [vmem:[%s4 + $0x68] sm:$0xff] %vm2340, %v3486
  %3587 = vst.msk [vmem:[%s4 + $0x70] sm:$0xff] %vm2340, %v3487
  %3588 = vst.msk [vmem:[%s4 + $0x78] sm:$0xff] %vm2340, %v3488
  %3589 = vst.msk [vmem:[%s4 + $0x80] sm:$0xff] %vm2340, %v3489
  %3590 = vst.msk [vmem:[%s4 + $0x88] sm:$0xff] %vm2340, %v3490
  %3591 = vst.msk [vmem:[%s4 + $0x90] sm:$0xff] %vm2340, %v3491
  %3592 = vst.msk [vmem:[%s4 + $0x98] sm:$0xff] %vm2340, %v3492
  %3593 = vst.msk [vmem:[%s4 + $0xa0] sm:$0xff] %vm2340, %v3493
  %3594 = vst.msk [vmem:[%s4 + $0xa8] sm:$0xff] %vm2340, %v3494
  %3595 = vst.msk [vmem:[%s4 + $0xb0] sm:$0xff] %vm2340, %v3495
  %3596 = vst.msk [vmem:[%s4 + $0xb8] sm:$0xff] %vm2340, %v3496
  %3597 = vst.msk [vmem:[%s4 + $0xc0] sm:$0xff] %vm2340, %v3497
  %3598 = vst.msk [vmem:[%s4 + $0xc8] sm:$0xff] %vm2340, %v3498
  %3599 = vst.msk [vmem:[%s4 + $0xd0] sm:$0xff] %vm2340, %v3499
  %3600 = vst.msk [vmem:[%s4 + $0xd8] sm:$0xff] %vm2340, %v3500
  %3601 = vst.msk [vmem:[%s4 + $0xe0] sm:$0xff] %vm2340, %v3501
  %3602 = vst.msk [vmem:[%s4 + $0xe8] sm:$0xff] %vm2340, %v3502
  %3603 = vst.msk [vmem:[%s4 + $0xf0] sm:$0xff] %vm2340, %v3503
  %3604 = vst.msk [vmem:[%s4 + $0xf8] sm:$0xff] %vm2340, %v3504
  %3605 = vst.msk [vmem:[%s4 + $0x100] sm:$0xff] %vm2340, %v3505
  %3606 = vst.msk [vmem:[%s4 + $0x108] sm:$0xff] %vm2340, %v3506
  %3607 = vst.msk [vmem:[%s4 + $0x110] sm:$0xff] %vm2340, %v3507
  %3608 = vst.msk [vmem:[%s4 + $0x118] sm:$0xff] %vm2340, %v3508
  %3609 = vst.msk [vmem:[%s4 + $0x120] sm:$0xff] %vm2340, %v3509
  %3610 = vst.msk [vmem:[%s4 + $0x128] sm:$0xff] %vm2340, %v3510
  %3611 = vst.msk [vmem:[%s4 + $0x130] sm:$0xff] %vm2340, %v3511
  %3612 = vst.msk [vmem:[%s4 + $0x138] sm:$0xff] %vm2340, %v3512
  %3613 = vst.msk [vmem:[%s4 + $0x140] sm:$0xff] %vm2340, %v3513
  %3614 = vst.msk [vmem:[%s4 + $0x148] sm:$0xff] %vm2340, %v3514
  %3615 = vst.msk [vmem:[%s4 + $0x150] sm:$0xff] %vm2340, %v3515
  %3616 = vst.msk [vmem:[%s4 + $0x158] sm:$0xff] %vm2340, %v3516
  %3617 = vst.msk [vmem:[%s4 + $0x160] sm:$0xff] %vm2340, %v3517
  %3618 = vst.msk [vmem:[%s4 + $0x168] sm:$0xff] %vm2340, %v3518
  %3619 = vst.msk [vmem:[%s4 + $0x170] sm:$0xff] %vm2340, %v3519
  %3620 = vst.msk [vmem:[%s4 + $0x178] sm:$0xff] %vm2340, %v3520
  %3621 = vst.msk [vmem:[%s4 + $0x180] sm:$0xff] %vm2340, %v3521
  %3622 = vst.msk [vmem:[%s4 + $0x188] sm:$0xff] %vm2340, %v3522
  %3623 = vst.msk [vmem:[%s4 + $0x190] sm:$0xff] %vm2340, %v3523
  %3624 = vst.msk [vmem:[%s4 + $0x198] sm:$0xff] %vm2340, %v3524
  %3625 = vst.msk [vmem:[%s4 + $0x1a0] sm:$0xff] %vm2340, %v3525
  %3626 = vst.msk [vmem:[%s4 + $0x1a8] sm:$0xff] %vm2340, %v3526
  %3627 = vst.msk [vmem:[%s4 + $0x1b0] sm:$0xff] %vm2340, %v3527
  %3628 = vst.msk [vmem:[%s4 + $0x1b8] sm:$0xff] %vm2340, %v3528
  %3629 = vst.msk [vmem:[%s4 + $0x1c0] sm:$0xff] %vm2340, %v3529
  %3630 = vst.msk [vmem:[%s4 + $0x1c8] sm:$0xff] %vm2340, %v3530
  %3631 = vst.msk [vmem:[%s4 + $0x1d0] sm:$0xff] %vm2340, %v3531
  %3632 = vst.msk [vmem:[%s4 + $0x1d8] sm:$0xff] %vm2340, %v3532
  %3633 = vst.msk [vmem:[%s4 + $0x1e0] sm:$0xff] %vm2340, %v3533
  %3634 = vst.msk [vmem:[%s4 + $0x1e8] sm:$0xff] %vm2340, %v3534
  %3635 = vst.msk [vmem:[%s4 + $0x1f0] sm:$0xff] %vm2340, %v3535
  %3636 = vst.msk [vmem:[%s4 + $0x1f8] sm:$0xff] %vm2340, %v3536
  %3637 = vst.msk [vmem:[%s4 + $0x200] sm:$0xff] %vm2340, %v3537
  %3638 = vst.msk [vmem:[%s4 + $0x208] sm:$0xff] %vm2340, %v3538
  %3639 = vst.msk [vmem:[%s4 + $0x210] sm:$0xff] %vm2340, %v3539
  %3640 = vst.msk [vmem:[%s4 + $0x218] sm:$0xff] %vm2340, %v3540
  %3641 = vst.msk [vmem:[%s4 + $0x220] sm:$0xff] %vm2340, %v3541
  %3642 = vst.msk [vmem:[%s4 + $0x228] sm:$0xff] %vm2340, %v3542
  %3643 = vst.msk [vmem:[%s4 + $0x230] sm:$0xff] %vm2340, %v3543
  %3644 = vst.msk [vmem:[%s4 + $0x238] sm:$0xff] %vm2340, %v3544
  %3645 = vst.msk [vmem:[%s4 + $0x240] sm:$0xff] %vm2340, %v3545
  %3646 = vst.msk [vmem:[%s4 + $0x248] sm:$0xff] %vm2340, %v3546
  %3647 = vst.msk [vmem:[%s4 + $0x250] sm:$0xff] %vm2340, %v3547
  %3648 = vst.msk [vmem:[%s4 + $0x258] sm:$0xff] %vm2340, %v3548
  %3649 = vst.msk [vmem:[%s4 + $0x260] sm:$0xff] %vm2340, %v3549
  %3650 = vst.msk [vmem:[%s4 + $0x268] sm:$0xff] %vm2340, %v3550
  %3651 = vst.msk [vmem:[%s4 + $0x270] sm:$0xff] %vm2340, %v3551
  %3652 = vst.msk [vmem:[%s4 + $0x278] sm:$0xff] %vm2340, %v3552
  %3653 = vst.msk [vmem:[%s4 + $0x280] sm:$0xff] %vm2340, %v3553
  %3654 = vst.msk [vmem:[%s4 + $0x288] sm:$0xff] %vm2340, %v3554
  %3655 = vst.msk [vmem:[%s4 + $0x290] sm:$0xff] %vm2340, %v3555
  %3656 = vst.msk [vmem:[%s4 + $0x298] sm:$0xff] %vm2340, %v3556
  %3657 = vst.msk [vmem:[%s4 + $0x2a0] sm:$0xff] %vm2340, %v3557
  %3658 = vst.msk [vmem:[%s4 + $0x2a8] sm:$0xff] %vm2340, %v3558
  %3659 = vst.msk [vmem:[%s4 + $0x2b0] sm:$0xff] %vm2340, %v3559
  %3660 = vst.msk [vmem:[%s4 + $0x2b8] sm:$0xff] %vm2340, %v3560
  %3661 = vst.msk [vmem:[%s4 + $0x2c0] sm:$0xff] %vm2340, %v3561
  %3662 = vst.msk [vmem:[%s4 + $0x2c8] sm:$0xff] %vm2340, %v3562
  %3663 = vst.msk [vmem:[%s4 + $0x2d0] sm:$0xff] %vm2340, %v3563
  %3664 = vst.msk [vmem:[%s4 + $0x2d8] sm:$0xff] %vm2340, %v3564
  %3665 = vst.msk [vmem:[%s4 + $0x2e0] sm:$0xff] %vm2340, %v3565
  %3666 = vst.msk [vmem:[%s4 + $0x2e8] sm:$0xff] %vm2340, %v3566
  %3667 = vst.msk [vmem:[%s4 + $0x2f0] sm:$0xff] %vm2340, %v3567
  %3668 = vst.msk [vmem:[%s4 + $0x2f8] sm:$0xff] %vm2340, %v3568
  %3669 = vst.msk [vmem:[%s4 + $0x300] sm:$0xff] %vm2340, %v3569
  %3670 = vst.msk [vmem:[%s4 + $0x308] sm:$0xff] %vm2340, %v3570
  %3671 = vst.msk [vmem:[%s4 + $0x310] sm:$0xff] %vm2340, %v3571
  %3672 = vst.msk [vmem:[%s4 + $0x318] sm:$0xff] %vm2340, %v3572
  // Predicated region
  $region18: #{forward.8} parent=0 // pred_check
    _
  $region19: #{forward.8} parent=0 // pred_check_branch
    %3674 = sbr.rel (0) target = $region21
  $region20: #{forward.8} parent=0 // pred_region
    _
  $region21: #{forward.8} parent=0 // pred_fallthru
    _
  // Predicated region
  $region22: #{forward.8} parent=0 // pred_check
    _
  $region23: #{forward.8} parent=0 // pred_check_branch
    %3676 = sbr.rel (0) target = $region25
  $region24: #{forward.8} parent=0 // pred_region
    _
  $region25: #{forward.8} parent=0 // pred_fallthru
    _

// kernel: forward.9
$region0: #{forward.9}
  #allocation0 [shape = 'u32[]', space=smem, size = 0x4, offset = 0x4, fixed_abs, tag = 'smem constant byte address 0x4 - core index']
  #allocation1 [shape = 'u32[144,128]{1,0:T(1,128)}', space=vmem, size = 0x12000, scoped, tag = 'internal scratch']
  #allocation2 [shape = 'f32[1,1]{1,0:T(1,128)S(1)}', space=vmem, size = 0x200, scoped, tag = 'scoped memory for forward.9']
  %s0 = inlined_call_operand.vmem [shape: bf16[1,256], index: 0, kind: input, shape index: {}]
  %s1 = inlined_call_operand.vmem [shape: bf16[256,3200], index: 1, kind: input, shape index: {}]
  %s2 = inlined_call_operand.<no memory space> [shape: f32[1,1], index: 2, kind: input, shape index: {}]
  %s3 = inlined_call_operand.vmem [shape: f32[1,3200], index: 3, kind: output, shape index: {}]
  %s4 = sld [smem:[#allocation0]]
  $region22: #{forward.9} parent=0
    _
  %s6 = ssub.s32 1, %s4
  %s7 = scalar_select 0, %s6, %s4
  %v8 = vstv %s2
  %9 = vst [vmem:[#allocation2] sm:$0x1] %v8
  // Predicated region
  $region2: #{forward.9} parent=0 // pred_check
    _
  $region3: #{forward.9} parent=0 // pred_check_branch
    %11 = sbr.rel (0) target = $region5
  $region4: #{forward.9} parent=0 // pred_region
    _
  $region5: #{forward.9} parent=0 // pred_fallthru
    _
  // Predicated region
  $region6: #{forward.9} parent=0 // pred_check
    _
  $region7: #{forward.9} parent=0 // pred_check_branch
    %13 = sbr.rel (0) target = $region9
  $region8: #{forward.9} parent=0 // pred_region
    _
  $region9: #{forward.9} parent=0 // pred_fallthru
    _
  // Predicated region
  $region10: #{forward.9} parent=0 // pred_check
    _
  $region11: #{forward.9} parent=0 // pred_check_branch
    %15 = sbr.rel (0) target = $region13
  $region12: #{forward.9} parent=0 // pred_region
    _
  $region13: #{forward.9} parent=0 // pred_fallthru
    _
  %v17 = vld [vmem:[%s0] sm:$0x3]
  %v18 = vld [vmem:[%s1] sm:$0xff]
  %v19 = vld [vmem:[%s1 + $0x8] sm:$0xff]
  %v20 = vld [vmem:[%s1 + $0x10] sm:$0xff]
  %v21 = vld [vmem:[%s1 + $0x18] sm:$0xff]
  %v22 = vld [vmem:[%s1 + $0x20] sm:$0xff]
  %v23 = vld [vmem:[%s1 + $0x28] sm:$0xff]
  %v24 = vld [vmem:[%s1 + $0x30] sm:$0xff]
  %v25 = vld [vmem:[%s1 + $0x38] sm:$0xff]
  %v26 = vld [vmem:[%s1 + $0x40] sm:$0xff]
  %v27 = vld [vmem:[%s1 + $0x48] sm:$0xff]
  %v28 = vld [vmem:[%s1 + $0x50] sm:$0xff]
  %v29 = vld [vmem:[%s1 + $0x58] sm:$0xff]
  %v30 = vld [vmem:[%s1 + $0x60] sm:$0xf]
  %v31 = vld [vmem:[%s1 + $0x64] sm:$0xff]
  %v32 = vld [vmem:[%s1 + $0x6c] sm:$0xff]
  %v33 = vld [vmem:[%s1 + $0x74] sm:$0xff]
  %v34 = vld [vmem:[%s1 + $0x7c] sm:$0xff]
  %v35 = vld [vmem:[%s1 + $0x84] sm:$0xff]
  %v36 = vld [vmem:[%s1 + $0x8c] sm:$0xff]
  %v37 = vld [vmem:[%s1 + $0x94] sm:$0xff]
  %v38 = vld [vmem:[%s1 + $0x9c] sm:$0xff]
  %v39 = vld [vmem:[%s1 + $0xa4] sm:$0xff]
  %v40 = vld [vmem:[%s1 + $0xac] sm:$0xff]
  %v41 = vld [vmem:[%s1 + $0xb4] sm:$0xff]
  %v42 = vld [vmem:[%s1 + $0xbc] sm:$0xff]
  %v43 = vld [vmem:[%s1 + $0xc4] sm:$0xf]
  %v44 = vld [vmem:[%s1 + $0xc8] sm:$0xff]
  %v45 = vld [vmem:[%s1 + $0xd0] sm:$0xff]
  %v46 = vld [vmem:[%s1 + $0xd8] sm:$0xff]
  %v47 = vld [vmem:[%s1 + $0xe0] sm:$0xff]
  %v48 = vld [vmem:[%s1 + $0xe8] sm:$0xff]
  %v49 = vld [vmem:[%s1 + $0xf0] sm:$0xff]
  %v50 = vld [vmem:[%s1 + $0xf8] sm:$0xff]
  %v51 = vld [vmem:[%s1 + $0x100] sm:$0xff]
  %v52 = vld [vmem:[%s1 + $0x108] sm:$0xff]
  %v53 = vld [vmem:[%s1 + $0x110] sm:$0xff]
  %v54 = vld [vmem:[%s1 + $0x118] sm:$0xff]
  %v55 = vld [vmem:[%s1 + $0x120] sm:$0xff]
  %v56 = vld [vmem:[%s1 + $0x128] sm:$0xf]
  %v57 = vld [vmem:[%s1 + $0x12c] sm:$0xff]
  %v58 = vld [vmem:[%s1 + $0x134] sm:$0xff]
  %v59 = vld [vmem:[%s1 + $0x13c] sm:$0xff]
  %v60 = vld [vmem:[%s1 + $0x144] sm:$0xff]
  %v61 = vld [vmem:[%s1 + $0x14c] sm:$0xff]
  %v62 = vld [vmem:[%s1 + $0x154] sm:$0xff]
  %v63 = vld [vmem:[%s1 + $0x15c] sm:$0xff]
  %v64 = vld [vmem:[%s1 + $0x164] sm:$0xff]
  %v65 = vld [vmem:[%s1 + $0x16c] sm:$0xff]
  %v66 = vld [vmem:[%s1 + $0x174] sm:$0xff]
  %v67 = vld [vmem:[%s1 + $0x17c] sm:$0xff]
  %v68 = vld [vmem:[%s1 + $0x184] sm:$0xff]
  %v69 = vld [vmem:[%s1 + $0x18c] sm:$0xf]
  %v70 = vld [vmem:[%s1 + $0x190] sm:$0xff]
  %v71 = vld [vmem:[%s1 + $0x198] sm:$0xff]
  %v72 = vld [vmem:[%s1 + $0x1a0] sm:$0xff]
  %v73 = vld [vmem:[%s1 + $0x1a8] sm:$0xff]
  %v74 = vld [vmem:[%s1 + $0x1b0] sm:$0xff]
  %v75 = vld [vmem:[%s1 + $0x1b8] sm:$0xff]
  %v76 = vld [vmem:[%s1 + $0x1c0] sm:$0xff]
  %v77 = vld [vmem:[%s1 + $0x1c8] sm:$0xff]
  %v78 = vld [vmem:[%s1 + $0x1d0] sm:$0xff]
  %v79 = vld [vmem:[%s1 + $0x1d8] sm:$0xff]
  %v80 = vld [vmem:[%s1 + $0x1e0] sm:$0xff]
  %v81 = vld [vmem:[%s1 + $0x1e8] sm:$0xff]
  %v82 = vld [vmem:[%s1 + $0x1f0] sm:$0xf]
  %v83 = vld [vmem:[%s1 + $0x1f4] sm:$0xff]
  %v84 = vld [vmem:[%s1 + $0x1fc] sm:$0xff]
  %v85 = vld [vmem:[%s1 + $0x204] sm:$0xff]
  %v86 = vld [vmem:[%s1 + $0x20c] sm:$0xff]
  %v87 = vld [vmem:[%s1 + $0x214] sm:$0xff]
  %v88 = vld [vmem:[%s1 + $0x21c] sm:$0xff]
  %v89 = vld [vmem:[%s1 + $0x224] sm:$0xff]
  %v90 = vld [vmem:[%s1 + $0x22c] sm:$0xff]
  %v91 = vld [vmem:[%s1 + $0x234] sm:$0xff]
  %v92 = vld [vmem:[%s1 + $0x23c] sm:$0xff]
  %v93 = vld [vmem:[%s1 + $0x244] sm:$0xff]
  %v94 = vld [vmem:[%s1 + $0x24c] sm:$0xff]
  %v95 = vld [vmem:[%s1 + $0x254] sm:$0xf]
  %v96 = vld [vmem:[%s1 + $0x258] sm:$0xff]
  %v97 = vld [vmem:[%s1 + $0x260] sm:$0xff]
  %v98 = vld [vmem:[%s1 + $0x268] sm:$0xff]
  %v99 = vld [vmem:[%s1 + $0x270] sm:$0xff]
  %v100 = vld [vmem:[%s1 + $0x278] sm:$0xff]
  %v101 = vld [vmem:[%s1 + $0x280] sm:$0xff]
  %v102 = vld [vmem:[%s1 + $0x288] sm:$0xff]
  %v103 = vld [vmem:[%s1 + $0x290] sm:$0xff]
  %v104 = vld [vmem:[%s1 + $0x298] sm:$0xff]
  %v105 = vld [vmem:[%s1 + $0x2a0] sm:$0xff]
  %v106 = vld [vmem:[%s1 + $0x2a8] sm:$0xff]
  %v107 = vld [vmem:[%s1 + $0x2b0] sm:$0xff]
  %v108 = vld [vmem:[%s1 + $0x2b8] sm:$0xf]
  %v109 = vld [vmem:[%s1 + $0x2bc] sm:$0xff]
  %v110 = vld [vmem:[%s1 + $0x2c4] sm:$0xff]
  %v111 = vld [vmem:[%s1 + $0x2cc] sm:$0xff]
  %v112 = vld [vmem:[%s1 + $0x2d4] sm:$0xff]
  %v113 = vld [vmem:[%s1 + $0x2dc] sm:$0xff]
  %v114 = vld [vmem:[%s1 + $0x2e4] sm:$0xff]
  %v115 = vld [vmem:[%s1 + $0x2ec] sm:$0xff]
  %v116 = vld [vmem:[%s1 + $0x2f4] sm:$0xff]
  %v117 = vld [vmem:[%s1 + $0x2fc] sm:$0xff]
  %v118 = vld [vmem:[%s1 + $0x304] sm:$0xff]
  %v119 = vld [vmem:[%s1 + $0x30c] sm:$0xff]
  %v120 = vld [vmem:[%s1 + $0x314] sm:$0xff]
  %v121 = vld [vmem:[%s1 + $0x31c] sm:$0xf]
  %v122 = vld [vmem:[%s1 + $0x320] sm:$0xff]
  %v123 = vld [vmem:[%s1 + $0x328] sm:$0xff]
  %v124 = vld [vmem:[%s1 + $0x330] sm:$0xff]
  %v125 = vld [vmem:[%s1 + $0x338] sm:$0xff]
  %v126 = vld [vmem:[%s1 + $0x340] sm:$0xff]
  %v127 = vld [vmem:[%s1 + $0x348] sm:$0xff]
  %v128 = vld [vmem:[%s1 + $0x350] sm:$0xff]
  %v129 = vld [vmem:[%s1 + $0x358] sm:$0xff]
  %v130 = vld [vmem:[%s1 + $0x360] sm:$0xff]
  %v131 = vld [vmem:[%s1 + $0x368] sm:$0xff]
  %v132 = vld [vmem:[%s1 + $0x370] sm:$0xff]
  %v133 = vld [vmem:[%s1 + $0x378] sm:$0xff]
  %v134 = vld [vmem:[%s1 + $0x380] sm:$0xf]
  %v135 = vld [vmem:[%s1 + $0x384] sm:$0xff]
  %v136 = vld [vmem:[%s1 + $0x38c] sm:$0xff]
  %v137 = vld [vmem:[%s1 + $0x394] sm:$0xff]
  %v138 = vld [vmem:[%s1 + $0x39c] sm:$0xff]
  %v139 = vld [vmem:[%s1 + $0x3a4] sm:$0xff]
  %v140 = vld [vmem:[%s1 + $0x3ac] sm:$0xff]
  %v141 = vld [vmem:[%s1 + $0x3b4] sm:$0xff]
  %v142 = vld [vmem:[%s1 + $0x3bc] sm:$0xff]
  %v143 = vld [vmem:[%s1 + $0x3c4] sm:$0xff]
  %v144 = vld [vmem:[%s1 + $0x3cc] sm:$0xff]
  %v145 = vld [vmem:[%s1 + $0x3d4] sm:$0xff]
  %v146 = vld [vmem:[%s1 + $0x3dc] sm:$0xff]
  %v147 = vld [vmem:[%s1 + $0x3e4] sm:$0xf]
  %v148 = vld [vmem:[%s1 + $0x3e8] sm:$0xff]
  %v149 = vld [vmem:[%s1 + $0x3f0] sm:$0xff]
  %v150 = vld [vmem:[%s1 + $0x3f8] sm:$0xff]
  %v151 = vld [vmem:[%s1 + $0x400] sm:$0xff]
  %v152 = vld [vmem:[%s1 + $0x408] sm:$0xff]
  %v153 = vld [vmem:[%s1 + $0x410] sm:$0xff]
  %v154 = vld [vmem:[%s1 + $0x418] sm:$0xff]
  %v155 = vld [vmem:[%s1 + $0x420] sm:$0xff]
  %v156 = vld [vmem:[%s1 + $0x428] sm:$0xff]
  %v157 = vld [vmem:[%s1 + $0x430] sm:$0xff]
  %v158 = vld [vmem:[%s1 + $0x438] sm:$0xff]
  %v159 = vld [vmem:[%s1 + $0x440] sm:$0xff]
  %v160 = vld [vmem:[%s1 + $0x448] sm:$0xf]
  %v161 = vld [vmem:[%s1 + $0x44c] sm:$0xff]
  %v162 = vld [vmem:[%s1 + $0x454] sm:$0xff]
  %v163 = vld [vmem:[%s1 + $0x45c] sm:$0xff]
  %v164 = vld [vmem:[%s1 + $0x464] sm:$0xff]
  %v165 = vld [vmem:[%s1 + $0x46c] sm:$0xff]
  %v166 = vld [vmem:[%s1 + $0x474] sm:$0xff]
  %v167 = vld [vmem:[%s1 + $0x47c] sm:$0xff]
  %v168 = vld [vmem:[%s1 + $0x484] sm:$0xff]
  %v169 = vld [vmem:[%s1 + $0x48c] sm:$0xff]
  %v170 = vld [vmem:[%s1 + $0x494] sm:$0xff]
  %v171 = vld [vmem:[%s1 + $0x49c] sm:$0xff]
  %v172 = vld [vmem:[%s1 + $0x4a4] sm:$0xff]
  %v173 = vld [vmem:[%s1 + $0x4ac] sm:$0xf]
  %v174 = vld [vmem:[%s1 + $0x4b0] sm:$0xff]
  %v175 = vld [vmem:[%s1 + $0x4b8] sm:$0xff]
  %v176 = vld [vmem:[%s1 + $0x4c0] sm:$0xff]
  %v177 = vld [vmem:[%s1 + $0x4c8] sm:$0xff]
  %v178 = vld [vmem:[%s1 + $0x4d0] sm:$0xff]
  %v179 = vld [vmem:[%s1 + $0x4d8] sm:$0xff]
  %v180 = vld [vmem:[%s1 + $0x4e0] sm:$0xff]
  %v181 = vld [vmem:[%s1 + $0x4e8] sm:$0xff]
  %v182 = vld [vmem:[%s1 + $0x4f0] sm:$0xff]
  %v183 = vld [vmem:[%s1 + $0x4f8] sm:$0xff]
  %v184 = vld [vmem:[%s1 + $0x500] sm:$0xff]
  %v185 = vld [vmem:[%s1 + $0x508] sm:$0xff]
  %v186 = vld [vmem:[%s1 + $0x510] sm:$0xf]
  %v187 = vld [vmem:[%s1 + $0x514] sm:$0xff]
  %v188 = vld [vmem:[%s1 + $0x51c] sm:$0xff]
  %v189 = vld [vmem:[%s1 + $0x524] sm:$0xff]
  %v190 = vld [vmem:[%s1 + $0x52c] sm:$0xff]
  %v191 = vld [vmem:[%s1 + $0x534] sm:$0xff]
  %v192 = vld [vmem:[%s1 + $0x53c] sm:$0xff]
  %v193 = vld [vmem:[%s1 + $0x544] sm:$0xff]
  %v194 = vld [vmem:[%s1 + $0x54c] sm:$0xff]
  %v195 = vld [vmem:[%s1 + $0x554] sm:$0xff]
  %v196 = vld [vmem:[%s1 + $0x55c] sm:$0xff]
  %v197 = vld [vmem:[%s1 + $0x564] sm:$0xff]
  %v198 = vld [vmem:[%s1 + $0x56c] sm:$0xff]
  %v199 = vld [vmem:[%s1 + $0x574] sm:$0xf]
  %v200 = vld [vmem:[%s1 + $0x578] sm:$0xff]
  %v201 = vld [vmem:[%s1 + $0x580] sm:$0xff]
  %v202 = vld [vmem:[%s1 + $0x588] sm:$0xff]
  %v203 = vld [vmem:[%s1 + $0x590] sm:$0xff]
  %v204 = vld [vmem:[%s1 + $0x598] sm:$0xff]
  %v205 = vld [vmem:[%s1 + $0x5a0] sm:$0xff]
  %v206 = vld [vmem:[%s1 + $0x5a8] sm:$0xff]
  %v207 = vld [vmem:[%s1 + $0x5b0] sm:$0xff]
  %v208 = vld [vmem:[%s1 + $0x5b8] sm:$0xff]
  %v209 = vld [vmem:[%s1 + $0x5c0] sm:$0xff]
  %v210 = vld [vmem:[%s1 + $0x5c8] sm:$0xff]
  %v211 = vld [vmem:[%s1 + $0x5d0] sm:$0xff]
  %v212 = vld [vmem:[%s1 + $0x5d8] sm:$0xf]
  %v213 = vld [vmem:[%s1 + $0x5dc] sm:$0xff]
  %v214 = vld [vmem:[%s1 + $0x5e4] sm:$0xff]
  %v215 = vld [vmem:[%s1 + $0x5ec] sm:$0xff]
  %v216 = vld [vmem:[%s1 + $0x5f4] sm:$0xff]
  %v217 = vld [vmem:[%s1 + $0x5fc] sm:$0xff]
  %v218 = vld [vmem:[%s1 + $0x604] sm:$0xff]
  %v219 = vld [vmem:[%s1 + $0x60c] sm:$0xff]
  %v220 = vld [vmem:[%s1 + $0x614] sm:$0xff]
  %v221 = vld [vmem:[%s1 + $0x61c] sm:$0xff]
  %v222 = vld [vmem:[%s1 + $0x624] sm:$0xff]
  %v223 = vld [vmem:[%s1 + $0x62c] sm:$0xff]
  %v224 = vld [vmem:[%s1 + $0x634] sm:$0xff]
  %v225 = vld [vmem:[%s1 + $0x63c] sm:$0xf]
  %v226 = vld [vmem:[%s1 + $0x640] sm:$0xff]
  %v227 = vld [vmem:[%s1 + $0x648] sm:$0xff]
  %v228 = vld [vmem:[%s1 + $0x650] sm:$0xff]
  %v229 = vld [vmem:[%s1 + $0x658] sm:$0xff]
  %v230 = vld [vmem:[%s1 + $0x660] sm:$0xff]
  %v231 = vld [vmem:[%s1 + $0x668] sm:$0xff]
  %v232 = vld [vmem:[%s1 + $0x670] sm:$0xff]
  %v233 = vld [vmem:[%s1 + $0x678] sm:$0xff]
  %v234 = vld [vmem:[%s1 + $0x680] sm:$0xff]
  %v235 = vld [vmem:[%s1 + $0x688] sm:$0xff]
  %v236 = vld [vmem:[%s1 + $0x690] sm:$0xff]
  %v237 = vld [vmem:[%s1 + $0x698] sm:$0xff]
  %v238 = vld [vmem:[%s1 + $0x6a0] sm:$0xf]
  %v239 = vld [vmem:[%s1 + $0x6a4] sm:$0xff]
  %v240 = vld [vmem:[%s1 + $0x6ac] sm:$0xff]
  %v241 = vld [vmem:[%s1 + $0x6b4] sm:$0xff]
  %v242 = vld [vmem:[%s1 + $0x6bc] sm:$0xff]
  %v243 = vld [vmem:[%s1 + $0x6c4] sm:$0xff]
  %v244 = vld [vmem:[%s1 + $0x6cc] sm:$0xff]
  %v245 = vld [vmem:[%s1 + $0x6d4] sm:$0xff]
  %v246 = vld [vmem:[%s1 + $0x6dc] sm:$0xff]
  %v247 = vld [vmem:[%s1 + $0x6e4] sm:$0xff]
  %v248 = vld [vmem:[%s1 + $0x6ec] sm:$0xff]
  %v249 = vld [vmem:[%s1 + $0x6f4] sm:$0xff]
  %v250 = vld [vmem:[%s1 + $0x6fc] sm:$0xff]
  %v251 = vld [vmem:[%s1 + $0x704] sm:$0xf]
  %v252 = vld [vmem:[%s1 + $0x708] sm:$0xff]
  %v253 = vld [vmem:[%s1 + $0x710] sm:$0xff]
  %v254 = vld [vmem:[%s1 + $0x718] sm:$0xff]
  %v255 = vld [vmem:[%s1 + $0x720] sm:$0xff]
  %v256 = vld [vmem:[%s1 + $0x728] sm:$0xff]
  %v257 = vld [vmem:[%s1 + $0x730] sm:$0xff]
  %v258 = vld [vmem:[%s1 + $0x738] sm:$0xff]
  %v259 = vld [vmem:[%s1 + $0x740] sm:$0xff]
  %v260 = vld [vmem:[%s1 + $0x748] sm:$0xff]
  %v261 = vld [vmem:[%s1 + $0x750] sm:$0xff]
  %v262 = vld [vmem:[%s1 + $0x758] sm:$0xff]
  %v263 = vld [vmem:[%s1 + $0x760] sm:$0xff]
  %v264 = vld [vmem:[%s1 + $0x768] sm:$0xf]
  %v265 = vld [vmem:[%s1 + $0x76c] sm:$0xff]
  %v266 = vld [vmem:[%s1 + $0x774] sm:$0xff]
  %v267 = vld [vmem:[%s1 + $0x77c] sm:$0xff]
  %v268 = vld [vmem:[%s1 + $0x784] sm:$0xff]
  %v269 = vld [vmem:[%s1 + $0x78c] sm:$0xff]
  %v270 = vld [vmem:[%s1 + $0x794] sm:$0xff]
  %v271 = vld [vmem:[%s1 + $0x79c] sm:$0xff]
  %v272 = vld [vmem:[%s1 + $0x7a4] sm:$0xff]
  %v273 = vld [vmem:[%s1 + $0x7ac] sm:$0xff]
  %v274 = vld [vmem:[%s1 + $0x7b4] sm:$0xff]
  %v275 = vld [vmem:[%s1 + $0x7bc] sm:$0xff]
  %v276 = vld [vmem:[%s1 + $0x7c4] sm:$0xff]
  %v277 = vld [vmem:[%s1 + $0x7cc] sm:$0xf]
  %v278 = vld [vmem:[%s1 + $0x7d0] sm:$0xff]
  %v279 = vld [vmem:[%s1 + $0x7d8] sm:$0xff]
  %v280 = vld [vmem:[%s1 + $0x7e0] sm:$0xff]
  %v281 = vld [vmem:[%s1 + $0x7e8] sm:$0xff]
  %v282 = vld [vmem:[%s1 + $0x7f0] sm:$0xff]
  %v283 = vld [vmem:[%s1 + $0x7f8] sm:$0xff]
  %v284 = vld [vmem:[%s1 + $0x800] sm:$0xff]
  %v285 = vld [vmem:[%s1 + $0x808] sm:$0xff]
  %v286 = vld [vmem:[%s1 + $0x810] sm:$0xff]
  %v287 = vld [vmem:[%s1 + $0x818] sm:$0xff]
  %v288 = vld [vmem:[%s1 + $0x820] sm:$0xff]
  %v289 = vld [vmem:[%s1 + $0x828] sm:$0xff]
  %v290 = vld [vmem:[%s1 + $0x830] sm:$0xf]
  %v291 = vld [vmem:[%s1 + $0x834] sm:$0xff]
  %v292 = vld [vmem:[%s1 + $0x83c] sm:$0xff]
  %v293 = vld [vmem:[%s1 + $0x844] sm:$0xff]
  %v294 = vld [vmem:[%s1 + $0x84c] sm:$0xff]
  %v295 = vld [vmem:[%s1 + $0x854] sm:$0xff]
  %v296 = vld [vmem:[%s1 + $0x85c] sm:$0xff]
  %v297 = vld [vmem:[%s1 + $0x864] sm:$0xff]
  %v298 = vld [vmem:[%s1 + $0x86c] sm:$0xff]
  %v299 = vld [vmem:[%s1 + $0x874] sm:$0xff]
  %v300 = vld [vmem:[%s1 + $0x87c] sm:$0xff]
  %v301 = vld [vmem:[%s1 + $0x884] sm:$0xff]
  %v302 = vld [vmem:[%s1 + $0x88c] sm:$0xff]
  %v303 = vld [vmem:[%s1 + $0x894] sm:$0xf]
  %v304 = vld [vmem:[%s1 + $0x898] sm:$0xff]
  %v305 = vld [vmem:[%s1 + $0x8a0] sm:$0xff]
  %v306 = vld [vmem:[%s1 + $0x8a8] sm:$0xff]
  %v307 = vld [vmem:[%s1 + $0x8b0] sm:$0xff]
  %v308 = vld [vmem:[%s1 + $0x8b8] sm:$0xff]
  %v309 = vld [vmem:[%s1 + $0x8c0] sm:$0xff]
  %v310 = vld [vmem:[%s1 + $0x8c8] sm:$0xff]
  %v311 = vld [vmem:[%s1 + $0x8d0] sm:$0xff]
  %v312 = vld [vmem:[%s1 + $0x8d8] sm:$0xff]
  %v313 = vld [vmem:[%s1 + $0x8e0] sm:$0xff]
  %v314 = vld [vmem:[%s1 + $0x8e8] sm:$0xff]
  %v315 = vld [vmem:[%s1 + $0x8f0] sm:$0xff]
  %v316 = vld [vmem:[%s1 + $0x8f8] sm:$0xf]
  %v317 = vld [vmem:[%s1 + $0x8fc] sm:$0xff]
  %v318 = vld [vmem:[%s1 + $0x904] sm:$0xff]
  %v319 = vld [vmem:[%s1 + $0x90c] sm:$0xff]
  %v320 = vld [vmem:[%s1 + $0x914] sm:$0xff]
  %v321 = vld [vmem:[%s1 + $0x91c] sm:$0xff]
  %v322 = vld [vmem:[%s1 + $0x924] sm:$0xff]
  %v323 = vld [vmem:[%s1 + $0x92c] sm:$0xff]
  %v324 = vld [vmem:[%s1 + $0x934] sm:$0xff]
  %v325 = vld [vmem:[%s1 + $0x93c] sm:$0xff]
  %v326 = vld [vmem:[%s1 + $0x944] sm:$0xff]
  %v327 = vld [vmem:[%s1 + $0x94c] sm:$0xff]
  %v328 = vld [vmem:[%s1 + $0x954] sm:$0xff]
  %v329 = vld [vmem:[%s1 + $0x95c] sm:$0xf]
  %v330 = vld [vmem:[%s1 + $0x960] sm:$0xff]
  %v331 = vld [vmem:[%s1 + $0x968] sm:$0xff]
  %v332 = vld [vmem:[%s1 + $0x970] sm:$0xff]
  %v333 = vld [vmem:[%s1 + $0x978] sm:$0xff]
  %v334 = vld [vmem:[%s1 + $0x980] sm:$0xff]
  %v335 = vld [vmem:[%s1 + $0x988] sm:$0xff]
  %v336 = vld [vmem:[%s1 + $0x990] sm:$0xff]
  %v337 = vld [vmem:[%s1 + $0x998] sm:$0xff]
  %v338 = vld [vmem:[%s1 + $0x9a0] sm:$0xff]
  %v339 = vld [vmem:[%s1 + $0x9a8] sm:$0xff]
  %v340 = vld [vmem:[%s1 + $0x9b0] sm:$0xff]
  %v341 = vld [vmem:[%s1 + $0x9b8] sm:$0xff]
  %v342 = vld [vmem:[%s1 + $0x9c0] sm:$0xf]
  %v343 = vld [vmem:[%s1 + $0x9c4] sm:$0xff]
  %v344 = vld [vmem:[%s1 + $0x9cc] sm:$0xff]
  %v345 = vld [vmem:[%s1 + $0x9d4] sm:$0xff]
  %v346 = vld [vmem:[%s1 + $0x9dc] sm:$0xff]
  %v347 = vld [vmem:[%s1 + $0x9e4] sm:$0xff]
  %v348 = vld [vmem:[%s1 + $0x9ec] sm:$0xff]
  %v349 = vld [vmem:[%s1 + $0x9f4] sm:$0xff]
  %v350 = vld [vmem:[%s1 + $0x9fc] sm:$0xff]
  %v351 = vld [vmem:[%s1 + $0xa04] sm:$0xff]
  %v352 = vld [vmem:[%s1 + $0xa0c] sm:$0xff]
  %v353 = vld [vmem:[%s1 + $0xa14] sm:$0xff]
  %v354 = vld [vmem:[%s1 + $0xa1c] sm:$0xff]
  %v355 = vld [vmem:[%s1 + $0xa24] sm:$0xf]
  %v356 = vld [vmem:[%s1 + $0xa28] sm:$0xff]
  %v357 = vld [vmem:[%s1 + $0xa30] sm:$0xff]
  %v358 = vld [vmem:[%s1 + $0xa38] sm:$0xff]
  %v359 = vld [vmem:[%s1 + $0xa40] sm:$0xff]
  %v360 = vld [vmem:[%s1 + $0xa48] sm:$0xff]
  %v361 = vld [vmem:[%s1 + $0xa50] sm:$0xff]
  %v362 = vld [vmem:[%s1 + $0xa58] sm:$0xff]
  %v363 = vld [vmem:[%s1 + $0xa60] sm:$0xff]
  %v364 = vld [vmem:[%s1 + $0xa68] sm:$0xff]
  %v365 = vld [vmem:[%s1 + $0xa70] sm:$0xff]
  %v366 = vld [vmem:[%s1 + $0xa78] sm:$0xff]
  %v367 = vld [vmem:[%s1 + $0xa80] sm:$0xff]
  %v368 = vld [vmem:[%s1 + $0xa88] sm:$0xf]
  %v369 = vld [vmem:[%s1 + $0xa8c] sm:$0xff]
  %v370 = vld [vmem:[%s1 + $0xa94] sm:$0xff]
  %v371 = vld [vmem:[%s1 + $0xa9c] sm:$0xff]
  %v372 = vld [vmem:[%s1 + $0xaa4] sm:$0xff]
  %v373 = vld [vmem:[%s1 + $0xaac] sm:$0xff]
  %v374 = vld [vmem:[%s1 + $0xab4] sm:$0xff]
  %v375 = vld [vmem:[%s1 + $0xabc] sm:$0xff]
  %v376 = vld [vmem:[%s1 + $0xac4] sm:$0xff]
  %v377 = vld [vmem:[%s1 + $0xacc] sm:$0xff]
  %v378 = vld [vmem:[%s1 + $0xad4] sm:$0xff]
  %v379 = vld [vmem:[%s1 + $0xadc] sm:$0xff]
  %v380 = vld [vmem:[%s1 + $0xae4] sm:$0xff]
  %v381 = vld [vmem:[%s1 + $0xaec] sm:$0xf]
  %v382 = vld [vmem:[%s1 + $0xaf0] sm:$0xff]
  %v383 = vld [vmem:[%s1 + $0xaf8] sm:$0xff]
  %v384 = vld [vmem:[%s1 + $0xb00] sm:$0xff]
  %v385 = vld [vmem:[%s1 + $0xb08] sm:$0xff]
  %v386 = vld [vmem:[%s1 + $0xb10] sm:$0xff]
  %v387 = vld [vmem:[%s1 + $0xb18] sm:$0xff]
  %v388 = vld [vmem:[%s1 + $0xb20] sm:$0xff]
  %v389 = vld [vmem:[%s1 + $0xb28] sm:$0xff]
  %v390 = vld [vmem:[%s1 + $0xb30] sm:$0xff]
  %v391 = vld [vmem:[%s1 + $0xb38] sm:$0xff]
  %v392 = vld [vmem:[%s1 + $0xb40] sm:$0xff]
  %v393 = vld [vmem:[%s1 + $0xb48] sm:$0xff]
  %v394 = vld [vmem:[%s1 + $0xb50] sm:$0xf]
  %v395 = vld [vmem:[%s1 + $0xb54] sm:$0xff]
  %v396 = vld [vmem:[%s1 + $0xb5c] sm:$0xff]
  %v397 = vld [vmem:[%s1 + $0xb64] sm:$0xff]
  %v398 = vld [vmem:[%s1 + $0xb6c] sm:$0xff]
  %v399 = vld [vmem:[%s1 + $0xb74] sm:$0xff]
  %v400 = vld [vmem:[%s1 + $0xb7c] sm:$0xff]
  %v401 = vld [vmem:[%s1 + $0xb84] sm:$0xff]
  %v402 = vld [vmem:[%s1 + $0xb8c] sm:$0xff]
  %v403 = vld [vmem:[%s1 + $0xb94] sm:$0xff]
  %v404 = vld [vmem:[%s1 + $0xb9c] sm:$0xff]
  %v405 = vld [vmem:[%s1 + $0xba4] sm:$0xff]
  %v406 = vld [vmem:[%s1 + $0xbac] sm:$0xff]
  %v407 = vld [vmem:[%s1 + $0xbb4] sm:$0xf]
  %v408 = vld [vmem:[%s1 + $0xbb8] sm:$0xff]
  %v409 = vld [vmem:[%s1 + $0xbc0] sm:$0xff]
  %v410 = vld [vmem:[%s1 + $0xbc8] sm:$0xff]
  %v411 = vld [vmem:[%s1 + $0xbd0] sm:$0xff]
  %v412 = vld [vmem:[%s1 + $0xbd8] sm:$0xff]
  %v413 = vld [vmem:[%s1 + $0xbe0] sm:$0xff]
  %v414 = vld [vmem:[%s1 + $0xbe8] sm:$0xff]
  %v415 = vld [vmem:[%s1 + $0xbf0] sm:$0xff]
  %v416 = vld [vmem:[%s1 + $0xbf8] sm:$0xff]
  %v417 = vld [vmem:[%s1 + $0xc00] sm:$0xff]
  %v418 = vld [vmem:[%s1 + $0xc08] sm:$0xff]
  %v419 = vld [vmem:[%s1 + $0xc10] sm:$0xff]
  %v420 = vld [vmem:[%s1 + $0xc18] sm:$0xf]
  %v421 = vld [vmem:[%s1 + $0xc1c] sm:$0xff]
  %v422 = vld [vmem:[%s1 + $0xc24] sm:$0xff]
  %v423 = vld [vmem:[%s1 + $0xc2c] sm:$0xff]
  %v424 = vld [vmem:[%s1 + $0xc34] sm:$0xff]
  %v425 = vld [vmem:[%s1 + $0xc3c] sm:$0xff]
  %v426 = vld [vmem:[%s1 + $0xc44] sm:$0xff]
  %v427 = vld [vmem:[%s1 + $0xc4c] sm:$0xff]
  %v428 = vld [vmem:[%s1 + $0xc54] sm:$0xff]
  %v429 = vld [vmem:[%s1 + $0xc5c] sm:$0xff]
  %v430 = vld [vmem:[%s1 + $0xc64] sm:$0xff]
  %v431 = vld [vmem:[%s1 + $0xc6c] sm:$0xff]
  %v432 = vld [vmem:[%s1 + $0xc74] sm:$0xff]
  %v433 = vld [vmem:[%s1 + $0xc7c] sm:$0xf]
  %v434 = vld [vmem:[#allocation2] sm:$0x1]
  %436 = vset.pattern.permute.xlu0 0
  %437 = vperm.xlu0 %436, %v434
  %v438 = vpop.permute.xlu0 %437
  %v440 = vlaneseq
  %v441 = vshrl.u32 %v440, 7
  %v442 = vsub.s32 0, %v441
  %v443 = vrot.slane %v438, %v442
  %v446 = vunpack.c.l.s4 1966171168
  %v447 = vunpack.c.0.s8 %v446
  %v448 = vlaneseq
  %v449 = vshrl.u32 %v448, 7
  %v450 = vsub.s32 %v447, %v449
  %v451 = vrot.slane %v17, %v450
  %v452 = vcombine.high %v451, %v451
  %v454 = vunpack.c.l.s4 1966171168
  %v455 = vunpack.c.0.s8 %v454
  %v456 = vlaneseq
  %v457 = vshrl.u32 %v456, 7
  %v458 = vsub.s32 %v455, %v457
  %v459 = vrot.slane %v451, %v458
  %v461 = vunpack.c.l.s4 1966171168
  %v462 = vunpack.c.0.s8 %v461
  %v463 = vlaneseq
  %v464 = vshrl.u32 %v463, 7
  %v465 = vsub.s32 %v462, %v464
  %v466 = vrot.slane %v452, %v465
  %v885 = vunpack.c.l.b16 %v18
  %v886 = vunpack.c.h.b16 %v18
  %v887 = vunpack.c.l.b16 %v19
  %v888 = vunpack.c.h.b16 %v19
  %v889 = vunpack.c.l.b16 %v20
  %v890 = vunpack.c.h.b16 %v20
  %v891 = vunpack.c.l.b16 %v21
  %v892 = vunpack.c.h.b16 %v21
  %v893 = vunpack.c.l.b16 %v22
  %v894 = vunpack.c.h.b16 %v22
  %v895 = vunpack.c.l.b16 %v23
  %v896 = vunpack.c.h.b16 %v23
  %v897 = vunpack.c.l.b16 %v24
  %v898 = vunpack.c.h.b16 %v24
  %v899 = vunpack.c.l.b16 %v25
  %v900 = vunpack.c.h.b16 %v25
  %v901 = vunpack.c.l.b16 %v26
  %v902 = vunpack.c.h.b16 %v26
  %v903 = vunpack.c.l.b16 %v27
  %v904 = vunpack.c.h.b16 %v27
  %v905 = vunpack.c.l.b16 %v28
  %v906 = vunpack.c.h.b16 %v28
  %v907 = vunpack.c.l.b16 %v29
  %v908 = vunpack.c.h.b16 %v29
  %v909 = vunpack.c.l.b16 %v30
  %v910 = vunpack.c.l.b16 %v31
  %v911 = vunpack.c.h.b16 %v31
  %v912 = vunpack.c.l.b16 %v32
  %v913 = vunpack.c.h.b16 %v32
  %v914 = vunpack.c.l.b16 %v33
  %v915 = vunpack.c.h.b16 %v33
  %v916 = vunpack.c.l.b16 %v34
  %v917 = vunpack.c.h.b16 %v34
  %v918 = vunpack.c.l.b16 %v35
  %v919 = vunpack.c.h.b16 %v35
  %v920 = vunpack.c.l.b16 %v36
  %v921 = vunpack.c.h.b16 %v36
  %v922 = vunpack.c.l.b16 %v37
  %v923 = vunpack.c.h.b16 %v37
  %v924 = vunpack.c.l.b16 %v38
  %v925 = vunpack.c.h.b16 %v38
  %v926 = vunpack.c.l.b16 %v39
  %v927 = vunpack.c.h.b16 %v39
  %v928 = vunpack.c.l.b16 %v40
  %v929 = vunpack.c.h.b16 %v40
  %v930 = vunpack.c.l.b16 %v41
  %v931 = vunpack.c.h.b16 %v41
  %v932 = vunpack.c.l.b16 %v42
  %v933 = vunpack.c.h.b16 %v42
  %v934 = vunpack.c.l.b16 %v43
  %v935 = vunpack.c.l.b16 %v44
  %v936 = vunpack.c.h.b16 %v44
  %v937 = vunpack.c.l.b16 %v45
  %v938 = vunpack.c.h.b16 %v45
  %v939 = vunpack.c.l.b16 %v46
  %v940 = vunpack.c.h.b16 %v46
  %v941 = vunpack.c.l.b16 %v47
  %v942 = vunpack.c.h.b16 %v47
  %v943 = vunpack.c.l.b16 %v48
  %v944 = vunpack.c.h.b16 %v48
  %v945 = vunpack.c.l.b16 %v49
  %v946 = vunpack.c.h.b16 %v49
  %v947 = vunpack.c.l.b16 %v50
  %v948 = vunpack.c.h.b16 %v50
  %v949 = vunpack.c.l.b16 %v51
  %v950 = vunpack.c.h.b16 %v51
  %v951 = vunpack.c.l.b16 %v52
  %v952 = vunpack.c.h.b16 %v52
  %v953 = vunpack.c.l.b16 %v53
  %v954 = vunpack.c.h.b16 %v53
  %v955 = vunpack.c.l.b16 %v54
  %v956 = vunpack.c.h.b16 %v54
  %v957 = vunpack.c.l.b16 %v55
  %v958 = vunpack.c.h.b16 %v55
  %v959 = vunpack.c.l.b16 %v56
  %v960 = vunpack.c.l.b16 %v57
  %v961 = vunpack.c.h.b16 %v57
  %v962 = vunpack.c.l.b16 %v58
  %v963 = vunpack.c.h.b16 %v58
  %v964 = vunpack.c.l.b16 %v59
  %v965 = vunpack.c.h.b16 %v59
  %v966 = vunpack.c.l.b16 %v60
  %v967 = vunpack.c.h.b16 %v60
  %v968 = vunpack.c.l.b16 %v61
  %v969 = vunpack.c.h.b16 %v61
  %v970 = vunpack.c.l.b16 %v62
  %v971 = vunpack.c.h.b16 %v62
  %v972 = vunpack.c.l.b16 %v63
  %v973 = vunpack.c.h.b16 %v63
  %v974 = vunpack.c.l.b16 %v64
  %v975 = vunpack.c.h.b16 %v64
  %v976 = vunpack.c.l.b16 %v65
  %v977 = vunpack.c.h.b16 %v65
  %v978 = vunpack.c.l.b16 %v66
  %v979 = vunpack.c.h.b16 %v66
  %v980 = vunpack.c.l.b16 %v67
  %v981 = vunpack.c.h.b16 %v67
  %v982 = vunpack.c.l.b16 %v68
  %v983 = vunpack.c.h.b16 %v68
  %v984 = vunpack.c.l.b16 %v69
  %v985 = vunpack.c.l.b16 %v70
  %v986 = vunpack.c.h.b16 %v70
  %v987 = vunpack.c.l.b16 %v71
  %v988 = vunpack.c.h.b16 %v71
  %v989 = vunpack.c.l.b16 %v72
  %v990 = vunpack.c.h.b16 %v72
  %v991 = vunpack.c.l.b16 %v73
  %v992 = vunpack.c.h.b16 %v73
  %v993 = vunpack.c.l.b16 %v74
  %v994 = vunpack.c.h.b16 %v74
  %v995 = vunpack.c.l.b16 %v75
  %v996 = vunpack.c.h.b16 %v75
  %v997 = vunpack.c.l.b16 %v76
  %v998 = vunpack.c.h.b16 %v76
  %v999 = vunpack.c.l.b16 %v77
  %v1000 = vunpack.c.h.b16 %v77
  %v1001 = vunpack.c.l.b16 %v78
  %v1002 = vunpack.c.h.b16 %v78
  %v1003 = vunpack.c.l.b16 %v79
  %v1004 = vunpack.c.h.b16 %v79
  %v1005 = vunpack.c.l.b16 %v80
  %v1006 = vunpack.c.h.b16 %v80
  %v1007 = vunpack.c.l.b16 %v81
  %v1008 = vunpack.c.h.b16 %v81
  %v1009 = vunpack.c.l.b16 %v82
  %v1010 = vunpack.c.l.b16 %v83
  %v1011 = vunpack.c.h.b16 %v83
  %v1012 = vunpack.c.l.b16 %v84
  %v1013 = vunpack.c.h.b16 %v84
  %v1014 = vunpack.c.l.b16 %v85
  %v1015 = vunpack.c.h.b16 %v85
  %v1016 = vunpack.c.l.b16 %v86
  %v1017 = vunpack.c.h.b16 %v86
  %v1018 = vunpack.c.l.b16 %v87
  %v1019 = vunpack.c.h.b16 %v87
  %v1020 = vunpack.c.l.b16 %v88
  %v1021 = vunpack.c.h.b16 %v88
  %v1022 = vunpack.c.l.b16 %v89
  %v1023 = vunpack.c.h.b16 %v89
  %v1024 = vunpack.c.l.b16 %v90
  %v1025 = vunpack.c.h.b16 %v90
  %v1026 = vunpack.c.l.b16 %v91
  %v1027 = vunpack.c.h.b16 %v91
  %v1028 = vunpack.c.l.b16 %v92
  %v1029 = vunpack.c.h.b16 %v92
  %v1030 = vunpack.c.l.b16 %v93
  %v1031 = vunpack.c.h.b16 %v93
  %v1032 = vunpack.c.l.b16 %v94
  %v1033 = vunpack.c.h.b16 %v94
  %v1034 = vunpack.c.l.b16 %v95
  %v1035 = vunpack.c.l.b16 %v96
  %v1036 = vunpack.c.h.b16 %v96
  %v1037 = vunpack.c.l.b16 %v97
  %v1038 = vunpack.c.h.b16 %v97
  %v1039 = vunpack.c.l.b16 %v98
  %v1040 = vunpack.c.h.b16 %v98
  %v1041 = vunpack.c.l.b16 %v99
  %v1042 = vunpack.c.h.b16 %v99
  %v1043 = vunpack.c.l.b16 %v100
  %v1044 = vunpack.c.h.b16 %v100
  %v1045 = vunpack.c.l.b16 %v101
  %v1046 = vunpack.c.h.b16 %v101
  %v1047 = vunpack.c.l.b16 %v102
  %v1048 = vunpack.c.h.b16 %v102
  %v1049 = vunpack.c.l.b16 %v103
  %v1050 = vunpack.c.h.b16 %v103
  %v1051 = vunpack.c.l.b16 %v104
  %v1052 = vunpack.c.h.b16 %v104
  %v1053 = vunpack.c.l.b16 %v105
  %v1054 = vunpack.c.h.b16 %v105
  %v1055 = vunpack.c.l.b16 %v106
  %v1056 = vunpack.c.h.b16 %v106
  %v1057 = vunpack.c.l.b16 %v107
  %v1058 = vunpack.c.h.b16 %v107
  %v1059 = vunpack.c.l.b16 %v108
  %v1060 = vunpack.c.l.b16 %v109
  %v1061 = vunpack.c.h.b16 %v109
  %v1062 = vunpack.c.l.b16 %v110
  %v1063 = vunpack.c.h.b16 %v110
  %v1064 = vunpack.c.l.b16 %v111
  %v1065 = vunpack.c.h.b16 %v111
  %v1066 = vunpack.c.l.b16 %v112
  %v1067 = vunpack.c.h.b16 %v112
  %v1068 = vunpack.c.l.b16 %v113
  %v1069 = vunpack.c.h.b16 %v113
  %v1070 = vunpack.c.l.b16 %v114
  %v1071 = vunpack.c.h.b16 %v114
  %v1072 = vunpack.c.l.b16 %v115
  %v1073 = vunpack.c.h.b16 %v115
  %v1074 = vunpack.c.l.b16 %v116
  %v1075 = vunpack.c.h.b16 %v116
  %v1076 = vunpack.c.l.b16 %v117
  %v1077 = vunpack.c.h.b16 %v117
  %v1078 = vunpack.c.l.b16 %v118
  %v1079 = vunpack.c.h.b16 %v118
  %v1080 = vunpack.c.l.b16 %v119
  %v1081 = vunpack.c.h.b16 %v119
  %v1082 = vunpack.c.l.b16 %v120
  %v1083 = vunpack.c.h.b16 %v120
  %v1084 = vunpack.c.l.b16 %v121
  %v1085 = vunpack.c.l.b16 %v122
  %v1086 = vunpack.c.h.b16 %v122
  %v1087 = vunpack.c.l.b16 %v123
  %v1088 = vunpack.c.h.b16 %v123
  %v1089 = vunpack.c.l.b16 %v124
  %v1090 = vunpack.c.h.b16 %v124
  %v1091 = vunpack.c.l.b16 %v125
  %v1092 = vunpack.c.h.b16 %v125
  %v1093 = vunpack.c.l.b16 %v126
  %v1094 = vunpack.c.h.b16 %v126
  %v1095 = vunpack.c.l.b16 %v127
  %v1096 = vunpack.c.h.b16 %v127
  %v1097 = vunpack.c.l.b16 %v128
  %v1098 = vunpack.c.h.b16 %v128
  %v1099 = vunpack.c.l.b16 %v129
  %v1100 = vunpack.c.h.b16 %v129
  %v1101 = vunpack.c.l.b16 %v130
  %v1102 = vunpack.c.h.b16 %v130
  %v1103 = vunpack.c.l.b16 %v131
  %v1104 = vunpack.c.h.b16 %v131
  %v1105 = vunpack.c.l.b16 %v132
  %v1106 = vunpack.c.h.b16 %v132
  %v1107 = vunpack.c.l.b16 %v133
  %v1108 = vunpack.c.h.b16 %v133
  %v1109 = vunpack.c.l.b16 %v134
  %v1110 = vunpack.c.l.b16 %v135
  %v1111 = vunpack.c.h.b16 %v135
  %v1112 = vunpack.c.l.b16 %v136
  %v1113 = vunpack.c.h.b16 %v136
  %v1114 = vunpack.c.l.b16 %v137
  %v1115 = vunpack.c.h.b16 %v137
  %v1116 = vunpack.c.l.b16 %v138
  %v1117 = vunpack.c.h.b16 %v138
  %v1118 = vunpack.c.l.b16 %v139
  %v1119 = vunpack.c.h.b16 %v139
  %v1120 = vunpack.c.l.b16 %v140
  %v1121 = vunpack.c.h.b16 %v140
  %v1122 = vunpack.c.l.b16 %v141
  %v1123 = vunpack.c.h.b16 %v141
  %v1124 = vunpack.c.l.b16 %v142
  %v1125 = vunpack.c.h.b16 %v142
  %v1126 = vunpack.c.l.b16 %v143
  %v1127 = vunpack.c.h.b16 %v143
  %v1128 = vunpack.c.l.b16 %v144
  %v1129 = vunpack.c.h.b16 %v144
  %v1130 = vunpack.c.l.b16 %v145
  %v1131 = vunpack.c.h.b16 %v145
  %v1132 = vunpack.c.l.b16 %v146
  %v1133 = vunpack.c.h.b16 %v146
  %v1134 = vunpack.c.l.b16 %v147
  %v1135 = vunpack.c.l.b16 %v148
  %v1136 = vunpack.c.h.b16 %v148
  %v1137 = vunpack.c.l.b16 %v149
  %v1138 = vunpack.c.h.b16 %v149
  %v1139 = vunpack.c.l.b16 %v150
  %v1140 = vunpack.c.h.b16 %v150
  %v1141 = vunpack.c.l.b16 %v151
  %v1142 = vunpack.c.h.b16 %v151
  %v1143 = vunpack.c.l.b16 %v152
  %v1144 = vunpack.c.h.b16 %v152
  %v1145 = vunpack.c.l.b16 %v153
  %v1146 = vunpack.c.h.b16 %v153
  %v1147 = vunpack.c.l.b16 %v154
  %v1148 = vunpack.c.h.b16 %v154
  %v1149 = vunpack.c.l.b16 %v155
  %v1150 = vunpack.c.h.b16 %v155
  %v1151 = vunpack.c.l.b16 %v156
  %v1152 = vunpack.c.h.b16 %v156
  %v1153 = vunpack.c.l.b16 %v157
  %v1154 = vunpack.c.h.b16 %v157
  %v1155 = vunpack.c.l.b16 %v158
  %v1156 = vunpack.c.h.b16 %v158
  %v1157 = vunpack.c.l.b16 %v159
  %v1158 = vunpack.c.h.b16 %v159
  %v1159 = vunpack.c.l.b16 %v160
  %v1160 = vunpack.c.l.b16 %v161
  %v1161 = vunpack.c.h.b16 %v161
  %v1162 = vunpack.c.l.b16 %v162
  %v1163 = vunpack.c.h.b16 %v162
  %v1164 = vunpack.c.l.b16 %v163
  %v1165 = vunpack.c.h.b16 %v163
  %v1166 = vunpack.c.l.b16 %v164
  %v1167 = vunpack.c.h.b16 %v164
  %v1168 = vunpack.c.l.b16 %v165
  %v1169 = vunpack.c.h.b16 %v165
  %v1170 = vunpack.c.l.b16 %v166
  %v1171 = vunpack.c.h.b16 %v166
  %v1172 = vunpack.c.l.b16 %v167
  %v1173 = vunpack.c.h.b16 %v167
  %v1174 = vunpack.c.l.b16 %v168
  %v1175 = vunpack.c.h.b16 %v168
  %v1176 = vunpack.c.l.b16 %v169
  %v1177 = vunpack.c.h.b16 %v169
  %v1178 = vunpack.c.l.b16 %v170
  %v1179 = vunpack.c.h.b16 %v170
  %v1180 = vunpack.c.l.b16 %v171
  %v1181 = vunpack.c.h.b16 %v171
  %v1182 = vunpack.c.l.b16 %v172
  %v1183 = vunpack.c.h.b16 %v172
  %v1184 = vunpack.c.l.b16 %v173
  %v1185 = vunpack.c.l.b16 %v174
  %v1186 = vunpack.c.h.b16 %v174
  %v1187 = vunpack.c.l.b16 %v175
  %v1188 = vunpack.c.h.b16 %v175
  %v1189 = vunpack.c.l.b16 %v176
  %v1190 = vunpack.c.h.b16 %v176
  %v1191 = vunpack.c.l.b16 %v177
  %v1192 = vunpack.c.h.b16 %v177
  %v1193 = vunpack.c.l.b16 %v178
  %v1194 = vunpack.c.h.b16 %v178
  %v1195 = vunpack.c.l.b16 %v179
  %v1196 = vunpack.c.h.b16 %v179
  %v1197 = vunpack.c.l.b16 %v180
  %v1198 = vunpack.c.h.b16 %v180
  %v1199 = vunpack.c.l.b16 %v181
  %v1200 = vunpack.c.h.b16 %v181
  %v1201 = vunpack.c.l.b16 %v182
  %v1202 = vunpack.c.h.b16 %v182
  %v1203 = vunpack.c.l.b16 %v183
  %v1204 = vunpack.c.h.b16 %v183
  %v1205 = vunpack.c.l.b16 %v184
  %v1206 = vunpack.c.h.b16 %v184
  %v1207 = vunpack.c.l.b16 %v185
  %v1208 = vunpack.c.h.b16 %v185
  %v1209 = vunpack.c.l.b16 %v186
  %v1210 = vunpack.c.l.b16 %v187
  %v1211 = vunpack.c.h.b16 %v187
  %v1212 = vunpack.c.l.b16 %v188
  %v1213 = vunpack.c.h.b16 %v188
  %v1214 = vunpack.c.l.b16 %v189
  %v1215 = vunpack.c.h.b16 %v189
  %v1216 = vunpack.c.l.b16 %v190
  %v1217 = vunpack.c.h.b16 %v190
  %v1218 = vunpack.c.l.b16 %v191
  %v1219 = vunpack.c.h.b16 %v191
  %v1220 = vunpack.c.l.b16 %v192
  %v1221 = vunpack.c.h.b16 %v192
  %v1222 = vunpack.c.l.b16 %v193
  %v1223 = vunpack.c.h.b16 %v193
  %v1224 = vunpack.c.l.b16 %v194
  %v1225 = vunpack.c.h.b16 %v194
  %v1226 = vunpack.c.l.b16 %v195
  %v1227 = vunpack.c.h.b16 %v195
  %v1228 = vunpack.c.l.b16 %v196
  %v1229 = vunpack.c.h.b16 %v196
  %v1230 = vunpack.c.l.b16 %v197
  %v1231 = vunpack.c.h.b16 %v197
  %v1232 = vunpack.c.l.b16 %v198
  %v1233 = vunpack.c.h.b16 %v198
  %v1234 = vunpack.c.l.b16 %v199
  %v1235 = vunpack.c.l.b16 %v200
  %v1236 = vunpack.c.h.b16 %v200
  %v1237 = vunpack.c.l.b16 %v201
  %v1238 = vunpack.c.h.b16 %v201
  %v1239 = vunpack.c.l.b16 %v202
  %v1240 = vunpack.c.h.b16 %v202
  %v1241 = vunpack.c.l.b16 %v203
  %v1242 = vunpack.c.h.b16 %v203
  %v1243 = vunpack.c.l.b16 %v204
  %v1244 = vunpack.c.h.b16 %v204
  %v1245 = vunpack.c.l.b16 %v205
  %v1246 = vunpack.c.h.b16 %v205
  %v1247 = vunpack.c.l.b16 %v206
  %v1248 = vunpack.c.h.b16 %v206
  %v1249 = vunpack.c.l.b16 %v207
  %v1250 = vunpack.c.h.b16 %v207
  %v1251 = vunpack.c.l.b16 %v208
  %v1252 = vunpack.c.h.b16 %v208
  %v1253 = vunpack.c.l.b16 %v209
  %v1254 = vunpack.c.h.b16 %v209
  %v1255 = vunpack.c.l.b16 %v210
  %v1256 = vunpack.c.h.b16 %v210
  %v1257 = vunpack.c.l.b16 %v211
  %v1258 = vunpack.c.h.b16 %v211
  %v1259 = vunpack.c.l.b16 %v212
  %v1260 = vunpack.c.l.b16 %v213
  %v1261 = vunpack.c.h.b16 %v213
  %v1262 = vunpack.c.l.b16 %v214
  %v1263 = vunpack.c.h.b16 %v214
  %v1264 = vunpack.c.l.b16 %v215
  %v1265 = vunpack.c.h.b16 %v215
  %v1266 = vunpack.c.l.b16 %v216
  %v1267 = vunpack.c.h.b16 %v216
  %v1268 = vunpack.c.l.b16 %v217
  %v1269 = vunpack.c.h.b16 %v217
  %v1270 = vunpack.c.l.b16 %v218
  %v1271 = vunpack.c.h.b16 %v218
  %v1272 = vunpack.c.l.b16 %v219
  %v1273 = vunpack.c.h.b16 %v219
  %v1274 = vunpack.c.l.b16 %v220
  %v1275 = vunpack.c.h.b16 %v220
  %v1276 = vunpack.c.l.b16 %v221
  %v1277 = vunpack.c.h.b16 %v221
  %v1278 = vunpack.c.l.b16 %v222
  %v1279 = vunpack.c.h.b16 %v222
  %v1280 = vunpack.c.l.b16 %v223
  %v1281 = vunpack.c.h.b16 %v223
  %v1282 = vunpack.c.l.b16 %v224
  %v1283 = vunpack.c.h.b16 %v224
  %v1284 = vunpack.c.l.b16 %v225
  %v1285 = vunpack.c.l.b16 %v226
  %v1286 = vunpack.c.h.b16 %v226
  %v1287 = vunpack.c.l.b16 %v227
  %v1288 = vunpack.c.h.b16 %v227
  %v1289 = vunpack.c.l.b16 %v228
  %v1290 = vunpack.c.h.b16 %v228
  %v1291 = vunpack.c.l.b16 %v229
  %v1292 = vunpack.c.h.b16 %v229
  %v1293 = vunpack.c.l.b16 %v230
  %v1294 = vunpack.c.h.b16 %v230
  %v1295 = vunpack.c.l.b16 %v231
  %v1296 = vunpack.c.h.b16 %v231
  %v1297 = vunpack.c.l.b16 %v232
  %v1298 = vunpack.c.h.b16 %v232
  %v1299 = vunpack.c.l.b16 %v233
  %v1300 = vunpack.c.h.b16 %v233
  %v1301 = vunpack.c.l.b16 %v234
  %v1302 = vunpack.c.h.b16 %v234
  %v1303 = vunpack.c.l.b16 %v235
  %v1304 = vunpack.c.h.b16 %v235
  %v1305 = vunpack.c.l.b16 %v236
  %v1306 = vunpack.c.h.b16 %v236
  %v1307 = vunpack.c.l.b16 %v237
  %v1308 = vunpack.c.h.b16 %v237
  %v1309 = vunpack.c.l.b16 %v238
  %v1310 = vunpack.c.l.b16 %v239
  %v1311 = vunpack.c.h.b16 %v239
  %v1312 = vunpack.c.l.b16 %v240
  %v1313 = vunpack.c.h.b16 %v240
  %v1314 = vunpack.c.l.b16 %v241
  %v1315 = vunpack.c.h.b16 %v241
  %v1316 = vunpack.c.l.b16 %v242
  %v1317 = vunpack.c.h.b16 %v242
  %v1318 = vunpack.c.l.b16 %v243
  %v1319 = vunpack.c.h.b16 %v243
  %v1320 = vunpack.c.l.b16 %v244
  %v1321 = vunpack.c.h.b16 %v244
  %v1322 = vunpack.c.l.b16 %v245
  %v1323 = vunpack.c.h.b16 %v245
  %v1324 = vunpack.c.l.b16 %v246
  %v1325 = vunpack.c.h.b16 %v246
  %v1326 = vunpack.c.l.b16 %v247
  %v1327 = vunpack.c.h.b16 %v247
  %v1328 = vunpack.c.l.b16 %v248
  %v1329 = vunpack.c.h.b16 %v248
  %v1330 = vunpack.c.l.b16 %v249
  %v1331 = vunpack.c.h.b16 %v249
  %v1332 = vunpack.c.l.b16 %v250
  %v1333 = vunpack.c.h.b16 %v250
  %v1334 = vunpack.c.l.b16 %v251
  %v1335 = vunpack.c.l.b16 %v252
  %v1336 = vunpack.c.h.b16 %v252
  %v1337 = vunpack.c.l.b16 %v253
  %v1338 = vunpack.c.h.b16 %v253
  %v1339 = vunpack.c.l.b16 %v254
  %v1340 = vunpack.c.h.b16 %v254
  %v1341 = vunpack.c.l.b16 %v255
  %v1342 = vunpack.c.h.b16 %v255
  %v1343 = vunpack.c.l.b16 %v256
  %v1344 = vunpack.c.h.b16 %v256
  %v1345 = vunpack.c.l.b16 %v257
  %v1346 = vunpack.c.h.b16 %v257
  %v1347 = vunpack.c.l.b16 %v258
  %v1348 = vunpack.c.h.b16 %v258
  %v1349 = vunpack.c.l.b16 %v259
  %v1350 = vunpack.c.h.b16 %v259
  %v1351 = vunpack.c.l.b16 %v260
  %v1352 = vunpack.c.h.b16 %v260
  %v1353 = vunpack.c.l.b16 %v261
  %v1354 = vunpack.c.h.b16 %v261
  %v1355 = vunpack.c.l.b16 %v262
  %v1356 = vunpack.c.h.b16 %v262
  %v1357 = vunpack.c.l.b16 %v263
  %v1358 = vunpack.c.h.b16 %v263
  %v1359 = vunpack.c.l.b16 %v264
  %v1360 = vunpack.c.l.b16 %v265
  %v1361 = vunpack.c.h.b16 %v265
  %v1362 = vunpack.c.l.b16 %v266
  %v1363 = vunpack.c.h.b16 %v266
  %v1364 = vunpack.c.l.b16 %v267
  %v1365 = vunpack.c.h.b16 %v267
  %v1366 = vunpack.c.l.b16 %v268
  %v1367 = vunpack.c.h.b16 %v268
  %v1368 = vunpack.c.l.b16 %v269
  %v1369 = vunpack.c.h.b16 %v269
  %v1370 = vunpack.c.l.b16 %v270
  %v1371 = vunpack.c.h.b16 %v270
  %v1372 = vunpack.c.l.b16 %v271
  %v1373 = vunpack.c.h.b16 %v271
  %v1374 = vunpack.c.l.b16 %v272
  %v1375 = vunpack.c.h.b16 %v272
  %v1376 = vunpack.c.l.b16 %v273
  %v1377 = vunpack.c.h.b16 %v273
  %v1378 = vunpack.c.l.b16 %v274
  %v1379 = vunpack.c.h.b16 %v274
  %v1380 = vunpack.c.l.b16 %v275
  %v1381 = vunpack.c.h.b16 %v275
  %v1382 = vunpack.c.l.b16 %v276
  %v1383 = vunpack.c.h.b16 %v276
  %v1384 = vunpack.c.l.b16 %v277
  %v1385 = vunpack.c.l.b16 %v278
  %v1386 = vunpack.c.h.b16 %v278
  %v1387 = vunpack.c.l.b16 %v279
  %v1388 = vunpack.c.h.b16 %v279
  %v1389 = vunpack.c.l.b16 %v280
  %v1390 = vunpack.c.h.b16 %v280
  %v1391 = vunpack.c.l.b16 %v281
  %v1392 = vunpack.c.h.b16 %v281
  %v1393 = vunpack.c.l.b16 %v282
  %v1394 = vunpack.c.h.b16 %v282
  %v1395 = vunpack.c.l.b16 %v283
  %v1396 = vunpack.c.h.b16 %v283
  %v1397 = vunpack.c.l.b16 %v284
  %v1398 = vunpack.c.h.b16 %v284
  %v1399 = vunpack.c.l.b16 %v285
  %v1400 = vunpack.c.h.b16 %v285
  %v1401 = vunpack.c.l.b16 %v286
  %v1402 = vunpack.c.h.b16 %v286
  %v1403 = vunpack.c.l.b16 %v287
  %v1404 = vunpack.c.h.b16 %v287
  %v1405 = vunpack.c.l.b16 %v288
  %v1406 = vunpack.c.h.b16 %v288
  %v1407 = vunpack.c.l.b16 %v289
  %v1408 = vunpack.c.h.b16 %v289
  %v1409 = vunpack.c.l.b16 %v290
  %v1410 = vunpack.c.l.b16 %v291
  %v1411 = vunpack.c.h.b16 %v291
  %v1412 = vunpack.c.l.b16 %v292
  %v1413 = vunpack.c.h.b16 %v292
  %v1414 = vunpack.c.l.b16 %v293
  %v1415 = vunpack.c.h.b16 %v293
  %v1416 = vunpack.c.l.b16 %v294
  %v1417 = vunpack.c.h.b16 %v294
  %v1418 = vunpack.c.l.b16 %v295
  %v1419 = vunpack.c.h.b16 %v295
  %v1420 = vunpack.c.l.b16 %v296
  %v1421 = vunpack.c.h.b16 %v296
  %v1422 = vunpack.c.l.b16 %v297
  %v1423 = vunpack.c.h.b16 %v297
  %v1424 = vunpack.c.l.b16 %v298
  %v1425 = vunpack.c.h.b16 %v298
  %v1426 = vunpack.c.l.b16 %v299
  %v1427 = vunpack.c.h.b16 %v299
  %v1428 = vunpack.c.l.b16 %v300
  %v1429 = vunpack.c.h.b16 %v300
  %v1430 = vunpack.c.l.b16 %v301
  %v1431 = vunpack.c.h.b16 %v301
  %v1432 = vunpack.c.l.b16 %v302
  %v1433 = vunpack.c.h.b16 %v302
  %v1434 = vunpack.c.l.b16 %v303
  %v1435 = vunpack.c.l.b16 %v304
  %v1436 = vunpack.c.h.b16 %v304
  %v1437 = vunpack.c.l.b16 %v305
  %v1438 = vunpack.c.h.b16 %v305
  %v1439 = vunpack.c.l.b16 %v306
  %v1440 = vunpack.c.h.b16 %v306
  %v1441 = vunpack.c.l.b16 %v307
  %v1442 = vunpack.c.h.b16 %v307
  %v1443 = vunpack.c.l.b16 %v308
  %v1444 = vunpack.c.h.b16 %v308
  %v1445 = vunpack.c.l.b16 %v309
  %v1446 = vunpack.c.h.b16 %v309
  %v1447 = vunpack.c.l.b16 %v310
  %v1448 = vunpack.c.h.b16 %v310
  %v1449 = vunpack.c.l.b16 %v311
  %v1450 = vunpack.c.h.b16 %v311
  %v1451 = vunpack.c.l.b16 %v312
  %v1452 = vunpack.c.h.b16 %v312
  %v1453 = vunpack.c.l.b16 %v313
  %v1454 = vunpack.c.h.b16 %v313
  %v1455 = vunpack.c.l.b16 %v314
  %v1456 = vunpack.c.h.b16 %v314
  %v1457 = vunpack.c.l.b16 %v315
  %v1458 = vunpack.c.h.b16 %v315
  %v1459 = vunpack.c.l.b16 %v316
  %v1460 = vunpack.c.l.b16 %v317
  %v1461 = vunpack.c.h.b16 %v317
  %v1462 = vunpack.c.l.b16 %v318
  %v1463 = vunpack.c.h.b16 %v318
  %v1464 = vunpack.c.l.b16 %v319
  %v1465 = vunpack.c.h.b16 %v319
  %v1466 = vunpack.c.l.b16 %v320
  %v1467 = vunpack.c.h.b16 %v320
  %v1468 = vunpack.c.l.b16 %v321
  %v1469 = vunpack.c.h.b16 %v321
  %v1470 = vunpack.c.l.b16 %v322
  %v1471 = vunpack.c.h.b16 %v322
  %v1472 = vunpack.c.l.b16 %v323
  %v1473 = vunpack.c.h.b16 %v323
  %v1474 = vunpack.c.l.b16 %v324
  %v1475 = vunpack.c.h.b16 %v324
  %v1476 = vunpack.c.l.b16 %v325
  %v1477 = vunpack.c.h.b16 %v325
  %v1478 = vunpack.c.l.b16 %v326
  %v1479 = vunpack.c.h.b16 %v326
  %v1480 = vunpack.c.l.b16 %v327
  %v1481 = vunpack.c.h.b16 %v327
  %v1482 = vunpack.c.l.b16 %v328
  %v1483 = vunpack.c.h.b16 %v328
  %v1484 = vunpack.c.l.b16 %v329
  %v1485 = vunpack.c.l.b16 %v330
  %v1486 = vunpack.c.h.b16 %v330
  %v1487 = vunpack.c.l.b16 %v331
  %v1488 = vunpack.c.h.b16 %v331
  %v1489 = vunpack.c.l.b16 %v332
  %v1490 = vunpack.c.h.b16 %v332
  %v1491 = vunpack.c.l.b16 %v333
  %v1492 = vunpack.c.h.b16 %v333
  %v1493 = vunpack.c.l.b16 %v334
  %v1494 = vunpack.c.h.b16 %v334
  %v1495 = vunpack.c.l.b16 %v335
  %v1496 = vunpack.c.h.b16 %v335
  %v1497 = vunpack.c.l.b16 %v336
  %v1498 = vunpack.c.h.b16 %v336
  %v1499 = vunpack.c.l.b16 %v337
  %v1500 = vunpack.c.h.b16 %v337
  %v1501 = vunpack.c.l.b16 %v338
  %v1502 = vunpack.c.h.b16 %v338
  %v1503 = vunpack.c.l.b16 %v339
  %v1504 = vunpack.c.h.b16 %v339
  %v1505 = vunpack.c.l.b16 %v340
  %v1506 = vunpack.c.h.b16 %v340
  %v1507 = vunpack.c.l.b16 %v341
  %v1508 = vunpack.c.h.b16 %v341
  %v1509 = vunpack.c.l.b16 %v342
  %v1510 = vunpack.c.l.b16 %v343
  %v1511 = vunpack.c.h.b16 %v343
  %v1512 = vunpack.c.l.b16 %v344
  %v1513 = vunpack.c.h.b16 %v344
  %v1514 = vunpack.c.l.b16 %v345
  %v1515 = vunpack.c.h.b16 %v345
  %v1516 = vunpack.c.l.b16 %v346
  %v1517 = vunpack.c.h.b16 %v346
  %v1518 = vunpack.c.l.b16 %v347
  %v1519 = vunpack.c.h.b16 %v347
  %v1520 = vunpack.c.l.b16 %v348
  %v1521 = vunpack.c.h.b16 %v348
  %v1522 = vunpack.c.l.b16 %v349
  %v1523 = vunpack.c.h.b16 %v349
  %v1524 = vunpack.c.l.b16 %v350
  %v1525 = vunpack.c.h.b16 %v350
  %v1526 = vunpack.c.l.b16 %v351
  %v1527 = vunpack.c.h.b16 %v351
  %v1528 = vunpack.c.l.b16 %v352
  %v1529 = vunpack.c.h.b16 %v352
  %v1530 = vunpack.c.l.b16 %v353
  %v1531 = vunpack.c.h.b16 %v353
  %v1532 = vunpack.c.l.b16 %v354
  %v1533 = vunpack.c.h.b16 %v354
  %v1534 = vunpack.c.l.b16 %v355
  %v1535 = vunpack.c.l.b16 %v356
  %v1536 = vunpack.c.h.b16 %v356
  %v1537 = vunpack.c.l.b16 %v357
  %v1538 = vunpack.c.h.b16 %v357
  %v1539 = vunpack.c.l.b16 %v358
  %v1540 = vunpack.c.h.b16 %v358
  %v1541 = vunpack.c.l.b16 %v359
  %v1542 = vunpack.c.h.b16 %v359
  %v1543 = vunpack.c.l.b16 %v360
  %v1544 = vunpack.c.h.b16 %v360
  %v1545 = vunpack.c.l.b16 %v361
  %v1546 = vunpack.c.h.b16 %v361
  %v1547 = vunpack.c.l.b16 %v362
  %v1548 = vunpack.c.h.b16 %v362
  %v1549 = vunpack.c.l.b16 %v363
  %v1550 = vunpack.c.h.b16 %v363
  %v1551 = vunpack.c.l.b16 %v364
  %v1552 = vunpack.c.h.b16 %v364
  %v1553 = vunpack.c.l.b16 %v365
  %v1554 = vunpack.c.h.b16 %v365
  %v1555 = vunpack.c.l.b16 %v366
  %v1556 = vunpack.c.h.b16 %v366
  %v1557 = vunpack.c.l.b16 %v367
  %v1558 = vunpack.c.h.b16 %v367
  %v1559 = vunpack.c.l.b16 %v368
  %v1560 = vunpack.c.l.b16 %v369
  %v1561 = vunpack.c.h.b16 %v369
  %v1562 = vunpack.c.l.b16 %v370
  %v1563 = vunpack.c.h.b16 %v370
  %v1564 = vunpack.c.l.b16 %v371
  %v1565 = vunpack.c.h.b16 %v371
  %v1566 = vunpack.c.l.b16 %v372
  %v1567 = vunpack.c.h.b16 %v372
  %v1568 = vunpack.c.l.b16 %v373
  %v1569 = vunpack.c.h.b16 %v373
  %v1570 = vunpack.c.l.b16 %v374
  %v1571 = vunpack.c.h.b16 %v374
  %v1572 = vunpack.c.l.b16 %v375
  %v1573 = vunpack.c.h.b16 %v375
  %v1574 = vunpack.c.l.b16 %v376
  %v1575 = vunpack.c.h.b16 %v376
  %v1576 = vunpack.c.l.b16 %v377
  %v1577 = vunpack.c.h.b16 %v377
  %v1578 = vunpack.c.l.b16 %v378
  %v1579 = vunpack.c.h.b16 %v378
  %v1580 = vunpack.c.l.b16 %v379
  %v1581 = vunpack.c.h.b16 %v379
  %v1582 = vunpack.c.l.b16 %v380
  %v1583 = vunpack.c.h.b16 %v380
  %v1584 = vunpack.c.l.b16 %v381
  %v1585 = vunpack.c.l.b16 %v382
  %v1586 = vunpack.c.h.b16 %v382
  %v1587 = vunpack.c.l.b16 %v383
  %v1588 = vunpack.c.h.b16 %v383
  %v1589 = vunpack.c.l.b16 %v384
  %v1590 = vunpack.c.h.b16 %v384
  %v1591 = vunpack.c.l.b16 %v385
  %v1592 = vunpack.c.h.b16 %v385
  %v1593 = vunpack.c.l.b16 %v386
  %v1594 = vunpack.c.h.b16 %v386
  %v1595 = vunpack.c.l.b16 %v387
  %v1596 = vunpack.c.h.b16 %v387
  %v1597 = vunpack.c.l.b16 %v388
  %v1598 = vunpack.c.h.b16 %v388
  %v1599 = vunpack.c.l.b16 %v389
  %v1600 = vunpack.c.h.b16 %v389
  %v1601 = vunpack.c.l.b16 %v390
  %v1602 = vunpack.c.h.b16 %v390
  %v1603 = vunpack.c.l.b16 %v391
  %v1604 = vunpack.c.h.b16 %v391
  %v1605 = vunpack.c.l.b16 %v392
  %v1606 = vunpack.c.h.b16 %v392
  %v1607 = vunpack.c.l.b16 %v393
  %v1608 = vunpack.c.h.b16 %v393
  %v1609 = vunpack.c.l.b16 %v394
  %v1610 = vunpack.c.l.b16 %v395
  %v1611 = vunpack.c.h.b16 %v395
  %v1612 = vunpack.c.l.b16 %v396
  %v1613 = vunpack.c.h.b16 %v396
  %v1614 = vunpack.c.l.b16 %v397
  %v1615 = vunpack.c.h.b16 %v397
  %v1616 = vunpack.c.l.b16 %v398
  %v1617 = vunpack.c.h.b16 %v398
  %v1618 = vunpack.c.l.b16 %v399
  %v1619 = vunpack.c.h.b16 %v399
  %v1620 = vunpack.c.l.b16 %v400
  %v1621 = vunpack.c.h.b16 %v400
  %v1622 = vunpack.c.l.b16 %v401
  %v1623 = vunpack.c.h.b16 %v401
  %v1624 = vunpack.c.l.b16 %v402
  %v1625 = vunpack.c.h.b16 %v402
  %v1626 = vunpack.c.l.b16 %v403
  %v1627 = vunpack.c.h.b16 %v403
  %v1628 = vunpack.c.l.b16 %v404
  %v1629 = vunpack.c.h.b16 %v404
  %v1630 = vunpack.c.l.b16 %v405
  %v1631 = vunpack.c.h.b16 %v405
  %v1632 = vunpack.c.l.b16 %v406
  %v1633 = vunpack.c.h.b16 %v406
  %v1634 = vunpack.c.l.b16 %v407
  %v1635 = vunpack.c.l.b16 %v408
  %v1636 = vunpack.c.h.b16 %v408
  %v1637 = vunpack.c.l.b16 %v409
  %v1638 = vunpack.c.h.b16 %v409
  %v1639 = vunpack.c.l.b16 %v410
  %v1640 = vunpack.c.h.b16 %v410
  %v1641 = vunpack.c.l.b16 %v411
  %v1642 = vunpack.c.h.b16 %v411
  %v1643 = vunpack.c.l.b16 %v412
  %v1644 = vunpack.c.h.b16 %v412
  %v1645 = vunpack.c.l.b16 %v413
  %v1646 = vunpack.c.h.b16 %v413
  %v1647 = vunpack.c.l.b16 %v414
  %v1648 = vunpack.c.h.b16 %v414
  %v1649 = vunpack.c.l.b16 %v415
  %v1650 = vunpack.c.h.b16 %v415
  %v1651 = vunpack.c.l.b16 %v416
  %v1652 = vunpack.c.h.b16 %v416
  %v1653 = vunpack.c.l.b16 %v417
  %v1654 = vunpack.c.h.b16 %v417
  %v1655 = vunpack.c.l.b16 %v418
  %v1656 = vunpack.c.h.b16 %v418
  %v1657 = vunpack.c.l.b16 %v419
  %v1658 = vunpack.c.h.b16 %v419
  %v1659 = vunpack.c.l.b16 %v420
  %v1660 = vunpack.c.l.b16 %v421
  %v1661 = vunpack.c.h.b16 %v421
  %v1662 = vunpack.c.l.b16 %v422
  %v1663 = vunpack.c.h.b16 %v422
  %v1664 = vunpack.c.l.b16 %v423
  %v1665 = vunpack.c.h.b16 %v423
  %v1666 = vunpack.c.l.b16 %v424
  %v1667 = vunpack.c.h.b16 %v424
  %v1668 = vunpack.c.l.b16 %v425
  %v1669 = vunpack.c.h.b16 %v425
  %v1670 = vunpack.c.l.b16 %v426
  %v1671 = vunpack.c.h.b16 %v426
  %v1672 = vunpack.c.l.b16 %v427
  %v1673 = vunpack.c.h.b16 %v427
  %v1674 = vunpack.c.l.b16 %v428
  %v1675 = vunpack.c.h.b16 %v428
  %v1676 = vunpack.c.l.b16 %v429
  %v1677 = vunpack.c.h.b16 %v429
  %v1678 = vunpack.c.l.b16 %v430
  %v1679 = vunpack.c.h.b16 %v430
  %v1680 = vunpack.c.l.b16 %v431
  %v1681 = vunpack.c.h.b16 %v431
  %v1682 = vunpack.c.l.b16 %v432
  %v1683 = vunpack.c.h.b16 %v432
  %v1684 = vunpack.c.l.b16 %v433
  %v1685 = vpack.c.b16 %v910, %v885
  %v1686 = vpack.c.b16 %v911, %v886
  %v1687 = vpack.c.b16 %v912, %v887
  %v1688 = vpack.c.b16 %v913, %v888
  %v1689 = vpack.c.b16 %v914, %v889
  %v1690 = vpack.c.b16 %v915, %v890
  %v1691 = vpack.c.b16 %v916, %v891
  %v1692 = vpack.c.b16 %v917, %v892
  %v1693 = vpack.c.b16 %v918, %v893
  %v1694 = vpack.c.b16 %v919, %v894
  %v1695 = vpack.c.b16 %v920, %v895
  %v1696 = vpack.c.b16 %v921, %v896
  %v1697 = vpack.c.b16 %v922, %v897
  %v1698 = vpack.c.b16 %v923, %v898
  %v1699 = vpack.c.b16 %v924, %v899
  %v1700 = vpack.c.b16 %v925, %v900
  %v1701 = vpack.c.b16 %v926, %v901
  %v1702 = vpack.c.b16 %v927, %v902
  %v1703 = vpack.c.b16 %v928, %v903
  %v1704 = vpack.c.b16 %v929, %v904
  %v1705 = vpack.c.b16 %v930, %v905
  %v1706 = vpack.c.b16 %v931, %v906
  %v1707 = vpack.c.b16 %v932, %v907
  %v1708 = vpack.c.b16 %v933, %v908
  %v1709 = vpack.c.b16 %v934, %v909
  %v1710 = vpack.c.b16 %v960, %v935
  %v1711 = vpack.c.b16 %v961, %v936
  %v1712 = vpack.c.b16 %v962, %v937
  %v1713 = vpack.c.b16 %v963, %v938
  %v1714 = vpack.c.b16 %v964, %v939
  %v1715 = vpack.c.b16 %v965, %v940
  %v1716 = vpack.c.b16 %v966, %v941
  %v1717 = vpack.c.b16 %v967, %v942
  %v1718 = vpack.c.b16 %v968, %v943
  %v1719 = vpack.c.b16 %v969, %v944
  %v1720 = vpack.c.b16 %v970, %v945
  %v1721 = vpack.c.b16 %v971, %v946
  %v1722 = vpack.c.b16 %v972, %v947
  %v1723 = vpack.c.b16 %v973, %v948
  %v1724 = vpack.c.b16 %v974, %v949
  %v1725 = vpack.c.b16 %v975, %v950
  %v1726 = vpack.c.b16 %v976, %v951
  %v1727 = vpack.c.b16 %v977, %v952
  %v1728 = vpack.c.b16 %v978, %v953
  %v1729 = vpack.c.b16 %v979, %v954
  %v1730 = vpack.c.b16 %v980, %v955
  %v1731 = vpack.c.b16 %v981, %v956
  %v1732 = vpack.c.b16 %v982, %v957
  %v1733 = vpack.c.b16 %v983, %v958
  %v1734 = vpack.c.b16 %v984, %v959
  %v1735 = vpack.c.b16 %v1010, %v985
  %v1736 = vpack.c.b16 %v1011, %v986
  %v1737 = vpack.c.b16 %v1012, %v987
  %v1738 = vpack.c.b16 %v1013, %v988
  %v1739 = vpack.c.b16 %v1014, %v989
  %v1740 = vpack.c.b16 %v1015, %v990
  %v1741 = vpack.c.b16 %v1016, %v991
  %v1742 = vpack.c.b16 %v1017, %v992
  %v1743 = vpack.c.b16 %v1018, %v993
  %v1744 = vpack.c.b16 %v1019, %v994
  %v1745 = vpack.c.b16 %v1020, %v995
  %v1746 = vpack.c.b16 %v1021, %v996
  %v1747 = vpack.c.b16 %v1022, %v997
  %v1748 = vpack.c.b16 %v1023, %v998
  %v1749 = vpack.c.b16 %v1024, %v999
  %v1750 = vpack.c.b16 %v1025, %v1000
  %v1751 = vpack.c.b16 %v1026, %v1001
  %v1752 = vpack.c.b16 %v1027, %v1002
  %v1753 = vpack.c.b16 %v1028, %v1003
  %v1754 = vpack.c.b16 %v1029, %v1004
  %v1755 = vpack.c.b16 %v1030, %v1005
  %v1756 = vpack.c.b16 %v1031, %v1006
  %v1757 = vpack.c.b16 %v1032, %v1007
  %v1758 = vpack.c.b16 %v1033, %v1008
  %v1759 = vpack.c.b16 %v1034, %v1009
  %v1760 = vpack.c.b16 %v1060, %v1035
  %v1761 = vpack.c.b16 %v1061, %v1036
  %v1762 = vpack.c.b16 %v1062, %v1037
  %v1763 = vpack.c.b16 %v1063, %v1038
  %v1764 = vpack.c.b16 %v1064, %v1039
  %v1765 = vpack.c.b16 %v1065, %v1040
  %v1766 = vpack.c.b16 %v1066, %v1041
  %v1767 = vpack.c.b16 %v1067, %v1042
  %v1768 = vpack.c.b16 %v1068, %v1043
  %v1769 = vpack.c.b16 %v1069, %v1044
  %v1770 = vpack.c.b16 %v1070, %v1045
  %v1771 = vpack.c.b16 %v1071, %v1046
  %v1772 = vpack.c.b16 %v1072, %v1047
  %v1773 = vpack.c.b16 %v1073, %v1048
  %v1774 = vpack.c.b16 %v1074, %v1049
  %v1775 = vpack.c.b16 %v1075, %v1050
  %v1776 = vpack.c.b16 %v1076, %v1051
  %v1777 = vpack.c.b16 %v1077, %v1052
  %v1778 = vpack.c.b16 %v1078, %v1053
  %v1779 = vpack.c.b16 %v1079, %v1054
  %v1780 = vpack.c.b16 %v1080, %v1055
  %v1781 = vpack.c.b16 %v1081, %v1056
  %v1782 = vpack.c.b16 %v1082, %v1057
  %v1783 = vpack.c.b16 %v1083, %v1058
  %v1784 = vpack.c.b16 %v1084, %v1059
  %v1785 = vpack.c.b16 %v1110, %v1085
  %v1786 = vpack.c.b16 %v1111, %v1086
  %v1787 = vpack.c.b16 %v1112, %v1087
  %v1788 = vpack.c.b16 %v1113, %v1088
  %v1789 = vpack.c.b16 %v1114, %v1089
  %v1790 = vpack.c.b16 %v1115, %v1090
  %v1791 = vpack.c.b16 %v1116, %v1091
  %v1792 = vpack.c.b16 %v1117, %v1092
  %v1793 = vpack.c.b16 %v1118, %v1093
  %v1794 = vpack.c.b16 %v1119, %v1094
  %v1795 = vpack.c.b16 %v1120, %v1095
  %v1796 = vpack.c.b16 %v1121, %v1096
  %v1797 = vpack.c.b16 %v1122, %v1097
  %v1798 = vpack.c.b16 %v1123, %v1098
  %v1799 = vpack.c.b16 %v1124, %v1099
  %v1800 = vpack.c.b16 %v1125, %v1100
  %v1801 = vpack.c.b16 %v1126, %v1101
  %v1802 = vpack.c.b16 %v1127, %v1102
  %v1803 = vpack.c.b16 %v1128, %v1103
  %v1804 = vpack.c.b16 %v1129, %v1104
  %v1805 = vpack.c.b16 %v1130, %v1105
  %v1806 = vpack.c.b16 %v1131, %v1106
  %v1807 = vpack.c.b16 %v1132, %v1107
  %v1808 = vpack.c.b16 %v1133, %v1108
  %v1809 = vpack.c.b16 %v1134, %v1109
  %v1810 = vpack.c.b16 %v1160, %v1135
  %v1811 = vpack.c.b16 %v1161, %v1136
  %v1812 = vpack.c.b16 %v1162, %v1137
  %v1813 = vpack.c.b16 %v1163, %v1138
  %v1814 = vpack.c.b16 %v1164, %v1139
  %v1815 = vpack.c.b16 %v1165, %v1140
  %v1816 = vpack.c.b16 %v1166, %v1141
  %v1817 = vpack.c.b16 %v1167, %v1142
  %v1818 = vpack.c.b16 %v1168, %v1143
  %v1819 = vpack.c.b16 %v1169, %v1144
  %v1820 = vpack.c.b16 %v1170, %v1145
  %v1821 = vpack.c.b16 %v1171, %v1146
  %v1822 = vpack.c.b16 %v1172, %v1147
  %v1823 = vpack.c.b16 %v1173, %v1148
  %v1824 = vpack.c.b16 %v1174, %v1149
  %v1825 = vpack.c.b16 %v1175, %v1150
  %v1826 = vpack.c.b16 %v1176, %v1151
  %v1827 = vpack.c.b16 %v1177, %v1152
  %v1828 = vpack.c.b16 %v1178, %v1153
  %v1829 = vpack.c.b16 %v1179, %v1154
  %v1830 = vpack.c.b16 %v1180, %v1155
  %v1831 = vpack.c.b16 %v1181, %v1156
  %v1832 = vpack.c.b16 %v1182, %v1157
  %v1833 = vpack.c.b16 %v1183, %v1158
  %v1834 = vpack.c.b16 %v1184, %v1159
  %v1835 = vpack.c.b16 %v1210, %v1185
  %v1836 = vpack.c.b16 %v1211, %v1186
  %v1837 = vpack.c.b16 %v1212, %v1187
  %v1838 = vpack.c.b16 %v1213, %v1188
  %v1839 = vpack.c.b16 %v1214, %v1189
  %v1840 = vpack.c.b16 %v1215, %v1190
  %v1841 = vpack.c.b16 %v1216, %v1191
  %v1842 = vpack.c.b16 %v1217, %v1192
  %v1843 = vpack.c.b16 %v1218, %v1193
  %v1844 = vpack.c.b16 %v1219, %v1194
  %v1845 = vpack.c.b16 %v1220, %v1195
  %v1846 = vpack.c.b16 %v1221, %v1196
  %v1847 = vpack.c.b16 %v1222, %v1197
  %v1848 = vpack.c.b16 %v1223, %v1198
  %v1849 = vpack.c.b16 %v1224, %v1199
  %v1850 = vpack.c.b16 %v1225, %v1200
  %v1851 = vpack.c.b16 %v1226, %v1201
  %v1852 = vpack.c.b16 %v1227, %v1202
  %v1853 = vpack.c.b16 %v1228, %v1203
  %v1854 = vpack.c.b16 %v1229, %v1204
  %v1855 = vpack.c.b16 %v1230, %v1205
  %v1856 = vpack.c.b16 %v1231, %v1206
  %v1857 = vpack.c.b16 %v1232, %v1207
  %v1858 = vpack.c.b16 %v1233, %v1208
  %v1859 = vpack.c.b16 %v1234, %v1209
  %v1860 = vpack.c.b16 %v1260, %v1235
  %v1861 = vpack.c.b16 %v1261, %v1236
  %v1862 = vpack.c.b16 %v1262, %v1237
  %v1863 = vpack.c.b16 %v1263, %v1238
  %v1864 = vpack.c.b16 %v1264, %v1239
  %v1865 = vpack.c.b16 %v1265, %v1240
  %v1866 = vpack.c.b16 %v1266, %v1241
  %v1867 = vpack.c.b16 %v1267, %v1242
  %v1868 = vpack.c.b16 %v1268, %v1243
  %v1869 = vpack.c.b16 %v1269, %v1244
  %v1870 = vpack.c.b16 %v1270, %v1245
  %v1871 = vpack.c.b16 %v1271, %v1246
  %v1872 = vpack.c.b16 %v1272, %v1247
  %v1873 = vpack.c.b16 %v1273, %v1248
  %v1874 = vpack.c.b16 %v1274, %v1249
  %v1875 = vpack.c.b16 %v1275, %v1250
  %v1876 = vpack.c.b16 %v1276, %v1251
  %v1877 = vpack.c.b16 %v1277, %v1252
  %v1878 = vpack.c.b16 %v1278, %v1253
  %v1879 = vpack.c.b16 %v1279, %v1254
  %v1880 = vpack.c.b16 %v1280, %v1255
  %v1881 = vpack.c.b16 %v1281, %v1256
  %v1882 = vpack.c.b16 %v1282, %v1257
  %v1883 = vpack.c.b16 %v1283, %v1258
  %v1884 = vpack.c.b16 %v1284, %v1259
  %v1885 = vpack.c.b16 %v1310, %v1285
  %v1886 = vpack.c.b16 %v1311, %v1286
  %v1887 = vpack.c.b16 %v1312, %v1287
  %v1888 = vpack.c.b16 %v1313, %v1288
  %v1889 = vpack.c.b16 %v1314, %v1289
  %v1890 = vpack.c.b16 %v1315, %v1290
  %v1891 = vpack.c.b16 %v1316, %v1291
  %v1892 = vpack.c.b16 %v1317, %v1292
  %v1893 = vpack.c.b16 %v1318, %v1293
  %v1894 = vpack.c.b16 %v1319, %v1294
  %v1895 = vpack.c.b16 %v1320, %v1295
  %v1896 = vpack.c.b16 %v1321, %v1296
  %v1897 = vpack.c.b16 %v1322, %v1297
  %v1898 = vpack.c.b16 %v1323, %v1298
  %v1899 = vpack.c.b16 %v1324, %v1299
  %v1900 = vpack.c.b16 %v1325, %v1300
  %v1901 = vpack.c.b16 %v1326, %v1301
  %v1902 = vpack.c.b16 %v1327, %v1302
  %v1903 = vpack.c.b16 %v1328, %v1303
  %v1904 = vpack.c.b16 %v1329, %v1304
  %v1905 = vpack.c.b16 %v1330, %v1305
  %v1906 = vpack.c.b16 %v1331, %v1306
  %v1907 = vpack.c.b16 %v1332, %v1307
  %v1908 = vpack.c.b16 %v1333, %v1308
  %v1909 = vpack.c.b16 %v1334, %v1309
  %v1910 = vpack.c.b16 %v1360, %v1335
  %v1911 = vpack.c.b16 %v1361, %v1336
  %v1912 = vpack.c.b16 %v1362, %v1337
  %v1913 = vpack.c.b16 %v1363, %v1338
  %v1914 = vpack.c.b16 %v1364, %v1339
  %v1915 = vpack.c.b16 %v1365, %v1340
  %v1916 = vpack.c.b16 %v1366, %v1341
  %v1917 = vpack.c.b16 %v1367, %v1342
  %v1918 = vpack.c.b16 %v1368, %v1343
  %v1919 = vpack.c.b16 %v1369, %v1344
  %v1920 = vpack.c.b16 %v1370, %v1345
  %v1921 = vpack.c.b16 %v1371, %v1346
  %v1922 = vpack.c.b16 %v1372, %v1347
  %v1923 = vpack.c.b16 %v1373, %v1348
  %v1924 = vpack.c.b16 %v1374, %v1349
  %v1925 = vpack.c.b16 %v1375, %v1350
  %v1926 = vpack.c.b16 %v1376, %v1351
  %v1927 = vpack.c.b16 %v1377, %v1352
  %v1928 = vpack.c.b16 %v1378, %v1353
  %v1929 = vpack.c.b16 %v1379, %v1354
  %v1930 = vpack.c.b16 %v1380, %v1355
  %v1931 = vpack.c.b16 %v1381, %v1356
  %v1932 = vpack.c.b16 %v1382, %v1357
  %v1933 = vpack.c.b16 %v1383, %v1358
  %v1934 = vpack.c.b16 %v1384, %v1359
  %v1935 = vpack.c.b16 %v1410, %v1385
  %v1936 = vpack.c.b16 %v1411, %v1386
  %v1937 = vpack.c.b16 %v1412, %v1387
  %v1938 = vpack.c.b16 %v1413, %v1388
  %v1939 = vpack.c.b16 %v1414, %v1389
  %v1940 = vpack.c.b16 %v1415, %v1390
  %v1941 = vpack.c.b16 %v1416, %v1391
  %v1942 = vpack.c.b16 %v1417, %v1392
  %v1943 = vpack.c.b16 %v1418, %v1393
  %v1944 = vpack.c.b16 %v1419, %v1394
  %v1945 = vpack.c.b16 %v1420, %v1395
  %v1946 = vpack.c.b16 %v1421, %v1396
  %v1947 = vpack.c.b16 %v1422, %v1397
  %v1948 = vpack.c.b16 %v1423, %v1398
  %v1949 = vpack.c.b16 %v1424, %v1399
  %v1950 = vpack.c.b16 %v1425, %v1400
  %v1951 = vpack.c.b16 %v1426, %v1401
  %v1952 = vpack.c.b16 %v1427, %v1402
  %v1953 = vpack.c.b16 %v1428, %v1403
  %v1954 = vpack.c.b16 %v1429, %v1404
  %v1955 = vpack.c.b16 %v1430, %v1405
  %v1956 = vpack.c.b16 %v1431, %v1406
  %v1957 = vpack.c.b16 %v1432, %v1407
  %v1958 = vpack.c.b16 %v1433, %v1408
  %v1959 = vpack.c.b16 %v1434, %v1409
  %v1960 = vpack.c.b16 %v1460, %v1435
  %v1961 = vpack.c.b16 %v1461, %v1436
  %v1962 = vpack.c.b16 %v1462, %v1437
  %v1963 = vpack.c.b16 %v1463, %v1438
  %v1964 = vpack.c.b16 %v1464, %v1439
  %v1965 = vpack.c.b16 %v1465, %v1440
  %v1966 = vpack.c.b16 %v1466, %v1441
  %v1967 = vpack.c.b16 %v1467, %v1442
  %v1968 = vpack.c.b16 %v1468, %v1443
  %v1969 = vpack.c.b16 %v1469, %v1444
  %v1970 = vpack.c.b16 %v1470, %v1445
  %v1971 = vpack.c.b16 %v1471, %v1446
  %v1972 = vpack.c.b16 %v1472, %v1447
  %v1973 = vpack.c.b16 %v1473, %v1448
  %v1974 = vpack.c.b16 %v1474, %v1449
  %v1975 = vpack.c.b16 %v1475, %v1450
  %v1976 = vpack.c.b16 %v1476, %v1451
  %v1977 = vpack.c.b16 %v1477, %v1452
  %v1978 = vpack.c.b16 %v1478, %v1453
  %v1979 = vpack.c.b16 %v1479, %v1454
  %v1980 = vpack.c.b16 %v1480, %v1455
  %v1981 = vpack.c.b16 %v1481, %v1456
  %v1982 = vpack.c.b16 %v1482, %v1457
  %v1983 = vpack.c.b16 %v1483, %v1458
  %v1984 = vpack.c.b16 %v1484, %v1459
  %v1985 = vpack.c.b16 %v1510, %v1485
  %v1986 = vpack.c.b16 %v1511, %v1486
  %v1987 = vpack.c.b16 %v1512, %v1487
  %v1988 = vpack.c.b16 %v1513, %v1488
  %v1989 = vpack.c.b16 %v1514, %v1489
  %v1990 = vpack.c.b16 %v1515, %v1490
  %v1991 = vpack.c.b16 %v1516, %v1491
  %v1992 = vpack.c.b16 %v1517, %v1492
  %v1993 = vpack.c.b16 %v1518, %v1493
  %v1994 = vpack.c.b16 %v1519, %v1494
  %v1995 = vpack.c.b16 %v1520, %v1495
  %v1996 = vpack.c.b16 %v1521, %v1496
  %v1997 = vpack.c.b16 %v1522, %v1497
  %v1998 = vpack.c.b16 %v1523, %v1498
  %v1999 = vpack.c.b16 %v1524, %v1499
  %v2000 = vpack.c.b16 %v1525, %v1500
  %v2001 = vpack.c.b16 %v1526, %v1501
  %v2002 = vpack.c.b16 %v1527, %v1502
  %v2003 = vpack.c.b16 %v1528, %v1503
  %v2004 = vpack.c.b16 %v1529, %v1504
  %v2005 = vpack.c.b16 %v1530, %v1505
  %v2006 = vpack.c.b16 %v1531, %v1506
  %v2007 = vpack.c.b16 %v1532, %v1507
  %v2008 = vpack.c.b16 %v1533, %v1508
  %v2009 = vpack.c.b16 %v1534, %v1509
  %v2010 = vpack.c.b16 %v1560, %v1535
  %v2011 = vpack.c.b16 %v1561, %v1536
  %v2012 = vpack.c.b16 %v1562, %v1537
  %v2013 = vpack.c.b16 %v1563, %v1538
  %v2014 = vpack.c.b16 %v1564, %v1539
  %v2015 = vpack.c.b16 %v1565, %v1540
  %v2016 = vpack.c.b16 %v1566, %v1541
  %v2017 = vpack.c.b16 %v1567, %v1542
  %v2018 = vpack.c.b16 %v1568, %v1543
  %v2019 = vpack.c.b16 %v1569, %v1544
  %v2020 = vpack.c.b16 %v1570, %v1545
  %v2021 = vpack.c.b16 %v1571, %v1546
  %v2022 = vpack.c.b16 %v1572, %v1547
  %v2023 = vpack.c.b16 %v1573, %v1548
  %v2024 = vpack.c.b16 %v1574, %v1549
  %v2025 = vpack.c.b16 %v1575, %v1550
  %v2026 = vpack.c.b16 %v1576, %v1551
  %v2027 = vpack.c.b16 %v1577, %v1552
  %v2028 = vpack.c.b16 %v1578, %v1553
  %v2029 = vpack.c.b16 %v1579, %v1554
  %v2030 = vpack.c.b16 %v1580, %v1555
  %v2031 = vpack.c.b16 %v1581, %v1556
  %v2032 = vpack.c.b16 %v1582, %v1557
  %v2033 = vpack.c.b16 %v1583, %v1558
  %v2034 = vpack.c.b16 %v1584, %v1559
  %v2035 = vpack.c.b16 %v1610, %v1585
  %v2036 = vpack.c.b16 %v1611, %v1586
  %v2037 = vpack.c.b16 %v1612, %v1587
  %v2038 = vpack.c.b16 %v1613, %v1588
  %v2039 = vpack.c.b16 %v1614, %v1589
  %v2040 = vpack.c.b16 %v1615, %v1590
  %v2041 = vpack.c.b16 %v1616, %v1591
  %v2042 = vpack.c.b16 %v1617, %v1592
  %v2043 = vpack.c.b16 %v1618, %v1593
  %v2044 = vpack.c.b16 %v1619, %v1594
  %v2045 = vpack.c.b16 %v1620, %v1595
  %v2046 = vpack.c.b16 %v1621, %v1596
  %v2047 = vpack.c.b16 %v1622, %v1597
  %v2048 = vpack.c.b16 %v1623, %v1598
  %v2049 = vpack.c.b16 %v1624, %v1599
  %v2050 = vpack.c.b16 %v1625, %v1600
  %v2051 = vpack.c.b16 %v1626, %v1601
  %v2052 = vpack.c.b16 %v1627, %v1602
  %v2053 = vpack.c.b16 %v1628, %v1603
  %v2054 = vpack.c.b16 %v1629, %v1604
  %v2055 = vpack.c.b16 %v1630, %v1605
  %v2056 = vpack.c.b16 %v1631, %v1606
  %v2057 = vpack.c.b16 %v1632, %v1607
  %v2058 = vpack.c.b16 %v1633, %v1608
  %v2059 = vpack.c.b16 %v1634, %v1609
  %v2060 = vpack.c.b16 %v1660, %v1635
  %v2061 = vpack.c.b16 %v1661, %v1636
  %v2062 = vpack.c.b16 %v1662, %v1637
  %v2063 = vpack.c.b16 %v1663, %v1638
  %v2064 = vpack.c.b16 %v1664, %v1639
  %v2065 = vpack.c.b16 %v1665, %v1640
  %v2066 = vpack.c.b16 %v1666, %v1641
  %v2067 = vpack.c.b16 %v1667, %v1642
  %v2068 = vpack.c.b16 %v1668, %v1643
  %v2069 = vpack.c.b16 %v1669, %v1644
  %v2070 = vpack.c.b16 %v1670, %v1645
  %v2071 = vpack.c.b16 %v1671, %v1646
  %v2072 = vpack.c.b16 %v1672, %v1647
  %v2073 = vpack.c.b16 %v1673, %v1648
  %v2074 = vpack.c.b16 %v1674, %v1649
  %v2075 = vpack.c.b16 %v1675, %v1650
  %v2076 = vpack.c.b16 %v1676, %v1651
  %v2077 = vpack.c.b16 %v1677, %v1652
  %v2078 = vpack.c.b16 %v1678, %v1653
  %v2079 = vpack.c.b16 %v1679, %v1654
  %v2080 = vpack.c.b16 %v1680, %v1655
  %v2081 = vpack.c.b16 %v1681, %v1656
  %v2082 = vpack.c.b16 %v1682, %v1657
  %v2083 = vpack.c.b16 %v1683, %v1658
  %v2084 = vpack.c.b16 %v1684, %v1659
  %2485 = vmatprep.subr.bf16.mxu0 %v1686
  %2486 = vmatpush1.bf16.msra.mxu0 %v1685
  %2487 = vmatprep.subr.bf16.mxu0 %v1711
  %2488 = vmatpush1.bf16.msra.mxu0 %v1710
  %2489 = vmatprep.subr.bf16.mxu0 %v1736
  %2490 = vmatpush1.bf16.msra.mxu0 %v1735
  %2491 = vmatprep.subr.bf16.mxu0 %v1761
  %2492 = vmatpush1.bf16.msra.mxu0 %v1760
  %2493 = vmatprep.subr.bf16.mxu0 %v1786
  %2494 = vmatpush1.bf16.msra.mxu0 %v1785
  %2495 = vmatprep.subr.bf16.mxu0 %v1811
  %2496 = vmatpush1.bf16.msra.mxu0 %v1810
  %2497 = vmatprep.subr.bf16.mxu0 %v1836
  %2498 = vmatpush1.bf16.msra.mxu0 %v1835
  %2499 = vmatprep.subr.bf16.mxu0 %v1861
  %2500 = vmatpush1.bf16.msra.mxu0 %v1860
  %2501 = vmatprep.subr.bf16.mxu0 %v1886
  %2502 = vmatpush1.bf16.msra.mxu0 %v1885
  %2503 = vmatprep.subr.bf16.mxu0 %v1911
  %2504 = vmatpush1.bf16.msra.mxu0 %v1910
  %2505 = vmatprep.subr.bf16.mxu0 %v1936
  %2506 = vmatpush1.bf16.msra.mxu0 %v1935
  %2507 = vmatprep.subr.bf16.mxu0 %v1961
  %2508 = vmatpush1.bf16.msra.mxu0 %v1960
  %2509 = vmatprep.subr.bf16.mxu0 %v1986
  %2510 = vmatpush1.bf16.msra.mxu0 %v1985
  %2511 = vmatprep.subr.bf16.mxu0 %v2011
  %2512 = vmatpush1.bf16.msra.mxu0 %v2010
  %2513 = vmatprep.subr.bf16.mxu0 %v2036
  %2514 = vmatpush1.bf16.msra.mxu0 %v2035
  %2515 = vmatprep.subr.bf16.mxu0 %v2061
  %2516 = vmatpush1.bf16.msra.mxu0 %v2060
  %2517 = vmatprep.mubr.bf16.mxu0 %v466
  %2518 = vmatmul.mubr.bf16.gmra.mrb[0].mxu0 %v459
  %v2519 = vpop.f32.mrb[0].mxu0
  %v2520 = vadd.f32 %v443, %v2519
  %v2521 = vpop.f32.mrb[0].mxu0
  %v2522 = vadd.f32 %v443, %v2521
  %v2523 = vpop.f32.mrb[0].mxu0
  %v2524 = vpop.f32.mrb[0].mxu0
  %2525 = vdwg.mxu0
  %2526 = vmatprep.subr.bf16.mxu0 %v1688
  %2527 = vmatpush1.bf16.msra.mxu0 %v1687
  %2528 = vmatprep.subr.bf16.mxu0 %v1713
  %2529 = vmatpush1.bf16.msra.mxu0 %v1712
  %2530 = vmatprep.subr.bf16.mxu0 %v1738
  %2531 = vmatpush1.bf16.msra.mxu0 %v1737
  %2532 = vmatprep.subr.bf16.mxu0 %v1763
  %2533 = vmatpush1.bf16.msra.mxu0 %v1762
  %2534 = vmatprep.subr.bf16.mxu0 %v1788
  %2535 = vmatpush1.bf16.msra.mxu0 %v1787
  %2536 = vmatprep.subr.bf16.mxu0 %v1813
  %2537 = vmatpush1.bf16.msra.mxu0 %v1812
  %2538 = vmatprep.subr.bf16.mxu0 %v1838
  %2539 = vmatpush1.bf16.msra.mxu0 %v1837
  %2540 = vmatprep.subr.bf16.mxu0 %v1863
  %2541 = vmatpush1.bf16.msra.mxu0 %v1862
  %2542 = vmatprep.subr.bf16.mxu0 %v1888
  %2543 = vmatpush1.bf16.msra.mxu0 %v1887
  %2544 = vmatprep.subr.bf16.mxu0 %v1913
  %2545 = vmatpush1.bf16.msra.mxu0 %v1912
  %2546 = vmatprep.subr.bf16.mxu0 %v1938
  %2547 = vmatpush1.bf16.msra.mxu0 %v1937
  %2548 = vmatprep.subr.bf16.mxu0 %v1963
  %2549 = vmatpush1.bf16.msra.mxu0 %v1962
  %2550 = vmatprep.subr.bf16.mxu0 %v1988
  %2551 = vmatpush1.bf16.msra.mxu0 %v1987
  %2552 = vmatprep.subr.bf16.mxu0 %v2013
  %2553 = vmatpush1.bf16.msra.mxu0 %v2012
  %2554 = vmatprep.subr.bf16.mxu0 %v2038
  %2555 = vmatpush1.bf16.msra.mxu0 %v2037
  %2556 = vmatprep.subr.bf16.mxu0 %v2063
  %2557 = vmatpush1.bf16.msra.mxu0 %v2062
  %2558 = vmatprep.mubr.bf16.mxu0 %v466
  %2559 = vmatmul.mubr.bf16.gmra.mrb[0].mxu0 %v459
  %v2560 = vpop.f32.mrb[0].mxu0
  %v2561 = vadd.f32 %v443, %v2560
  %v2562 = vpop.f32.mrb[0].mxu0
  %v2563 = vadd.f32 %v443, %v2562
  %v2564 = vpop.f32.mrb[0].mxu0
  %v2565 = vpop.f32.mrb[0].mxu0
  %2566 = vdwg.mxu0
  %2567 = vmatprep.subr.bf16.mxu0 %v1690
  %2568 = vmatpush1.bf16.msra.mxu0 %v1689
  %2569 = vmatprep.subr.bf16.mxu0 %v1715
  %2570 = vmatpush1.bf16.msra.mxu0 %v1714
  %2571 = vmatprep.subr.bf16.mxu0 %v1740
  %2572 = vmatpush1.bf16.msra.mxu0 %v1739
  %2573 = vmatprep.subr.bf16.mxu0 %v1765
  %2574 = vmatpush1.bf16.msra.mxu0 %v1764
  %2575 = vmatprep.subr.bf16.mxu0 %v1790
  %2576 = vmatpush1.bf16.msra.mxu0 %v1789
  %2577 = vmatprep.subr.bf16.mxu0 %v1815
  %2578 = vmatpush1.bf16.msra.mxu0 %v1814
  %2579 = vmatprep.subr.bf16.mxu0 %v1840
  %2580 = vmatpush1.bf16.msra.mxu0 %v1839
  %2581 = vmatprep.subr.bf16.mxu0 %v1865
  %2582 = vmatpush1.bf16.msra.mxu0 %v1864
  %2583 = vmatprep.subr.bf16.mxu0 %v1890
  %2584 = vmatpush1.bf16.msra.mxu0 %v1889
  %2585 = vmatprep.subr.bf16.mxu0 %v1915
  %2586 = vmatpush1.bf16.msra.mxu0 %v1914
  %2587 = vmatprep.subr.bf16.mxu0 %v1940
  %2588 = vmatpush1.bf16.msra.mxu0 %v1939
  %2589 = vmatprep.subr.bf16.mxu0 %v1965
  %2590 = vmatpush1.bf16.msra.mxu0 %v1964
  %2591 = vmatprep.subr.bf16.mxu0 %v1990
  %2592 = vmatpush1.bf16.msra.mxu0 %v1989
  %2593 = vmatprep.subr.bf16.mxu0 %v2015
  %2594 = vmatpush1.bf16.msra.mxu0 %v2014
  %2595 = vmatprep.subr.bf16.mxu0 %v2040
  %2596 = vmatpush1.bf16.msra.mxu0 %v2039
  %2597 = vmatprep.subr.bf16.mxu0 %v2065
  %2598 = vmatpush1.bf16.msra.mxu0 %v2064
  %2599 = vmatprep.mubr.bf16.mxu0 %v466
  %2600 = vmatmul.mubr.bf16.gmra.mrb[0].mxu0 %v459
  %v2601 = vpop.f32.mrb[0].mxu0
  %v2602 = vadd.f32 %v443, %v2601
  %v2603 = vpop.f32.mrb[0].mxu0
  %v2604 = vadd.f32 %v443, %v2603
  %v2605 = vpop.f32.mrb[0].mxu0
  %v2606 = vpop.f32.mrb[0].mxu0
  %2607 = vdwg.mxu0
  %2608 = vmatprep.subr.bf16.mxu0 %v1692
  %2609 = vmatpush1.bf16.msra.mxu0 %v1691
  %2610 = vmatprep.subr.bf16.mxu0 %v1717
  %2611 = vmatpush1.bf16.msra.mxu0 %v1716
  %2612 = vmatprep.subr.bf16.mxu0 %v1742
  %2613 = vmatpush1.bf16.msra.mxu0 %v1741
  %2614 = vmatprep.subr.bf16.mxu0 %v1767
  %2615 = vmatpush1.bf16.msra.mxu0 %v1766
  %2616 = vmatprep.subr.bf16.mxu0 %v1792
  %2617 = vmatpush1.bf16.msra.mxu0 %v1791
  %2618 = vmatprep.subr.bf16.mxu0 %v1817
  %2619 = vmatpush1.bf16.msra.mxu0 %v1816
  %2620 = vmatprep.subr.bf16.mxu0 %v1842
  %2621 = vmatpush1.bf16.msra.mxu0 %v1841
  %2622 = vmatprep.subr.bf16.mxu0 %v1867
  %2623 = vmatpush1.bf16.msra.mxu0 %v1866
  %2624 = vmatprep.subr.bf16.mxu0 %v1892
  %2625 = vmatpush1.bf16.msra.mxu0 %v1891
  %2626 = vmatprep.subr.bf16.mxu0 %v1917
  %2627 = vmatpush1.bf16.msra.mxu0 %v1916
  %2628 = vmatprep.subr.bf16.mxu0 %v1942
  %2629 = vmatpush1.bf16.msra.mxu0 %v1941
  %2630 = vmatprep.subr.bf16.mxu0 %v1967
  %2631 = vmatpush1.bf16.msra.mxu0 %v1966
  %2632 = vmatprep.subr.bf16.mxu0 %v1992
  %2633 = vmatpush1.bf16.msra.mxu0 %v1991
  %2634 = vmatprep.subr.bf16.mxu0 %v2017
  %2635 = vmatpush1.bf16.msra.mxu0 %v2016
  %2636 = vmatprep.subr.bf16.mxu0 %v2042
  %2637 = vmatpush1.bf16.msra.mxu0 %v2041
  %2638 = vmatprep.subr.bf16.mxu0 %v2067
  %2639 = vmatpush1.bf16.msra.mxu0 %v2066
  %2640 = vmatprep.mubr.bf16.mxu0 %v466
  %2641 = vmatmul.mubr.bf16.gmra.mrb[0].mxu0 %v459
  %v2642 = vpop.f32.mrb[0].mxu0
  %v2643 = vadd.f32 %v443, %v2642
  %v2644 = vpop.f32.mrb[0].mxu0
  %v2645 = vadd.f32 %v443, %v2644
  %v2646 = vpop.f32.mrb[0].mxu0
  %v2647 = vpop.f32.mrb[0].mxu0
  %2648 = vdwg.mxu0
  %2649 = vmatprep.subr.bf16.mxu0 %v1694
  %2650 = vmatpush1.bf16.msra.mxu0 %v1693
  %2651 = vmatprep.subr.bf16.mxu0 %v1719
  %2652 = vmatpush1.bf16.msra.mxu0 %v1718
  %2653 = vmatprep.subr.bf16.mxu0 %v1744
  %2654 = vmatpush1.bf16.msra.mxu0 %v1743
  %2655 = vmatprep.subr.bf16.mxu0 %v1769
  %2656 = vmatpush1.bf16.msra.mxu0 %v1768
  %2657 = vmatprep.subr.bf16.mxu0 %v1794
  %2658 = vmatpush1.bf16.msra.mxu0 %v1793
  %2659 = vmatprep.subr.bf16.mxu0 %v1819
  %2660 = vmatpush1.bf16.msra.mxu0 %v1818
  %2661 = vmatprep.subr.bf16.mxu0 %v1844
  %2662 = vmatpush1.bf16.msra.mxu0 %v1843
  %2663 = vmatprep.subr.bf16.mxu0 %v1869
  %2664 = vmatpush1.bf16.msra.mxu0 %v1868
  %2665 = vmatprep.subr.bf16.mxu0 %v1894
  %2666 = vmatpush1.bf16.msra.mxu0 %v1893
  %2667 = vmatprep.subr.bf16.mxu0 %v1919
  %2668 = vmatpush1.bf16.msra.mxu0 %v1918
  %2669 = vmatprep.subr.bf16.mxu0 %v1944
  %2670 = vmatpush1.bf16.msra.mxu0 %v1943
  %2671 = vmatprep.subr.bf16.mxu0 %v1969
  %2672 = vmatpush1.bf16.msra.mxu0 %v1968
  %2673 = vmatprep.subr.bf16.mxu0 %v1994
  %2674 = vmatpush1.bf16.msra.mxu0 %v1993
  %2675 = vmatprep.subr.bf16.mxu0 %v2019
  %2676 = vmatpush1.bf16.msra.mxu0 %v2018
  %2677 = vmatprep.subr.bf16.mxu0 %v2044
  %2678 = vmatpush1.bf16.msra.mxu0 %v2043
  %2679 = vmatprep.subr.bf16.mxu0 %v2069
  %2680 = vmatpush1.bf16.msra.mxu0 %v2068
  %2681 = vmatprep.mubr.bf16.mxu0 %v466
  %2682 = vmatmul.mubr.bf16.gmra.mrb[0].mxu0 %v459
  %v2683 = vpop.f32.mrb[0].mxu0
  %v2684 = vadd.f32 %v443, %v2683
  %v2685 = vpop.f32.mrb[0].mxu0
  %v2686 = vadd.f32 %v443, %v2685
  %v2687 = vpop.f32.mrb[0].mxu0
  %v2688 = vpop.f32.mrb[0].mxu0
  %2689 = vdwg.mxu0
  %2690 = vmatprep.subr.bf16.mxu0 %v1696
  %2691 = vmatpush1.bf16.msra.mxu0 %v1695
  %2692 = vmatprep.subr.bf16.mxu0 %v1721
  %2693 = vmatpush1.bf16.msra.mxu0 %v1720
  %2694 = vmatprep.subr.bf16.mxu0 %v1746
  %2695 = vmatpush1.bf16.msra.mxu0 %v1745
  %2696 = vmatprep.subr.bf16.mxu0 %v1771
  %2697 = vmatpush1.bf16.msra.mxu0 %v1770
  %2698 = vmatprep.subr.bf16.mxu0 %v1796
  %2699 = vmatpush1.bf16.msra.mxu0 %v1795
  %2700 = vmatprep.subr.bf16.mxu0 %v1821
  %2701 = vmatpush1.bf16.msra.mxu0 %v1820
  %2702 = vmatprep.subr.bf16.mxu0 %v1846
  %2703 = vmatpush1.bf16.msra.mxu0 %v1845
  %2704 = vmatprep.subr.bf16.mxu0 %v1871
  %2705 = vmatpush1.bf16.msra.mxu0 %v1870
  %2706 = vmatprep.subr.bf16.mxu0 %v1896
  %2707 = vmatpush1.bf16.msra.mxu0 %v1895
  %2708 = vmatprep.subr.bf16.mxu0 %v1921
  %2709 = vmatpush1.bf16.msra.mxu0 %v1920
  %2710 = vmatprep.subr.bf16.mxu0 %v1946
  %2711 = vmatpush1.bf16.msra.mxu0 %v1945
  %2712 = vmatprep.subr.bf16.mxu0 %v1971
  %2713 = vmatpush1.bf16.msra.mxu0 %v1970
  %2714 = vmatprep.subr.bf16.mxu0 %v1996
  %2715 = vmatpush1.bf16.msra.mxu0 %v1995
  %2716 = vmatprep.subr.bf16.mxu0 %v2021
  %2717 = vmatpush1.bf16.msra.mxu0 %v2020
  %2718 = vmatprep.subr.bf16.mxu0 %v2046
  %2719 = vmatpush1.bf16.msra.mxu0 %v2045
  %2720 = vmatprep.subr.bf16.mxu0 %v2071
  %2721 = vmatpush1.bf16.msra.mxu0 %v2070
  %2722 = vmatprep.mubr.bf16.mxu0 %v466
  %2723 = vmatmul.mubr.bf16.gmra.mrb[0].mxu0 %v459
  %v2724 = vpop.f32.mrb[0].mxu0
  %v2725 = vadd.f32 %v443, %v2724
  %v2726 = vpop.f32.mrb[0].mxu0
  %v2727 = vadd.f32 %v443, %v2726
  %v2728 = vpop.f32.mrb[0].mxu0
  %v2729 = vpop.f32.mrb[0].mxu0
  %2730 = vdwg.mxu0
  %2731 = vmatprep.subr.bf16.mxu0 %v1698
  %2732 = vmatpush1.bf16.msra.mxu0 %v1697
  %2733 = vmatprep.subr.bf16.mxu0 %v1723
  %2734 = vmatpush1.bf16.msra.mxu0 %v1722
  %2735 = vmatprep.subr.bf16.mxu0 %v1748
  %2736 = vmatpush1.bf16.msra.mxu0 %v1747
  %2737 = vmatprep.subr.bf16.mxu0 %v1773
  %2738 = vmatpush1.bf16.msra.mxu0 %v1772
  %2739 = vmatprep.subr.bf16.mxu0 %v1798
  %2740 = vmatpush1.bf16.msra.mxu0 %v1797
  %2741 = vmatprep.subr.bf16.mxu0 %v1823
  %2742 = vmatpush1.bf16.msra.mxu0 %v1822
  %2743 = vmatprep.subr.bf16.mxu0 %v1848
  %2744 = vmatpush1.bf16.msra.mxu0 %v1847
  %2745 = vmatprep.subr.bf16.mxu0 %v1873
  %2746 = vmatpush1.bf16.msra.mxu0 %v1872
  %2747 = vmatprep.subr.bf16.mxu0 %v1898
  %2748 = vmatpush1.bf16.msra.mxu0 %v1897
  %2749 = vmatprep.subr.bf16.mxu0 %v1923
  %2750 = vmatpush1.bf16.msra.mxu0 %v1922
  %2751 = vmatprep.subr.bf16.mxu0 %v1948
  %2752 = vmatpush1.bf16.msra.mxu0 %v1947
  %2753 = vmatprep.subr.bf16.mxu0 %v1973
  %2754 = vmatpush1.bf16.msra.mxu0 %v1972
  %2755 = vmatprep.subr.bf16.mxu0 %v1998
  %2756 = vmatpush1.bf16.msra.mxu0 %v1997
  %2757 = vmatprep.subr.bf16.mxu0 %v2023
  %2758 = vmatpush1.bf16.msra.mxu0 %v2022
  %2759 = vmatprep.subr.bf16.mxu0 %v2048
  %2760 = vmatpush1.bf16.msra.mxu0 %v2047
  %2761 = vmatprep.subr.bf16.mxu0 %v2073
  %2762 = vmatpush1.bf16.msra.mxu0 %v2072
  %2763 = vmatprep.mubr.bf16.mxu0 %v466
  %2764 = vmatmul.mubr.bf16.gmra.mrb[0].mxu0 %v459
  %v2765 = vpop.f32.mrb[0].mxu0
  %v2766 = vadd.f32 %v443, %v2765
  %v2767 = vpop.f32.mrb[0].mxu0
  %v2768 = vadd.f32 %v443, %v2767
  %v2769 = vpop.f32.mrb[0].mxu0
  %v2770 = vpop.f32.mrb[0].mxu0
  %2771 = vdwg.mxu0
  %2772 = vmatprep.subr.bf16.mxu0 %v1700
  %2773 = vmatpush1.bf16.msra.mxu0 %v1699
  %2774 = vmatprep.subr.bf16.mxu0 %v1725
  %2775 = vmatpush1.bf16.msra.mxu0 %v1724
  %2776 = vmatprep.subr.bf16.mxu0 %v1750
  %2777 = vmatpush1.bf16.msra.mxu0 %v1749
  %2778 = vmatprep.subr.bf16.mxu0 %v1775
  %2779 = vmatpush1.bf16.msra.mxu0 %v1774
  %2780 = vmatprep.subr.bf16.mxu0 %v1800
  %2781 = vmatpush1.bf16.msra.mxu0 %v1799
  %2782 = vmatprep.subr.bf16.mxu0 %v1825
  %2783 = vmatpush1.bf16.msra.mxu0 %v1824
  %2784 = vmatprep.subr.bf16.mxu0 %v1850
  %2785 = vmatpush1.bf16.msra.mxu0 %v1849
  %2786 = vmatprep.subr.bf16.mxu0 %v1875
  %2787 = vmatpush1.bf16.msra.mxu0 %v1874
  %2788 = vmatprep.subr.bf16.mxu0 %v1900
  %2789 = vmatpush1.bf16.msra.mxu0 %v1899
  %2790 = vmatprep.subr.bf16.mxu0 %v1925
  %2791 = vmatpush1.bf16.msra.mxu0 %v1924
  %2792 = vmatprep.subr.bf16.mxu0 %v1950
  %2793 = vmatpush1.bf16.msra.mxu0 %v1949
  %2794 = vmatprep.subr.bf16.mxu0 %v1975
  %2795 = vmatpush1.bf16.msra.mxu0 %v1974
  %2796 = vmatprep.subr.bf16.mxu0 %v2000
  %2797 = vmatpush1.bf16.msra.mxu0 %v1999
  %2798 = vmatprep.subr.bf16.mxu0 %v2025
  %2799 = vmatpush1.bf16.msra.mxu0 %v2024
  %2800 = vmatprep.subr.bf16.mxu0 %v2050
  %2801 = vmatpush1.bf16.msra.mxu0 %v2049
  %2802 = vmatprep.subr.bf16.mxu0 %v2075
  %2803 = vmatpush1.bf16.msra.mxu0 %v2074
  %2804 = vmatprep.mubr.bf16.mxu0 %v466
  %2805 = vmatmul.mubr.bf16.gmra.mrb[0].mxu0 %v459
  %v2806 = vpop.f32.mrb[0].mxu0
  %v2807 = vadd.f32 %v443, %v2806
  %v2808 = vpop.f32.mrb[0].mxu0
  %v2809 = vadd.f32 %v443, %v2808
  %v2810 = vpop.f32.mrb[0].mxu0
  %v2811 = vpop.f32.mrb[0].mxu0
  %2812 = vdwg.mxu0
  %2813 = vmatprep.subr.bf16.mxu0 %v1702
  %2814 = vmatpush1.bf16.msra.mxu0 %v1701
  %2815 = vmatprep.subr.bf16.mxu0 %v1727
  %2816 = vmatpush1.bf16.msra.mxu0 %v1726
  %2817 = vmatprep.subr.bf16.mxu0 %v1752
  %2818 = vmatpush1.bf16.msra.mxu0 %v1751
  %2819 = vmatprep.subr.bf16.mxu0 %v1777
  %2820 = vmatpush1.bf16.msra.mxu0 %v1776
  %2821 = vmatprep.subr.bf16.mxu0 %v1802
  %2822 = vmatpush1.bf16.msra.mxu0 %v1801
  %2823 = vmatprep.subr.bf16.mxu0 %v1827
  %2824 = vmatpush1.bf16.msra.mxu0 %v1826
  %2825 = vmatprep.subr.bf16.mxu0 %v1852
  %2826 = vmatpush1.bf16.msra.mxu0 %v1851
  %2827 = vmatprep.subr.bf16.mxu0 %v1877
  %2828 = vmatpush1.bf16.msra.mxu0 %v1876
  %2829 = vmatprep.subr.bf16.mxu0 %v1902
  %2830 = vmatpush1.bf16.msra.mxu0 %v1901
  %2831 = vmatprep.subr.bf16.mxu0 %v1927
  %2832 = vmatpush1.bf16.msra.mxu0 %v1926
  %2833 = vmatprep.subr.bf16.mxu0 %v1952
  %2834 = vmatpush1.bf16.msra.mxu0 %v1951
  %2835 = vmatprep.subr.bf16.mxu0 %v1977
  %2836 = vmatpush1.bf16.msra.mxu0 %v1976
  %2837 = vmatprep.subr.bf16.mxu0 %v2002
  %2838 = vmatpush1.bf16.msra.mxu0 %v2001
  %2839 = vmatprep.subr.bf16.mxu0 %v2027
  %2840 = vmatpush1.bf16.msra.mxu0 %v2026
  %2841 = vmatprep.subr.bf16.mxu0 %v2052
  %2842 = vmatpush1.bf16.msra.mxu0 %v2051
  %2843 = vmatprep.subr.bf16.mxu0 %v2077
  %2844 = vmatpush1.bf16.msra.mxu0 %v2076
  %2845 = vmatprep.mubr.bf16.mxu0 %v466
  %2846 = vmatmul.mubr.bf16.gmra.mrb[0].mxu0 %v459
  %v2847 = vpop.f32.mrb[0].mxu0
  %v2848 = vadd.f32 %v443, %v2847
  %v2849 = vpop.f32.mrb[0].mxu0
  %v2850 = vadd.f32 %v443, %v2849
  %v2851 = vpop.f32.mrb[0].mxu0
  %v2852 = vpop.f32.mrb[0].mxu0
  %2853 = vdwg.mxu0
  %2854 = vmatprep.subr.bf16.mxu0 %v1704
  %2855 = vmatpush1.bf16.msra.mxu0 %v1703
  %2856 = vmatprep.subr.bf16.mxu0 %v1729
  %2857 = vmatpush1.bf16.msra.mxu0 %v1728
  %2858 = vmatprep.subr.bf16.mxu0 %v1754
  %2859 = vmatpush1.bf16.msra.mxu0 %v1753
  %2860 = vmatprep.subr.bf16.mxu0 %v1779
  %2861 = vmatpush1.bf16.msra.mxu0 %v1778
  %2862 = vmatprep.subr.bf16.mxu0 %v1804
  %2863 = vmatpush1.bf16.msra.mxu0 %v1803
  %2864 = vmatprep.subr.bf16.mxu0 %v1829
  %2865 = vmatpush1.bf16.msra.mxu0 %v1828
  %2866 = vmatprep.subr.bf16.mxu0 %v1854
  %2867 = vmatpush1.bf16.msra.mxu0 %v1853
  %2868 = vmatprep.subr.bf16.mxu0 %v1879
  %2869 = vmatpush1.bf16.msra.mxu0 %v1878
  %2870 = vmatprep.subr.bf16.mxu0 %v1904
  %2871 = vmatpush1.bf16.msra.mxu0 %v1903
  %2872 = vmatprep.subr.bf16.mxu0 %v1929
  %2873 = vmatpush1.bf16.msra.mxu0 %v1928
  %2874 = vmatprep.subr.bf16.mxu0 %v1954
  %2875 = vmatpush1.bf16.msra.mxu0 %v1953
  %2876 = vmatprep.subr.bf16.mxu0 %v1979
  %2877 = vmatpush1.bf16.msra.mxu0 %v1978
  %2878 = vmatprep.subr.bf16.mxu0 %v2004
  %2879 = vmatpush1.bf16.msra.mxu0 %v2003
  %2880 = vmatprep.subr.bf16.mxu0 %v2029
  %2881 = vmatpush1.bf16.msra.mxu0 %v2028
  %2882 = vmatprep.subr.bf16.mxu0 %v2054
  %2883 = vmatpush1.bf16.msra.mxu0 %v2053
  %2884 = vmatprep.subr.bf16.mxu0 %v2079
  %2885 = vmatpush1.bf16.msra.mxu0 %v2078
  %2886 = vmatprep.mubr.bf16.mxu0 %v466
  %2887 = vmatmul.mubr.bf16.gmra.mrb[0].mxu0 %v459
  %v2888 = vpop.f32.mrb[0].mxu0
  %v2889 = vadd.f32 %v443, %v2888
  %v2890 = vpop.f32.mrb[0].mxu0
  %v2891 = vadd.f32 %v443, %v2890
  %v2892 = vpop.f32.mrb[0].mxu0
  %v2893 = vpop.f32.mrb[0].mxu0
  %2894 = vdwg.mxu0
  %2895 = vmatprep.subr.bf16.mxu0 %v1706
  %2896 = vmatpush1.bf16.msra.mxu0 %v1705
  %2897 = vmatprep.subr.bf16.mxu0 %v1731
  %2898 = vmatpush1.bf16.msra.mxu0 %v1730
  %2899 = vmatprep.subr.bf16.mxu0 %v1756
  %2900 = vmatpush1.bf16.msra.mxu0 %v1755
  %2901 = vmatprep.subr.bf16.mxu0 %v1781
  %2902 = vmatpush1.bf16.msra.mxu0 %v1780
  %2903 = vmatprep.subr.bf16.mxu0 %v1806
  %2904 = vmatpush1.bf16.msra.mxu0 %v1805
  %2905 = vmatprep.subr.bf16.mxu0 %v1831
  %2906 = vmatpush1.bf16.msra.mxu0 %v1830
  %2907 = vmatprep.subr.bf16.mxu0 %v1856
  %2908 = vmatpush1.bf16.msra.mxu0 %v1855
  %2909 = vmatprep.subr.bf16.mxu0 %v1881
  %2910 = vmatpush1.bf16.msra.mxu0 %v1880
  %2911 = vmatprep.subr.bf16.mxu0 %v1906
  %2912 = vmatpush1.bf16.msra.mxu0 %v1905
  %2913 = vmatprep.subr.bf16.mxu0 %v1931
  %2914 = vmatpush1.bf16.msra.mxu0 %v1930
  %2915 = vmatprep.subr.bf16.mxu0 %v1956
  %2916 = vmatpush1.bf16.msra.mxu0 %v1955
  %2917 = vmatprep.subr.bf16.mxu0 %v1981
  %2918 = vmatpush1.bf16.msra.mxu0 %v1980
  %2919 = vmatprep.subr.bf16.mxu0 %v2006
  %2920 = vmatpush1.bf16.msra.mxu0 %v2005
  %2921 = vmatprep.subr.bf16.mxu0 %v2031
  %2922 = vmatpush1.bf16.msra.mxu0 %v2030
  %2923 = vmatprep.subr.bf16.mxu0 %v2056
  %2924 = vmatpush1.bf16.msra.mxu0 %v2055
  %2925 = vmatprep.subr.bf16.mxu0 %v2081
  %2926 = vmatpush1.bf16.msra.mxu0 %v2080
  %2927 = vmatprep.mubr.bf16.mxu0 %v466
  %2928 = vmatmul.mubr.bf16.gmra.mrb[0].mxu0 %v459
  %v2929 = vpop.f32.mrb[0].mxu0
  %v2930 = vadd.f32 %v443, %v2929
  %v2931 = vpop.f32.mrb[0].mxu0
  %v2932 = vadd.f32 %v443, %v2931
  %v2933 = vpop.f32.mrb[0].mxu0
  %v2934 = vpop.f32.mrb[0].mxu0
  %2935 = vdwg.mxu0
  %2936 = vmatprep.subr.bf16.mxu0 %v1708
  %2937 = vmatpush1.bf16.msra.mxu0 %v1707
  %2938 = vmatprep.subr.bf16.mxu0 %v1733
  %2939 = vmatpush1.bf16.msra.mxu0 %v1732
  %2940 = vmatprep.subr.bf16.mxu0 %v1758
  %2941 = vmatpush1.bf16.msra.mxu0 %v1757
  %2942 = vmatprep.subr.bf16.mxu0 %v1783
  %2943 = vmatpush1.bf16.msra.mxu0 %v1782
  %2944 = vmatprep.subr.bf16.mxu0 %v1808
  %2945 = vmatpush1.bf16.msra.mxu0 %v1807
  %2946 = vmatprep.subr.bf16.mxu0 %v1833
  %2947 = vmatpush1.bf16.msra.mxu0 %v1832
  %2948 = vmatprep.subr.bf16.mxu0 %v1858
  %2949 = vmatpush1.bf16.msra.mxu0 %v1857
  %2950 = vmatprep.subr.bf16.mxu0 %v1883
  %2951 = vmatpush1.bf16.msra.mxu0 %v1882
  %2952 = vmatprep.subr.bf16.mxu0 %v1908
  %2953 = vmatpush1.bf16.msra.mxu0 %v1907
  %2954 = vmatprep.subr.bf16.mxu0 %v1933
  %2955 = vmatpush1.bf16.msra.mxu0 %v1932
  %2956 = vmatprep.subr.bf16.mxu0 %v1958
  %2957 = vmatpush1.bf16.msra.mxu0 %v1957
  %2958 = vmatprep.subr.bf16.mxu0 %v1983
  %2959 = vmatpush1.bf16.msra.mxu0 %v1982
  %2960 = vmatprep.subr.bf16.mxu0 %v2008
  %2961 = vmatpush1.bf16.msra.mxu0 %v2007
  %2962 = vmatprep.subr.bf16.mxu0 %v2033
  %2963 = vmatpush1.bf16.msra.mxu0 %v2032
  %2964 = vmatprep.subr.bf16.mxu0 %v2058
  %2965 = vmatpush1.bf16.msra.mxu0 %v2057
  %2966 = vmatprep.subr.bf16.mxu0 %v2083
  %2967 = vmatpush1.bf16.msra.mxu0 %v2082
  %2968 = vmatprep.mubr.bf16.mxu0 %v466
  %2969 = vmatmul.mubr.bf16.gmra.mrb[0].mxu0 %v459
  %v2970 = vpop.f32.mrb[0].mxu0
  %v2971 = vadd.f32 %v443, %v2970
  %v2972 = vpop.f32.mrb[0].mxu0
  %v2973 = vadd.f32 %v443, %v2972
  %v2974 = vpop.f32.mrb[0].mxu0
  %v2975 = vpop.f32.mrb[0].mxu0
  %2976 = vdwg.mxu0
  %2977 = vmatprep.subr.bf16.mxu0 0
  %2978 = vmatpush1.bf16.msra.mxu0 %v1709
  %2979 = vmatprep.subr.bf16.mxu0 0
  %2980 = vmatpush1.bf16.msra.mxu0 %v1734
  %2981 = vmatprep.subr.bf16.mxu0 0
  %2982 = vmatpush1.bf16.msra.mxu0 %v1759
  %2983 = vmatprep.subr.bf16.mxu0 0
  %2984 = vmatpush1.bf16.msra.mxu0 %v1784
  %2985 = vmatprep.subr.bf16.mxu0 0
  %2986 = vmatpush1.bf16.msra.mxu0 %v1809
  %2987 = vmatprep.subr.bf16.mxu0 0
  %2988 = vmatpush1.bf16.msra.mxu0 %v1834
  %2989 = vmatprep.subr.bf16.mxu0 0
  %2990 = vmatpush1.bf16.msra.mxu0 %v1859
  %2991 = vmatprep.subr.bf16.mxu0 0
  %2992 = vmatpush1.bf16.msra.mxu0 %v1884
  %2993 = vmatprep.subr.bf16.mxu0 0
  %2994 = vmatpush1.bf16.msra.mxu0 %v1909
  %2995 = vmatprep.subr.bf16.mxu0 0
  %2996 = vmatpush1.bf16.msra.mxu0 %v1934
  %2997 = vmatprep.subr.bf16.mxu0 0
  %2998 = vmatpush1.bf16.msra.mxu0 %v1959
  %2999 = vmatprep.subr.bf16.mxu0 0
  %3000 = vmatpush1.bf16.msra.mxu0 %v1984
  %3001 = vmatprep.subr.bf16.mxu0 0
  %3002 = vmatpush1.bf16.msra.mxu0 %v2009
  %3003 = vmatprep.subr.bf16.mxu0 0
  %3004 = vmatpush1.bf16.msra.mxu0 %v2034
  %3005 = vmatprep.subr.bf16.mxu0 0
  %3006 = vmatpush1.bf16.msra.mxu0 %v2059
  %3007 = vmatprep.subr.bf16.mxu0 0
  %3008 = vmatpush1.bf16.msra.mxu0 %v2084
  %3009 = vmatprep.mubr.bf16.mxu0 %v466
  %3010 = vmatmul.mubr.bf16.gmra.mrb[0].mxu0 %v459
  %v3011 = vpop.f32.mrb[0].mxu0
  %v3012 = vadd.f32 %v443, %v3011
  %v3013 = vpop.f32.mrb[0].mxu0
  %v3014 = vpop.f32.mrb[0].mxu0
  %v3015 = vpop.f32.mrb[0].mxu0
  %3016 = vdwg.mxu0
  %v3017 = vtanh.pop %v2520
  %v3018 = vtanh.pop %v2522
  %v3019 = vtanh.pop %v2561
  %v3020 = vtanh.pop %v2563
  %v3021 = vtanh.pop %v2602
  %v3022 = vtanh.pop %v2604
  %v3023 = vtanh.pop %v2643
  %v3024 = vtanh.pop %v2645
  %v3025 = vtanh.pop %v2684
  %v3026 = vtanh.pop %v2686
  %v3027 = vtanh.pop %v2725
  %v3028 = vtanh.pop %v2727
  %v3029 = vtanh.pop %v2766
  %v3030 = vtanh.pop %v2768
  %v3031 = vtanh.pop %v2807
  %v3032 = vtanh.pop %v2809
  %v3033 = vtanh.pop %v2848
  %v3034 = vtanh.pop %v2850
  %v3035 = vtanh.pop %v2889
  %v3036 = vtanh.pop %v2891
  %v3037 = vtanh.pop %v2930
  %v3038 = vtanh.pop %v2932
  %v3039 = vtanh.pop %v2971
  %v3040 = vtanh.pop %v2973
  %v3041 = vtanh.pop %v3012
  %v3067 = vcombine.low %v3017, %v3018
  %v3068 = vcombine.low %v3019, %v3020
  %v3069 = vcombine.low %v3021, %v3022
  %v3070 = vcombine.low %v3023, %v3024
  %v3072 = vunpack.c.l.s4 1966171168
  %v3073 = vunpack.c.0.s8 %v3072
  %v3074 = vlaneseq
  %v3075 = vshrl.u32 %v3074, 7
  %v3076 = vsub.s32 %v3073, %v3075
  %v3077 = vrot.slane %v3067, %v3076
  %v3079 = vunpack.c.l.s4 1966171168
  %v3080 = vunpack.c.0.s8 %v3079
  %v3081 = vlaneseq
  %v3082 = vshrl.u32 %v3081, 7
  %v3083 = vsub.s32 %v3080, %v3082
  %v3084 = vrot.slane %v3068, %v3083
  %v3086 = vunpack.c.l.s4 1966171168
  %v3087 = vunpack.c.0.s8 %v3086
  %v3088 = vlaneseq
  %v3089 = vshrl.u32 %v3088, 7
  %v3090 = vsub.s32 %v3087, %v3089
  %v3091 = vrot.slane %v3069, %v3090
  %v3093 = vunpack.c.l.s4 1966171168
  %v3094 = vunpack.c.0.s8 %v3093
  %v3095 = vlaneseq
  %v3096 = vshrl.u32 %v3095, 7
  %v3097 = vsub.s32 %v3094, %v3096
  %v3098 = vrot.slane %v3070, %v3097
  %v3099 = vcombine.low %v3077, %v3084
  %v3100 = vcombine.low %v3091, %v3098
  %v3102 = vunpack.c.l.s4 1966171168
  %v3103 = vunpack.c.0.s8 %v3102
  %v3104 = vlaneseq
  %v3105 = vshrl.u32 %v3104, 7
  %v3106 = vsub.s32 %v3103, %v3105
  %v3107 = vrot.slane %v3099, %v3106
  %v3109 = vunpack.c.l.s4 1966171168
  %v3110 = vunpack.c.0.s8 %v3109
  %v3111 = vlaneseq
  %v3112 = vshrl.u32 %v3111, 7
  %v3113 = vsub.s32 %v3110, %v3112
  %v3114 = vrot.slane %v3100, %v3113
  %v3115 = vcombine.low %v3107, %v3114
  %v3116 = vcombine.low %v3025, %v3026
  %v3117 = vcombine.low %v3027, %v3028
  %v3118 = vcombine.low %v3029, %v3030
  %v3119 = vcombine.low %v3031, %v3032
  %v3121 = vunpack.c.l.s4 1966171168
  %v3122 = vunpack.c.0.s8 %v3121
  %v3123 = vlaneseq
  %v3124 = vshrl.u32 %v3123, 7
  %v3125 = vsub.s32 %v3122, %v3124
  %v3126 = vrot.slane %v3116, %v3125
  %v3128 = vunpack.c.l.s4 1966171168
  %v3129 = vunpack.c.0.s8 %v3128
  %v3130 = vlaneseq
  %v3131 = vshrl.u32 %v3130, 7
  %v3132 = vsub.s32 %v3129, %v3131
  %v3133 = vrot.slane %v3117, %v3132
  %v3135 = vunpack.c.l.s4 1966171168
  %v3136 = vunpack.c.0.s8 %v3135
  %v3137 = vlaneseq
  %v3138 = vshrl.u32 %v3137, 7
  %v3139 = vsub.s32 %v3136, %v3138
  %v3140 = vrot.slane %v3118, %v3139
  %v3142 = vunpack.c.l.s4 1966171168
  %v3143 = vunpack.c.0.s8 %v3142
  %v3144 = vlaneseq
  %v3145 = vshrl.u32 %v3144, 7
  %v3146 = vsub.s32 %v3143, %v3145
  %v3147 = vrot.slane %v3119, %v3146
  %v3148 = vcombine.low %v3126, %v3133
  %v3149 = vcombine.low %v3140, %v3147
  %v3151 = vunpack.c.l.s4 1966171168
  %v3152 = vunpack.c.0.s8 %v3151
  %v3153 = vlaneseq
  %v3154 = vshrl.u32 %v3153, 7
  %v3155 = vsub.s32 %v3152, %v3154
  %v3156 = vrot.slane %v3148, %v3155
  %v3158 = vunpack.c.l.s4 1966171168
  %v3159 = vunpack.c.0.s8 %v3158
  %v3160 = vlaneseq
  %v3161 = vshrl.u32 %v3160, 7
  %v3162 = vsub.s32 %v3159, %v3161
  %v3163 = vrot.slane %v3149, %v3162
  %v3164 = vcombine.low %v3156, %v3163
  %v3165 = vcombine.low %v3033, %v3034
  %v3166 = vcombine.low %v3035, %v3036
  %v3167 = vcombine.low %v3037, %v3038
  %v3168 = vcombine.low %v3039, %v3040
  %v3170 = vunpack.c.l.s4 1966171168
  %v3171 = vunpack.c.0.s8 %v3170
  %v3172 = vlaneseq
  %v3173 = vshrl.u32 %v3172, 7
  %v3174 = vsub.s32 %v3171, %v3173
  %v3175 = vrot.slane %v3165, %v3174
  %v3177 = vunpack.c.l.s4 1966171168
  %v3178 = vunpack.c.0.s8 %v3177
  %v3179 = vlaneseq
  %v3180 = vshrl.u32 %v3179, 7
  %v3181 = vsub.s32 %v3178, %v3180
  %v3182 = vrot.slane %v3166, %v3181
  %v3184 = vunpack.c.l.s4 1966171168
  %v3185 = vunpack.c.0.s8 %v3184
  %v3186 = vlaneseq
  %v3187 = vshrl.u32 %v3186, 7
  %v3188 = vsub.s32 %v3185, %v3187
  %v3189 = vrot.slane %v3167, %v3188
  %v3191 = vunpack.c.l.s4 1966171168
  %v3192 = vunpack.c.0.s8 %v3191
  %v3193 = vlaneseq
  %v3194 = vshrl.u32 %v3193, 7
  %v3195 = vsub.s32 %v3192, %v3194
  %v3196 = vrot.slane %v3168, %v3195
  %v3197 = vcombine.low %v3175, %v3182
  %v3198 = vcombine.low %v3189, %v3196
  %v3200 = vunpack.c.l.s4 1966171168
  %v3201 = vunpack.c.0.s8 %v3200
  %v3202 = vlaneseq
  %v3203 = vshrl.u32 %v3202, 7
  %v3204 = vsub.s32 %v3201, %v3203
  %v3205 = vrot.slane %v3197, %v3204
  %v3207 = vunpack.c.l.s4 1966171168
  %v3208 = vunpack.c.0.s8 %v3207
  %v3209 = vlaneseq
  %v3210 = vshrl.u32 %v3209, 7
  %v3211 = vsub.s32 %v3208, %v3210
  %v3212 = vrot.slane %v3198, %v3211
  %v3213 = vcombine.low %v3205, %v3212
  %v3215 = vunpack.c.l.s4 1966171168
  %v3216 = vunpack.c.0.s8 %v3215
  %v3217 = vlaneseq
  %v3218 = vshrl.u32 %v3217, 7
  %v3219 = vsub.s32 %v3216, %v3218
  %v3220 = vrot.slane %v3041, %v3219
  %v3222 = vunpack.c.l.s4 1966171168
  %v3223 = vunpack.c.0.s8 %v3222
  %v3224 = vlaneseq
  %v3225 = vshrl.u32 %v3224, 7
  %v3226 = vsub.s32 %v3223, %v3225
  %v3227 = vrot.slane %v3220, %v3226
  %3232 = vst [vmem:[%s3] sm:$0xff] %v3115
  %3233 = vst [vmem:[%s3 + $0x8] sm:$0xff] %v3164
  %3234 = vst [vmem:[%s3 + $0x10] sm:$0xff] %v3213
  %v3235 = vlaneseq
  %vm3236 = vcmp.ge.s32.totalorder %v3235, 0
  %vm3237 = vcmp.lt.s32.totalorder %v3235, 128
  %vm3238 = vmand %vm3236, %vm3237
  %3239 = vst.msk [vmem:[%s3 + $0x18] sm:$0x1] %vm3238, %v3227
  // Predicated region
  $region14: #{forward.9} parent=0 // pred_check
    _
  $region15: #{forward.9} parent=0 // pred_check_branch
    %3241 = sbr.rel (0) target = $region17
  $region16: #{forward.9} parent=0 // pred_region
    _
  $region17: #{forward.9} parent=0 // pred_fallthru
    _
  // Predicated region
  $region18: #{forward.9} parent=0 // pred_check
    _
  $region19: #{forward.9} parent=0 // pred_check_branch
    %3243 = sbr.rel (0) target = $region21
  $region20: #{forward.9} parent=0 // pred_region
    _
  $region21: #{forward.9} parent=0 // pred_fallthru
    _

</llo_original>
